<compile_context>
chip_gen: v5e
topology: v5e:2x2
jax: 0.10.0
libtpu: 0.0.40
codegen_flags: <defaults>
</compile_context>

<pallas_src>
import functools

import jax
import jax.numpy as jnp
from jax.experimental import pallas as pl
from jax.experimental.pallas import tpu as pltpu

LANES = 128


def _round_up(x, m):
    return (x + m - 1) // m * m


# --------------------------------------------------------------------------
# Single fused encoder kernel (one pallas_call for ALL Down layers)
# --------------------------------------------------------------------------
def _encoder_kernel(x_ref, w_ref, g_ref, b_ref, *rest,
                    N, H, W, C, n_layers, eps):
    # x_ref : (N, H, W, C)           lane-padded NHWC input (C % 128 == 0)
    # w_ref : (2*n_layers, 9, C, C)  bf16 per-tap conv weights (zero-padded)
    # g_ref : (2*n_layers, C)        BN gamma (zero-padded -> padded lanes stay 0)
    # b_ref : (2*n_layers, C)        BN beta  (zero-padded)
    # rest  : n_layers output refs (N, H/2^l, W/2^l, C), then n_layers VMEM
    #         halo-padded scratch refs (N, H/2^l + 2, W/2^l + 2, C)
    out_refs = rest[:n_layers]
    pad_refs = rest[n_layers:]

    act = x_ref[...]                       # f32 activation, stays on-chip
    h, w = H, W
    for li in range(n_layers):
        hp, wp = h // 2, w // 2
        m = N * hp * wp
        pad_ref = pad_refs[li]

        # ---- MaxPool2d(2): pool adjacent columns, then adjacent rows -------
        xw = jnp.max(act.reshape(N * h * wp, 2, C), axis=1)
        xh = xw.reshape(N * hp, 2, wp, C)
        pooled = jnp.maximum(xh[:, 0], xh[:, 1]).reshape(N, hp, wp, C)

        # ---- zero ONLY the 1-pixel halo ring (interior is overwritten) -----
        zrow = jnp.zeros((N, 1, wp + 2, C), jnp.float32)
        zcol = jnp.zeros((N, hp + 2, 1, C), jnp.float32)
        pad_ref[:, 0:1, :, :] = zrow
        pad_ref[:, hp + 1:hp + 2, :, :] = zrow
        pad_ref[:, :, 0:1, :] = zcol
        pad_ref[:, :, wp + 1:wp + 2, :] = zcol
        pad_ref[:, 1:hp + 1, 1:wp + 1, :] = pooled

        a = None
        for ci in range(2):
            conv = 2 * li + ci
            # Conv3x3(pad=1) as 9 accumulated per-tap MXU matmuls (no im2col
            # patches buffer, no concat / reshape copies).
            acc = jnp.zeros((m, C), jnp.float32)
            for t in range(9):
                kh, kw = divmod(t, 3)
                tap = pad_ref[:, kh:kh + hp, kw:kw + wp, :].reshape(m, C)
                acc = acc + jnp.dot(tap.astype(jnp.bfloat16), w_ref[conv, t],
                                    preferred_element_type=jnp.float32)
            # Conv bias omitted: training-mode BN mean subtraction cancels it.
            # BatchNorm2d (batch stats, biased variance) in one pass, f32.
            inv_m = 1.0 / float(m)
            s1 = jnp.sum(acc, axis=0, keepdims=True)
            s2 = jnp.sum(acc * acc, axis=0, keepdims=True)
            mean = s1 * inv_m
            var = jnp.maximum(s2 * inv_m - mean * mean, 0.0)
            scale = g_ref[conv:conv + 1, :] * jax.lax.rsqrt(var + eps)
            shift = b_ref[conv:conv + 1, :] - mean * scale
            a = jnp.maximum(acc * scale + shift, 0.0)            # ReLU
            if ci == 0:   # conv1 result becomes conv2 input (halo ring stays 0)
                pad_ref[:, 1:hp + 1, 1:wp + 1, :] = a.reshape(N, hp, wp, C)

        act = a.reshape(N, hp, wp, C)
        out_refs[li][...] = act.astype(out_refs[li].dtype)
        h, w = hp, wp


def fused_encoder(x_nhwc, w_all, g_all, b_all, *, eps=1e-5):
    """Run the whole encoder in one pallas_call; returns one NHWC(pad) array per layer."""
    N, H, W, C = x_nhwc.shape
    n_layers = w_all.shape[0] // 2
    assert H % (2 ** n_layers) == 0 and W % (2 ** n_layers) == 0 and C % LANES == 0

    shapes = []
    h, w = H, W
    for _ in range(n_layers):
        h, w = h // 2, w // 2
        shapes.append((N, h, w, C))

    def full_spec(shape):
        return pl.BlockSpec(shape, lambda i: (0,) * len(shape))

    kern = functools.partial(_encoder_kernel, N=N, H=H, W=W, C=C,
                             n_layers=n_layers, eps=eps)
    return pl.pallas_call(
        kern,
        out_shape=tuple(jax.ShapeDtypeStruct(s, x_nhwc.dtype) for s in shapes),
        grid=(1,),
        in_specs=[full_spec(x_nhwc.shape), full_spec(w_all.shape),
                  full_spec(g_all.shape), full_spec(b_all.shape)],
        out_specs=tuple(full_spec(s) for s in shapes),
        scratch_shapes=[pltpu.VMEM((N, s[1] + 2, s[2] + 2, C), jnp.float32)
                        for s in shapes],
        # TODO(synk): batch-stat BN couples the whole batch, so this runs as a
        # single grid step; for large spatial sizes add a row-band grid axis
        # (1-row halo) plus a cross-core sum/sum-sq BN reduction to use both
        # v7x TensorCores and stay inside its 64 MiB VMEM.
        compiler_params=pltpu.CompilerParams(
            dimension_semantics=("arbitrary",),
            vmem_limit_bytes=32 * 1024 * 1024),
    )(x_nhwc, w_all, g_all, b_all)


# --------------------------------------------------------------------------
# Parameters (deterministic synthetic, matching the PyTorch module's shapes)
# --------------------------------------------------------------------------
def init_params(key, topology):
    n_layers = len(topology)
    params = []
    for idx in range(n_layers):
        in_dim = topology[idx]
        out_dim = topology[idx + 1] if idx != n_layers - 1 else topology[idx]
        layer = {}
        for j, (ci, co) in enumerate([(in_dim, out_dim), (out_dim, out_dim)]):
            key, k1, k2 = jax.random.split(key, 3)
            bound = 1.0 / float(jnp.sqrt(ci * 9.0))
            layer[f"w{j}"] = jax.random.uniform(
                k1, (3, 3, ci, co), jnp.float32, -bound, bound)
            # Conv bias exists in the PyTorch module but is numerically
            # cancelled by training-mode BatchNorm -> not used by the kernel.
            layer[f"b{j}"] = jax.random.uniform(
                k2, (co,), jnp.float32, -bound, bound)
            layer[f"gamma{j}"] = jnp.ones((co,), jnp.float32)   # BN weight init
            layer[f"beta{j}"] = jnp.zeros((co,), jnp.float32)   # BN bias init
        params.append(layer)
    return params


def pack_params(params, topology):
    """Pack every conv/BN into three stacked arrays for the fused kernel."""
    n_layers = len(topology)
    C = _round_up(max(max(topology), LANES), LANES)
    w_list, g_list, b_list = [], [], []
    for layer in params:
        for j in range(2):
            w = layer[f"w{j}"]                              # (3, 3, cin, cout)
            cin, cout = w.shape[2], w.shape[3]
            w9 = jnp.pad(w.reshape(9, cin, cout),
                         ((0, 0), (0, C - cin), (0, C - cout)))
            w_list.append(w9.astype(jnp.bfloat16))          # halve weight DMA
            g_list.append(jnp.pad(layer[f"gamma{j}"], (0, C - cout)))
            b_list.append(jnp.pad(layer[f"beta{j}"], (0, C - cout)))
    w_all = jnp.stack(w_list)                               # (2L, 9, C, C) bf16
    g_all = jnp.stack(g_list).astype(jnp.float32)           # (2L, C)
    b_all = jnp.stack(b_list).astype(jnp.float32)           # (2L, C)
    out_dims = tuple(topology[i + 1] if i != n_layers - 1 else topology[i]
                     for i in range(n_layers))
    return w_all, g_all, b_all, out_dims, C


# --------------------------------------------------------------------------
# Encoder forward (matches Encoder.forward: [deepest, ..., shallowest, input])
# --------------------------------------------------------------------------
@functools.partial(jax.jit, static_argnums=(4,))
def encoder_forward(x_nchw, w_all, g_all, b_all, out_dims):
    C = w_all.shape[-1]
    cin = x_nchw.shape[1]
    # TODO(synk): the NCHW <-> lane-dense-NHWC relayouts of the tiny public
    # interface stay as (fused) XLA ops outside the kernel; in-kernel
    # transposes of these lane-sparse shapes aren't worth the lowering risk.
    h = jnp.transpose(x_nchw, (0, 2, 3, 1))                          # NCHW -> NHWC
    h = jnp.pad(h, ((0, 0), (0, 0), (0, 0), (0, C - cin)))           # lane-dense C
    layer_outs = fused_encoder(h, w_all, g_all, b_all)               # ONE pallas_call
    feats = [x_nchw]
    for o, od in zip(layer_outs, out_dims):
        feats.append(jnp.transpose(o[..., :od], (0, 3, 1, 2)))       # strip pad -> NCHW
    feats.reverse()
    return feats


if __name__ == "__main__":
    topology = [4, 8, 16]  # cfg.MODEL.TOPOLOGY
    key = jax.random.PRNGKey(0)
    kx, kp = jax.random.split(key)
    x = jax.random.normal(kx, (2, 4, 16, 16), jnp.float32)  # NCHW input
    params = init_params(kp, topology)
    w_all, g_all, b_all, out_dims, _ = pack_params(params, topology)

    outs = encoder_forward(x, w_all, g_all, b_all, out_dims)
    for o in outs:
        jax.block_until_ready(o)

    # expected shapes: [(2,16,2,2), (2,16,4,4), (2,8,8,8), (2,4,16,16)]
    assert [tuple(o.shape) for o in outs] == [
        (2, 16, 2, 2), (2, 16, 4, 4), (2, 8, 8, 8), (2, 4, 16, 16)]
    print("KERNEL_OK")
</pallas_src>

<mosaic_0001>
module attributes {stable_mosaic.version = 11 : i64} {
  func.func @_encoder_kernel(%arg0: i32, %arg1: memref<2x16x16x128xf32, #tpu.memory_space<vmem>>, %arg2: memref<6x9x128x128xbf16, #tpu.memory_space<vmem>>, %arg3: memref<6x128xf32, #tpu.memory_space<vmem>>, %arg4: memref<6x128xf32, #tpu.memory_space<vmem>>, %arg5: memref<2x8x8x128xf32, #tpu.memory_space<vmem>>, %arg6: memref<2x4x4x128xf32, #tpu.memory_space<vmem>>, %arg7: memref<2x2x2x128xf32, #tpu.memory_space<vmem>>, %arg8: memref<2x10x10x128xf32, #tpu.memory_space<vmem>>, %arg9: memref<2x6x6x128xf32, #tpu.memory_space<vmem>>, %arg10: memref<2x4x4x128xf32, #tpu.memory_space<vmem>>) attributes {dimension_semantics = [#tpu.dimension_semantics<arbitrary>], iteration_bounds = array<i64: 1>, scalar_prefetch = 0 : i64, scratch_operands = 3 : i64, tpu.core_type = #tpu.core_type<tc>, window_params = [{pipeline_mode = #tpu.pipeline_mode<synchronous>, transform_indices = @transform_0, window_bounds = array<i64: 2, 16, 16, 128>}, {pipeline_mode = #tpu.pipeline_mode<synchronous>, transform_indices = @transform_1, window_bounds = array<i64: 6, 9, 128, 128>}, {pipeline_mode = #tpu.pipeline_mode<synchronous>, transform_indices = @transform_2, window_bounds = array<i64: 6, 128>}, {pipeline_mode = #tpu.pipeline_mode<synchronous>, transform_indices = @transform_3, window_bounds = array<i64: 6, 128>}, {pipeline_mode = #tpu.pipeline_mode<synchronous>, transform_indices = @transform_4, window_bounds = array<i64: 2, 8, 8, 128>}, {pipeline_mode = #tpu.pipeline_mode<synchronous>, transform_indices = @transform_5, window_bounds = array<i64: 2, 4, 4, 128>}, {pipeline_mode = #tpu.pipeline_mode<synchronous>, transform_indices = @transform_6, window_bounds = array<i64: 2, 2, 2, 128>}]} {
    %c0 = arith.constant 0 : index
    %c0_0 = arith.constant 0 : index
    %c0_1 = arith.constant 0 : index
    %c0_2 = arith.constant 0 : index
    %0 = vector.load %arg1[%c0, %c0_0, %c0_1, %c0_2] : memref<2x16x16x128xf32, #tpu.memory_space<vmem>>, vector<2x16x16x128xf32>
    %1 = vector.shape_cast %0 : vector<2x16x16x128xf32> to vector<256x2x128xf32>
    %cst = arith.constant dense<0xFF800000> : vector<256x128xf32>
    %2 = vector.multi_reduction <maximumf>, %1, %cst [1] : vector<256x2x128xf32> to vector<256x128xf32>
    %3 = vector.shape_cast %2 : vector<256x128xf32> to vector<16x2x8x128xf32>
    %4 = vector.extract_strided_slice %3 {offsets = [0, 0, 0, 0], sizes = [16, 1, 8, 128], strides = [1, 1, 1, 1]} : vector<16x2x8x128xf32> to vector<16x1x8x128xf32>
    %5 = vector.shape_cast %4 : vector<16x1x8x128xf32> to vector<16x8x128xf32>
    %6 = vector.extract_strided_slice %3 {offsets = [0, 1, 0, 0], sizes = [16, 1, 8, 128], strides = [1, 1, 1, 1]} : vector<16x2x8x128xf32> to vector<16x1x8x128xf32>
    %7 = vector.shape_cast %6 : vector<16x1x8x128xf32> to vector<16x8x128xf32>
    %8 = arith.maximumf %5, %7 : vector<16x8x128xf32>
    %9 = vector.shape_cast %8 : vector<16x8x128xf32> to vector<2x8x8x128xf32>
    %cst_3 = arith.constant 0.000000e+00 : f32
    %10 = vector.broadcast %cst_3 : f32 to vector<2x1x10x128xf32>
    %cst_4 = arith.constant 0.000000e+00 : f32
    %11 = vector.broadcast %cst_4 : f32 to vector<2x10x1x128xf32>
    %c0_5 = arith.constant 0 : index
    %c0_6 = arith.constant 0 : index
    %c0_7 = arith.constant 0 : index
    %c0_8 = arith.constant 0 : index
    %12 = vector.load %arg8[%c0_5, %c0_6, %c0_7, %c0_8] : memref<2x10x10x128xf32, #tpu.memory_space<vmem>>, vector<2x1x10x128xf32>
    tpu.vector_store %arg8[%c0_5, %c0_6, %c0_7, %c0_8], %10 {strides = array<i32>} : memref<2x10x10x128xf32, #tpu.memory_space<vmem>>, vector<2x1x10x128xf32>,
    %c0_9 = arith.constant 0 : index
    %c9 = arith.constant 9 : index
    %c0_10 = arith.constant 0 : index
    %c0_11 = arith.constant 0 : index
    %13 = vector.load %arg8[%c0_9, %c9, %c0_10, %c0_11] : memref<2x10x10x128xf32, #tpu.memory_space<vmem>>, vector<2x1x10x128xf32>
    tpu.vector_store %arg8[%c0_9, %c9, %c0_10, %c0_11], %10 {strides = array<i32>} : memref<2x10x10x128xf32, #tpu.memory_space<vmem>>, vector<2x1x10x128xf32>,
    %c0_12 = arith.constant 0 : index
    %c0_13 = arith.constant 0 : index
    %c0_14 = arith.constant 0 : index
    %c0_15 = arith.constant 0 : index
    %14 = vector.load %arg8[%c0_12, %c0_13, %c0_14, %c0_15] : memref<2x10x10x128xf32, #tpu.memory_space<vmem>>, vector<2x10x1x128xf32>
    tpu.vector_store %arg8[%c0_12, %c0_13, %c0_14, %c0_15], %11 {strides = array<i32>} : memref<2x10x10x128xf32, #tpu.memory_space<vmem>>, vector<2x10x1x128xf32>,
    %c0_16 = arith.constant 0 : index
    %c0_17 = arith.constant 0 : index
    %c9_18 = arith.constant 9 : index
    %c0_19 = arith.constant 0 : index
    %15 = vector.load %arg8[%c0_16, %c0_17, %c9_18, %c0_19] : memref<2x10x10x128xf32, #tpu.memory_space<vmem>>, vector<2x10x1x128xf32>
    tpu.vector_store %arg8[%c0_16, %c0_17, %c9_18, %c0_19], %11 {strides = array<i32>} : memref<2x10x10x128xf32, #tpu.memory_space<vmem>>, vector<2x10x1x128xf32>,
    %c0_20 = arith.constant 0 : index
    %c1 = arith.constant 1 : index
    %c1_21 = arith.constant 1 : index
    %c0_22 = arith.constant 0 : index
    %16 = vector.load %arg8[%c0_20, %c1, %c1_21, %c0_22] : memref<2x10x10x128xf32, #tpu.memory_space<vmem>>, vector<2x8x8x128xf32>
    tpu.vector_store %arg8[%c0_20, %c1, %c1_21, %c0_22], %9 {strides = array<i32>} : memref<2x10x10x128xf32, #tpu.memory_space<vmem>>, vector<2x8x8x128xf32>,
    %cst_23 = arith.constant 0.000000e+00 : f32
    %17 = vector.broadcast %cst_23 : f32 to vector<128x128xf32>
    %c0_24 = arith.constant 0 : index
    %c0_25 = arith.constant 0 : index
    %c0_26 = arith.constant 0 : index
    %c0_27 = arith.constant 0 : index
    %18 = vector.load %arg8[%c0_24, %c0_25, %c0_26, %c0_27] : memref<2x10x10x128xf32, #tpu.memory_space<vmem>>, vector<2x8x8x128xf32>
    %19 = vector.shape_cast %18 : vector<2x8x8x128xf32> to vector<128x128xf32>
    %20 = arith.truncf %19 : vector<128x128xf32> to vector<128x128xbf16>
    %c0_28 = arith.constant 0 : index
    %c0_29 = arith.constant 0 : index
    %c0_30 = arith.constant 0 : index
    %c0_31 = arith.constant 0 : index
    %21 = vector.load %arg2[%c0_28, %c0_29, %c0_30, %c0_31] : memref<6x9x128x128xbf16, #tpu.memory_space<vmem>>, vector<1x1x128x128xbf16>
    %22 = vector.shape_cast %21 : vector<1x1x128x128xbf16> to vector<128x128xbf16>
    %cst_32 = arith.constant dense<0.000000e+00> : vector<128x128xf32>
    %23 = tpu.matmul %20, %22, %cst_32 {dimension_numbers = #tpu.dot_dimension_numbers<[1], [0], [0], [1], [0, 0, 1, 1], [], []>} : vector<128x128xbf16>, vector<128x128xbf16>, vector<128x128xf32> -> vector<128x128xf32>
    %24 = arith.addf %17, %23 : vector<128x128xf32>
    %c0_33 = arith.constant 0 : index
    %c0_34 = arith.constant 0 : index
    %c1_35 = arith.constant 1 : index
    %c0_36 = arith.constant 0 : index
    %25 = vector.load %arg8[%c0_33, %c0_34, %c1_35, %c0_36] : memref<2x10x10x128xf32, #tpu.memory_space<vmem>>, vector<2x8x8x128xf32>
    %26 = vector.shape_cast %25 : vector<2x8x8x128xf32> to vector<128x128xf32>
    %27 = arith.truncf %26 : vector<128x128xf32> to vector<128x128xbf16>
    %c0_37 = arith.constant 0 : index
    %c1_38 = arith.constant 1 : index
    %c0_39 = arith.constant 0 : index
    %c0_40 = arith.constant 0 : index
    %28 = vector.load %arg2[%c0_37, %c1_38, %c0_39, %c0_40] : memref<6x9x128x128xbf16, #tpu.memory_space<vmem>>, vector<1x1x128x128xbf16>
    %29 = vector.shape_cast %28 : vector<1x1x128x128xbf16> to vector<128x128xbf16>
    %cst_41 = arith.constant dense<0.000000e+00> : vector<128x128xf32>
    %30 = tpu.matmul %27, %29, %cst_41 {dimension_numbers = #tpu.dot_dimension_numbers<[1], [0], [0], [1], [0, 0, 1, 1], [], []>} : vector<128x128xbf16>, vector<128x128xbf16>, vector<128x128xf32> -> vector<128x128xf32>
    %31 = arith.addf %24, %30 : vector<128x128xf32>
    %c0_42 = arith.constant 0 : index
    %c0_43 = arith.constant 0 : index
    %c2 = arith.constant 2 : index
    %c0_44 = arith.constant 0 : index
    %32 = vector.load %arg8[%c0_42, %c0_43, %c2, %c0_44] : memref<2x10x10x128xf32, #tpu.memory_space<vmem>>, vector<2x8x8x128xf32>
    %33 = vector.shape_cast %32 : vector<2x8x8x128xf32> to vector<128x128xf32>
    %34 = arith.truncf %33 : vector<128x128xf32> to vector<128x128xbf16>
    %c0_45 = arith.constant 0 : index
    %c2_46 = arith.constant 2 : index
    %c0_47 = arith.constant 0 : index
    %c0_48 = arith.constant 0 : index
    %35 = vector.load %arg2[%c0_45, %c2_46, %c0_47, %c0_48] : memref<6x9x128x128xbf16, #tpu.memory_space<vmem>>, vector<1x1x128x128xbf16>
    %36 = vector.shape_cast %35 : vector<1x1x128x128xbf16> to vector<128x128xbf16>
    %cst_49 = arith.constant dense<0.000000e+00> : vector<128x128xf32>
    %37 = tpu.matmul %34, %36, %cst_49 {dimension_numbers = #tpu.dot_dimension_numbers<[1], [0], [0], [1], [0, 0, 1, 1], [], []>} : vector<128x128xbf16>, vector<128x128xbf16>, vector<128x128xf32> -> vector<128x128xf32>
    %38 = arith.addf %31, %37 : vector<128x128xf32>
    %c0_50 = arith.constant 0 : index
    %c1_51 = arith.constant 1 : index
    %c0_52 = arith.constant 0 : index
    %c0_53 = arith.constant 0 : index
    %39 = vector.load %arg8[%c0_50, %c1_51, %c0_52, %c0_53] : memref<2x10x10x128xf32, #tpu.memory_space<vmem>>, vector<2x8x8x128xf32>
    %40 = vector.shape_cast %39 : vector<2x8x8x128xf32> to vector<128x128xf32>
    %41 = arith.truncf %40 : vector<128x128xf32> to vector<128x128xbf16>
    %c0_54 = arith.constant 0 : index
    %c3 = arith.constant 3 : index
    %c0_55 = arith.constant 0 : index
    %c0_56 = arith.constant 0 : index
    %42 = vector.load %arg2[%c0_54, %c3, %c0_55, %c0_56] : memref<6x9x128x128xbf16, #tpu.memory_space<vmem>>, vector<1x1x128x128xbf16>
    %43 = vector.shape_cast %42 : vector<1x1x128x128xbf16> to vector<128x128xbf16>
    %cst_57 = arith.constant dense<0.000000e+00> : vector<128x128xf32>
    %44 = tpu.matmul %41, %43, %cst_57 {dimension_numbers = #tpu.dot_dimension_numbers<[1], [0], [0], [1], [0, 0, 1, 1], [], []>} : vector<128x128xbf16>, vector<128x128xbf16>, vector<128x128xf32> -> vector<128x128xf32>
    %45 = arith.addf %38, %44 : vector<128x128xf32>
    %c0_58 = arith.constant 0 : index
    %c1_59 = arith.constant 1 : index
    %c1_60 = arith.constant 1 : index
    %c0_61 = arith.constant 0 : index
    %46 = vector.load %arg8[%c0_58, %c1_59, %c1_60, %c0_61] : memref<2x10x10x128xf32, #tpu.memory_space<vmem>>, vector<2x8x8x128xf32>
    %47 = vector.shape_cast %46 : vector<2x8x8x128xf32> to vector<128x128xf32>
    %48 = arith.truncf %47 : vector<128x128xf32> to vector<128x128xbf16>
    %c0_62 = arith.constant 0 : index
    %c4 = arith.constant 4 : index
    %c0_63 = arith.constant 0 : index
    %c0_64 = arith.constant 0 : index
    %49 = vector.load %arg2[%c0_62, %c4, %c0_63, %c0_64] : memref<6x9x128x128xbf16, #tpu.memory_space<vmem>>, vector<1x1x128x128xbf16>
    %50 = vector.shape_cast %49 : vector<1x1x128x128xbf16> to vector<128x128xbf16>
    %cst_65 = arith.constant dense<0.000000e+00> : vector<128x128xf32>
    %51 = tpu.matmul %48, %50, %cst_65 {dimension_numbers = #tpu.dot_dimension_numbers<[1], [0], [0], [1], [0, 0, 1, 1], [], []>} : vector<128x128xbf16>, vector<128x128xbf16>, vector<128x128xf32> -> vector<128x128xf32>
    %52 = arith.addf %45, %51 : vector<128x128xf32>
    %c0_66 = arith.constant 0 : index
    %c1_67 = arith.constant 1 : index
    %c2_68 = arith.constant 2 : index
    %c0_69 = arith.constant 0 : index
    %53 = vector.load %arg8[%c0_66, %c1_67, %c2_68, %c0_69] : memref<2x10x10x128xf32, #tpu.memory_space<vmem>>, vector<2x8x8x128xf32>
    %54 = vector.shape_cast %53 : vector<2x8x8x128xf32> to vector<128x128xf32>
    %55 = arith.truncf %54 : vector<128x128xf32> to vector<128x128xbf16>
    %c0_70 = arith.constant 0 : index
    %c5 = arith.constant 5 : index
    %c0_71 = arith.constant 0 : index
    %c0_72 = arith.constant 0 : index
    %56 = vector.load %arg2[%c0_70, %c5, %c0_71, %c0_72] : memref<6x9x128x128xbf16, #tpu.memory_space<vmem>>, vector<1x1x128x128xbf16>
    %57 = vector.shape_cast %56 : vector<1x1x128x128xbf16> to vector<128x128xbf16>
    %cst_73 = arith.constant dense<0.000000e+00> : vector<128x128xf32>
    %58 = tpu.matmul %55, %57, %cst_73 {dimension_numbers = #tpu.dot_dimension_numbers<[1], [0], [0], [1], [0, 0, 1, 1], [], []>} : vector<128x128xbf16>, vector<128x128xbf16>, vector<128x128xf32> -> vector<128x128xf32>
    %59 = arith.addf %52, %58 : vector<128x128xf32>
    %c0_74 = arith.constant 0 : index
    %c2_75 = arith.constant 2 : index
    %c0_76 = arith.constant 0 : index
    %c0_77 = arith.constant 0 : index
    %60 = vector.load %arg8[%c0_74, %c2_75, %c0_76, %c0_77] : memref<2x10x10x128xf32, #tpu.memory_space<vmem>>, vector<2x8x8x128xf32>
    %61 = vector.shape_cast %60 : vector<2x8x8x128xf32> to vector<128x128xf32>
    %62 = arith.truncf %61 : vector<128x128xf32> to vector<128x128xbf16>
    %c0_78 = arith.constant 0 : index
    %c6 = arith.constant 6 : index
    %c0_79 = arith.constant 0 : index
    %c0_80 = arith.constant 0 : index
    %63 = vector.load %arg2[%c0_78, %c6, %c0_79, %c0_80] : memref<6x9x128x128xbf16, #tpu.memory_space<vmem>>, vector<1x1x128x128xbf16>
    %64 = vector.shape_cast %63 : vector<1x1x128x128xbf16> to vector<128x128xbf16>
    %cst_81 = arith.constant dense<0.000000e+00> : vector<128x128xf32>
    %65 = tpu.matmul %62, %64, %cst_81 {dimension_numbers = #tpu.dot_dimension_numbers<[1], [0], [0], [1], [0, 0, 1, 1], [], []>} : vector<128x128xbf16>, vector<128x128xbf16>, vector<128x128xf32> -> vector<128x128xf32>
    %66 = arith.addf %59, %65 : vector<128x128xf32>
    %c0_82 = arith.constant 0 : index
    %c2_83 = arith.constant 2 : index
    %c1_84 = arith.constant 1 : index
    %c0_85 = arith.constant 0 : index
    %67 = vector.load %arg8[%c0_82, %c2_83, %c1_84, %c0_85] : memref<2x10x10x128xf32, #tpu.memory_space<vmem>>, vector<2x8x8x128xf32>
    %68 = vector.shape_cast %67 : vector<2x8x8x128xf32> to vector<128x128xf32>
    %69 = arith.truncf %68 : vector<128x128xf32> to vector<128x128xbf16>
    %c0_86 = arith.constant 0 : index
    %c7 = arith.constant 7 : index
    %c0_87 = arith.constant 0 : index
    %c0_88 = arith.constant 0 : index
    %70 = vector.load %arg2[%c0_86, %c7, %c0_87, %c0_88] : memref<6x9x128x128xbf16, #tpu.memory_space<vmem>>, vector<1x1x128x128xbf16>
    %71 = vector.shape_cast %70 : vector<1x1x128x128xbf16> to vector<128x128xbf16>
    %cst_89 = arith.constant dense<0.000000e+00> : vector<128x128xf32>
    %72 = tpu.matmul %69, %71, %cst_89 {dimension_numbers = #tpu.dot_dimension_numbers<[1], [0], [0], [1], [0, 0, 1, 1], [], []>} : vector<128x128xbf16>, vector<128x128xbf16>, vector<128x128xf32> -> vector<128x128xf32>
    %73 = arith.addf %66, %72 : vector<128x128xf32>
    %c0_90 = arith.constant 0 : index
    %c2_91 = arith.constant 2 : index
    %c2_92 = arith.constant 2 : index
    %c0_93 = arith.constant 0 : index
    %74 = vector.load %arg8[%c0_90, %c2_91, %c2_92, %c0_93] : memref<2x10x10x128xf32, #tpu.memory_space<vmem>>, vector<2x8x8x128xf32>
    %75 = vector.shape_cast %74 : vector<2x8x8x128xf32> to vector<128x128xf32>
    %76 = arith.truncf %75 : vector<128x128xf32> to vector<128x128xbf16>
    %c0_94 = arith.constant 0 : index
    %c8 = arith.constant 8 : index
    %c0_95 = arith.constant 0 : index
    %c0_96 = arith.constant 0 : index
    %77 = vector.load %arg2[%c0_94, %c8, %c0_95, %c0_96] : memref<6x9x128x128xbf16, #tpu.memory_space<vmem>>, vector<1x1x128x128xbf16>
    %78 = vector.shape_cast %77 : vector<1x1x128x128xbf16> to vector<128x128xbf16>
    %cst_97 = arith.constant dense<0.000000e+00> : vector<128x128xf32>
    %79 = tpu.matmul %76, %78, %cst_97 {dimension_numbers = #tpu.dot_dimension_numbers<[1], [0], [0], [1], [0, 0, 1, 1], [], []>} : vector<128x128xbf16>, vector<128x128xbf16>, vector<128x128xf32> -> vector<128x128xf32>
    %80 = arith.addf %73, %79 : vector<128x128xf32>
    %cst_98 = arith.constant dense<0.000000e+00> : vector<128xf32>
    %81 = vector.multi_reduction <add>, %80, %cst_98 [0] : vector<128x128xf32> to vector<128xf32>
    %82 = vector.shape_cast %81 : vector<128xf32> to vector<1x128xf32>
    %83 = arith.mulf %80, %80 : vector<128x128xf32>
    %cst_99 = arith.constant dense<0.000000e+00> : vector<128xf32>
    %84 = vector.multi_reduction <add>, %83, %cst_99 [0] : vector<128x128xf32> to vector<128xf32>
    %85 = vector.shape_cast %84 : vector<128xf32> to vector<1x128xf32>
    %cst_100 = arith.constant 7.812500e-03 : f32
    %86 = vector.broadcast %cst_100 : f32 to vector<1x128xf32>
    %87 = arith.mulf %82, %86 : vector<1x128xf32>
    %cst_101 = arith.constant 7.812500e-03 : f32
    %88 = vector.broadcast %cst_101 : f32 to vector<1x128xf32>
    %89 = arith.mulf %85, %88 : vector<1x128xf32>
    %90 = arith.mulf %87, %87 : vector<1x128xf32>
    %91 = arith.subf %89, %90 : vector<1x128xf32>
    %cst_102 = arith.constant 0.000000e+00 : f32
    %92 = vector.broadcast %cst_102 : f32 to vector<1x128xf32>
    %93 = arith.maximumf %91, %92 : vector<1x128xf32>
    %c0_103 = arith.constant 0 : index
    %c0_104 = arith.constant 0 : index
    %94 = vector.load %arg3[%c0_103, %c0_104] : memref<6x128xf32, #tpu.memory_space<vmem>>, vector<1x128xf32>
    %cst_105 = arith.constant 9.99999974E-6 : f32
    %95 = vector.broadcast %cst_105 : f32 to vector<1x128xf32>
    %96 = arith.addf %93, %95 : vector<1x128xf32>
    %97 = math.rsqrt %96 : vector<1x128xf32>
    %98 = arith.mulf %94, %97 : vector<1x128xf32>
    %c0_106 = arith.constant 0 : index
    %c0_107 = arith.constant 0 : index
    %99 = vector.load %arg4[%c0_106, %c0_107] : memref<6x128xf32, #tpu.memory_space<vmem>>, vector<1x128xf32>
    %100 = arith.mulf %87, %98 : vector<1x128xf32>
    %101 = arith.subf %99, %100 : vector<1x128xf32>
    %102 = vector.broadcast %98 : vector<1x128xf32> to vector<128x128xf32>
    %103 = arith.mulf %80, %102 : vector<128x128xf32>
    %104 = vector.broadcast %101 : vector<1x128xf32> to vector<128x128xf32>
    %105 = arith.addf %103, %104 : vector<128x128xf32>
    %cst_108 = arith.constant 0.000000e+00 : f32
    %106 = vector.broadcast %cst_108 : f32 to vector<128x128xf32>
    %107 = arith.maximumf %105, %106 : vector<128x128xf32>
    %108 = vector.shape_cast %107 : vector<128x128xf32> to vector<2x8x8x128xf32>
    %c0_109 = arith.constant 0 : index
    %c1_110 = arith.constant 1 : index
    %c1_111 = arith.constant 1 : index
    %c0_112 = arith.constant 0 : index
    %109 = vector.load %arg8[%c0_109, %c1_110, %c1_111, %c0_112] : memref<2x10x10x128xf32, #tpu.memory_space<vmem>>, vector<2x8x8x128xf32>
    tpu.vector_store %arg8[%c0_109, %c1_110, %c1_111, %c0_112], %108 {strides = array<i32>} : memref<2x10x10x128xf32, #tpu.memory_space<vmem>>, vector<2x8x8x128xf32>,
    %cst_113 = arith.constant 0.000000e+00 : f32
    %110 = vector.broadcast %cst_113 : f32 to vector<128x128xf32>
    %c0_114 = arith.constant 0 : index
    %c0_115 = arith.constant 0 : index
    %c0_116 = arith.constant 0 : index
    %c0_117 = arith.constant 0 : index
    %111 = vector.load %arg8[%c0_114, %c0_115, %c0_116, %c0_117] : memref<2x10x10x128xf32, #tpu.memory_space<vmem>>, vector<2x8x8x128xf32>
    %112 = vector.shape_cast %111 : vector<2x8x8x128xf32> to vector<128x128xf32>
    %113 = arith.truncf %112 : vector<128x128xf32> to vector<128x128xbf16>
    %c1_118 = arith.constant 1 : index
    %c0_119 = arith.constant 0 : index
    %c0_120 = arith.constant 0 : index
    %c0_121 = arith.constant 0 : index
    %114 = vector.load %arg2[%c1_118, %c0_119, %c0_120, %c0_121] : memref<6x9x128x128xbf16, #tpu.memory_space<vmem>>, vector<1x1x128x128xbf16>
    %115 = vector.shape_cast %114 : vector<1x1x128x128xbf16> to vector<128x128xbf16>
    %cst_122 = arith.constant dense<0.000000e+00> : vector<128x128xf32>
    %116 = tpu.matmul %113, %115, %cst_122 {dimension_numbers = #tpu.dot_dimension_numbers<[1], [0], [0], [1], [0, 0, 1, 1], [], []>} : vector<128x128xbf16>, vector<128x128xbf16>, vector<128x128xf32> -> vector<128x128xf32>
    %117 = arith.addf %110, %116 : vector<128x128xf32>
    %c0_123 = arith.constant 0 : index
    %c0_124 = arith.constant 0 : index
    %c1_125 = arith.constant 1 : index
    %c0_126 = arith.constant 0 : index
    %118 = vector.load %arg8[%c0_123, %c0_124, %c1_125, %c0_126] : memref<2x10x10x128xf32, #tpu.memory_space<vmem>>, vector<2x8x8x128xf32>
    %119 = vector.shape_cast %118 : vector<2x8x8x128xf32> to vector<128x128xf32>
    %120 = arith.truncf %119 : vector<128x128xf32> to vector<128x128xbf16>
    %c1_127 = arith.constant 1 : index
    %c1_128 = arith.constant 1 : index
    %c0_129 = arith.constant 0 : index
    %c0_130 = arith.constant 0 : index
    %121 = vector.load %arg2[%c1_127, %c1_128, %c0_129, %c0_130] : memref<6x9x128x128xbf16, #tpu.memory_space<vmem>>, vector<1x1x128x128xbf16>
    %122 = vector.shape_cast %121 : vector<1x1x128x128xbf16> to vector<128x128xbf16>
    %cst_131 = arith.constant dense<0.000000e+00> : vector<128x128xf32>
    %123 = tpu.matmul %120, %122, %cst_131 {dimension_numbers = #tpu.dot_dimension_numbers<[1], [0], [0], [1], [0, 0, 1, 1], [], []>} : vector<128x128xbf16>, vector<128x128xbf16>, vector<128x128xf32> -> vector<128x128xf32>
    %124 = arith.addf %117, %123 : vector<128x128xf32>
    %c0_132 = arith.constant 0 : index
    %c0_133 = arith.constant 0 : index
    %c2_134 = arith.constant 2 : index
    %c0_135 = arith.constant 0 : index
    %125 = vector.load %arg8[%c0_132, %c0_133, %c2_134, %c0_135] : memref<2x10x10x128xf32, #tpu.memory_space<vmem>>, vector<2x8x8x128xf32>
    %126 = vector.shape_cast %125 : vector<2x8x8x128xf32> to vector<128x128xf32>
    %127 = arith.truncf %126 : vector<128x128xf32> to vector<128x128xbf16>
    %c1_136 = arith.constant 1 : index
    %c2_137 = arith.constant 2 : index
    %c0_138 = arith.constant 0 : index
    %c0_139 = arith.constant 0 : index
    %128 = vector.load %arg2[%c1_136, %c2_137, %c0_138, %c0_139] : memref<6x9x128x128xbf16, #tpu.memory_space<vmem>>, vector<1x1x128x128xbf16>
    %129 = vector.shape_cast %128 : vector<1x1x128x128xbf16> to vector<128x128xbf16>
    %cst_140 = arith.constant dense<0.000000e+00> : vector<128x128xf32>
    %130 = tpu.matmul %127, %129, %cst_140 {dimension_numbers = #tpu.dot_dimension_numbers<[1], [0], [0], [1], [0, 0, 1, 1], [], []>} : vector<128x128xbf16>, vector<128x128xbf16>, vector<128x128xf32> -> vector<128x128xf32>
    %131 = arith.addf %124, %130 : vector<128x128xf32>
    %c0_141 = arith.constant 0 : index
    %c1_142 = arith.constant 1 : index
    %c0_143 = arith.constant 0 : index
    %c0_144 = arith.constant 0 : index
    %132 = vector.load %arg8[%c0_141, %c1_142, %c0_143, %c0_144] : memref<2x10x10x128xf32, #tpu.memory_space<vmem>>, vector<2x8x8x128xf32>
    %133 = vector.shape_cast %132 : vector<2x8x8x128xf32> to vector<128x128xf32>
    %134 = arith.truncf %133 : vector<128x128xf32> to vector<128x128xbf16>
    %c1_145 = arith.constant 1 : index
    %c3_146 = arith.constant 3 : index
    %c0_147 = arith.constant 0 : index
    %c0_148 = arith.constant 0 : index
    %135 = vector.load %arg2[%c1_145, %c3_146, %c0_147, %c0_148] : memref<6x9x128x128xbf16, #tpu.memory_space<vmem>>, vector<1x1x128x128xbf16>
    %136 = vector.shape_cast %135 : vector<1x1x128x128xbf16> to vector<128x128xbf16>
    %cst_149 = arith.constant dense<0.000000e+00> : vector<128x128xf32>
    %137 = tpu.matmul %134, %136, %cst_149 {dimension_numbers = #tpu.dot_dimension_numbers<[1], [0], [0], [1], [0, 0, 1, 1], [], []>} : vector<128x128xbf16>, vector<128x128xbf16>, vector<128x128xf32> -> vector<128x128xf32>
    %138 = arith.addf %131, %137 : vector<128x128xf32>
    %c0_150 = arith.constant 0 : index
    %c1_151 = arith.constant 1 : index
    %c1_152 = arith.constant 1 : index
    %c0_153 = arith.constant 0 : index
    %139 = vector.load %arg8[%c0_150, %c1_151, %c1_152, %c0_153] : memref<2x10x10x128xf32, #tpu.memory_space<vmem>>, vector<2x8x8x128xf32>
    %140 = vector.shape_cast %139 : vector<2x8x8x128xf32> to vector<128x128xf32>
    %141 = arith.truncf %140 : vector<128x128xf32> to vector<128x128xbf16>
    %c1_154 = arith.constant 1 : index
    %c4_155 = arith.constant 4 : index
    %c0_156 = arith.constant 0 : index
    %c0_157 = arith.constant 0 : index
    %142 = vector.load %arg2[%c1_154, %c4_155, %c0_156, %c0_157] : memref<6x9x128x128xbf16, #tpu.memory_space<vmem>>, vector<1x1x128x128xbf16>
    %143 = vector.shape_cast %142 : vector<1x1x128x128xbf16> to vector<128x128xbf16>
    %cst_158 = arith.constant dense<0.000000e+00> : vector<128x128xf32>
    %144 = tpu.matmul %141, %143, %cst_158 {dimension_numbers = #tpu.dot_dimension_numbers<[1], [0], [0], [1], [0, 0, 1, 1], [], []>} : vector<128x128xbf16>, vector<128x128xbf16>, vector<128x128xf32> -> vector<128x128xf32>
    %145 = arith.addf %138, %144 : vector<128x128xf32>
    %c0_159 = arith.constant 0 : index
    %c1_160 = arith.constant 1 : index
    %c2_161 = arith.constant 2 : index
    %c0_162 = arith.constant 0 : index
    %146 = vector.load %arg8[%c0_159, %c1_160, %c2_161, %c0_162] : memref<2x10x10x128xf32, #tpu.memory_space<vmem>>, vector<2x8x8x128xf32>
    %147 = vector.shape_cast %146 : vector<2x8x8x128xf32> to vector<128x128xf32>
    %148 = arith.truncf %147 : vector<128x128xf32> to vector<128x128xbf16>
    %c1_163 = arith.constant 1 : index
    %c5_164 = arith.constant 5 : index
    %c0_165 = arith.constant 0 : index
    %c0_166 = arith.constant 0 : index
    %149 = vector.load %arg2[%c1_163, %c5_164, %c0_165, %c0_166] : memref<6x9x128x128xbf16, #tpu.memory_space<vmem>>, vector<1x1x128x128xbf16>
    %150 = vector.shape_cast %149 : vector<1x1x128x128xbf16> to vector<128x128xbf16>
    %cst_167 = arith.constant dense<0.000000e+00> : vector<128x128xf32>
    %151 = tpu.matmul %148, %150, %cst_167 {dimension_numbers = #tpu.dot_dimension_numbers<[1], [0], [0], [1], [0, 0, 1, 1], [], []>} : vector<128x128xbf16>, vector<128x128xbf16>, vector<128x128xf32> -> vector<128x128xf32>
    %152 = arith.addf %145, %151 : vector<128x128xf32>
    %c0_168 = arith.constant 0 : index
    %c2_169 = arith.constant 2 : index
    %c0_170 = arith.constant 0 : index
    %c0_171 = arith.constant 0 : index
    %153 = vector.load %arg8[%c0_168, %c2_169, %c0_170, %c0_171] : memref<2x10x10x128xf32, #tpu.memory_space<vmem>>, vector<2x8x8x128xf32>
    %154 = vector.shape_cast %153 : vector<2x8x8x128xf32> to vector<128x128xf32>
    %155 = arith.truncf %154 : vector<128x128xf32> to vector<128x128xbf16>
    %c1_172 = arith.constant 1 : index
    %c6_173 = arith.constant 6 : index
    %c0_174 = arith.constant 0 : index
    %c0_175 = arith.constant 0 : index
    %156 = vector.load %arg2[%c1_172, %c6_173, %c0_174, %c0_175] : memref<6x9x128x128xbf16, #tpu.memory_space<vmem>>, vector<1x1x128x128xbf16>
    %157 = vector.shape_cast %156 : vector<1x1x128x128xbf16> to vector<128x128xbf16>
    %cst_176 = arith.constant dense<0.000000e+00> : vector<128x128xf32>
    %158 = tpu.matmul %155, %157, %cst_176 {dimension_numbers = #tpu.dot_dimension_numbers<[1], [0], [0], [1], [0, 0, 1, 1], [], []>} : vector<128x128xbf16>, vector<128x128xbf16>, vector<128x128xf32> -> vector<128x128xf32>
    %159 = arith.addf %152, %158 : vector<128x128xf32>
    %c0_177 = arith.constant 0 : index
    %c2_178 = arith.constant 2 : index
    %c1_179 = arith.constant 1 : index
    %c0_180 = arith.constant 0 : index
    %160 = vector.load %arg8[%c0_177, %c2_178, %c1_179, %c0_180] : memref<2x10x10x128xf32, #tpu.memory_space<vmem>>, vector<2x8x8x128xf32>
    %161 = vector.shape_cast %160 : vector<2x8x8x128xf32> to vector<128x128xf32>
    %162 = arith.truncf %161 : vector<128x128xf32> to vector<128x128xbf16>
    %c1_181 = arith.constant 1 : index
    %c7_182 = arith.constant 7 : index
    %c0_183 = arith.constant 0 : index
    %c0_184 = arith.constant 0 : index
    %163 = vector.load %arg2[%c1_181, %c7_182, %c0_183, %c0_184] : memref<6x9x128x128xbf16, #tpu.memory_space<vmem>>, vector<1x1x128x128xbf16>
    %164 = vector.shape_cast %163 : vector<1x1x128x128xbf16> to vector<128x128xbf16>
    %cst_185 = arith.constant dense<0.000000e+00> : vector<128x128xf32>
    %165 = tpu.matmul %162, %164, %cst_185 {dimension_numbers = #tpu.dot_dimension_numbers<[1], [0], [0], [1], [0, 0, 1, 1], [], []>} : vector<128x128xbf16>, vector<128x128xbf16>, vector<128x128xf32> -> vector<128x128xf32>
    %166 = arith.addf %159, %165 : vector<128x128xf32>
    %c0_186 = arith.constant 0 : index
    %c2_187 = arith.constant 2 : index
    %c2_188 = arith.constant 2 : index
    %c0_189 = arith.constant 0 : index
    %167 = vector.load %arg8[%c0_186, %c2_187, %c2_188, %c0_189] : memref<2x10x10x128xf32, #tpu.memory_space<vmem>>, vector<2x8x8x128xf32>
    %168 = vector.shape_cast %167 : vector<2x8x8x128xf32> to vector<128x128xf32>
    %169 = arith.truncf %168 : vector<128x128xf32> to vector<128x128xbf16>
    %c1_190 = arith.constant 1 : index
    %c8_191 = arith.constant 8 : index
    %c0_192 = arith.constant 0 : index
    %c0_193 = arith.constant 0 : index
    %170 = vector.load %arg2[%c1_190, %c8_191, %c0_192, %c0_193] : memref<6x9x128x128xbf16, #tpu.memory_space<vmem>>, vector<1x1x128x128xbf16>
    %171 = vector.shape_cast %170 : vector<1x1x128x128xbf16> to vector<128x128xbf16>
    %cst_194 = arith.constant dense<0.000000e+00> : vector<128x128xf32>
    %172 = tpu.matmul %169, %171, %cst_194 {dimension_numbers = #tpu.dot_dimension_numbers<[1], [0], [0], [1], [0, 0, 1, 1], [], []>} : vector<128x128xbf16>, vector<128x128xbf16>, vector<128x128xf32> -> vector<128x128xf32>
    %173 = arith.addf %166, %172 : vector<128x128xf32>
    %cst_195 = arith.constant dense<0.000000e+00> : vector<128xf32>
    %174 = vector.multi_reduction <add>, %173, %cst_195 [0] : vector<128x128xf32> to vector<128xf32>
    %175 = vector.shape_cast %174 : vector<128xf32> to vector<1x128xf32>
    %176 = arith.mulf %173, %173 : vector<128x128xf32>
    %cst_196 = arith.constant dense<0.000000e+00> : vector<128xf32>
    %177 = vector.multi_reduction <add>, %176, %cst_196 [0] : vector<128x128xf32> to vector<128xf32>
    %178 = vector.shape_cast %177 : vector<128xf32> to vector<1x128xf32>
    %cst_197 = arith.constant 7.812500e-03 : f32
    %179 = vector.broadcast %cst_197 : f32 to vector<1x128xf32>
    %180 = arith.mulf %175, %179 : vector<1x128xf32>
    %cst_198 = arith.constant 7.812500e-03 : f32
    %181 = vector.broadcast %cst_198 : f32 to vector<1x128xf32>
    %182 = arith.mulf %178, %181 : vector<1x128xf32>
    %183 = arith.mulf %180, %180 : vector<1x128xf32>
    %184 = arith.subf %182, %183 : vector<1x128xf32>
    %cst_199 = arith.constant 0.000000e+00 : f32
    %185 = vector.broadcast %cst_199 : f32 to vector<1x128xf32>
    %186 = arith.maximumf %184, %185 : vector<1x128xf32>
    %c1_200 = arith.constant 1 : index
    %c0_201 = arith.constant 0 : index
    %187 = vector.load %arg3[%c1_200, %c0_201] : memref<6x128xf32, #tpu.memory_space<vmem>>, vector<1x128xf32>
    %cst_202 = arith.constant 9.99999974E-6 : f32
    %188 = vector.broadcast %cst_202 : f32 to vector<1x128xf32>
    %189 = arith.addf %186, %188 : vector<1x128xf32>
    %190 = math.rsqrt %189 : vector<1x128xf32>
    %191 = arith.mulf %187, %190 : vector<1x128xf32>
    %c1_203 = arith.constant 1 : index
    %c0_204 = arith.constant 0 : index
    %192 = vector.load %arg4[%c1_203, %c0_204] : memref<6x128xf32, #tpu.memory_space<vmem>>, vector<1x128xf32>
    %193 = arith.mulf %180, %191 : vector<1x128xf32>
    %194 = arith.subf %192, %193 : vector<1x128xf32>
    %195 = vector.broadcast %191 : vector<1x128xf32> to vector<128x128xf32>
    %196 = arith.mulf %173, %195 : vector<128x128xf32>
    %197 = vector.broadcast %194 : vector<1x128xf32> to vector<128x128xf32>
    %198 = arith.addf %196, %197 : vector<128x128xf32>
    %cst_205 = arith.constant 0.000000e+00 : f32
    %199 = vector.broadcast %cst_205 : f32 to vector<128x128xf32>
    %200 = arith.maximumf %198, %199 : vector<128x128xf32>
    %201 = vector.shape_cast %200 : vector<128x128xf32> to vector<2x8x8x128xf32>
    %c0_206 = arith.constant 0 : index
    %c0_207 = arith.constant 0 : index
    %c0_208 = arith.constant 0 : index
    %c0_209 = arith.constant 0 : index
    %202 = vector.load %arg5[%c0_206, %c0_207, %c0_208, %c0_209] : memref<2x8x8x128xf32, #tpu.memory_space<vmem>>, vector<2x8x8x128xf32>
    tpu.vector_store %arg5[%c0_206, %c0_207, %c0_208, %c0_209], %201 {strides = array<i32>} : memref<2x8x8x128xf32, #tpu.memory_space<vmem>>, vector<2x8x8x128xf32>,
    %203 = vector.shape_cast %201 : vector<2x8x8x128xf32> to vector<64x2x128xf32>
    %cst_210 = arith.constant dense<0xFF800000> : vector<64x128xf32>
    %204 = vector.multi_reduction <maximumf>, %203, %cst_210 [1] : vector<64x2x128xf32> to vector<64x128xf32>
    %205 = vector.shape_cast %204 : vector<64x128xf32> to vector<8x2x4x128xf32>
    %206 = vector.extract_strided_slice %205 {offsets = [0, 0, 0, 0], sizes = [8, 1, 4, 128], strides = [1, 1, 1, 1]} : vector<8x2x4x128xf32> to vector<8x1x4x128xf32>
    %207 = vector.shape_cast %206 : vector<8x1x4x128xf32> to vector<8x4x128xf32>
    %208 = vector.extract_strided_slice %205 {offsets = [0, 1, 0, 0], sizes = [8, 1, 4, 128], strides = [1, 1, 1, 1]} : vector<8x2x4x128xf32> to vector<8x1x4x128xf32>
    %209 = vector.shape_cast %208 : vector<8x1x4x128xf32> to vector<8x4x128xf32>
    %210 = arith.maximumf %207, %209 : vector<8x4x128xf32>
    %211 = vector.shape_cast %210 : vector<8x4x128xf32> to vector<2x4x4x128xf32>
    %cst_211 = arith.constant 0.000000e+00 : f32
    %212 = vector.broadcast %cst_211 : f32 to vector<2x1x6x128xf32>
    %cst_212 = arith.constant 0.000000e+00 : f32
    %213 = vector.broadcast %cst_212 : f32 to vector<2x6x1x128xf32>
    %c0_213 = arith.constant 0 : index
    %c0_214 = arith.constant 0 : index
    %c0_215 = arith.constant 0 : index
    %c0_216 = arith.constant 0 : index
    %214 = vector.load %arg9[%c0_213, %c0_214, %c0_215, %c0_216] : memref<2x6x6x128xf32, #tpu.memory_space<vmem>>, vector<2x1x6x128xf32>
    tpu.vector_store %arg9[%c0_213, %c0_214, %c0_215, %c0_216], %212 {strides = array<i32>} : memref<2x6x6x128xf32, #tpu.memory_space<vmem>>, vector<2x1x6x128xf32>,
    %c0_217 = arith.constant 0 : index
    %c5_218 = arith.constant 5 : index
    %c0_219 = arith.constant 0 : index
    %c0_220 = arith.constant 0 : index
    %215 = vector.load %arg9[%c0_217, %c5_218, %c0_219, %c0_220] : memref<2x6x6x128xf32, #tpu.memory_space<vmem>>, vector<2x1x6x128xf32>
    tpu.vector_store %arg9[%c0_217, %c5_218, %c0_219, %c0_220], %212 {strides = array<i32>} : memref<2x6x6x128xf32, #tpu.memory_space<vmem>>, vector<2x1x6x128xf32>,
    %c0_221 = arith.constant 0 : index
    %c0_222 = arith.constant 0 : index
    %c0_223 = arith.constant 0 : index
    %c0_224 = arith.constant 0 : index
    %216 = vector.load %arg9[%c0_221, %c0_222, %c0_223, %c0_224] : memref<2x6x6x128xf32, #tpu.memory_space<vmem>>, vector<2x6x1x128xf32>
    tpu.vector_store %arg9[%c0_221, %c0_222, %c0_223, %c0_224], %213 {strides = array<i32>} : memref<2x6x6x128xf32, #tpu.memory_space<vmem>>, vector<2x6x1x128xf32>,
    %c0_225 = arith.constant 0 : index
    %c0_226 = arith.constant 0 : index
    %c5_227 = arith.constant 5 : index
    %c0_228 = arith.constant 0 : index
    %217 = vector.load %arg9[%c0_225, %c0_226, %c5_227, %c0_228] : memref<2x6x6x128xf32, #tpu.memory_space<vmem>>, vector<2x6x1x128xf32>
    tpu.vector_store %arg9[%c0_225, %c0_226, %c5_227, %c0_228], %213 {strides = array<i32>} : memref<2x6x6x128xf32, #tpu.memory_space<vmem>>, vector<2x6x1x128xf32>,
    %c0_229 = arith.constant 0 : index
    %c1_230 = arith.constant 1 : index
    %c1_231 = arith.constant 1 : index
    %c0_232 = arith.constant 0 : index
    %218 = vector.load %arg9[%c0_229, %c1_230, %c1_231, %c0_232] : memref<2x6x6x128xf32, #tpu.memory_space<vmem>>, vector<2x4x4x128xf32>
    tpu.vector_store %arg9[%c0_229, %c1_230, %c1_231, %c0_232], %211 {strides = array<i32>} : memref<2x6x6x128xf32, #tpu.memory_space<vmem>>, vector<2x4x4x128xf32>,
    %cst_233 = arith.constant 0.000000e+00 : f32
    %219 = vector.broadcast %cst_233 : f32 to vector<32x128xf32>
    %c0_234 = arith.constant 0 : index
    %c0_235 = arith.constant 0 : index
    %c0_236 = arith.constant 0 : index
    %c0_237 = arith.constant 0 : index
    %220 = vector.load %arg9[%c0_234, %c0_235, %c0_236, %c0_237] : memref<2x6x6x128xf32, #tpu.memory_space<vmem>>, vector<2x4x4x128xf32>
    %221 = vector.shape_cast %220 : vector<2x4x4x128xf32> to vector<32x128xf32>
    %222 = arith.truncf %221 : vector<32x128xf32> to vector<32x128xbf16>
    %c2_238 = arith.constant 2 : index
    %c0_239 = arith.constant 0 : index
    %c0_240 = arith.constant 0 : index
    %c0_241 = arith.constant 0 : index
    %223 = vector.load %arg2[%c2_238, %c0_239, %c0_240, %c0_241] : memref<6x9x128x128xbf16, #tpu.memory_space<vmem>>, vector<1x1x128x128xbf16>
    %224 = vector.shape_cast %223 : vector<1x1x128x128xbf16> to vector<128x128xbf16>
    %cst_242 = arith.constant dense<0.000000e+00> : vector<32x128xf32>
    %225 = tpu.matmul %222, %224, %cst_242 {dimension_numbers = #tpu.dot_dimension_numbers<[1], [0], [0], [1], [0, 0, 1, 1], [], []>} : vector<32x128xbf16>, vector<128x128xbf16>, vector<32x128xf32> -> vector<32x128xf32>
    %226 = arith.addf %219, %225 : vector<32x128xf32>
    %c0_243 = arith.constant 0 : index
    %c0_244 = arith.constant 0 : index
    %c1_245 = arith.constant 1 : index
    %c0_246 = arith.constant 0 : index
    %227 = vector.load %arg9[%c0_243, %c0_244, %c1_245, %c0_246] : memref<2x6x6x128xf32, #tpu.memory_space<vmem>>, vector<2x4x4x128xf32>
    %228 = vector.shape_cast %227 : vector<2x4x4x128xf32> to vector<32x128xf32>
    %229 = arith.truncf %228 : vector<32x128xf32> to vector<32x128xbf16>
    %c2_247 = arith.constant 2 : index
    %c1_248 = arith.constant 1 : index
    %c0_249 = arith.constant 0 : index
    %c0_250 = arith.constant 0 : index
    %230 = vector.load %arg2[%c2_247, %c1_248, %c0_249, %c0_250] : memref<6x9x128x128xbf16, #tpu.memory_space<vmem>>, vector<1x1x128x128xbf16>
    %231 = vector.shape_cast %230 : vector<1x1x128x128xbf16> to vector<128x128xbf16>
    %cst_251 = arith.constant dense<0.000000e+00> : vector<32x128xf32>
    %232 = tpu.matmul %229, %231, %cst_251 {dimension_numbers = #tpu.dot_dimension_numbers<[1], [0], [0], [1], [0, 0, 1, 1], [], []>} : vector<32x128xbf16>, vector<128x128xbf16>, vector<32x128xf32> -> vector<32x128xf32>
    %233 = arith.addf %226, %232 : vector<32x128xf32>
    %c0_252 = arith.constant 0 : index
    %c0_253 = arith.constant 0 : index
    %c2_254 = arith.constant 2 : index
    %c0_255 = arith.constant 0 : index
    %234 = vector.load %arg9[%c0_252, %c0_253, %c2_254, %c0_255] : memref<2x6x6x128xf32, #tpu.memory_space<vmem>>, vector<2x4x4x128xf32>
    %235 = vector.shape_cast %234 : vector<2x4x4x128xf32> to vector<32x128xf32>
    %236 = arith.truncf %235 : vector<32x128xf32> to vector<32x128xbf16>
    %c2_256 = arith.constant 2 : index
    %c2_257 = arith.constant 2 : index
    %c0_258 = arith.constant 0 : index
    %c0_259 = arith.constant 0 : index
    %237 = vector.load %arg2[%c2_256, %c2_257, %c0_258, %c0_259] : memref<6x9x128x128xbf16, #tpu.memory_space<vmem>>, vector<1x1x128x128xbf16>
    %238 = vector.shape_cast %237 : vector<1x1x128x128xbf16> to vector<128x128xbf16>
    %cst_260 = arith.constant dense<0.000000e+00> : vector<32x128xf32>
    %239 = tpu.matmul %236, %238, %cst_260 {dimension_numbers = #tpu.dot_dimension_numbers<[1], [0], [0], [1], [0, 0, 1, 1], [], []>} : vector<32x128xbf16>, vector<128x128xbf16>, vector<32x128xf32> -> vector<32x128xf32>
    %240 = arith.addf %233, %239 : vector<32x128xf32>
    %c0_261 = arith.constant 0 : index
    %c1_262 = arith.constant 1 : index
    %c0_263 = arith.constant 0 : index
    %c0_264 = arith.constant 0 : index
    %241 = vector.load %arg9[%c0_261, %c1_262, %c0_263, %c0_264] : memref<2x6x6x128xf32, #tpu.memory_space<vmem>>, vector<2x4x4x128xf32>
    %242 = vector.shape_cast %241 : vector<2x4x4x128xf32> to vector<32x128xf32>
    %243 = arith.truncf %242 : vector<32x128xf32> to vector<32x128xbf16>
    %c2_265 = arith.constant 2 : index
    %c3_266 = arith.constant 3 : index
    %c0_267 = arith.constant 0 : index
    %c0_268 = arith.constant 0 : index
    %244 = vector.load %arg2[%c2_265, %c3_266, %c0_267, %c0_268] : memref<6x9x128x128xbf16, #tpu.memory_space<vmem>>, vector<1x1x128x128xbf16>
    %245 = vector.shape_cast %244 : vector<1x1x128x128xbf16> to vector<128x128xbf16>
    %cst_269 = arith.constant dense<0.000000e+00> : vector<32x128xf32>
    %246 = tpu.matmul %243, %245, %cst_269 {dimension_numbers = #tpu.dot_dimension_numbers<[1], [0], [0], [1], [0, 0, 1, 1], [], []>} : vector<32x128xbf16>, vector<128x128xbf16>, vector<32x128xf32> -> vector<32x128xf32>
    %247 = arith.addf %240, %246 : vector<32x128xf32>
    %c0_270 = arith.constant 0 : index
    %c1_271 = arith.constant 1 : index
    %c1_272 = arith.constant 1 : index
    %c0_273 = arith.constant 0 : index
    %248 = vector.load %arg9[%c0_270, %c1_271, %c1_272, %c0_273] : memref<2x6x6x128xf32, #tpu.memory_space<vmem>>, vector<2x4x4x128xf32>
    %249 = vector.shape_cast %248 : vector<2x4x4x128xf32> to vector<32x128xf32>
    %250 = arith.truncf %249 : vector<32x128xf32> to vector<32x128xbf16>
    %c2_274 = arith.constant 2 : index
    %c4_275 = arith.constant 4 : index
    %c0_276 = arith.constant 0 : index
    %c0_277 = arith.constant 0 : index
    %251 = vector.load %arg2[%c2_274, %c4_275, %c0_276, %c0_277] : memref<6x9x128x128xbf16, #tpu.memory_space<vmem>>, vector<1x1x128x128xbf16>
    %252 = vector.shape_cast %251 : vector<1x1x128x128xbf16> to vector<128x128xbf16>
    %cst_278 = arith.constant dense<0.000000e+00> : vector<32x128xf32>
    %253 = tpu.matmul %250, %252, %cst_278 {dimension_numbers = #tpu.dot_dimension_numbers<[1], [0], [0], [1], [0, 0, 1, 1], [], []>} : vector<32x128xbf16>, vector<128x128xbf16>, vector<32x128xf32> -> vector<32x128xf32>
    %254 = arith.addf %247, %253 : vector<32x128xf32>
    %c0_279 = arith.constant 0 : index
    %c1_280 = arith.constant 1 : index
    %c2_281 = arith.constant 2 : index
    %c0_282 = arith.constant 0 : index
    %255 = vector.load %arg9[%c0_279, %c1_280, %c2_281, %c0_282] : memref<2x6x6x128xf32, #tpu.memory_space<vmem>>, vector<2x4x4x128xf32>
    %256 = vector.shape_cast %255 : vector<2x4x4x128xf32> to vector<32x128xf32>
    %257 = arith.truncf %256 : vector<32x128xf32> to vector<32x128xbf16>
    %c2_283 = arith.constant 2 : index
    %c5_284 = arith.constant 5 : index
    %c0_285 = arith.constant 0 : index
    %c0_286 = arith.constant 0 : index
    %258 = vector.load %arg2[%c2_283, %c5_284, %c0_285, %c0_286] : memref<6x9x128x128xbf16, #tpu.memory_space<vmem>>, vector<1x1x128x128xbf16>
    %259 = vector.shape_cast %258 : vector<1x1x128x128xbf16> to vector<128x128xbf16>
    %cst_287 = arith.constant dense<0.000000e+00> : vector<32x128xf32>
    %260 = tpu.matmul %257, %259, %cst_287 {dimension_numbers = #tpu.dot_dimension_numbers<[1], [0], [0], [1], [0, 0, 1, 1], [], []>} : vector<32x128xbf16>, vector<128x128xbf16>, vector<32x128xf32> -> vector<32x128xf32>
    %261 = arith.addf %254, %260 : vector<32x128xf32>
    %c0_288 = arith.constant 0 : index
    %c2_289 = arith.constant 2 : index
    %c0_290 = arith.constant 0 : index
    %c0_291 = arith.constant 0 : index
    %262 = vector.load %arg9[%c0_288, %c2_289, %c0_290, %c0_291] : memref<2x6x6x128xf32, #tpu.memory_space<vmem>>, vector<2x4x4x128xf32>
    %263 = vector.shape_cast %262 : vector<2x4x4x128xf32> to vector<32x128xf32>
    %264 = arith.truncf %263 : vector<32x128xf32> to vector<32x128xbf16>
    %c2_292 = arith.constant 2 : index
    %c6_293 = arith.constant 6 : index
    %c0_294 = arith.constant 0 : index
    %c0_295 = arith.constant 0 : index
    %265 = vector.load %arg2[%c2_292, %c6_293, %c0_294, %c0_295] : memref<6x9x128x128xbf16, #tpu.memory_space<vmem>>, vector<1x1x128x128xbf16>
    %266 = vector.shape_cast %265 : vector<1x1x128x128xbf16> to vector<128x128xbf16>
    %cst_296 = arith.constant dense<0.000000e+00> : vector<32x128xf32>
    %267 = tpu.matmul %264, %266, %cst_296 {dimension_numbers = #tpu.dot_dimension_numbers<[1], [0], [0], [1], [0, 0, 1, 1], [], []>} : vector<32x128xbf16>, vector<128x128xbf16>, vector<32x128xf32> -> vector<32x128xf32>
    %268 = arith.addf %261, %267 : vector<32x128xf32>
    %c0_297 = arith.constant 0 : index
    %c2_298 = arith.constant 2 : index
    %c1_299 = arith.constant 1 : index
    %c0_300 = arith.constant 0 : index
    %269 = vector.load %arg9[%c0_297, %c2_298, %c1_299, %c0_300] : memref<2x6x6x128xf32, #tpu.memory_space<vmem>>, vector<2x4x4x128xf32>
    %270 = vector.shape_cast %269 : vector<2x4x4x128xf32> to vector<32x128xf32>
    %271 = arith.truncf %270 : vector<32x128xf32> to vector<32x128xbf16>
    %c2_301 = arith.constant 2 : index
    %c7_302 = arith.constant 7 : index
    %c0_303 = arith.constant 0 : index
    %c0_304 = arith.constant 0 : index
    %272 = vector.load %arg2[%c2_301, %c7_302, %c0_303, %c0_304] : memref<6x9x128x128xbf16, #tpu.memory_space<vmem>>, vector<1x1x128x128xbf16>
    %273 = vector.shape_cast %272 : vector<1x1x128x128xbf16> to vector<128x128xbf16>
    %cst_305 = arith.constant dense<0.000000e+00> : vector<32x128xf32>
    %274 = tpu.matmul %271, %273, %cst_305 {dimension_numbers = #tpu.dot_dimension_numbers<[1], [0], [0], [1], [0, 0, 1, 1], [], []>} : vector<32x128xbf16>, vector<128x128xbf16>, vector<32x128xf32> -> vector<32x128xf32>
    %275 = arith.addf %268, %274 : vector<32x128xf32>
    %c0_306 = arith.constant 0 : index
    %c2_307 = arith.constant 2 : index
    %c2_308 = arith.constant 2 : index
    %c0_309 = arith.constant 0 : index
    %276 = vector.load %arg9[%c0_306, %c2_307, %c2_308, %c0_309] : memref<2x6x6x128xf32, #tpu.memory_space<vmem>>, vector<2x4x4x128xf32>
    %277 = vector.shape_cast %276 : vector<2x4x4x128xf32> to vector<32x128xf32>
    %278 = arith.truncf %277 : vector<32x128xf32> to vector<32x128xbf16>
    %c2_310 = arith.constant 2 : index
    %c8_311 = arith.constant 8 : index
    %c0_312 = arith.constant 0 : index
    %c0_313 = arith.constant 0 : index
    %279 = vector.load %arg2[%c2_310, %c8_311, %c0_312, %c0_313] : memref<6x9x128x128xbf16, #tpu.memory_space<vmem>>, vector<1x1x128x128xbf16>
    %280 = vector.shape_cast %279 : vector<1x1x128x128xbf16> to vector<128x128xbf16>
    %cst_314 = arith.constant dense<0.000000e+00> : vector<32x128xf32>
    %281 = tpu.matmul %278, %280, %cst_314 {dimension_numbers = #tpu.dot_dimension_numbers<[1], [0], [0], [1], [0, 0, 1, 1], [], []>} : vector<32x128xbf16>, vector<128x128xbf16>, vector<32x128xf32> -> vector<32x128xf32>
    %282 = arith.addf %275, %281 : vector<32x128xf32>
    %cst_315 = arith.constant dense<0.000000e+00> : vector<128xf32>
    %283 = vector.multi_reduction <add>, %282, %cst_315 [0] : vector<32x128xf32> to vector<128xf32>
    %284 = vector.shape_cast %283 : vector<128xf32> to vector<1x128xf32>
    %285 = arith.mulf %282, %282 : vector<32x128xf32>
    %cst_316 = arith.constant dense<0.000000e+00> : vector<128xf32>
    %286 = vector.multi_reduction <add>, %285, %cst_316 [0] : vector<32x128xf32> to vector<128xf32>
    %287 = vector.shape_cast %286 : vector<128xf32> to vector<1x128xf32>
    %cst_317 = arith.constant 3.125000e-02 : f32
    %288 = vector.broadcast %cst_317 : f32 to vector<1x128xf32>
    %289 = arith.mulf %284, %288 : vector<1x128xf32>
    %cst_318 = arith.constant 3.125000e-02 : f32
    %290 = vector.broadcast %cst_318 : f32 to vector<1x128xf32>
    %291 = arith.mulf %287, %290 : vector<1x128xf32>
    %292 = arith.mulf %289, %289 : vector<1x128xf32>
    %293 = arith.subf %291, %292 : vector<1x128xf32>
    %cst_319 = arith.constant 0.000000e+00 : f32
    %294 = vector.broadcast %cst_319 : f32 to vector<1x128xf32>
    %295 = arith.maximumf %293, %294 : vector<1x128xf32>
    %c2_320 = arith.constant 2 : index
    %c0_321 = arith.constant 0 : index
    %296 = vector.load %arg3[%c2_320, %c0_321] : memref<6x128xf32, #tpu.memory_space<vmem>>, vector<1x128xf32>
    %cst_322 = arith.constant 9.99999974E-6 : f32
    %297 = vector.broadcast %cst_322 : f32 to vector<1x128xf32>
    %298 = arith.addf %295, %297 : vector<1x128xf32>
    %299 = math.rsqrt %298 : vector<1x128xf32>
    %300 = arith.mulf %296, %299 : vector<1x128xf32>
    %c2_323 = arith.constant 2 : index
    %c0_324 = arith.constant 0 : index
    %301 = vector.load %arg4[%c2_323, %c0_324] : memref<6x128xf32, #tpu.memory_space<vmem>>, vector<1x128xf32>
    %302 = arith.mulf %289, %300 : vector<1x128xf32>
    %303 = arith.subf %301, %302 : vector<1x128xf32>
    %304 = vector.broadcast %300 : vector<1x128xf32> to vector<32x128xf32>
    %305 = arith.mulf %282, %304 : vector<32x128xf32>
    %306 = vector.broadcast %303 : vector<1x128xf32> to vector<32x128xf32>
    %307 = arith.addf %305, %306 : vector<32x128xf32>
    %cst_325 = arith.constant 0.000000e+00 : f32
    %308 = vector.broadcast %cst_325 : f32 to vector<32x128xf32>
    %309 = arith.maximumf %307, %308 : vector<32x128xf32>
    %310 = vector.shape_cast %309 : vector<32x128xf32> to vector<2x4x4x128xf32>
    %c0_326 = arith.constant 0 : index
    %c1_327 = arith.constant 1 : index
    %c1_328 = arith.constant 1 : index
    %c0_329 = arith.constant 0 : index
    %311 = vector.load %arg9[%c0_326, %c1_327, %c1_328, %c0_329] : memref<2x6x6x128xf32, #tpu.memory_space<vmem>>, vector<2x4x4x128xf32>
    tpu.vector_store %arg9[%c0_326, %c1_327, %c1_328, %c0_329], %310 {strides = array<i32>} : memref<2x6x6x128xf32, #tpu.memory_space<vmem>>, vector<2x4x4x128xf32>,
    %cst_330 = arith.constant 0.000000e+00 : f32
    %312 = vector.broadcast %cst_330 : f32 to vector<32x128xf32>
    %c0_331 = arith.constant 0 : index
    %c0_332 = arith.constant 0 : index
    %c0_333 = arith.constant 0 : index
    %c0_334 = arith.constant 0 : index
    %313 = vector.load %arg9[%c0_331, %c0_332, %c0_333, %c0_334] : memref<2x6x6x128xf32, #tpu.memory_space<vmem>>, vector<2x4x4x128xf32>
    %314 = vector.shape_cast %313 : vector<2x4x4x128xf32> to vector<32x128xf32>
    %315 = arith.truncf %314 : vector<32x128xf32> to vector<32x128xbf16>
    %c3_335 = arith.constant 3 : index
    %c0_336 = arith.constant 0 : index
    %c0_337 = arith.constant 0 : index
    %c0_338 = arith.constant 0 : index
    %316 = vector.load %arg2[%c3_335, %c0_336, %c0_337, %c0_338] : memref<6x9x128x128xbf16, #tpu.memory_space<vmem>>, vector<1x1x128x128xbf16>
    %317 = vector.shape_cast %316 : vector<1x1x128x128xbf16> to vector<128x128xbf16>
    %cst_339 = arith.constant dense<0.000000e+00> : vector<32x128xf32>
    %318 = tpu.matmul %315, %317, %cst_339 {dimension_numbers = #tpu.dot_dimension_numbers<[1], [0], [0], [1], [0, 0, 1, 1], [], []>} : vector<32x128xbf16>, vector<128x128xbf16>, vector<32x128xf32> -> vector<32x128xf32>
    %319 = arith.addf %312, %318 : vector<32x128xf32>
    %c0_340 = arith.constant 0 : index
    %c0_341 = arith.constant 0 : index
    %c1_342 = arith.constant 1 : index
    %c0_343 = arith.constant 0 : index
    %320 = vector.load %arg9[%c0_340, %c0_341, %c1_342, %c0_343] : memref<2x6x6x128xf32, #tpu.memory_space<vmem>>, vector<2x4x4x128xf32>
    %321 = vector.shape_cast %320 : vector<2x4x4x128xf32> to vector<32x128xf32>
    %322 = arith.truncf %321 : vector<32x128xf32> to vector<32x128xbf16>
    %c3_344 = arith.constant 3 : index
    %c1_345 = arith.constant 1 : index
    %c0_346 = arith.constant 0 : index
    %c0_347 = arith.constant 0 : index
    %323 = vector.load %arg2[%c3_344, %c1_345, %c0_346, %c0_347] : memref<6x9x128x128xbf16, #tpu.memory_space<vmem>>, vector<1x1x128x128xbf16>
    %324 = vector.shape_cast %323 : vector<1x1x128x128xbf16> to vector<128x128xbf16>
    %cst_348 = arith.constant dense<0.000000e+00> : vector<32x128xf32>
    %325 = tpu.matmul %322, %324, %cst_348 {dimension_numbers = #tpu.dot_dimension_numbers<[1], [0], [0], [1], [0, 0, 1, 1], [], []>} : vector<32x128xbf16>, vector<128x128xbf16>, vector<32x128xf32> -> vector<32x128xf32>
    %326 = arith.addf %319, %325 : vector<32x128xf32>
    %c0_349 = arith.constant 0 : index
    %c0_350 = arith.constant 0 : index
    %c2_351 = arith.constant 2 : index
    %c0_352 = arith.constant 0 : index
    %327 = vector.load %arg9[%c0_349, %c0_350, %c2_351, %c0_352] : memref<2x6x6x128xf32, #tpu.memory_space<vmem>>, vector<2x4x4x128xf32>
    %328 = vector.shape_cast %327 : vector<2x4x4x128xf32> to vector<32x128xf32>
    %329 = arith.truncf %328 : vector<32x128xf32> to vector<32x128xbf16>
    %c3_353 = arith.constant 3 : index
    %c2_354 = arith.constant 2 : index
    %c0_355 = arith.constant 0 : index
    %c0_356 = arith.constant 0 : index
    %330 = vector.load %arg2[%c3_353, %c2_354, %c0_355, %c0_356] : memref<6x9x128x128xbf16, #tpu.memory_space<vmem>>, vector<1x1x128x128xbf16>
    %331 = vector.shape_cast %330 : vector<1x1x128x128xbf16> to vector<128x128xbf16>
    %cst_357 = arith.constant dense<0.000000e+00> : vector<32x128xf32>
    %332 = tpu.matmul %329, %331, %cst_357 {dimension_numbers = #tpu.dot_dimension_numbers<[1], [0], [0], [1], [0, 0, 1, 1], [], []>} : vector<32x128xbf16>, vector<128x128xbf16>, vector<32x128xf32> -> vector<32x128xf32>
    %333 = arith.addf %326, %332 : vector<32x128xf32>
    %c0_358 = arith.constant 0 : index
    %c1_359 = arith.constant 1 : index
    %c0_360 = arith.constant 0 : index
    %c0_361 = arith.constant 0 : index
    %334 = vector.load %arg9[%c0_358, %c1_359, %c0_360, %c0_361] : memref<2x6x6x128xf32, #tpu.memory_space<vmem>>, vector<2x4x4x128xf32>
    %335 = vector.shape_cast %334 : vector<2x4x4x128xf32> to vector<32x128xf32>
    %336 = arith.truncf %335 : vector<32x128xf32> to vector<32x128xbf16>
    %c3_362 = arith.constant 3 : index
    %c3_363 = arith.constant 3 : index
    %c0_364 = arith.constant 0 : index
    %c0_365 = arith.constant 0 : index
    %337 = vector.load %arg2[%c3_362, %c3_363, %c0_364, %c0_365] : memref<6x9x128x128xbf16, #tpu.memory_space<vmem>>, vector<1x1x128x128xbf16>
    %338 = vector.shape_cast %337 : vector<1x1x128x128xbf16> to vector<128x128xbf16>
    %cst_366 = arith.constant dense<0.000000e+00> : vector<32x128xf32>
    %339 = tpu.matmul %336, %338, %cst_366 {dimension_numbers = #tpu.dot_dimension_numbers<[1], [0], [0], [1], [0, 0, 1, 1], [], []>} : vector<32x128xbf16>, vector<128x128xbf16>, vector<32x128xf32> -> vector<32x128xf32>
    %340 = arith.addf %333, %339 : vector<32x128xf32>
    %c0_367 = arith.constant 0 : index
    %c1_368 = arith.constant 1 : index
    %c1_369 = arith.constant 1 : index
    %c0_370 = arith.constant 0 : index
    %341 = vector.load %arg9[%c0_367, %c1_368, %c1_369, %c0_370] : memref<2x6x6x128xf32, #tpu.memory_space<vmem>>, vector<2x4x4x128xf32>
    %342 = vector.shape_cast %341 : vector<2x4x4x128xf32> to vector<32x128xf32>
    %343 = arith.truncf %342 : vector<32x128xf32> to vector<32x128xbf16>
    %c3_371 = arith.constant 3 : index
    %c4_372 = arith.constant 4 : index
    %c0_373 = arith.constant 0 : index
    %c0_374 = arith.constant 0 : index
    %344 = vector.load %arg2[%c3_371, %c4_372, %c0_373, %c0_374] : memref<6x9x128x128xbf16, #tpu.memory_space<vmem>>, vector<1x1x128x128xbf16>
    %345 = vector.shape_cast %344 : vector<1x1x128x128xbf16> to vector<128x128xbf16>
    %cst_375 = arith.constant dense<0.000000e+00> : vector<32x128xf32>
    %346 = tpu.matmul %343, %345, %cst_375 {dimension_numbers = #tpu.dot_dimension_numbers<[1], [0], [0], [1], [0, 0, 1, 1], [], []>} : vector<32x128xbf16>, vector<128x128xbf16>, vector<32x128xf32> -> vector<32x128xf32>
    %347 = arith.addf %340, %346 : vector<32x128xf32>
    %c0_376 = arith.constant 0 : index
    %c1_377 = arith.constant 1 : index
    %c2_378 = arith.constant 2 : index
    %c0_379 = arith.constant 0 : index
    %348 = vector.load %arg9[%c0_376, %c1_377, %c2_378, %c0_379] : memref<2x6x6x128xf32, #tpu.memory_space<vmem>>, vector<2x4x4x128xf32>
    %349 = vector.shape_cast %348 : vector<2x4x4x128xf32> to vector<32x128xf32>
    %350 = arith.truncf %349 : vector<32x128xf32> to vector<32x128xbf16>
    %c3_380 = arith.constant 3 : index
    %c5_381 = arith.constant 5 : index
    %c0_382 = arith.constant 0 : index
    %c0_383 = arith.constant 0 : index
    %351 = vector.load %arg2[%c3_380, %c5_381, %c0_382, %c0_383] : memref<6x9x128x128xbf16, #tpu.memory_space<vmem>>, vector<1x1x128x128xbf16>
    %352 = vector.shape_cast %351 : vector<1x1x128x128xbf16> to vector<128x128xbf16>
    %cst_384 = arith.constant dense<0.000000e+00> : vector<32x128xf32>
    %353 = tpu.matmul %350, %352, %cst_384 {dimension_numbers = #tpu.dot_dimension_numbers<[1], [0], [0], [1], [0, 0, 1, 1], [], []>} : vector<32x128xbf16>, vector<128x128xbf16>, vector<32x128xf32> -> vector<32x128xf32>
    %354 = arith.addf %347, %353 : vector<32x128xf32>
    %c0_385 = arith.constant 0 : index
    %c2_386 = arith.constant 2 : index
    %c0_387 = arith.constant 0 : index
    %c0_388 = arith.constant 0 : index
    %355 = vector.load %arg9[%c0_385, %c2_386, %c0_387, %c0_388] : memref<2x6x6x128xf32, #tpu.memory_space<vmem>>, vector<2x4x4x128xf32>
    %356 = vector.shape_cast %355 : vector<2x4x4x128xf32> to vector<32x128xf32>
    %357 = arith.truncf %356 : vector<32x128xf32> to vector<32x128xbf16>
    %c3_389 = arith.constant 3 : index
    %c6_390 = arith.constant 6 : index
    %c0_391 = arith.constant 0 : index
    %c0_392 = arith.constant 0 : index
    %358 = vector.load %arg2[%c3_389, %c6_390, %c0_391, %c0_392] : memref<6x9x128x128xbf16, #tpu.memory_space<vmem>>, vector<1x1x128x128xbf16>
    %359 = vector.shape_cast %358 : vector<1x1x128x128xbf16> to vector<128x128xbf16>
    %cst_393 = arith.constant dense<0.000000e+00> : vector<32x128xf32>
    %360 = tpu.matmul %357, %359, %cst_393 {dimension_numbers = #tpu.dot_dimension_numbers<[1], [0], [0], [1], [0, 0, 1, 1], [], []>} : vector<32x128xbf16>, vector<128x128xbf16>, vector<32x128xf32> -> vector<32x128xf32>
    %361 = arith.addf %354, %360 : vector<32x128xf32>
    %c0_394 = arith.constant 0 : index
    %c2_395 = arith.constant 2 : index
    %c1_396 = arith.constant 1 : index
    %c0_397 = arith.constant 0 : index
    %362 = vector.load %arg9[%c0_394, %c2_395, %c1_396, %c0_397] : memref<2x6x6x128xf32, #tpu.memory_space<vmem>>, vector<2x4x4x128xf32>
    %363 = vector.shape_cast %362 : vector<2x4x4x128xf32> to vector<32x128xf32>
    %364 = arith.truncf %363 : vector<32x128xf32> to vector<32x128xbf16>
    %c3_398 = arith.constant 3 : index
    %c7_399 = arith.constant 7 : index
    %c0_400 = arith.constant 0 : index
    %c0_401 = arith.constant 0 : index
    %365 = vector.load %arg2[%c3_398, %c7_399, %c0_400, %c0_401] : memref<6x9x128x128xbf16, #tpu.memory_space<vmem>>, vector<1x1x128x128xbf16>
    %366 = vector.shape_cast %365 : vector<1x1x128x128xbf16> to vector<128x128xbf16>
    %cst_402 = arith.constant dense<0.000000e+00> : vector<32x128xf32>
    %367 = tpu.matmul %364, %366, %cst_402 {dimension_numbers = #tpu.dot_dimension_numbers<[1], [0], [0], [1], [0, 0, 1, 1], [], []>} : vector<32x128xbf16>, vector<128x128xbf16>, vector<32x128xf32> -> vector<32x128xf32>
    %368 = arith.addf %361, %367 : vector<32x128xf32>
    %c0_403 = arith.constant 0 : index
    %c2_404 = arith.constant 2 : index
    %c2_405 = arith.constant 2 : index
    %c0_406 = arith.constant 0 : index
    %369 = vector.load %arg9[%c0_403, %c2_404, %c2_405, %c0_406] : memref<2x6x6x128xf32, #tpu.memory_space<vmem>>, vector<2x4x4x128xf32>
    %370 = vector.shape_cast %369 : vector<2x4x4x128xf32> to vector<32x128xf32>
    %371 = arith.truncf %370 : vector<32x128xf32> to vector<32x128xbf16>
    %c3_407 = arith.constant 3 : index
    %c8_408 = arith.constant 8 : index
    %c0_409 = arith.constant 0 : index
    %c0_410 = arith.constant 0 : index
    %372 = vector.load %arg2[%c3_407, %c8_408, %c0_409, %c0_410] : memref<6x9x128x128xbf16, #tpu.memory_space<vmem>>, vector<1x1x128x128xbf16>
    %373 = vector.shape_cast %372 : vector<1x1x128x128xbf16> to vector<128x128xbf16>
    %cst_411 = arith.constant dense<0.000000e+00> : vector<32x128xf32>
    %374 = tpu.matmul %371, %373, %cst_411 {dimension_numbers = #tpu.dot_dimension_numbers<[1], [0], [0], [1], [0, 0, 1, 1], [], []>} : vector<32x128xbf16>, vector<128x128xbf16>, vector<32x128xf32> -> vector<32x128xf32>
    %375 = arith.addf %368, %374 : vector<32x128xf32>
    %cst_412 = arith.constant dense<0.000000e+00> : vector<128xf32>
    %376 = vector.multi_reduction <add>, %375, %cst_412 [0] : vector<32x128xf32> to vector<128xf32>
    %377 = vector.shape_cast %376 : vector<128xf32> to vector<1x128xf32>
    %378 = arith.mulf %375, %375 : vector<32x128xf32>
    %cst_413 = arith.constant dense<0.000000e+00> : vector<128xf32>
    %379 = vector.multi_reduction <add>, %378, %cst_413 [0] : vector<32x128xf32> to vector<128xf32>
    %380 = vector.shape_cast %379 : vector<128xf32> to vector<1x128xf32>
    %cst_414 = arith.constant 3.125000e-02 : f32
    %381 = vector.broadcast %cst_414 : f32 to vector<1x128xf32>
    %382 = arith.mulf %377, %381 : vector<1x128xf32>
    %cst_415 = arith.constant 3.125000e-02 : f32
    %383 = vector.broadcast %cst_415 : f32 to vector<1x128xf32>
    %384 = arith.mulf %380, %383 : vector<1x128xf32>
    %385 = arith.mulf %382, %382 : vector<1x128xf32>
    %386 = arith.subf %384, %385 : vector<1x128xf32>
    %cst_416 = arith.constant 0.000000e+00 : f32
    %387 = vector.broadcast %cst_416 : f32 to vector<1x128xf32>
    %388 = arith.maximumf %386, %387 : vector<1x128xf32>
    %c3_417 = arith.constant 3 : index
    %c0_418 = arith.constant 0 : index
    %389 = vector.load %arg3[%c3_417, %c0_418] : memref<6x128xf32, #tpu.memory_space<vmem>>, vector<1x128xf32>
    %cst_419 = arith.constant 9.99999974E-6 : f32
    %390 = vector.broadcast %cst_419 : f32 to vector<1x128xf32>
    %391 = arith.addf %388, %390 : vector<1x128xf32>
    %392 = math.rsqrt %391 : vector<1x128xf32>
    %393 = arith.mulf %389, %392 : vector<1x128xf32>
    %c3_420 = arith.constant 3 : index
    %c0_421 = arith.constant 0 : index
    %394 = vector.load %arg4[%c3_420, %c0_421] : memref<6x128xf32, #tpu.memory_space<vmem>>, vector<1x128xf32>
    %395 = arith.mulf %382, %393 : vector<1x128xf32>
    %396 = arith.subf %394, %395 : vector<1x128xf32>
    %397 = vector.broadcast %393 : vector<1x128xf32> to vector<32x128xf32>
    %398 = arith.mulf %375, %397 : vector<32x128xf32>
    %399 = vector.broadcast %396 : vector<1x128xf32> to vector<32x128xf32>
    %400 = arith.addf %398, %399 : vector<32x128xf32>
    %cst_422 = arith.constant 0.000000e+00 : f32
    %401 = vector.broadcast %cst_422 : f32 to vector<32x128xf32>
    %402 = arith.maximumf %400, %401 : vector<32x128xf32>
    %403 = vector.shape_cast %402 : vector<32x128xf32> to vector<2x4x4x128xf32>
    %c0_423 = arith.constant 0 : index
    %c0_424 = arith.constant 0 : index
    %c0_425 = arith.constant 0 : index
    %c0_426 = arith.constant 0 : index
    %404 = vector.load %arg6[%c0_423, %c0_424, %c0_425, %c0_426] : memref<2x4x4x128xf32, #tpu.memory_space<vmem>>, vector<2x4x4x128xf32>
    tpu.vector_store %arg6[%c0_423, %c0_424, %c0_425, %c0_426], %403 {strides = array<i32>} : memref<2x4x4x128xf32, #tpu.memory_space<vmem>>, vector<2x4x4x128xf32>,
    %405 = vector.shape_cast %403 : vector<2x4x4x128xf32> to vector<16x2x128xf32>
    %cst_427 = arith.constant dense<0xFF800000> : vector<16x128xf32>
    %406 = vector.multi_reduction <maximumf>, %405, %cst_427 [1] : vector<16x2x128xf32> to vector<16x128xf32>
    %407 = vector.shape_cast %406 : vector<16x128xf32> to vector<4x2x2x128xf32>
    %408 = vector.extract_strided_slice %407 {offsets = [0, 0, 0, 0], sizes = [4, 1, 2, 128], strides = [1, 1, 1, 1]} : vector<4x2x2x128xf32> to vector<4x1x2x128xf32>
    %409 = vector.shape_cast %408 : vector<4x1x2x128xf32> to vector<4x2x128xf32>
    %410 = vector.extract_strided_slice %407 {offsets = [0, 1, 0, 0], sizes = [4, 1, 2, 128], strides = [1, 1, 1, 1]} : vector<4x2x2x128xf32> to vector<4x1x2x128xf32>
    %411 = vector.shape_cast %410 : vector<4x1x2x128xf32> to vector<4x2x128xf32>
    %412 = arith.maximumf %409, %411 : vector<4x2x128xf32>
    %413 = vector.shape_cast %412 : vector<4x2x128xf32> to vector<2x2x2x128xf32>
    %cst_428 = arith.constant 0.000000e+00 : f32
    %414 = vector.broadcast %cst_428 : f32 to vector<2x1x4x128xf32>
    %cst_429 = arith.constant 0.000000e+00 : f32
    %415 = vector.broadcast %cst_429 : f32 to vector<2x4x1x128xf32>
    %c0_430 = arith.constant 0 : index
    %c0_431 = arith.constant 0 : index
    %c0_432 = arith.constant 0 : index
    %c0_433 = arith.constant 0 : index
    %416 = vector.load %arg10[%c0_430, %c0_431, %c0_432, %c0_433] : memref<2x4x4x128xf32, #tpu.memory_space<vmem>>, vector<2x1x4x128xf32>
    tpu.vector_store %arg10[%c0_430, %c0_431, %c0_432, %c0_433], %414 {strides = array<i32>} : memref<2x4x4x128xf32, #tpu.memory_space<vmem>>, vector<2x1x4x128xf32>,
    %c0_434 = arith.constant 0 : index
    %c3_435 = arith.constant 3 : index
    %c0_436 = arith.constant 0 : index
    %c0_437 = arith.constant 0 : index
    %417 = vector.load %arg10[%c0_434, %c3_435, %c0_436, %c0_437] : memref<2x4x4x128xf32, #tpu.memory_space<vmem>>, vector<2x1x4x128xf32>
    tpu.vector_store %arg10[%c0_434, %c3_435, %c0_436, %c0_437], %414 {strides = array<i32>} : memref<2x4x4x128xf32, #tpu.memory_space<vmem>>, vector<2x1x4x128xf32>,
    %c0_438 = arith.constant 0 : index
    %c0_439 = arith.constant 0 : index
    %c0_440 = arith.constant 0 : index
    %c0_441 = arith.constant 0 : index
    %418 = vector.load %arg10[%c0_438, %c0_439, %c0_440, %c0_441] : memref<2x4x4x128xf32, #tpu.memory_space<vmem>>, vector<2x4x1x128xf32>
    tpu.vector_store %arg10[%c0_438, %c0_439, %c0_440, %c0_441], %415 {strides = array<i32>} : memref<2x4x4x128xf32, #tpu.memory_space<vmem>>, vector<2x4x1x128xf32>,
    %c0_442 = arith.constant 0 : index
    %c0_443 = arith.constant 0 : index
    %c3_444 = arith.constant 3 : index
    %c0_445 = arith.constant 0 : index
    %419 = vector.load %arg10[%c0_442, %c0_443, %c3_444, %c0_445] : memref<2x4x4x128xf32, #tpu.memory_space<vmem>>, vector<2x4x1x128xf32>
    tpu.vector_store %arg10[%c0_442, %c0_443, %c3_444, %c0_445], %415 {strides = array<i32>} : memref<2x4x4x128xf32, #tpu.memory_space<vmem>>, vector<2x4x1x128xf32>,
    %c0_446 = arith.constant 0 : index
    %c1_447 = arith.constant 1 : index
    %c1_448 = arith.constant 1 : index
    %c0_449 = arith.constant 0 : index
    %420 = vector.load %arg10[%c0_446, %c1_447, %c1_448, %c0_449] : memref<2x4x4x128xf32, #tpu.memory_space<vmem>>, vector<2x2x2x128xf32>
    tpu.vector_store %arg10[%c0_446, %c1_447, %c1_448, %c0_449], %413 {strides = array<i32>} : memref<2x4x4x128xf32, #tpu.memory_space<vmem>>, vector<2x2x2x128xf32>,
    %cst_450 = arith.constant 0.000000e+00 : f32
    %421 = vector.broadcast %cst_450 : f32 to vector<8x128xf32>
    %c0_451 = arith.constant 0 : index
    %c0_452 = arith.constant 0 : index
    %c0_453 = arith.constant 0 : index
    %c0_454 = arith.constant 0 : index
    %422 = vector.load %arg10[%c0_451, %c0_452, %c0_453, %c0_454] : memref<2x4x4x128xf32, #tpu.memory_space<vmem>>, vector<2x2x2x128xf32>
    %423 = vector.shape_cast %422 : vector<2x2x2x128xf32> to vector<8x128xf32>
    %424 = arith.truncf %423 : vector<8x128xf32> to vector<8x128xbf16>
    %c4_455 = arith.constant 4 : index
    %c0_456 = arith.constant 0 : index
    %c0_457 = arith.constant 0 : index
    %c0_458 = arith.constant 0 : index
    %425 = vector.load %arg2[%c4_455, %c0_456, %c0_457, %c0_458] : memref<6x9x128x128xbf16, #tpu.memory_space<vmem>>, vector<1x1x128x128xbf16>
    %426 = vector.shape_cast %425 : vector<1x1x128x128xbf16> to vector<128x128xbf16>
    %cst_459 = arith.constant dense<0.000000e+00> : vector<8x128xf32>
    %427 = tpu.matmul %424, %426, %cst_459 {dimension_numbers = #tpu.dot_dimension_numbers<[1], [0], [0], [1], [0, 0, 1, 1], [], []>} : vector<8x128xbf16>, vector<128x128xbf16>, vector<8x128xf32> -> vector<8x128xf32>
    %428 = arith.addf %421, %427 : vector<8x128xf32>
    %c0_460 = arith.constant 0 : index
    %c0_461 = arith.constant 0 : index
    %c1_462 = arith.constant 1 : index
    %c0_463 = arith.constant 0 : index
    %429 = vector.load %arg10[%c0_460, %c0_461, %c1_462, %c0_463] : memref<2x4x4x128xf32, #tpu.memory_space<vmem>>, vector<2x2x2x128xf32>
    %430 = vector.shape_cast %429 : vector<2x2x2x128xf32> to vector<8x128xf32>
    %431 = arith.truncf %430 : vector<8x128xf32> to vector<8x128xbf16>
    %c4_464 = arith.constant 4 : index
    %c1_465 = arith.constant 1 : index
    %c0_466 = arith.constant 0 : index
    %c0_467 = arith.constant 0 : index
    %432 = vector.load %arg2[%c4_464, %c1_465, %c0_466, %c0_467] : memref<6x9x128x128xbf16, #tpu.memory_space<vmem>>, vector<1x1x128x128xbf16>
    %433 = vector.shape_cast %432 : vector<1x1x128x128xbf16> to vector<128x128xbf16>
    %cst_468 = arith.constant dense<0.000000e+00> : vector<8x128xf32>
    %434 = tpu.matmul %431, %433, %cst_468 {dimension_numbers = #tpu.dot_dimension_numbers<[1], [0], [0], [1], [0, 0, 1, 1], [], []>} : vector<8x128xbf16>, vector<128x128xbf16>, vector<8x128xf32> -> vector<8x128xf32>
    %435 = arith.addf %428, %434 : vector<8x128xf32>
    %c0_469 = arith.constant 0 : index
    %c0_470 = arith.constant 0 : index
    %c2_471 = arith.constant 2 : index
    %c0_472 = arith.constant 0 : index
    %436 = vector.load %arg10[%c0_469, %c0_470, %c2_471, %c0_472] : memref<2x4x4x128xf32, #tpu.memory_space<vmem>>, vector<2x2x2x128xf32>
    %437 = vector.shape_cast %436 : vector<2x2x2x128xf32> to vector<8x128xf32>
    %438 = arith.truncf %437 : vector<8x128xf32> to vector<8x128xbf16>
    %c4_473 = arith.constant 4 : index
    %c2_474 = arith.constant 2 : index
    %c0_475 = arith.constant 0 : index
    %c0_476 = arith.constant 0 : index
    %439 = vector.load %arg2[%c4_473, %c2_474, %c0_475, %c0_476] : memref<6x9x128x128xbf16, #tpu.memory_space<vmem>>, vector<1x1x128x128xbf16>
    %440 = vector.shape_cast %439 : vector<1x1x128x128xbf16> to vector<128x128xbf16>
    %cst_477 = arith.constant dense<0.000000e+00> : vector<8x128xf32>
    %441 = tpu.matmul %438, %440, %cst_477 {dimension_numbers = #tpu.dot_dimension_numbers<[1], [0], [0], [1], [0, 0, 1, 1], [], []>} : vector<8x128xbf16>, vector<128x128xbf16>, vector<8x128xf32> -> vector<8x128xf32>
    %442 = arith.addf %435, %441 : vector<8x128xf32>
    %c0_478 = arith.constant 0 : index
    %c1_479 = arith.constant 1 : index
    %c0_480 = arith.constant 0 : index
    %c0_481 = arith.constant 0 : index
    %443 = vector.load %arg10[%c0_478, %c1_479, %c0_480, %c0_481] : memref<2x4x4x128xf32, #tpu.memory_space<vmem>>, vector<2x2x2x128xf32>
    %444 = vector.shape_cast %443 : vector<2x2x2x128xf32> to vector<8x128xf32>
    %445 = arith.truncf %444 : vector<8x128xf32> to vector<8x128xbf16>
    %c4_482 = arith.constant 4 : index
    %c3_483 = arith.constant 3 : index
    %c0_484 = arith.constant 0 : index
    %c0_485 = arith.constant 0 : index
    %446 = vector.load %arg2[%c4_482, %c3_483, %c0_484, %c0_485] : memref<6x9x128x128xbf16, #tpu.memory_space<vmem>>, vector<1x1x128x128xbf16>
    %447 = vector.shape_cast %446 : vector<1x1x128x128xbf16> to vector<128x128xbf16>
    %cst_486 = arith.constant dense<0.000000e+00> : vector<8x128xf32>
    %448 = tpu.matmul %445, %447, %cst_486 {dimension_numbers = #tpu.dot_dimension_numbers<[1], [0], [0], [1], [0, 0, 1, 1], [], []>} : vector<8x128xbf16>, vector<128x128xbf16>, vector<8x128xf32> -> vector<8x128xf32>
    %449 = arith.addf %442, %448 : vector<8x128xf32>
    %c0_487 = arith.constant 0 : index
    %c1_488 = arith.constant 1 : index
    %c1_489 = arith.constant 1 : index
    %c0_490 = arith.constant 0 : index
    %450 = vector.load %arg10[%c0_487, %c1_488, %c1_489, %c0_490] : memref<2x4x4x128xf32, #tpu.memory_space<vmem>>, vector<2x2x2x128xf32>
    %451 = vector.shape_cast %450 : vector<2x2x2x128xf32> to vector<8x128xf32>
    %452 = arith.truncf %451 : vector<8x128xf32> to vector<8x128xbf16>
    %c4_491 = arith.constant 4 : index
    %c4_492 = arith.constant 4 : index
    %c0_493 = arith.constant 0 : index
    %c0_494 = arith.constant 0 : index
    %453 = vector.load %arg2[%c4_491, %c4_492, %c0_493, %c0_494] : memref<6x9x128x128xbf16, #tpu.memory_space<vmem>>, vector<1x1x128x128xbf16>
    %454 = vector.shape_cast %453 : vector<1x1x128x128xbf16> to vector<128x128xbf16>
    %cst_495 = arith.constant dense<0.000000e+00> : vector<8x128xf32>
    %455 = tpu.matmul %452, %454, %cst_495 {dimension_numbers = #tpu.dot_dimension_numbers<[1], [0], [0], [1], [0, 0, 1, 1], [], []>} : vector<8x128xbf16>, vector<128x128xbf16>, vector<8x128xf32> -> vector<8x128xf32>
    %456 = arith.addf %449, %455 : vector<8x128xf32>
    %c0_496 = arith.constant 0 : index
    %c1_497 = arith.constant 1 : index
    %c2_498 = arith.constant 2 : index
    %c0_499 = arith.constant 0 : index
    %457 = vector.load %arg10[%c0_496, %c1_497, %c2_498, %c0_499] : memref<2x4x4x128xf32, #tpu.memory_space<vmem>>, vector<2x2x2x128xf32>
    %458 = vector.shape_cast %457 : vector<2x2x2x128xf32> to vector<8x128xf32>
    %459 = arith.truncf %458 : vector<8x128xf32> to vector<8x128xbf16>
    %c4_500 = arith.constant 4 : index
    %c5_501 = arith.constant 5 : index
    %c0_502 = arith.constant 0 : index
    %c0_503 = arith.constant 0 : index
    %460 = vector.load %arg2[%c4_500, %c5_501, %c0_502, %c0_503] : memref<6x9x128x128xbf16, #tpu.memory_space<vmem>>, vector<1x1x128x128xbf16>
    %461 = vector.shape_cast %460 : vector<1x1x128x128xbf16> to vector<128x128xbf16>
    %cst_504 = arith.constant dense<0.000000e+00> : vector<8x128xf32>
    %462 = tpu.matmul %459, %461, %cst_504 {dimension_numbers = #tpu.dot_dimension_numbers<[1], [0], [0], [1], [0, 0, 1, 1], [], []>} : vector<8x128xbf16>, vector<128x128xbf16>, vector<8x128xf32> -> vector<8x128xf32>
    %463 = arith.addf %456, %462 : vector<8x128xf32>
    %c0_505 = arith.constant 0 : index
    %c2_506 = arith.constant 2 : index
    %c0_507 = arith.constant 0 : index
    %c0_508 = arith.constant 0 : index
    %464 = vector.load %arg10[%c0_505, %c2_506, %c0_507, %c0_508] : memref<2x4x4x128xf32, #tpu.memory_space<vmem>>, vector<2x2x2x128xf32>
    %465 = vector.shape_cast %464 : vector<2x2x2x128xf32> to vector<8x128xf32>
    %466 = arith.truncf %465 : vector<8x128xf32> to vector<8x128xbf16>
    %c4_509 = arith.constant 4 : index
    %c6_510 = arith.constant 6 : index
    %c0_511 = arith.constant 0 : index
    %c0_512 = arith.constant 0 : index
    %467 = vector.load %arg2[%c4_509, %c6_510, %c0_511, %c0_512] : memref<6x9x128x128xbf16, #tpu.memory_space<vmem>>, vector<1x1x128x128xbf16>
    %468 = vector.shape_cast %467 : vector<1x1x128x128xbf16> to vector<128x128xbf16>
    %cst_513 = arith.constant dense<0.000000e+00> : vector<8x128xf32>
    %469 = tpu.matmul %466, %468, %cst_513 {dimension_numbers = #tpu.dot_dimension_numbers<[1], [0], [0], [1], [0, 0, 1, 1], [], []>} : vector<8x128xbf16>, vector<128x128xbf16>, vector<8x128xf32> -> vector<8x128xf32>
    %470 = arith.addf %463, %469 : vector<8x128xf32>
    %c0_514 = arith.constant 0 : index
    %c2_515 = arith.constant 2 : index
    %c1_516 = arith.constant 1 : index
    %c0_517 = arith.constant 0 : index
    %471 = vector.load %arg10[%c0_514, %c2_515, %c1_516, %c0_517] : memref<2x4x4x128xf32, #tpu.memory_space<vmem>>, vector<2x2x2x128xf32>
    %472 = vector.shape_cast %471 : vector<2x2x2x128xf32> to vector<8x128xf32>
    %473 = arith.truncf %472 : vector<8x128xf32> to vector<8x128xbf16>
    %c4_518 = arith.constant 4 : index
    %c7_519 = arith.constant 7 : index
    %c0_520 = arith.constant 0 : index
    %c0_521 = arith.constant 0 : index
    %474 = vector.load %arg2[%c4_518, %c7_519, %c0_520, %c0_521] : memref<6x9x128x128xbf16, #tpu.memory_space<vmem>>, vector<1x1x128x128xbf16>
    %475 = vector.shape_cast %474 : vector<1x1x128x128xbf16> to vector<128x128xbf16>
    %cst_522 = arith.constant dense<0.000000e+00> : vector<8x128xf32>
    %476 = tpu.matmul %473, %475, %cst_522 {dimension_numbers = #tpu.dot_dimension_numbers<[1], [0], [0], [1], [0, 0, 1, 1], [], []>} : vector<8x128xbf16>, vector<128x128xbf16>, vector<8x128xf32> -> vector<8x128xf32>
    %477 = arith.addf %470, %476 : vector<8x128xf32>
    %c0_523 = arith.constant 0 : index
    %c2_524 = arith.constant 2 : index
    %c2_525 = arith.constant 2 : index
    %c0_526 = arith.constant 0 : index
    %478 = vector.load %arg10[%c0_523, %c2_524, %c2_525, %c0_526] : memref<2x4x4x128xf32, #tpu.memory_space<vmem>>, vector<2x2x2x128xf32>
    %479 = vector.shape_cast %478 : vector<2x2x2x128xf32> to vector<8x128xf32>
    %480 = arith.truncf %479 : vector<8x128xf32> to vector<8x128xbf16>
    %c4_527 = arith.constant 4 : index
    %c8_528 = arith.constant 8 : index
    %c0_529 = arith.constant 0 : index
    %c0_530 = arith.constant 0 : index
    %481 = vector.load %arg2[%c4_527, %c8_528, %c0_529, %c0_530] : memref<6x9x128x128xbf16, #tpu.memory_space<vmem>>, vector<1x1x128x128xbf16>
    %482 = vector.shape_cast %481 : vector<1x1x128x128xbf16> to vector<128x128xbf16>
    %cst_531 = arith.constant dense<0.000000e+00> : vector<8x128xf32>
    %483 = tpu.matmul %480, %482, %cst_531 {dimension_numbers = #tpu.dot_dimension_numbers<[1], [0], [0], [1], [0, 0, 1, 1], [], []>} : vector<8x128xbf16>, vector<128x128xbf16>, vector<8x128xf32> -> vector<8x128xf32>
    %484 = arith.addf %477, %483 : vector<8x128xf32>
    %cst_532 = arith.constant dense<0.000000e+00> : vector<128xf32>
    %485 = vector.multi_reduction <add>, %484, %cst_532 [0] : vector<8x128xf32> to vector<128xf32>
    %486 = vector.shape_cast %485 : vector<128xf32> to vector<1x128xf32>
    %487 = arith.mulf %484, %484 : vector<8x128xf32>
    %cst_533 = arith.constant dense<0.000000e+00> : vector<128xf32>
    %488 = vector.multi_reduction <add>, %487, %cst_533 [0] : vector<8x128xf32> to vector<128xf32>
    %489 = vector.shape_cast %488 : vector<128xf32> to vector<1x128xf32>
    %cst_534 = arith.constant 1.250000e-01 : f32
    %490 = vector.broadcast %cst_534 : f32 to vector<1x128xf32>
    %491 = arith.mulf %486, %490 : vector<1x128xf32>
    %cst_535 = arith.constant 1.250000e-01 : f32
    %492 = vector.broadcast %cst_535 : f32 to vector<1x128xf32>
    %493 = arith.mulf %489, %492 : vector<1x128xf32>
    %494 = arith.mulf %491, %491 : vector<1x128xf32>
    %495 = arith.subf %493, %494 : vector<1x128xf32>
    %cst_536 = arith.constant 0.000000e+00 : f32
    %496 = vector.broadcast %cst_536 : f32 to vector<1x128xf32>
    %497 = arith.maximumf %495, %496 : vector<1x128xf32>
    %c4_537 = arith.constant 4 : index
    %c0_538 = arith.constant 0 : index
    %498 = vector.load %arg3[%c4_537, %c0_538] : memref<6x128xf32, #tpu.memory_space<vmem>>, vector<1x128xf32>
    %cst_539 = arith.constant 9.99999974E-6 : f32
    %499 = vector.broadcast %cst_539 : f32 to vector<1x128xf32>
    %500 = arith.addf %497, %499 : vector<1x128xf32>
    %501 = math.rsqrt %500 : vector<1x128xf32>
    %502 = arith.mulf %498, %501 : vector<1x128xf32>
    %c4_540 = arith.constant 4 : index
    %c0_541 = arith.constant 0 : index
    %503 = vector.load %arg4[%c4_540, %c0_541] : memref<6x128xf32, #tpu.memory_space<vmem>>, vector<1x128xf32>
    %504 = arith.mulf %491, %502 : vector<1x128xf32>
    %505 = arith.subf %503, %504 : vector<1x128xf32>
    %506 = vector.broadcast %502 : vector<1x128xf32> to vector<8x128xf32>
    %507 = arith.mulf %484, %506 : vector<8x128xf32>
    %508 = vector.broadcast %505 : vector<1x128xf32> to vector<8x128xf32>
    %509 = arith.addf %507, %508 : vector<8x128xf32>
    %cst_542 = arith.constant 0.000000e+00 : f32
    %510 = vector.broadcast %cst_542 : f32 to vector<8x128xf32>
    %511 = arith.maximumf %509, %510 : vector<8x128xf32>
    %512 = vector.shape_cast %511 : vector<8x128xf32> to vector<2x2x2x128xf32>
    %c0_543 = arith.constant 0 : index
    %c1_544 = arith.constant 1 : index
    %c1_545 = arith.constant 1 : index
    %c0_546 = arith.constant 0 : index
    %513 = vector.load %arg10[%c0_543, %c1_544, %c1_545, %c0_546] : memref<2x4x4x128xf32, #tpu.memory_space<vmem>>, vector<2x2x2x128xf32>
    tpu.vector_store %arg10[%c0_543, %c1_544, %c1_545, %c0_546], %512 {strides = array<i32>} : memref<2x4x4x128xf32, #tpu.memory_space<vmem>>, vector<2x2x2x128xf32>,
    %cst_547 = arith.constant 0.000000e+00 : f32
    %514 = vector.broadcast %cst_547 : f32 to vector<8x128xf32>
    %c0_548 = arith.constant 0 : index
    %c0_549 = arith.constant 0 : index
    %c0_550 = arith.constant 0 : index
    %c0_551 = arith.constant 0 : index
    %515 = vector.load %arg10[%c0_548, %c0_549, %c0_550, %c0_551] : memref<2x4x4x128xf32, #tpu.memory_space<vmem>>, vector<2x2x2x128xf32>
    %516 = vector.shape_cast %515 : vector<2x2x2x128xf32> to vector<8x128xf32>
    %517 = arith.truncf %516 : vector<8x128xf32> to vector<8x128xbf16>
    %c5_552 = arith.constant 5 : index
    %c0_553 = arith.constant 0 : index
    %c0_554 = arith.constant 0 : index
    %c0_555 = arith.constant 0 : index
    %518 = vector.load %arg2[%c5_552, %c0_553, %c0_554, %c0_555] : memref<6x9x128x128xbf16, #tpu.memory_space<vmem>>, vector<1x1x128x128xbf16>
    %519 = vector.shape_cast %518 : vector<1x1x128x128xbf16> to vector<128x128xbf16>
    %cst_556 = arith.constant dense<0.000000e+00> : vector<8x128xf32>
    %520 = tpu.matmul %517, %519, %cst_556 {dimension_numbers = #tpu.dot_dimension_numbers<[1], [0], [0], [1], [0, 0, 1, 1], [], []>} : vector<8x128xbf16>, vector<128x128xbf16>, vector<8x128xf32> -> vector<8x128xf32>
    %521 = arith.addf %514, %520 : vector<8x128xf32>
    %c0_557 = arith.constant 0 : index
    %c0_558 = arith.constant 0 : index
    %c1_559 = arith.constant 1 : index
    %c0_560 = arith.constant 0 : index
    %522 = vector.load %arg10[%c0_557, %c0_558, %c1_559, %c0_560] : memref<2x4x4x128xf32, #tpu.memory_space<vmem>>, vector<2x2x2x128xf32>
    %523 = vector.shape_cast %522 : vector<2x2x2x128xf32> to vector<8x128xf32>
    %524 = arith.truncf %523 : vector<8x128xf32> to vector<8x128xbf16>
    %c5_561 = arith.constant 5 : index
    %c1_562 = arith.constant 1 : index
    %c0_563 = arith.constant 0 : index
    %c0_564 = arith.constant 0 : index
    %525 = vector.load %arg2[%c5_561, %c1_562, %c0_563, %c0_564] : memref<6x9x128x128xbf16, #tpu.memory_space<vmem>>, vector<1x1x128x128xbf16>
    %526 = vector.shape_cast %525 : vector<1x1x128x128xbf16> to vector<128x128xbf16>
    %cst_565 = arith.constant dense<0.000000e+00> : vector<8x128xf32>
    %527 = tpu.matmul %524, %526, %cst_565 {dimension_numbers = #tpu.dot_dimension_numbers<[1], [0], [0], [1], [0, 0, 1, 1], [], []>} : vector<8x128xbf16>, vector<128x128xbf16>, vector<8x128xf32> -> vector<8x128xf32>
    %528 = arith.addf %521, %527 : vector<8x128xf32>
    %c0_566 = arith.constant 0 : index
    %c0_567 = arith.constant 0 : index
    %c2_568 = arith.constant 2 : index
    %c0_569 = arith.constant 0 : index
    %529 = vector.load %arg10[%c0_566, %c0_567, %c2_568, %c0_569] : memref<2x4x4x128xf32, #tpu.memory_space<vmem>>, vector<2x2x2x128xf32>
    %530 = vector.shape_cast %529 : vector<2x2x2x128xf32> to vector<8x128xf32>
    %531 = arith.truncf %530 : vector<8x128xf32> to vector<8x128xbf16>
    %c5_570 = arith.constant 5 : index
    %c2_571 = arith.constant 2 : index
    %c0_572 = arith.constant 0 : index
    %c0_573 = arith.constant 0 : index
    %532 = vector.load %arg2[%c5_570, %c2_571, %c0_572, %c0_573] : memref<6x9x128x128xbf16, #tpu.memory_space<vmem>>, vector<1x1x128x128xbf16>
    %533 = vector.shape_cast %532 : vector<1x1x128x128xbf16> to vector<128x128xbf16>
    %cst_574 = arith.constant dense<0.000000e+00> : vector<8x128xf32>
    %534 = tpu.matmul %531, %533, %cst_574 {dimension_numbers = #tpu.dot_dimension_numbers<[1], [0], [0], [1], [0, 0, 1, 1], [], []>} : vector<8x128xbf16>, vector<128x128xbf16>, vector<8x128xf32> -> vector<8x128xf32>
    %535 = arith.addf %528, %534 : vector<8x128xf32>
    %c0_575 = arith.constant 0 : index
    %c1_576 = arith.constant 1 : index
    %c0_577 = arith.constant 0 : index
    %c0_578 = arith.constant 0 : index
    %536 = vector.load %arg10[%c0_575, %c1_576, %c0_577, %c0_578] : memref<2x4x4x128xf32, #tpu.memory_space<vmem>>, vector<2x2x2x128xf32>
    %537 = vector.shape_cast %536 : vector<2x2x2x128xf32> to vector<8x128xf32>
    %538 = arith.truncf %537 : vector<8x128xf32> to vector<8x128xbf16>
    %c5_579 = arith.constant 5 : index
    %c3_580 = arith.constant 3 : index
    %c0_581 = arith.constant 0 : index
    %c0_582 = arith.constant 0 : index
    %539 = vector.load %arg2[%c5_579, %c3_580, %c0_581, %c0_582] : memref<6x9x128x128xbf16, #tpu.memory_space<vmem>>, vector<1x1x128x128xbf16>
    %540 = vector.shape_cast %539 : vector<1x1x128x128xbf16> to vector<128x128xbf16>
    %cst_583 = arith.constant dense<0.000000e+00> : vector<8x128xf32>
    %541 = tpu.matmul %538, %540, %cst_583 {dimension_numbers = #tpu.dot_dimension_numbers<[1], [0], [0], [1], [0, 0, 1, 1], [], []>} : vector<8x128xbf16>, vector<128x128xbf16>, vector<8x128xf32> -> vector<8x128xf32>
    %542 = arith.addf %535, %541 : vector<8x128xf32>
    %c0_584 = arith.constant 0 : index
    %c1_585 = arith.constant 1 : index
    %c1_586 = arith.constant 1 : index
    %c0_587 = arith.constant 0 : index
    %543 = vector.load %arg10[%c0_584, %c1_585, %c1_586, %c0_587] : memref<2x4x4x128xf32, #tpu.memory_space<vmem>>, vector<2x2x2x128xf32>
    %544 = vector.shape_cast %543 : vector<2x2x2x128xf32> to vector<8x128xf32>
    %545 = arith.truncf %544 : vector<8x128xf32> to vector<8x128xbf16>
    %c5_588 = arith.constant 5 : index
    %c4_589 = arith.constant 4 : index
    %c0_590 = arith.constant 0 : index
    %c0_591 = arith.constant 0 : index
    %546 = vector.load %arg2[%c5_588, %c4_589, %c0_590, %c0_591] : memref<6x9x128x128xbf16, #tpu.memory_space<vmem>>, vector<1x1x128x128xbf16>
    %547 = vector.shape_cast %546 : vector<1x1x128x128xbf16> to vector<128x128xbf16>
    %cst_592 = arith.constant dense<0.000000e+00> : vector<8x128xf32>
    %548 = tpu.matmul %545, %547, %cst_592 {dimension_numbers = #tpu.dot_dimension_numbers<[1], [0], [0], [1], [0, 0, 1, 1], [], []>} : vector<8x128xbf16>, vector<128x128xbf16>, vector<8x128xf32> -> vector<8x128xf32>
    %549 = arith.addf %542, %548 : vector<8x128xf32>
    %c0_593 = arith.constant 0 : index
    %c1_594 = arith.constant 1 : index
    %c2_595 = arith.constant 2 : index
    %c0_596 = arith.constant 0 : index
    %550 = vector.load %arg10[%c0_593, %c1_594, %c2_595, %c0_596] : memref<2x4x4x128xf32, #tpu.memory_space<vmem>>, vector<2x2x2x128xf32>
    %551 = vector.shape_cast %550 : vector<2x2x2x128xf32> to vector<8x128xf32>
    %552 = arith.truncf %551 : vector<8x128xf32> to vector<8x128xbf16>
    %c5_597 = arith.constant 5 : index
    %c5_598 = arith.constant 5 : index
    %c0_599 = arith.constant 0 : index
    %c0_600 = arith.constant 0 : index
    %553 = vector.load %arg2[%c5_597, %c5_598, %c0_599, %c0_600] : memref<6x9x128x128xbf16, #tpu.memory_space<vmem>>, vector<1x1x128x128xbf16>
    %554 = vector.shape_cast %553 : vector<1x1x128x128xbf16> to vector<128x128xbf16>
    %cst_601 = arith.constant dense<0.000000e+00> : vector<8x128xf32>
    %555 = tpu.matmul %552, %554, %cst_601 {dimension_numbers = #tpu.dot_dimension_numbers<[1], [0], [0], [1], [0, 0, 1, 1], [], []>} : vector<8x128xbf16>, vector<128x128xbf16>, vector<8x128xf32> -> vector<8x128xf32>
    %556 = arith.addf %549, %555 : vector<8x128xf32>
    %c0_602 = arith.constant 0 : index
    %c2_603 = arith.constant 2 : index
    %c0_604 = arith.constant 0 : index
    %c0_605 = arith.constant 0 : index
    %557 = vector.load %arg10[%c0_602, %c2_603, %c0_604, %c0_605] : memref<2x4x4x128xf32, #tpu.memory_space<vmem>>, vector<2x2x2x128xf32>
    %558 = vector.shape_cast %557 : vector<2x2x2x128xf32> to vector<8x128xf32>
    %559 = arith.truncf %558 : vector<8x128xf32> to vector<8x128xbf16>
    %c5_606 = arith.constant 5 : index
    %c6_607 = arith.constant 6 : index
    %c0_608 = arith.constant 0 : index
    %c0_609 = arith.constant 0 : index
    %560 = vector.load %arg2[%c5_606, %c6_607, %c0_608, %c0_609] : memref<6x9x128x128xbf16, #tpu.memory_space<vmem>>, vector<1x1x128x128xbf16>
    %561 = vector.shape_cast %560 : vector<1x1x128x128xbf16> to vector<128x128xbf16>
    %cst_610 = arith.constant dense<0.000000e+00> : vector<8x128xf32>
    %562 = tpu.matmul %559, %561, %cst_610 {dimension_numbers = #tpu.dot_dimension_numbers<[1], [0], [0], [1], [0, 0, 1, 1], [], []>} : vector<8x128xbf16>, vector<128x128xbf16>, vector<8x128xf32> -> vector<8x128xf32>
    %563 = arith.addf %556, %562 : vector<8x128xf32>
    %c0_611 = arith.constant 0 : index
    %c2_612 = arith.constant 2 : index
    %c1_613 = arith.constant 1 : index
    %c0_614 = arith.constant 0 : index
    %564 = vector.load %arg10[%c0_611, %c2_612, %c1_613, %c0_614] : memref<2x4x4x128xf32, #tpu.memory_space<vmem>>, vector<2x2x2x128xf32>
    %565 = vector.shape_cast %564 : vector<2x2x2x128xf32> to vector<8x128xf32>
    %566 = arith.truncf %565 : vector<8x128xf32> to vector<8x128xbf16>
    %c5_615 = arith.constant 5 : index
    %c7_616 = arith.constant 7 : index
    %c0_617 = arith.constant 0 : index
    %c0_618 = arith.constant 0 : index
    %567 = vector.load %arg2[%c5_615, %c7_616, %c0_617, %c0_618] : memref<6x9x128x128xbf16, #tpu.memory_space<vmem>>, vector<1x1x128x128xbf16>
    %568 = vector.shape_cast %567 : vector<1x1x128x128xbf16> to vector<128x128xbf16>
    %cst_619 = arith.constant dense<0.000000e+00> : vector<8x128xf32>
    %569 = tpu.matmul %566, %568, %cst_619 {dimension_numbers = #tpu.dot_dimension_numbers<[1], [0], [0], [1], [0, 0, 1, 1], [], []>} : vector<8x128xbf16>, vector<128x128xbf16>, vector<8x128xf32> -> vector<8x128xf32>
    %570 = arith.addf %563, %569 : vector<8x128xf32>
    %c0_620 = arith.constant 0 : index
    %c2_621 = arith.constant 2 : index
    %c2_622 = arith.constant 2 : index
    %c0_623 = arith.constant 0 : index
    %571 = vector.load %arg10[%c0_620, %c2_621, %c2_622, %c0_623] : memref<2x4x4x128xf32, #tpu.memory_space<vmem>>, vector<2x2x2x128xf32>
    %572 = vector.shape_cast %571 : vector<2x2x2x128xf32> to vector<8x128xf32>
    %573 = arith.truncf %572 : vector<8x128xf32> to vector<8x128xbf16>
    %c5_624 = arith.constant 5 : index
    %c8_625 = arith.constant 8 : index
    %c0_626 = arith.constant 0 : index
    %c0_627 = arith.constant 0 : index
    %574 = vector.load %arg2[%c5_624, %c8_625, %c0_626, %c0_627] : memref<6x9x128x128xbf16, #tpu.memory_space<vmem>>, vector<1x1x128x128xbf16>
    %575 = vector.shape_cast %574 : vector<1x1x128x128xbf16> to vector<128x128xbf16>
    %cst_628 = arith.constant dense<0.000000e+00> : vector<8x128xf32>
    %576 = tpu.matmul %573, %575, %cst_628 {dimension_numbers = #tpu.dot_dimension_numbers<[1], [0], [0], [1], [0, 0, 1, 1], [], []>} : vector<8x128xbf16>, vector<128x128xbf16>, vector<8x128xf32> -> vector<8x128xf32>
    %577 = arith.addf %570, %576 : vector<8x128xf32>
    %cst_629 = arith.constant dense<0.000000e+00> : vector<128xf32>
    %578 = vector.multi_reduction <add>, %577, %cst_629 [0] : vector<8x128xf32> to vector<128xf32>
    %579 = vector.shape_cast %578 : vector<128xf32> to vector<1x128xf32>
    %580 = arith.mulf %577, %577 : vector<8x128xf32>
    %cst_630 = arith.constant dense<0.000000e+00> : vector<128xf32>
    %581 = vector.multi_reduction <add>, %580, %cst_630 [0] : vector<8x128xf32> to vector<128xf32>
    %582 = vector.shape_cast %581 : vector<128xf32> to vector<1x128xf32>
    %cst_631 = arith.constant 1.250000e-01 : f32
    %583 = vector.broadcast %cst_631 : f32 to vector<1x128xf32>
    %584 = arith.mulf %579, %583 : vector<1x128xf32>
    %cst_632 = arith.constant 1.250000e-01 : f32
    %585 = vector.broadcast %cst_632 : f32 to vector<1x128xf32>
    %586 = arith.mulf %582, %585 : vector<1x128xf32>
    %587 = arith.mulf %584, %584 : vector<1x128xf32>
    %588 = arith.subf %586, %587 : vector<1x128xf32>
    %cst_633 = arith.constant 0.000000e+00 : f32
    %589 = vector.broadcast %cst_633 : f32 to vector<1x128xf32>
    %590 = arith.maximumf %588, %589 : vector<1x128xf32>
    %c5_634 = arith.constant 5 : index
    %c0_635 = arith.constant 0 : index
    %591 = vector.load %arg3[%c5_634, %c0_635] : memref<6x128xf32, #tpu.memory_space<vmem>>, vector<1x128xf32>
    %cst_636 = arith.constant 9.99999974E-6 : f32
    %592 = vector.broadcast %cst_636 : f32 to vector<1x128xf32>
    %593 = arith.addf %590, %592 : vector<1x128xf32>
    %594 = math.rsqrt %593 : vector<1x128xf32>
    %595 = arith.mulf %591, %594 : vector<1x128xf32>
    %c5_637 = arith.constant 5 : index
    %c0_638 = arith.constant 0 : index
    %596 = vector.load %arg4[%c5_637, %c0_638] : memref<6x128xf32, #tpu.memory_space<vmem>>, vector<1x128xf32>
    %597 = arith.mulf %584, %595 : vector<1x128xf32>
    %598 = arith.subf %596, %597 : vector<1x128xf32>
    %599 = vector.broadcast %595 : vector<1x128xf32> to vector<8x128xf32>
    %600 = arith.mulf %577, %599 : vector<8x128xf32>
    %601 = vector.broadcast %598 : vector<1x128xf32> to vector<8x128xf32>
    %602 = arith.addf %600, %601 : vector<8x128xf32>
    %cst_639 = arith.constant 0.000000e+00 : f32
    %603 = vector.broadcast %cst_639 : f32 to vector<8x128xf32>
    %604 = arith.maximumf %602, %603 : vector<8x128xf32>
    %605 = vector.shape_cast %604 : vector<8x128xf32> to vector<2x2x2x128xf32>
    %c0_640 = arith.constant 0 : index
    %c0_641 = arith.constant 0 : index
    %c0_642 = arith.constant 0 : index
    %c0_643 = arith.constant 0 : index
    %606 = vector.load %arg7[%c0_640, %c0_641, %c0_642, %c0_643] : memref<2x2x2x128xf32, #tpu.memory_space<vmem>>, vector<2x2x2x128xf32>
    tpu.vector_store %arg7[%c0_640, %c0_641, %c0_642, %c0_643], %605 {strides = array<i32>} : memref<2x2x2x128xf32, #tpu.memory_space<vmem>>, vector<2x2x2x128xf32>,
    return
  }
  func.func @transform_0(%arg0: i32) -> (i32, i32, i32, i32) {
    %c0_i32 = arith.constant 0 : i32
    %c0_i32_0 = arith.constant 0 : i32
    %c0_i32_1 = arith.constant 0 : i32
    %c0_i32_2 = arith.constant 0 : i32
    %c0_i32_3 = arith.constant 0 : i32
    return %c0_i32, %c0_i32_0, %c0_i32_1, %c0_i32_2 : i32, i32, i32, i32
  }
  func.func @transform_1(%arg0: i32) -> (i32, i32, i32, i32) {
    %c0_i32 = arith.constant 0 : i32
    %c0_i32_0 = arith.constant 0 : i32
    %c0_i32_1 = arith.constant 0 : i32
    %c0_i32_2 = arith.constant 0 : i32
    %c0_i32_3 = arith.constant 0 : i32
    return %c0_i32, %c0_i32_0, %c0_i32_1, %c0_i32_2 : i32, i32, i32, i32
  }
  func.func @transform_2(%arg0: i32) -> (i32, i32) {
    %c0_i32 = arith.constant 0 : i32
    %c0_i32_0 = arith.constant 0 : i32
    %c0_i32_1 = arith.constant 0 : i32
    return %c0_i32, %c0_i32_0 : i32, i32
  }
  func.func @transform_3(%arg0: i32) -> (i32, i32) {
    %c0_i32 = arith.constant 0 : i32
    %c0_i32_0 = arith.constant 0 : i32
    %c0_i32_1 = arith.constant 0 : i32
    return %c0_i32, %c0_i32_0 : i32, i32
  }
  func.func @transform_4(%arg0: i32) -> (i32, i32, i32, i32) {
    %c0_i32 = arith.constant 0 : i32
    %c0_i32_0 = arith.constant 0 : i32
    %c0_i32_1 = arith.constant 0 : i32
    %c0_i32_2 = arith.constant 0 : i32
    %c0_i32_3 = arith.constant 0 : i32
    return %c0_i32, %c0_i32_0, %c0_i32_1, %c0_i32_2 : i32, i32, i32, i32
  }
  func.func @transform_5(%arg0: i32) -> (i32, i32, i32, i32) {
    %c0_i32 = arith.constant 0 : i32
    %c0_i32_0 = arith.constant 0 : i32
    %c0_i32_1 = arith.constant 0 : i32
    %c0_i32_2 = arith.constant 0 : i32
    %c0_i32_3 = arith.constant 0 : i32
    return %c0_i32, %c0_i32_0, %c0_i32_1, %c0_i32_2 : i32, i32, i32, i32
  }
  func.func @transform_6(%arg0: i32) -> (i32, i32, i32, i32) {
    %c0_i32 = arith.constant 0 : i32
    %c0_i32_0 = arith.constant 0 : i32
    %c0_i32_1 = arith.constant 0 : i32
    %c0_i32_2 = arith.constant 0 : i32
    %c0_i32_3 = arith.constant 0 : i32
    return %c0_i32, %c0_i32_0, %c0_i32_1, %c0_i32_2 : i32, i32, i32, i32
  }
}

</mosaic_0001>

<llo_original>
// kernel: encoder_forward.1
$region0: #{encoder_forward.1}
  #allocation0 [shape = 'u32[]', space=smem, size = 0x4, offset = 0x4, fixed_abs, tag = 'smem constant byte address 0x4 - core index']
  #allocation1 [shape = 'u32[72,128]{1,0:T(1,128)}', space=vmem, size = 0x9000, scoped, tag = 'internal scratch']
  #allocation2 [shape = 'f32[2,10,10,128]{3,2,1,0:T(8,128)}', space=vmem, size = 0x28000, scoped, tag = 'scratch operand']
  #allocation3 [shape = 'f32[2,6,6,128]{3,2,1,0:T(8,128)}', space=vmem, size = 0xc000, scoped, tag = 'scratch operand']
  #allocation4 [shape = 'f32[2,4,4,128]{3,2,1,0:T(4,128)}', space=vmem, size = 0x4000, scoped, tag = 'scratch operand']
  %s0 = inlined_call_operand.vmem [shape: f32[2,16,16,128], index: 0, kind: input, shape index: {}]
  %s1 = inlined_call_operand.hbm [shape: bf16[6,9,128,128], index: 1, kind: input, shape index: {}]
  %s2 = inlined_call_operand.hbm [shape: f32[6,128], index: 2, kind: input, shape index: {}]
  %s3 = inlined_call_operand.hbm [shape: f32[6,128], index: 3, kind: input, shape index: {}]
  %s4 = inlined_call_operand.vmem [shape: f32[2,8,8,128], index: 4, kind: output, shape index: {0}]
  %s5 = inlined_call_operand.vmem [shape: f32[2,4,4,128], index: 5, kind: output, shape index: {1}]
  %s6 = inlined_call_operand.vmem [shape: f32[2,2,2,128], index: 6, kind: output, shape index: {2}]
  %7 = xla_tuple %s4, %s5, %s6
  %s8 = sld [smem:[#allocation0]]
  $region54: #{encoder_forward.1} parent=0
    _
  %s10 = ssub.s32 1, %s8
  %s11 = scalar_select 0, %s10, %s8
  $region1: #{encoder_forward.1} parent=0
    #allocation5 [shape = 'u8[1769472]{0}', space=vmem, size = 0x1b0000, scoped, tag = 'input window, operand 1, single buffered']
    #allocation6 [shape = 's32[1]{0}', space=sflag, size = 0x4, scoped, tag = 'scoped memory for encoder_forward.1']
    #allocation7 [shape = 'u8[4096]{0}', space=vmem, size = 0x1000, scoped, tag = 'input window, operand 2, single buffered']
    #allocation8 [shape = 's32[1]{0}', space=sflag, size = 0x4, scoped, tag = 'scoped memory for encoder_forward.1']
    #allocation9 [shape = 'u8[4096]{0}', space=vmem, size = 0x1000, scoped, tag = 'input window, operand 3, single buffered']
    %12 = vsyncpa [#allocation6], 0
    %13 = vsyncpa [#allocation8], 0
    // Predicated region
    $region2: #{encoder_forward.1} parent=1 // pred_check
      _
    $region3: #{encoder_forward.1} parent=1 // pred_check_branch
      %15 = sbr.rel (0) target = $region5
    $region4: #{encoder_forward.1} parent=1 // pred_region
      _
    $region5: #{encoder_forward.1} parent=1 // pred_fallthru
      _
    // Predicated region
    $region6: #{encoder_forward.1} parent=1 // pred_check
      _
    $region7: #{encoder_forward.1} parent=1 // pred_check_branch
      %17 = sbr.rel (0) target = $region9
    $region8: #{encoder_forward.1} parent=1 // pred_region
      %19 = vsyncadd [#allocation6], 0
      %s20 = sshll.u32 %s1, 4
      %s21 = int_to_ptr.hbm [resolvable:$true] %s20
      %s22 = sshll.u32 [#allocation5], 4
      %s23 = int_to_ptr.vmem [resolvable:$true] %s22
      %28 = dma.hbm_to_vmem [thread:$0]  %s21, 55296, %s23, [#allocation6], 64, 64, 4
    $region9: #{encoder_forward.1} parent=1 // pred_fallthru
      _
    // Predicated region
    $region10: #{encoder_forward.1} parent=1 // pred_check
      _
    $region11: #{encoder_forward.1} parent=1 // pred_check_branch
      %30 = sbr.rel (0) target = $region13
    $region12: #{encoder_forward.1} parent=1 // pred_region
      %32 = vsyncadd [#allocation8], 0
      %s34 = sshll.u32 %s2, 4
      %s35 = int_to_ptr.hbm [resolvable:$true] %s34
      %s36 = sshll.u32 [#allocation7], 4
      %s37 = int_to_ptr.vmem [resolvable:$true] %s36
      %39 = dma.hbm_to_vmem [thread:$0]  %s35, 128, %s37, [#allocation8]
    $region13: #{encoder_forward.1} parent=1 // pred_fallthru
      _
    // Predicated region
    $region14: #{encoder_forward.1} parent=1 // pred_check
      _
    $region15: #{encoder_forward.1} parent=1 // pred_check_branch
      %41 = sbr.rel (0) target = $region17
    $region16: #{encoder_forward.1} parent=1 // pred_region
      %43 = vsyncadd [#allocation8], 0
      %s45 = sshll.u32 %s3, 4
      %s46 = int_to_ptr.hbm [resolvable:$true] %s45
      %s47 = sshll.u32 [#allocation9], 4
      %s48 = int_to_ptr.vmem [resolvable:$true] %s47
      %50 = dma.hbm_to_vmem [thread:$0]  %s46, 128, %s48, [#allocation8]
    $region17: #{encoder_forward.1} parent=1 // pred_fallthru
      _
    // Predicated region
    $region18: #{encoder_forward.1} parent=1 // pred_check
      _
    $region19: #{encoder_forward.1} parent=1 // pred_check_branch
      %52 = sbr.rel (0) target = $region21
    $region20: #{encoder_forward.1} parent=1 // pred_region
      %54 = dma.done [#allocation6], 55296
    $region21: #{encoder_forward.1} parent=1 // pred_fallthru
      _
    // Predicated region
    $region22: #{encoder_forward.1} parent=1 // pred_check
      _
    $region23: #{encoder_forward.1} parent=1 // pred_check_branch
      %56 = sbr.rel (0) target = $region25
    $region24: #{encoder_forward.1} parent=1 // pred_region
      %58 = dma.done [#allocation8], 128
    $region25: #{encoder_forward.1} parent=1 // pred_fallthru
      _
    // Predicated region
    $region26: #{encoder_forward.1} parent=1 // pred_check
      _
    $region27: #{encoder_forward.1} parent=1 // pred_check_branch
      %60 = sbr.rel (0) target = $region29
    $region28: #{encoder_forward.1} parent=1 // pred_region
      %62 = dma.done [#allocation8], 128
    $region29: #{encoder_forward.1} parent=1 // pred_fallthru
      _
    %v63 = vld [vmem:[%s0] sm:$0xff]
    %v64 = vld [vmem:[%s0 + $0x8] sm:$0xff]
    %v65 = vld [vmem:[%s0 + $0x10] sm:$0xff]
    %v66 = vld [vmem:[%s0 + $0x18] sm:$0xff]
    %v67 = vld [vmem:[%s0 + $0x20] sm:$0xff]
    %v68 = vld [vmem:[%s0 + $0x28] sm:$0xff]
    %v69 = vld [vmem:[%s0 + $0x30] sm:$0xff]
    %v70 = vld [vmem:[%s0 + $0x38] sm:$0xff]
    %v71 = vld [vmem:[%s0 + $0x40] sm:$0xff]
    %v72 = vld [vmem:[%s0 + $0x48] sm:$0xff]
    %v73 = vld [vmem:[%s0 + $0x50] sm:$0xff]
    %v74 = vld [vmem:[%s0 + $0x58] sm:$0xff]
    %v75 = vld [vmem:[%s0 + $0x60] sm:$0xff]
    %v76 = vld [vmem:[%s0 + $0x68] sm:$0xff]
    %v77 = vld [vmem:[%s0 + $0x70] sm:$0xff]
    %v78 = vld [vmem:[%s0 + $0x78] sm:$0xff]
    %v79 = vld [vmem:[%s0 + $0x80] sm:$0xff]
    %v80 = vld [vmem:[%s0 + $0x88] sm:$0xff]
    %v81 = vld [vmem:[%s0 + $0x90] sm:$0xff]
    %v82 = vld [vmem:[%s0 + $0x98] sm:$0xff]
    %v83 = vld [vmem:[%s0 + $0xa0] sm:$0xff]
    %v84 = vld [vmem:[%s0 + $0xa8] sm:$0xff]
    %v85 = vld [vmem:[%s0 + $0xb0] sm:$0xff]
    %v86 = vld [vmem:[%s0 + $0xb8] sm:$0xff]
    %v87 = vld [vmem:[%s0 + $0xc0] sm:$0xff]
    %v88 = vld [vmem:[%s0 + $0xc8] sm:$0xff]
    %v89 = vld [vmem:[%s0 + $0xd0] sm:$0xff]
    %v90 = vld [vmem:[%s0 + $0xd8] sm:$0xff]
    %v91 = vld [vmem:[%s0 + $0xe0] sm:$0xff]
    %v92 = vld [vmem:[%s0 + $0xe8] sm:$0xff]
    %v93 = vld [vmem:[%s0 + $0xf0] sm:$0xff]
    %v94 = vld [vmem:[%s0 + $0xf8] sm:$0xff]
    %v95 = vld [vmem:[%s0 + $0x100] sm:$0xff]
    %v96 = vld [vmem:[%s0 + $0x108] sm:$0xff]
    %v97 = vld [vmem:[%s0 + $0x110] sm:$0xff]
    %v98 = vld [vmem:[%s0 + $0x118] sm:$0xff]
    %v99 = vld [vmem:[%s0 + $0x120] sm:$0xff]
    %v100 = vld [vmem:[%s0 + $0x128] sm:$0xff]
    %v101 = vld [vmem:[%s0 + $0x130] sm:$0xff]
    %v102 = vld [vmem:[%s0 + $0x138] sm:$0xff]
    %v103 = vld [vmem:[%s0 + $0x140] sm:$0xff]
    %v104 = vld [vmem:[%s0 + $0x148] sm:$0xff]
    %v105 = vld [vmem:[%s0 + $0x150] sm:$0xff]
    %v106 = vld [vmem:[%s0 + $0x158] sm:$0xff]
    %v107 = vld [vmem:[%s0 + $0x160] sm:$0xff]
    %v108 = vld [vmem:[%s0 + $0x168] sm:$0xff]
    %v109 = vld [vmem:[%s0 + $0x170] sm:$0xff]
    %v110 = vld [vmem:[%s0 + $0x178] sm:$0xff]
    %v111 = vld [vmem:[%s0 + $0x180] sm:$0xff]
    %v112 = vld [vmem:[%s0 + $0x188] sm:$0xff]
    %v113 = vld [vmem:[%s0 + $0x190] sm:$0xff]
    %v114 = vld [vmem:[%s0 + $0x198] sm:$0xff]
    %v115 = vld [vmem:[%s0 + $0x1a0] sm:$0xff]
    %v116 = vld [vmem:[%s0 + $0x1a8] sm:$0xff]
    %v117 = vld [vmem:[%s0 + $0x1b0] sm:$0xff]
    %v118 = vld [vmem:[%s0 + $0x1b8] sm:$0xff]
    %v119 = vld [vmem:[%s0 + $0x1c0] sm:$0xff]
    %v120 = vld [vmem:[%s0 + $0x1c8] sm:$0xff]
    %v121 = vld [vmem:[%s0 + $0x1d0] sm:$0xff]
    %v122 = vld [vmem:[%s0 + $0x1d8] sm:$0xff]
    %v123 = vld [vmem:[%s0 + $0x1e0] sm:$0xff]
    %v124 = vld [vmem:[%s0 + $0x1e8] sm:$0xff]
    %v125 = vld [vmem:[%s0 + $0x1f0] sm:$0xff]
    %v126 = vld [vmem:[%s0 + $0x1f8] sm:$0xff]
    %v191 = vrot.slane %v63, 2
    %v192 = vrot.slane %v63, 4
    %v193 = vrot.slane %v63, 6
    %v194 = vrot.slane %v64, 2
    %v195 = vrot.slane %v64, 4
    %v196 = vrot.slane %v64, 6
    %v197 = vrot.slane %v65, 2
    %v198 = vrot.slane %v65, 4
    %v199 = vrot.slane %v65, 6
    %v200 = vrot.slane %v66, 2
    %v201 = vrot.slane %v66, 4
    %v202 = vrot.slane %v66, 6
    %v203 = vrot.slane %v67, 2
    %v204 = vrot.slane %v67, 4
    %v205 = vrot.slane %v67, 6
    %v206 = vrot.slane %v68, 2
    %v207 = vrot.slane %v68, 4
    %v208 = vrot.slane %v68, 6
    %v209 = vrot.slane %v69, 2
    %v210 = vrot.slane %v69, 4
    %v211 = vrot.slane %v69, 6
    %v212 = vrot.slane %v70, 2
    %v213 = vrot.slane %v70, 4
    %v214 = vrot.slane %v70, 6
    %v215 = vrot.slane %v71, 2
    %v216 = vrot.slane %v71, 4
    %v217 = vrot.slane %v71, 6
    %v218 = vrot.slane %v72, 2
    %v219 = vrot.slane %v72, 4
    %v220 = vrot.slane %v72, 6
    %v221 = vrot.slane %v73, 2
    %v222 = vrot.slane %v73, 4
    %v223 = vrot.slane %v73, 6
    %v224 = vrot.slane %v74, 2
    %v225 = vrot.slane %v74, 4
    %v226 = vrot.slane %v74, 6
    %v227 = vrot.slane %v75, 2
    %v228 = vrot.slane %v75, 4
    %v229 = vrot.slane %v75, 6
    %v230 = vrot.slane %v76, 2
    %v231 = vrot.slane %v76, 4
    %v232 = vrot.slane %v76, 6
    %v233 = vrot.slane %v77, 2
    %v234 = vrot.slane %v77, 4
    %v235 = vrot.slane %v77, 6
    %v236 = vrot.slane %v78, 2
    %v237 = vrot.slane %v78, 4
    %v238 = vrot.slane %v78, 6
    %v239 = vrot.slane %v79, 2
    %v240 = vrot.slane %v79, 4
    %v241 = vrot.slane %v79, 6
    %v242 = vrot.slane %v80, 2
    %v243 = vrot.slane %v80, 4
    %v244 = vrot.slane %v80, 6
    %v245 = vrot.slane %v81, 2
    %v246 = vrot.slane %v81, 4
    %v247 = vrot.slane %v81, 6
    %v248 = vrot.slane %v82, 2
    %v249 = vrot.slane %v82, 4
    %v250 = vrot.slane %v82, 6
    %v251 = vrot.slane %v83, 2
    %v252 = vrot.slane %v83, 4
    %v253 = vrot.slane %v83, 6
    %v254 = vrot.slane %v84, 2
    %v255 = vrot.slane %v84, 4
    %v256 = vrot.slane %v84, 6
    %v257 = vrot.slane %v85, 2
    %v258 = vrot.slane %v85, 4
    %v259 = vrot.slane %v85, 6
    %v260 = vrot.slane %v86, 2
    %v261 = vrot.slane %v86, 4
    %v262 = vrot.slane %v86, 6
    %v263 = vrot.slane %v87, 2
    %v264 = vrot.slane %v87, 4
    %v265 = vrot.slane %v87, 6
    %v266 = vrot.slane %v88, 2
    %v267 = vrot.slane %v88, 4
    %v268 = vrot.slane %v88, 6
    %v269 = vrot.slane %v89, 2
    %v270 = vrot.slane %v89, 4
    %v271 = vrot.slane %v89, 6
    %v272 = vrot.slane %v90, 2
    %v273 = vrot.slane %v90, 4
    %v274 = vrot.slane %v90, 6
    %v275 = vrot.slane %v91, 2
    %v276 = vrot.slane %v91, 4
    %v277 = vrot.slane %v91, 6
    %v278 = vrot.slane %v92, 2
    %v279 = vrot.slane %v92, 4
    %v280 = vrot.slane %v92, 6
    %v281 = vrot.slane %v93, 2
    %v282 = vrot.slane %v93, 4
    %v283 = vrot.slane %v93, 6
    %v284 = vrot.slane %v94, 2
    %v285 = vrot.slane %v94, 4
    %v286 = vrot.slane %v94, 6
    %v287 = vrot.slane %v95, 2
    %v288 = vrot.slane %v95, 4
    %v289 = vrot.slane %v95, 6
    %v290 = vrot.slane %v96, 2
    %v291 = vrot.slane %v96, 4
    %v292 = vrot.slane %v96, 6
    %v293 = vrot.slane %v97, 2
    %v294 = vrot.slane %v97, 4
    %v295 = vrot.slane %v97, 6
    %v296 = vrot.slane %v98, 2
    %v297 = vrot.slane %v98, 4
    %v298 = vrot.slane %v98, 6
    %v299 = vrot.slane %v99, 2
    %v300 = vrot.slane %v99, 4
    %v301 = vrot.slane %v99, 6
    %v302 = vrot.slane %v100, 2
    %v303 = vrot.slane %v100, 4
    %v304 = vrot.slane %v100, 6
    %v305 = vrot.slane %v101, 2
    %v306 = vrot.slane %v101, 4
    %v307 = vrot.slane %v101, 6
    %v308 = vrot.slane %v102, 2
    %v309 = vrot.slane %v102, 4
    %v310 = vrot.slane %v102, 6
    %v311 = vrot.slane %v103, 2
    %v312 = vrot.slane %v103, 4
    %v313 = vrot.slane %v103, 6
    %v314 = vrot.slane %v104, 2
    %v315 = vrot.slane %v104, 4
    %v316 = vrot.slane %v104, 6
    %v317 = vrot.slane %v105, 2
    %v318 = vrot.slane %v105, 4
    %v319 = vrot.slane %v105, 6
    %v320 = vrot.slane %v106, 2
    %v321 = vrot.slane %v106, 4
    %v322 = vrot.slane %v106, 6
    %v323 = vrot.slane %v107, 2
    %v324 = vrot.slane %v107, 4
    %v325 = vrot.slane %v107, 6
    %v326 = vrot.slane %v108, 2
    %v327 = vrot.slane %v108, 4
    %v328 = vrot.slane %v108, 6
    %v329 = vrot.slane %v109, 2
    %v330 = vrot.slane %v109, 4
    %v331 = vrot.slane %v109, 6
    %v332 = vrot.slane %v110, 2
    %v333 = vrot.slane %v110, 4
    %v334 = vrot.slane %v110, 6
    %v335 = vrot.slane %v111, 2
    %v336 = vrot.slane %v111, 4
    %v337 = vrot.slane %v111, 6
    %v338 = vrot.slane %v112, 2
    %v339 = vrot.slane %v112, 4
    %v340 = vrot.slane %v112, 6
    %v341 = vrot.slane %v113, 2
    %v342 = vrot.slane %v113, 4
    %v343 = vrot.slane %v113, 6
    %v344 = vrot.slane %v114, 2
    %v345 = vrot.slane %v114, 4
    %v346 = vrot.slane %v114, 6
    %v347 = vrot.slane %v115, 2
    %v348 = vrot.slane %v115, 4
    %v349 = vrot.slane %v115, 6
    %v350 = vrot.slane %v116, 2
    %v351 = vrot.slane %v116, 4
    %v352 = vrot.slane %v116, 6
    %v353 = vrot.slane %v117, 2
    %v354 = vrot.slane %v117, 4
    %v355 = vrot.slane %v117, 6
    %v356 = vrot.slane %v118, 2
    %v357 = vrot.slane %v118, 4
    %v358 = vrot.slane %v118, 6
    %v359 = vrot.slane %v119, 2
    %v360 = vrot.slane %v119, 4
    %v361 = vrot.slane %v119, 6
    %v362 = vrot.slane %v120, 2
    %v363 = vrot.slane %v120, 4
    %v364 = vrot.slane %v120, 6
    %v365 = vrot.slane %v121, 2
    %v366 = vrot.slane %v121, 4
    %v367 = vrot.slane %v121, 6
    %v368 = vrot.slane %v122, 2
    %v369 = vrot.slane %v122, 4
    %v370 = vrot.slane %v122, 6
    %v371 = vrot.slane %v123, 2
    %v372 = vrot.slane %v123, 4
    %v373 = vrot.slane %v123, 6
    %v374 = vrot.slane %v124, 2
    %v375 = vrot.slane %v124, 4
    %v376 = vrot.slane %v124, 6
    %v377 = vrot.slane %v125, 2
    %v378 = vrot.slane %v125, 4
    %v379 = vrot.slane %v125, 6
    %v380 = vrot.slane %v126, 2
    %v381 = vrot.slane %v126, 4
    %v382 = vrot.slane %v126, 6
    %vm575 = vcmask 1041408
    %v576 = vsel %vm575, %v63, -inf
    %v577 = vrot.slane %v576, 4
    %v578 = vmax.f32 %v576, %v577
    %v579 = vrot.slane %v578, 2
    %v580 = vmax.f32 %v578, %v579
    %v581 = vrot.slane %v580, 1
    %v582 = vmax.f32 %v580, %v581
    %v583 = vsel %vm575, %v191, -inf
    %v584 = vrot.slane %v583, 4
    %v585 = vmax.f32 %v583, %v584
    %v586 = vrot.slane %v585, 2
    %v587 = vmax.f32 %v585, %v586
    %v588 = vrot.slane %v587, 1
    %v589 = vmax.f32 %v587, %v588
    %v590 = vsel %vm575, %v192, -inf
    %v591 = vrot.slane %v590, 4
    %v592 = vmax.f32 %v590, %v591
    %v593 = vrot.slane %v592, 2
    %v594 = vmax.f32 %v592, %v593
    %v595 = vrot.slane %v594, 1
    %v596 = vmax.f32 %v594, %v595
    %v597 = vsel %vm575, %v193, -inf
    %v598 = vrot.slane %v597, 4
    %v599 = vmax.f32 %v597, %v598
    %v600 = vrot.slane %v599, 2
    %v601 = vmax.f32 %v599, %v600
    %v602 = vrot.slane %v601, 1
    %v603 = vmax.f32 %v601, %v602
    %v604 = vsel %vm575, %v64, -inf
    %v605 = vrot.slane %v604, 4
    %v606 = vmax.f32 %v604, %v605
    %v607 = vrot.slane %v606, 2
    %v608 = vmax.f32 %v606, %v607
    %v609 = vrot.slane %v608, 1
    %v610 = vmax.f32 %v608, %v609
    %v611 = vsel %vm575, %v194, -inf
    %v612 = vrot.slane %v611, 4
    %v613 = vmax.f32 %v611, %v612
    %v614 = vrot.slane %v613, 2
    %v615 = vmax.f32 %v613, %v614
    %v616 = vrot.slane %v615, 1
    %v617 = vmax.f32 %v615, %v616
    %v618 = vsel %vm575, %v195, -inf
    %v619 = vrot.slane %v618, 4
    %v620 = vmax.f32 %v618, %v619
    %v621 = vrot.slane %v620, 2
    %v622 = vmax.f32 %v620, %v621
    %v623 = vrot.slane %v622, 1
    %v624 = vmax.f32 %v622, %v623
    %v625 = vsel %vm575, %v196, -inf
    %v626 = vrot.slane %v625, 4
    %v627 = vmax.f32 %v625, %v626
    %v628 = vrot.slane %v627, 2
    %v629 = vmax.f32 %v627, %v628
    %v630 = vrot.slane %v629, 1
    %v631 = vmax.f32 %v629, %v630
    %v632 = vsel %vm575, %v65, -inf
    %v633 = vrot.slane %v632, 4
    %v634 = vmax.f32 %v632, %v633
    %v635 = vrot.slane %v634, 2
    %v636 = vmax.f32 %v634, %v635
    %v637 = vrot.slane %v636, 1
    %v638 = vmax.f32 %v636, %v637
    %v639 = vsel %vm575, %v197, -inf
    %v640 = vrot.slane %v639, 4
    %v641 = vmax.f32 %v639, %v640
    %v642 = vrot.slane %v641, 2
    %v643 = vmax.f32 %v641, %v642
    %v644 = vrot.slane %v643, 1
    %v645 = vmax.f32 %v643, %v644
    %v646 = vsel %vm575, %v198, -inf
    %v647 = vrot.slane %v646, 4
    %v648 = vmax.f32 %v646, %v647
    %v649 = vrot.slane %v648, 2
    %v650 = vmax.f32 %v648, %v649
    %v651 = vrot.slane %v650, 1
    %v652 = vmax.f32 %v650, %v651
    %v653 = vsel %vm575, %v199, -inf
    %v654 = vrot.slane %v653, 4
    %v655 = vmax.f32 %v653, %v654
    %v656 = vrot.slane %v655, 2
    %v657 = vmax.f32 %v655, %v656
    %v658 = vrot.slane %v657, 1
    %v659 = vmax.f32 %v657, %v658
    %v660 = vsel %vm575, %v66, -inf
    %v661 = vrot.slane %v660, 4
    %v662 = vmax.f32 %v660, %v661
    %v663 = vrot.slane %v662, 2
    %v664 = vmax.f32 %v662, %v663
    %v665 = vrot.slane %v664, 1
    %v666 = vmax.f32 %v664, %v665
    %v667 = vsel %vm575, %v200, -inf
    %v668 = vrot.slane %v667, 4
    %v669 = vmax.f32 %v667, %v668
    %v670 = vrot.slane %v669, 2
    %v671 = vmax.f32 %v669, %v670
    %v672 = vrot.slane %v671, 1
    %v673 = vmax.f32 %v671, %v672
    %v674 = vsel %vm575, %v201, -inf
    %v675 = vrot.slane %v674, 4
    %v676 = vmax.f32 %v674, %v675
    %v677 = vrot.slane %v676, 2
    %v678 = vmax.f32 %v676, %v677
    %v679 = vrot.slane %v678, 1
    %v680 = vmax.f32 %v678, %v679
    %v681 = vsel %vm575, %v202, -inf
    %v682 = vrot.slane %v681, 4
    %v683 = vmax.f32 %v681, %v682
    %v684 = vrot.slane %v683, 2
    %v685 = vmax.f32 %v683, %v684
    %v686 = vrot.slane %v685, 1
    %v687 = vmax.f32 %v685, %v686
    %v688 = vsel %vm575, %v67, -inf
    %v689 = vrot.slane %v688, 4
    %v690 = vmax.f32 %v688, %v689
    %v691 = vrot.slane %v690, 2
    %v692 = vmax.f32 %v690, %v691
    %v693 = vrot.slane %v692, 1
    %v694 = vmax.f32 %v692, %v693
    %v695 = vsel %vm575, %v203, -inf
    %v696 = vrot.slane %v695, 4
    %v697 = vmax.f32 %v695, %v696
    %v698 = vrot.slane %v697, 2
    %v699 = vmax.f32 %v697, %v698
    %v700 = vrot.slane %v699, 1
    %v701 = vmax.f32 %v699, %v700
    %v702 = vsel %vm575, %v204, -inf
    %v703 = vrot.slane %v702, 4
    %v704 = vmax.f32 %v702, %v703
    %v705 = vrot.slane %v704, 2
    %v706 = vmax.f32 %v704, %v705
    %v707 = vrot.slane %v706, 1
    %v708 = vmax.f32 %v706, %v707
    %v709 = vsel %vm575, %v205, -inf
    %v710 = vrot.slane %v709, 4
    %v711 = vmax.f32 %v709, %v710
    %v712 = vrot.slane %v711, 2
    %v713 = vmax.f32 %v711, %v712
    %v714 = vrot.slane %v713, 1
    %v715 = vmax.f32 %v713, %v714
    %v716 = vsel %vm575, %v68, -inf
    %v717 = vrot.slane %v716, 4
    %v718 = vmax.f32 %v716, %v717
    %v719 = vrot.slane %v718, 2
    %v720 = vmax.f32 %v718, %v719
    %v721 = vrot.slane %v720, 1
    %v722 = vmax.f32 %v720, %v721
    %v723 = vsel %vm575, %v206, -inf
    %v724 = vrot.slane %v723, 4
    %v725 = vmax.f32 %v723, %v724
    %v726 = vrot.slane %v725, 2
    %v727 = vmax.f32 %v725, %v726
    %v728 = vrot.slane %v727, 1
    %v729 = vmax.f32 %v727, %v728
    %v730 = vsel %vm575, %v207, -inf
    %v731 = vrot.slane %v730, 4
    %v732 = vmax.f32 %v730, %v731
    %v733 = vrot.slane %v732, 2
    %v734 = vmax.f32 %v732, %v733
    %v735 = vrot.slane %v734, 1
    %v736 = vmax.f32 %v734, %v735
    %v737 = vsel %vm575, %v208, -inf
    %v738 = vrot.slane %v737, 4
    %v739 = vmax.f32 %v737, %v738
    %v740 = vrot.slane %v739, 2
    %v741 = vmax.f32 %v739, %v740
    %v742 = vrot.slane %v741, 1
    %v743 = vmax.f32 %v741, %v742
    %v744 = vsel %vm575, %v69, -inf
    %v745 = vrot.slane %v744, 4
    %v746 = vmax.f32 %v744, %v745
    %v747 = vrot.slane %v746, 2
    %v748 = vmax.f32 %v746, %v747
    %v749 = vrot.slane %v748, 1
    %v750 = vmax.f32 %v748, %v749
    %v751 = vsel %vm575, %v209, -inf
    %v752 = vrot.slane %v751, 4
    %v753 = vmax.f32 %v751, %v752
    %v754 = vrot.slane %v753, 2
    %v755 = vmax.f32 %v753, %v754
    %v756 = vrot.slane %v755, 1
    %v757 = vmax.f32 %v755, %v756
    %v758 = vsel %vm575, %v210, -inf
    %v759 = vrot.slane %v758, 4
    %v760 = vmax.f32 %v758, %v759
    %v761 = vrot.slane %v760, 2
    %v762 = vmax.f32 %v760, %v761
    %v763 = vrot.slane %v762, 1
    %v764 = vmax.f32 %v762, %v763
    %v765 = vsel %vm575, %v211, -inf
    %v766 = vrot.slane %v765, 4
    %v767 = vmax.f32 %v765, %v766
    %v768 = vrot.slane %v767, 2
    %v769 = vmax.f32 %v767, %v768
    %v770 = vrot.slane %v769, 1
    %v771 = vmax.f32 %v769, %v770
    %v772 = vsel %vm575, %v70, -inf
    %v773 = vrot.slane %v772, 4
    %v774 = vmax.f32 %v772, %v773
    %v775 = vrot.slane %v774, 2
    %v776 = vmax.f32 %v774, %v775
    %v777 = vrot.slane %v776, 1
    %v778 = vmax.f32 %v776, %v777
    %v779 = vsel %vm575, %v212, -inf
    %v780 = vrot.slane %v779, 4
    %v781 = vmax.f32 %v779, %v780
    %v782 = vrot.slane %v781, 2
    %v783 = vmax.f32 %v781, %v782
    %v784 = vrot.slane %v783, 1
    %v785 = vmax.f32 %v783, %v784
    %v786 = vsel %vm575, %v213, -inf
    %v787 = vrot.slane %v786, 4
    %v788 = vmax.f32 %v786, %v787
    %v789 = vrot.slane %v788, 2
    %v790 = vmax.f32 %v788, %v789
    %v791 = vrot.slane %v790, 1
    %v792 = vmax.f32 %v790, %v791
    %v793 = vsel %vm575, %v214, -inf
    %v794 = vrot.slane %v793, 4
    %v795 = vmax.f32 %v793, %v794
    %v796 = vrot.slane %v795, 2
    %v797 = vmax.f32 %v795, %v796
    %v798 = vrot.slane %v797, 1
    %v799 = vmax.f32 %v797, %v798
    %v800 = vsel %vm575, %v71, -inf
    %v801 = vrot.slane %v800, 4
    %v802 = vmax.f32 %v800, %v801
    %v803 = vrot.slane %v802, 2
    %v804 = vmax.f32 %v802, %v803
    %v805 = vrot.slane %v804, 1
    %v806 = vmax.f32 %v804, %v805
    %v807 = vsel %vm575, %v215, -inf
    %v808 = vrot.slane %v807, 4
    %v809 = vmax.f32 %v807, %v808
    %v810 = vrot.slane %v809, 2
    %v811 = vmax.f32 %v809, %v810
    %v812 = vrot.slane %v811, 1
    %v813 = vmax.f32 %v811, %v812
    %v814 = vsel %vm575, %v216, -inf
    %v815 = vrot.slane %v814, 4
    %v816 = vmax.f32 %v814, %v815
    %v817 = vrot.slane %v816, 2
    %v818 = vmax.f32 %v816, %v817
    %v819 = vrot.slane %v818, 1
    %v820 = vmax.f32 %v818, %v819
    %v821 = vsel %vm575, %v217, -inf
    %v822 = vrot.slane %v821, 4
    %v823 = vmax.f32 %v821, %v822
    %v824 = vrot.slane %v823, 2
    %v825 = vmax.f32 %v823, %v824
    %v826 = vrot.slane %v825, 1
    %v827 = vmax.f32 %v825, %v826
    %v828 = vsel %vm575, %v72, -inf
    %v829 = vrot.slane %v828, 4
    %v830 = vmax.f32 %v828, %v829
    %v831 = vrot.slane %v830, 2
    %v832 = vmax.f32 %v830, %v831
    %v833 = vrot.slane %v832, 1
    %v834 = vmax.f32 %v832, %v833
    %v835 = vsel %vm575, %v218, -inf
    %v836 = vrot.slane %v835, 4
    %v837 = vmax.f32 %v835, %v836
    %v838 = vrot.slane %v837, 2
    %v839 = vmax.f32 %v837, %v838
    %v840 = vrot.slane %v839, 1
    %v841 = vmax.f32 %v839, %v840
    %v842 = vsel %vm575, %v219, -inf
    %v843 = vrot.slane %v842, 4
    %v844 = vmax.f32 %v842, %v843
    %v845 = vrot.slane %v844, 2
    %v846 = vmax.f32 %v844, %v845
    %v847 = vrot.slane %v846, 1
    %v848 = vmax.f32 %v846, %v847
    %v849 = vsel %vm575, %v220, -inf
    %v850 = vrot.slane %v849, 4
    %v851 = vmax.f32 %v849, %v850
    %v852 = vrot.slane %v851, 2
    %v853 = vmax.f32 %v851, %v852
    %v854 = vrot.slane %v853, 1
    %v855 = vmax.f32 %v853, %v854
    %v856 = vsel %vm575, %v73, -inf
    %v857 = vrot.slane %v856, 4
    %v858 = vmax.f32 %v856, %v857
    %v859 = vrot.slane %v858, 2
    %v860 = vmax.f32 %v858, %v859
    %v861 = vrot.slane %v860, 1
    %v862 = vmax.f32 %v860, %v861
    %v863 = vsel %vm575, %v221, -inf
    %v864 = vrot.slane %v863, 4
    %v865 = vmax.f32 %v863, %v864
    %v866 = vrot.slane %v865, 2
    %v867 = vmax.f32 %v865, %v866
    %v868 = vrot.slane %v867, 1
    %v869 = vmax.f32 %v867, %v868
    %v870 = vsel %vm575, %v222, -inf
    %v871 = vrot.slane %v870, 4
    %v872 = vmax.f32 %v870, %v871
    %v873 = vrot.slane %v872, 2
    %v874 = vmax.f32 %v872, %v873
    %v875 = vrot.slane %v874, 1
    %v876 = vmax.f32 %v874, %v875
    %v877 = vsel %vm575, %v223, -inf
    %v878 = vrot.slane %v877, 4
    %v879 = vmax.f32 %v877, %v878
    %v880 = vrot.slane %v879, 2
    %v881 = vmax.f32 %v879, %v880
    %v882 = vrot.slane %v881, 1
    %v883 = vmax.f32 %v881, %v882
    %v884 = vsel %vm575, %v74, -inf
    %v885 = vrot.slane %v884, 4
    %v886 = vmax.f32 %v884, %v885
    %v887 = vrot.slane %v886, 2
    %v888 = vmax.f32 %v886, %v887
    %v889 = vrot.slane %v888, 1
    %v890 = vmax.f32 %v888, %v889
    %v891 = vsel %vm575, %v224, -inf
    %v892 = vrot.slane %v891, 4
    %v893 = vmax.f32 %v891, %v892
    %v894 = vrot.slane %v893, 2
    %v895 = vmax.f32 %v893, %v894
    %v896 = vrot.slane %v895, 1
    %v897 = vmax.f32 %v895, %v896
    %v898 = vsel %vm575, %v225, -inf
    %v899 = vrot.slane %v898, 4
    %v900 = vmax.f32 %v898, %v899
    %v901 = vrot.slane %v900, 2
    %v902 = vmax.f32 %v900, %v901
    %v903 = vrot.slane %v902, 1
    %v904 = vmax.f32 %v902, %v903
    %v905 = vsel %vm575, %v226, -inf
    %v906 = vrot.slane %v905, 4
    %v907 = vmax.f32 %v905, %v906
    %v908 = vrot.slane %v907, 2
    %v909 = vmax.f32 %v907, %v908
    %v910 = vrot.slane %v909, 1
    %v911 = vmax.f32 %v909, %v910
    %v912 = vsel %vm575, %v75, -inf
    %v913 = vrot.slane %v912, 4
    %v914 = vmax.f32 %v912, %v913
    %v915 = vrot.slane %v914, 2
    %v916 = vmax.f32 %v914, %v915
    %v917 = vrot.slane %v916, 1
    %v918 = vmax.f32 %v916, %v917
    %v919 = vsel %vm575, %v227, -inf
    %v920 = vrot.slane %v919, 4
    %v921 = vmax.f32 %v919, %v920
    %v922 = vrot.slane %v921, 2
    %v923 = vmax.f32 %v921, %v922
    %v924 = vrot.slane %v923, 1
    %v925 = vmax.f32 %v923, %v924
    %v926 = vsel %vm575, %v228, -inf
    %v927 = vrot.slane %v926, 4
    %v928 = vmax.f32 %v926, %v927
    %v929 = vrot.slane %v928, 2
    %v930 = vmax.f32 %v928, %v929
    %v931 = vrot.slane %v930, 1
    %v932 = vmax.f32 %v930, %v931
    %v933 = vsel %vm575, %v229, -inf
    %v934 = vrot.slane %v933, 4
    %v935 = vmax.f32 %v933, %v934
    %v936 = vrot.slane %v935, 2
    %v937 = vmax.f32 %v935, %v936
    %v938 = vrot.slane %v937, 1
    %v939 = vmax.f32 %v937, %v938
    %v940 = vsel %vm575, %v76, -inf
    %v941 = vrot.slane %v940, 4
    %v942 = vmax.f32 %v940, %v941
    %v943 = vrot.slane %v942, 2
    %v944 = vmax.f32 %v942, %v943
    %v945 = vrot.slane %v944, 1
    %v946 = vmax.f32 %v944, %v945
    %v947 = vsel %vm575, %v230, -inf
    %v948 = vrot.slane %v947, 4
    %v949 = vmax.f32 %v947, %v948
    %v950 = vrot.slane %v949, 2
    %v951 = vmax.f32 %v949, %v950
    %v952 = vrot.slane %v951, 1
    %v953 = vmax.f32 %v951, %v952
    %v954 = vsel %vm575, %v231, -inf
    %v955 = vrot.slane %v954, 4
    %v956 = vmax.f32 %v954, %v955
    %v957 = vrot.slane %v956, 2
    %v958 = vmax.f32 %v956, %v957
    %v959 = vrot.slane %v958, 1
    %v960 = vmax.f32 %v958, %v959
    %v961 = vsel %vm575, %v232, -inf
    %v962 = vrot.slane %v961, 4
    %v963 = vmax.f32 %v961, %v962
    %v964 = vrot.slane %v963, 2
    %v965 = vmax.f32 %v963, %v964
    %v966 = vrot.slane %v965, 1
    %v967 = vmax.f32 %v965, %v966
    %v968 = vsel %vm575, %v77, -inf
    %v969 = vrot.slane %v968, 4
    %v970 = vmax.f32 %v968, %v969
    %v971 = vrot.slane %v970, 2
    %v972 = vmax.f32 %v970, %v971
    %v973 = vrot.slane %v972, 1
    %v974 = vmax.f32 %v972, %v973
    %v975 = vsel %vm575, %v233, -inf
    %v976 = vrot.slane %v975, 4
    %v977 = vmax.f32 %v975, %v976
    %v978 = vrot.slane %v977, 2
    %v979 = vmax.f32 %v977, %v978
    %v980 = vrot.slane %v979, 1
    %v981 = vmax.f32 %v979, %v980
    %v982 = vsel %vm575, %v234, -inf
    %v983 = vrot.slane %v982, 4
    %v984 = vmax.f32 %v982, %v983
    %v985 = vrot.slane %v984, 2
    %v986 = vmax.f32 %v984, %v985
    %v987 = vrot.slane %v986, 1
    %v988 = vmax.f32 %v986, %v987
    %v989 = vsel %vm575, %v235, -inf
    %v990 = vrot.slane %v989, 4
    %v991 = vmax.f32 %v989, %v990
    %v992 = vrot.slane %v991, 2
    %v993 = vmax.f32 %v991, %v992
    %v994 = vrot.slane %v993, 1
    %v995 = vmax.f32 %v993, %v994
    %v996 = vsel %vm575, %v78, -inf
    %v997 = vrot.slane %v996, 4
    %v998 = vmax.f32 %v996, %v997
    %v999 = vrot.slane %v998, 2
    %v1000 = vmax.f32 %v998, %v999
    %v1001 = vrot.slane %v1000, 1
    %v1002 = vmax.f32 %v1000, %v1001
    %v1003 = vsel %vm575, %v236, -inf
    %v1004 = vrot.slane %v1003, 4
    %v1005 = vmax.f32 %v1003, %v1004
    %v1006 = vrot.slane %v1005, 2
    %v1007 = vmax.f32 %v1005, %v1006
    %v1008 = vrot.slane %v1007, 1
    %v1009 = vmax.f32 %v1007, %v1008
    %v1010 = vsel %vm575, %v237, -inf
    %v1011 = vrot.slane %v1010, 4
    %v1012 = vmax.f32 %v1010, %v1011
    %v1013 = vrot.slane %v1012, 2
    %v1014 = vmax.f32 %v1012, %v1013
    %v1015 = vrot.slane %v1014, 1
    %v1016 = vmax.f32 %v1014, %v1015
    %v1017 = vsel %vm575, %v238, -inf
    %v1018 = vrot.slane %v1017, 4
    %v1019 = vmax.f32 %v1017, %v1018
    %v1020 = vrot.slane %v1019, 2
    %v1021 = vmax.f32 %v1019, %v1020
    %v1022 = vrot.slane %v1021, 1
    %v1023 = vmax.f32 %v1021, %v1022
    %v1024 = vsel %vm575, %v79, -inf
    %v1025 = vrot.slane %v1024, 4
    %v1026 = vmax.f32 %v1024, %v1025
    %v1027 = vrot.slane %v1026, 2
    %v1028 = vmax.f32 %v1026, %v1027
    %v1029 = vrot.slane %v1028, 1
    %v1030 = vmax.f32 %v1028, %v1029
    %v1031 = vsel %vm575, %v239, -inf
    %v1032 = vrot.slane %v1031, 4
    %v1033 = vmax.f32 %v1031, %v1032
    %v1034 = vrot.slane %v1033, 2
    %v1035 = vmax.f32 %v1033, %v1034
    %v1036 = vrot.slane %v1035, 1
    %v1037 = vmax.f32 %v1035, %v1036
    %v1038 = vsel %vm575, %v240, -inf
    %v1039 = vrot.slane %v1038, 4
    %v1040 = vmax.f32 %v1038, %v1039
    %v1041 = vrot.slane %v1040, 2
    %v1042 = vmax.f32 %v1040, %v1041
    %v1043 = vrot.slane %v1042, 1
    %v1044 = vmax.f32 %v1042, %v1043
    %v1045 = vsel %vm575, %v241, -inf
    %v1046 = vrot.slane %v1045, 4
    %v1047 = vmax.f32 %v1045, %v1046
    %v1048 = vrot.slane %v1047, 2
    %v1049 = vmax.f32 %v1047, %v1048
    %v1050 = vrot.slane %v1049, 1
    %v1051 = vmax.f32 %v1049, %v1050
    %v1052 = vsel %vm575, %v80, -inf
    %v1053 = vrot.slane %v1052, 4
    %v1054 = vmax.f32 %v1052, %v1053
    %v1055 = vrot.slane %v1054, 2
    %v1056 = vmax.f32 %v1054, %v1055
    %v1057 = vrot.slane %v1056, 1
    %v1058 = vmax.f32 %v1056, %v1057
    %v1059 = vsel %vm575, %v242, -inf
    %v1060 = vrot.slane %v1059, 4
    %v1061 = vmax.f32 %v1059, %v1060
    %v1062 = vrot.slane %v1061, 2
    %v1063 = vmax.f32 %v1061, %v1062
    %v1064 = vrot.slane %v1063, 1
    %v1065 = vmax.f32 %v1063, %v1064
    %v1066 = vsel %vm575, %v243, -inf
    %v1067 = vrot.slane %v1066, 4
    %v1068 = vmax.f32 %v1066, %v1067
    %v1069 = vrot.slane %v1068, 2
    %v1070 = vmax.f32 %v1068, %v1069
    %v1071 = vrot.slane %v1070, 1
    %v1072 = vmax.f32 %v1070, %v1071
    %v1073 = vsel %vm575, %v244, -inf
    %v1074 = vrot.slane %v1073, 4
    %v1075 = vmax.f32 %v1073, %v1074
    %v1076 = vrot.slane %v1075, 2
    %v1077 = vmax.f32 %v1075, %v1076
    %v1078 = vrot.slane %v1077, 1
    %v1079 = vmax.f32 %v1077, %v1078
    %v1080 = vsel %vm575, %v81, -inf
    %v1081 = vrot.slane %v1080, 4
    %v1082 = vmax.f32 %v1080, %v1081
    %v1083 = vrot.slane %v1082, 2
    %v1084 = vmax.f32 %v1082, %v1083
    %v1085 = vrot.slane %v1084, 1
    %v1086 = vmax.f32 %v1084, %v1085
    %v1087 = vsel %vm575, %v245, -inf
    %v1088 = vrot.slane %v1087, 4
    %v1089 = vmax.f32 %v1087, %v1088
    %v1090 = vrot.slane %v1089, 2
    %v1091 = vmax.f32 %v1089, %v1090
    %v1092 = vrot.slane %v1091, 1
    %v1093 = vmax.f32 %v1091, %v1092
    %v1094 = vsel %vm575, %v246, -inf
    %v1095 = vrot.slane %v1094, 4
    %v1096 = vmax.f32 %v1094, %v1095
    %v1097 = vrot.slane %v1096, 2
    %v1098 = vmax.f32 %v1096, %v1097
    %v1099 = vrot.slane %v1098, 1
    %v1100 = vmax.f32 %v1098, %v1099
    %v1101 = vsel %vm575, %v247, -inf
    %v1102 = vrot.slane %v1101, 4
    %v1103 = vmax.f32 %v1101, %v1102
    %v1104 = vrot.slane %v1103, 2
    %v1105 = vmax.f32 %v1103, %v1104
    %v1106 = vrot.slane %v1105, 1
    %v1107 = vmax.f32 %v1105, %v1106
    %v1108 = vsel %vm575, %v82, -inf
    %v1109 = vrot.slane %v1108, 4
    %v1110 = vmax.f32 %v1108, %v1109
    %v1111 = vrot.slane %v1110, 2
    %v1112 = vmax.f32 %v1110, %v1111
    %v1113 = vrot.slane %v1112, 1
    %v1114 = vmax.f32 %v1112, %v1113
    %v1115 = vsel %vm575, %v248, -inf
    %v1116 = vrot.slane %v1115, 4
    %v1117 = vmax.f32 %v1115, %v1116
    %v1118 = vrot.slane %v1117, 2
    %v1119 = vmax.f32 %v1117, %v1118
    %v1120 = vrot.slane %v1119, 1
    %v1121 = vmax.f32 %v1119, %v1120
    %v1122 = vsel %vm575, %v249, -inf
    %v1123 = vrot.slane %v1122, 4
    %v1124 = vmax.f32 %v1122, %v1123
    %v1125 = vrot.slane %v1124, 2
    %v1126 = vmax.f32 %v1124, %v1125
    %v1127 = vrot.slane %v1126, 1
    %v1128 = vmax.f32 %v1126, %v1127
    %v1129 = vsel %vm575, %v250, -inf
    %v1130 = vrot.slane %v1129, 4
    %v1131 = vmax.f32 %v1129, %v1130
    %v1132 = vrot.slane %v1131, 2
    %v1133 = vmax.f32 %v1131, %v1132
    %v1134 = vrot.slane %v1133, 1
    %v1135 = vmax.f32 %v1133, %v1134
    %v1136 = vsel %vm575, %v83, -inf
    %v1137 = vrot.slane %v1136, 4
    %v1138 = vmax.f32 %v1136, %v1137
    %v1139 = vrot.slane %v1138, 2
    %v1140 = vmax.f32 %v1138, %v1139
    %v1141 = vrot.slane %v1140, 1
    %v1142 = vmax.f32 %v1140, %v1141
    %v1143 = vsel %vm575, %v251, -inf
    %v1144 = vrot.slane %v1143, 4
    %v1145 = vmax.f32 %v1143, %v1144
    %v1146 = vrot.slane %v1145, 2
    %v1147 = vmax.f32 %v1145, %v1146
    %v1148 = vrot.slane %v1147, 1
    %v1149 = vmax.f32 %v1147, %v1148
    %v1150 = vsel %vm575, %v252, -inf
    %v1151 = vrot.slane %v1150, 4
    %v1152 = vmax.f32 %v1150, %v1151
    %v1153 = vrot.slane %v1152, 2
    %v1154 = vmax.f32 %v1152, %v1153
    %v1155 = vrot.slane %v1154, 1
    %v1156 = vmax.f32 %v1154, %v1155
    %v1157 = vsel %vm575, %v253, -inf
    %v1158 = vrot.slane %v1157, 4
    %v1159 = vmax.f32 %v1157, %v1158
    %v1160 = vrot.slane %v1159, 2
    %v1161 = vmax.f32 %v1159, %v1160
    %v1162 = vrot.slane %v1161, 1
    %v1163 = vmax.f32 %v1161, %v1162
    %v1164 = vsel %vm575, %v84, -inf
    %v1165 = vrot.slane %v1164, 4
    %v1166 = vmax.f32 %v1164, %v1165
    %v1167 = vrot.slane %v1166, 2
    %v1168 = vmax.f32 %v1166, %v1167
    %v1169 = vrot.slane %v1168, 1
    %v1170 = vmax.f32 %v1168, %v1169
    %v1171 = vsel %vm575, %v254, -inf
    %v1172 = vrot.slane %v1171, 4
    %v1173 = vmax.f32 %v1171, %v1172
    %v1174 = vrot.slane %v1173, 2
    %v1175 = vmax.f32 %v1173, %v1174
    %v1176 = vrot.slane %v1175, 1
    %v1177 = vmax.f32 %v1175, %v1176
    %v1178 = vsel %vm575, %v255, -inf
    %v1179 = vrot.slane %v1178, 4
    %v1180 = vmax.f32 %v1178, %v1179
    %v1181 = vrot.slane %v1180, 2
    %v1182 = vmax.f32 %v1180, %v1181
    %v1183 = vrot.slane %v1182, 1
    %v1184 = vmax.f32 %v1182, %v1183
    %v1185 = vsel %vm575, %v256, -inf
    %v1186 = vrot.slane %v1185, 4
    %v1187 = vmax.f32 %v1185, %v1186
    %v1188 = vrot.slane %v1187, 2
    %v1189 = vmax.f32 %v1187, %v1188
    %v1190 = vrot.slane %v1189, 1
    %v1191 = vmax.f32 %v1189, %v1190
    %v1192 = vsel %vm575, %v85, -inf
    %v1193 = vrot.slane %v1192, 4
    %v1194 = vmax.f32 %v1192, %v1193
    %v1195 = vrot.slane %v1194, 2
    %v1196 = vmax.f32 %v1194, %v1195
    %v1197 = vrot.slane %v1196, 1
    %v1198 = vmax.f32 %v1196, %v1197
    %v1199 = vsel %vm575, %v257, -inf
    %v1200 = vrot.slane %v1199, 4
    %v1201 = vmax.f32 %v1199, %v1200
    %v1202 = vrot.slane %v1201, 2
    %v1203 = vmax.f32 %v1201, %v1202
    %v1204 = vrot.slane %v1203, 1
    %v1205 = vmax.f32 %v1203, %v1204
    %v1206 = vsel %vm575, %v258, -inf
    %v1207 = vrot.slane %v1206, 4
    %v1208 = vmax.f32 %v1206, %v1207
    %v1209 = vrot.slane %v1208, 2
    %v1210 = vmax.f32 %v1208, %v1209
    %v1211 = vrot.slane %v1210, 1
    %v1212 = vmax.f32 %v1210, %v1211
    %v1213 = vsel %vm575, %v259, -inf
    %v1214 = vrot.slane %v1213, 4
    %v1215 = vmax.f32 %v1213, %v1214
    %v1216 = vrot.slane %v1215, 2
    %v1217 = vmax.f32 %v1215, %v1216
    %v1218 = vrot.slane %v1217, 1
    %v1219 = vmax.f32 %v1217, %v1218
    %v1220 = vsel %vm575, %v86, -inf
    %v1221 = vrot.slane %v1220, 4
    %v1222 = vmax.f32 %v1220, %v1221
    %v1223 = vrot.slane %v1222, 2
    %v1224 = vmax.f32 %v1222, %v1223
    %v1225 = vrot.slane %v1224, 1
    %v1226 = vmax.f32 %v1224, %v1225
    %v1227 = vsel %vm575, %v260, -inf
    %v1228 = vrot.slane %v1227, 4
    %v1229 = vmax.f32 %v1227, %v1228
    %v1230 = vrot.slane %v1229, 2
    %v1231 = vmax.f32 %v1229, %v1230
    %v1232 = vrot.slane %v1231, 1
    %v1233 = vmax.f32 %v1231, %v1232
    %v1234 = vsel %vm575, %v261, -inf
    %v1235 = vrot.slane %v1234, 4
    %v1236 = vmax.f32 %v1234, %v1235
    %v1237 = vrot.slane %v1236, 2
    %v1238 = vmax.f32 %v1236, %v1237
    %v1239 = vrot.slane %v1238, 1
    %v1240 = vmax.f32 %v1238, %v1239
    %v1241 = vsel %vm575, %v262, -inf
    %v1242 = vrot.slane %v1241, 4
    %v1243 = vmax.f32 %v1241, %v1242
    %v1244 = vrot.slane %v1243, 2
    %v1245 = vmax.f32 %v1243, %v1244
    %v1246 = vrot.slane %v1245, 1
    %v1247 = vmax.f32 %v1245, %v1246
    %v1248 = vsel %vm575, %v87, -inf
    %v1249 = vrot.slane %v1248, 4
    %v1250 = vmax.f32 %v1248, %v1249
    %v1251 = vrot.slane %v1250, 2
    %v1252 = vmax.f32 %v1250, %v1251
    %v1253 = vrot.slane %v1252, 1
    %v1254 = vmax.f32 %v1252, %v1253
    %v1255 = vsel %vm575, %v263, -inf
    %v1256 = vrot.slane %v1255, 4
    %v1257 = vmax.f32 %v1255, %v1256
    %v1258 = vrot.slane %v1257, 2
    %v1259 = vmax.f32 %v1257, %v1258
    %v1260 = vrot.slane %v1259, 1
    %v1261 = vmax.f32 %v1259, %v1260
    %v1262 = vsel %vm575, %v264, -inf
    %v1263 = vrot.slane %v1262, 4
    %v1264 = vmax.f32 %v1262, %v1263
    %v1265 = vrot.slane %v1264, 2
    %v1266 = vmax.f32 %v1264, %v1265
    %v1267 = vrot.slane %v1266, 1
    %v1268 = vmax.f32 %v1266, %v1267
    %v1269 = vsel %vm575, %v265, -inf
    %v1270 = vrot.slane %v1269, 4
    %v1271 = vmax.f32 %v1269, %v1270
    %v1272 = vrot.slane %v1271, 2
    %v1273 = vmax.f32 %v1271, %v1272
    %v1274 = vrot.slane %v1273, 1
    %v1275 = vmax.f32 %v1273, %v1274
    %v1276 = vsel %vm575, %v88, -inf
    %v1277 = vrot.slane %v1276, 4
    %v1278 = vmax.f32 %v1276, %v1277
    %v1279 = vrot.slane %v1278, 2
    %v1280 = vmax.f32 %v1278, %v1279
    %v1281 = vrot.slane %v1280, 1
    %v1282 = vmax.f32 %v1280, %v1281
    %v1283 = vsel %vm575, %v266, -inf
    %v1284 = vrot.slane %v1283, 4
    %v1285 = vmax.f32 %v1283, %v1284
    %v1286 = vrot.slane %v1285, 2
    %v1287 = vmax.f32 %v1285, %v1286
    %v1288 = vrot.slane %v1287, 1
    %v1289 = vmax.f32 %v1287, %v1288
    %v1290 = vsel %vm575, %v267, -inf
    %v1291 = vrot.slane %v1290, 4
    %v1292 = vmax.f32 %v1290, %v1291
    %v1293 = vrot.slane %v1292, 2
    %v1294 = vmax.f32 %v1292, %v1293
    %v1295 = vrot.slane %v1294, 1
    %v1296 = vmax.f32 %v1294, %v1295
    %v1297 = vsel %vm575, %v268, -inf
    %v1298 = vrot.slane %v1297, 4
    %v1299 = vmax.f32 %v1297, %v1298
    %v1300 = vrot.slane %v1299, 2
    %v1301 = vmax.f32 %v1299, %v1300
    %v1302 = vrot.slane %v1301, 1
    %v1303 = vmax.f32 %v1301, %v1302
    %v1304 = vsel %vm575, %v89, -inf
    %v1305 = vrot.slane %v1304, 4
    %v1306 = vmax.f32 %v1304, %v1305
    %v1307 = vrot.slane %v1306, 2
    %v1308 = vmax.f32 %v1306, %v1307
    %v1309 = vrot.slane %v1308, 1
    %v1310 = vmax.f32 %v1308, %v1309
    %v1311 = vsel %vm575, %v269, -inf
    %v1312 = vrot.slane %v1311, 4
    %v1313 = vmax.f32 %v1311, %v1312
    %v1314 = vrot.slane %v1313, 2
    %v1315 = vmax.f32 %v1313, %v1314
    %v1316 = vrot.slane %v1315, 1
    %v1317 = vmax.f32 %v1315, %v1316
    %v1318 = vsel %vm575, %v270, -inf
    %v1319 = vrot.slane %v1318, 4
    %v1320 = vmax.f32 %v1318, %v1319
    %v1321 = vrot.slane %v1320, 2
    %v1322 = vmax.f32 %v1320, %v1321
    %v1323 = vrot.slane %v1322, 1
    %v1324 = vmax.f32 %v1322, %v1323
    %v1325 = vsel %vm575, %v271, -inf
    %v1326 = vrot.slane %v1325, 4
    %v1327 = vmax.f32 %v1325, %v1326
    %v1328 = vrot.slane %v1327, 2
    %v1329 = vmax.f32 %v1327, %v1328
    %v1330 = vrot.slane %v1329, 1
    %v1331 = vmax.f32 %v1329, %v1330
    %v1332 = vsel %vm575, %v90, -inf
    %v1333 = vrot.slane %v1332, 4
    %v1334 = vmax.f32 %v1332, %v1333
    %v1335 = vrot.slane %v1334, 2
    %v1336 = vmax.f32 %v1334, %v1335
    %v1337 = vrot.slane %v1336, 1
    %v1338 = vmax.f32 %v1336, %v1337
    %v1339 = vsel %vm575, %v272, -inf
    %v1340 = vrot.slane %v1339, 4
    %v1341 = vmax.f32 %v1339, %v1340
    %v1342 = vrot.slane %v1341, 2
    %v1343 = vmax.f32 %v1341, %v1342
    %v1344 = vrot.slane %v1343, 1
    %v1345 = vmax.f32 %v1343, %v1344
    %v1346 = vsel %vm575, %v273, -inf
    %v1347 = vrot.slane %v1346, 4
    %v1348 = vmax.f32 %v1346, %v1347
    %v1349 = vrot.slane %v1348, 2
    %v1350 = vmax.f32 %v1348, %v1349
    %v1351 = vrot.slane %v1350, 1
    %v1352 = vmax.f32 %v1350, %v1351
    %v1353 = vsel %vm575, %v274, -inf
    %v1354 = vrot.slane %v1353, 4
    %v1355 = vmax.f32 %v1353, %v1354
    %v1356 = vrot.slane %v1355, 2
    %v1357 = vmax.f32 %v1355, %v1356
    %v1358 = vrot.slane %v1357, 1
    %v1359 = vmax.f32 %v1357, %v1358
    %v1360 = vsel %vm575, %v91, -inf
    %v1361 = vrot.slane %v1360, 4
    %v1362 = vmax.f32 %v1360, %v1361
    %v1363 = vrot.slane %v1362, 2
    %v1364 = vmax.f32 %v1362, %v1363
    %v1365 = vrot.slane %v1364, 1
    %v1366 = vmax.f32 %v1364, %v1365
    %v1367 = vsel %vm575, %v275, -inf
    %v1368 = vrot.slane %v1367, 4
    %v1369 = vmax.f32 %v1367, %v1368
    %v1370 = vrot.slane %v1369, 2
    %v1371 = vmax.f32 %v1369, %v1370
    %v1372 = vrot.slane %v1371, 1
    %v1373 = vmax.f32 %v1371, %v1372
    %v1374 = vsel %vm575, %v276, -inf
    %v1375 = vrot.slane %v1374, 4
    %v1376 = vmax.f32 %v1374, %v1375
    %v1377 = vrot.slane %v1376, 2
    %v1378 = vmax.f32 %v1376, %v1377
    %v1379 = vrot.slane %v1378, 1
    %v1380 = vmax.f32 %v1378, %v1379
    %v1381 = vsel %vm575, %v277, -inf
    %v1382 = vrot.slane %v1381, 4
    %v1383 = vmax.f32 %v1381, %v1382
    %v1384 = vrot.slane %v1383, 2
    %v1385 = vmax.f32 %v1383, %v1384
    %v1386 = vrot.slane %v1385, 1
    %v1387 = vmax.f32 %v1385, %v1386
    %v1388 = vsel %vm575, %v92, -inf
    %v1389 = vrot.slane %v1388, 4
    %v1390 = vmax.f32 %v1388, %v1389
    %v1391 = vrot.slane %v1390, 2
    %v1392 = vmax.f32 %v1390, %v1391
    %v1393 = vrot.slane %v1392, 1
    %v1394 = vmax.f32 %v1392, %v1393
    %v1395 = vsel %vm575, %v278, -inf
    %v1396 = vrot.slane %v1395, 4
    %v1397 = vmax.f32 %v1395, %v1396
    %v1398 = vrot.slane %v1397, 2
    %v1399 = vmax.f32 %v1397, %v1398
    %v1400 = vrot.slane %v1399, 1
    %v1401 = vmax.f32 %v1399, %v1400
    %v1402 = vsel %vm575, %v279, -inf
    %v1403 = vrot.slane %v1402, 4
    %v1404 = vmax.f32 %v1402, %v1403
    %v1405 = vrot.slane %v1404, 2
    %v1406 = vmax.f32 %v1404, %v1405
    %v1407 = vrot.slane %v1406, 1
    %v1408 = vmax.f32 %v1406, %v1407
    %v1409 = vsel %vm575, %v280, -inf
    %v1410 = vrot.slane %v1409, 4
    %v1411 = vmax.f32 %v1409, %v1410
    %v1412 = vrot.slane %v1411, 2
    %v1413 = vmax.f32 %v1411, %v1412
    %v1414 = vrot.slane %v1413, 1
    %v1415 = vmax.f32 %v1413, %v1414
    %v1416 = vsel %vm575, %v93, -inf
    %v1417 = vrot.slane %v1416, 4
    %v1418 = vmax.f32 %v1416, %v1417
    %v1419 = vrot.slane %v1418, 2
    %v1420 = vmax.f32 %v1418, %v1419
    %v1421 = vrot.slane %v1420, 1
    %v1422 = vmax.f32 %v1420, %v1421
    %v1423 = vsel %vm575, %v281, -inf
    %v1424 = vrot.slane %v1423, 4
    %v1425 = vmax.f32 %v1423, %v1424
    %v1426 = vrot.slane %v1425, 2
    %v1427 = vmax.f32 %v1425, %v1426
    %v1428 = vrot.slane %v1427, 1
    %v1429 = vmax.f32 %v1427, %v1428
    %v1430 = vsel %vm575, %v282, -inf
    %v1431 = vrot.slane %v1430, 4
    %v1432 = vmax.f32 %v1430, %v1431
    %v1433 = vrot.slane %v1432, 2
    %v1434 = vmax.f32 %v1432, %v1433
    %v1435 = vrot.slane %v1434, 1
    %v1436 = vmax.f32 %v1434, %v1435
    %v1437 = vsel %vm575, %v283, -inf
    %v1438 = vrot.slane %v1437, 4
    %v1439 = vmax.f32 %v1437, %v1438
    %v1440 = vrot.slane %v1439, 2
    %v1441 = vmax.f32 %v1439, %v1440
    %v1442 = vrot.slane %v1441, 1
    %v1443 = vmax.f32 %v1441, %v1442
    %v1444 = vsel %vm575, %v94, -inf
    %v1445 = vrot.slane %v1444, 4
    %v1446 = vmax.f32 %v1444, %v1445
    %v1447 = vrot.slane %v1446, 2
    %v1448 = vmax.f32 %v1446, %v1447
    %v1449 = vrot.slane %v1448, 1
    %v1450 = vmax.f32 %v1448, %v1449
    %v1451 = vsel %vm575, %v284, -inf
    %v1452 = vrot.slane %v1451, 4
    %v1453 = vmax.f32 %v1451, %v1452
    %v1454 = vrot.slane %v1453, 2
    %v1455 = vmax.f32 %v1453, %v1454
    %v1456 = vrot.slane %v1455, 1
    %v1457 = vmax.f32 %v1455, %v1456
    %v1458 = vsel %vm575, %v285, -inf
    %v1459 = vrot.slane %v1458, 4
    %v1460 = vmax.f32 %v1458, %v1459
    %v1461 = vrot.slane %v1460, 2
    %v1462 = vmax.f32 %v1460, %v1461
    %v1463 = vrot.slane %v1462, 1
    %v1464 = vmax.f32 %v1462, %v1463
    %v1465 = vsel %vm575, %v286, -inf
    %v1466 = vrot.slane %v1465, 4
    %v1467 = vmax.f32 %v1465, %v1466
    %v1468 = vrot.slane %v1467, 2
    %v1469 = vmax.f32 %v1467, %v1468
    %v1470 = vrot.slane %v1469, 1
    %v1471 = vmax.f32 %v1469, %v1470
    %v1472 = vsel %vm575, %v95, -inf
    %v1473 = vrot.slane %v1472, 4
    %v1474 = vmax.f32 %v1472, %v1473
    %v1475 = vrot.slane %v1474, 2
    %v1476 = vmax.f32 %v1474, %v1475
    %v1477 = vrot.slane %v1476, 1
    %v1478 = vmax.f32 %v1476, %v1477
    %v1479 = vsel %vm575, %v287, -inf
    %v1480 = vrot.slane %v1479, 4
    %v1481 = vmax.f32 %v1479, %v1480
    %v1482 = vrot.slane %v1481, 2
    %v1483 = vmax.f32 %v1481, %v1482
    %v1484 = vrot.slane %v1483, 1
    %v1485 = vmax.f32 %v1483, %v1484
    %v1486 = vsel %vm575, %v288, -inf
    %v1487 = vrot.slane %v1486, 4
    %v1488 = vmax.f32 %v1486, %v1487
    %v1489 = vrot.slane %v1488, 2
    %v1490 = vmax.f32 %v1488, %v1489
    %v1491 = vrot.slane %v1490, 1
    %v1492 = vmax.f32 %v1490, %v1491
    %v1493 = vsel %vm575, %v289, -inf
    %v1494 = vrot.slane %v1493, 4
    %v1495 = vmax.f32 %v1493, %v1494
    %v1496 = vrot.slane %v1495, 2
    %v1497 = vmax.f32 %v1495, %v1496
    %v1498 = vrot.slane %v1497, 1
    %v1499 = vmax.f32 %v1497, %v1498
    %v1500 = vsel %vm575, %v96, -inf
    %v1501 = vrot.slane %v1500, 4
    %v1502 = vmax.f32 %v1500, %v1501
    %v1503 = vrot.slane %v1502, 2
    %v1504 = vmax.f32 %v1502, %v1503
    %v1505 = vrot.slane %v1504, 1
    %v1506 = vmax.f32 %v1504, %v1505
    %v1507 = vsel %vm575, %v290, -inf
    %v1508 = vrot.slane %v1507, 4
    %v1509 = vmax.f32 %v1507, %v1508
    %v1510 = vrot.slane %v1509, 2
    %v1511 = vmax.f32 %v1509, %v1510
    %v1512 = vrot.slane %v1511, 1
    %v1513 = vmax.f32 %v1511, %v1512
    %v1514 = vsel %vm575, %v291, -inf
    %v1515 = vrot.slane %v1514, 4
    %v1516 = vmax.f32 %v1514, %v1515
    %v1517 = vrot.slane %v1516, 2
    %v1518 = vmax.f32 %v1516, %v1517
    %v1519 = vrot.slane %v1518, 1
    %v1520 = vmax.f32 %v1518, %v1519
    %v1521 = vsel %vm575, %v292, -inf
    %v1522 = vrot.slane %v1521, 4
    %v1523 = vmax.f32 %v1521, %v1522
    %v1524 = vrot.slane %v1523, 2
    %v1525 = vmax.f32 %v1523, %v1524
    %v1526 = vrot.slane %v1525, 1
    %v1527 = vmax.f32 %v1525, %v1526
    %v1528 = vsel %vm575, %v97, -inf
    %v1529 = vrot.slane %v1528, 4
    %v1530 = vmax.f32 %v1528, %v1529
    %v1531 = vrot.slane %v1530, 2
    %v1532 = vmax.f32 %v1530, %v1531
    %v1533 = vrot.slane %v1532, 1
    %v1534 = vmax.f32 %v1532, %v1533
    %v1535 = vsel %vm575, %v293, -inf
    %v1536 = vrot.slane %v1535, 4
    %v1537 = vmax.f32 %v1535, %v1536
    %v1538 = vrot.slane %v1537, 2
    %v1539 = vmax.f32 %v1537, %v1538
    %v1540 = vrot.slane %v1539, 1
    %v1541 = vmax.f32 %v1539, %v1540
    %v1542 = vsel %vm575, %v294, -inf
    %v1543 = vrot.slane %v1542, 4
    %v1544 = vmax.f32 %v1542, %v1543
    %v1545 = vrot.slane %v1544, 2
    %v1546 = vmax.f32 %v1544, %v1545
    %v1547 = vrot.slane %v1546, 1
    %v1548 = vmax.f32 %v1546, %v1547
    %v1549 = vsel %vm575, %v295, -inf
    %v1550 = vrot.slane %v1549, 4
    %v1551 = vmax.f32 %v1549, %v1550
    %v1552 = vrot.slane %v1551, 2
    %v1553 = vmax.f32 %v1551, %v1552
    %v1554 = vrot.slane %v1553, 1
    %v1555 = vmax.f32 %v1553, %v1554
    %v1556 = vsel %vm575, %v98, -inf
    %v1557 = vrot.slane %v1556, 4
    %v1558 = vmax.f32 %v1556, %v1557
    %v1559 = vrot.slane %v1558, 2
    %v1560 = vmax.f32 %v1558, %v1559
    %v1561 = vrot.slane %v1560, 1
    %v1562 = vmax.f32 %v1560, %v1561
    %v1563 = vsel %vm575, %v296, -inf
    %v1564 = vrot.slane %v1563, 4
    %v1565 = vmax.f32 %v1563, %v1564
    %v1566 = vrot.slane %v1565, 2
    %v1567 = vmax.f32 %v1565, %v1566
    %v1568 = vrot.slane %v1567, 1
    %v1569 = vmax.f32 %v1567, %v1568
    %v1570 = vsel %vm575, %v297, -inf
    %v1571 = vrot.slane %v1570, 4
    %v1572 = vmax.f32 %v1570, %v1571
    %v1573 = vrot.slane %v1572, 2
    %v1574 = vmax.f32 %v1572, %v1573
    %v1575 = vrot.slane %v1574, 1
    %v1576 = vmax.f32 %v1574, %v1575
    %v1577 = vsel %vm575, %v298, -inf
    %v1578 = vrot.slane %v1577, 4
    %v1579 = vmax.f32 %v1577, %v1578
    %v1580 = vrot.slane %v1579, 2
    %v1581 = vmax.f32 %v1579, %v1580
    %v1582 = vrot.slane %v1581, 1
    %v1583 = vmax.f32 %v1581, %v1582
    %v1584 = vsel %vm575, %v99, -inf
    %v1585 = vrot.slane %v1584, 4
    %v1586 = vmax.f32 %v1584, %v1585
    %v1587 = vrot.slane %v1586, 2
    %v1588 = vmax.f32 %v1586, %v1587
    %v1589 = vrot.slane %v1588, 1
    %v1590 = vmax.f32 %v1588, %v1589
    %v1591 = vsel %vm575, %v299, -inf
    %v1592 = vrot.slane %v1591, 4
    %v1593 = vmax.f32 %v1591, %v1592
    %v1594 = vrot.slane %v1593, 2
    %v1595 = vmax.f32 %v1593, %v1594
    %v1596 = vrot.slane %v1595, 1
    %v1597 = vmax.f32 %v1595, %v1596
    %v1598 = vsel %vm575, %v300, -inf
    %v1599 = vrot.slane %v1598, 4
    %v1600 = vmax.f32 %v1598, %v1599
    %v1601 = vrot.slane %v1600, 2
    %v1602 = vmax.f32 %v1600, %v1601
    %v1603 = vrot.slane %v1602, 1
    %v1604 = vmax.f32 %v1602, %v1603
    %v1605 = vsel %vm575, %v301, -inf
    %v1606 = vrot.slane %v1605, 4
    %v1607 = vmax.f32 %v1605, %v1606
    %v1608 = vrot.slane %v1607, 2
    %v1609 = vmax.f32 %v1607, %v1608
    %v1610 = vrot.slane %v1609, 1
    %v1611 = vmax.f32 %v1609, %v1610
    %v1612 = vsel %vm575, %v100, -inf
    %v1613 = vrot.slane %v1612, 4
    %v1614 = vmax.f32 %v1612, %v1613
    %v1615 = vrot.slane %v1614, 2
    %v1616 = vmax.f32 %v1614, %v1615
    %v1617 = vrot.slane %v1616, 1
    %v1618 = vmax.f32 %v1616, %v1617
    %v1619 = vsel %vm575, %v302, -inf
    %v1620 = vrot.slane %v1619, 4
    %v1621 = vmax.f32 %v1619, %v1620
    %v1622 = vrot.slane %v1621, 2
    %v1623 = vmax.f32 %v1621, %v1622
    %v1624 = vrot.slane %v1623, 1
    %v1625 = vmax.f32 %v1623, %v1624
    %v1626 = vsel %vm575, %v303, -inf
    %v1627 = vrot.slane %v1626, 4
    %v1628 = vmax.f32 %v1626, %v1627
    %v1629 = vrot.slane %v1628, 2
    %v1630 = vmax.f32 %v1628, %v1629
    %v1631 = vrot.slane %v1630, 1
    %v1632 = vmax.f32 %v1630, %v1631
    %v1633 = vsel %vm575, %v304, -inf
    %v1634 = vrot.slane %v1633, 4
    %v1635 = vmax.f32 %v1633, %v1634
    %v1636 = vrot.slane %v1635, 2
    %v1637 = vmax.f32 %v1635, %v1636
    %v1638 = vrot.slane %v1637, 1
    %v1639 = vmax.f32 %v1637, %v1638
    %v1640 = vsel %vm575, %v101, -inf
    %v1641 = vrot.slane %v1640, 4
    %v1642 = vmax.f32 %v1640, %v1641
    %v1643 = vrot.slane %v1642, 2
    %v1644 = vmax.f32 %v1642, %v1643
    %v1645 = vrot.slane %v1644, 1
    %v1646 = vmax.f32 %v1644, %v1645
    %v1647 = vsel %vm575, %v305, -inf
    %v1648 = vrot.slane %v1647, 4
    %v1649 = vmax.f32 %v1647, %v1648
    %v1650 = vrot.slane %v1649, 2
    %v1651 = vmax.f32 %v1649, %v1650
    %v1652 = vrot.slane %v1651, 1
    %v1653 = vmax.f32 %v1651, %v1652
    %v1654 = vsel %vm575, %v306, -inf
    %v1655 = vrot.slane %v1654, 4
    %v1656 = vmax.f32 %v1654, %v1655
    %v1657 = vrot.slane %v1656, 2
    %v1658 = vmax.f32 %v1656, %v1657
    %v1659 = vrot.slane %v1658, 1
    %v1660 = vmax.f32 %v1658, %v1659
    %v1661 = vsel %vm575, %v307, -inf
    %v1662 = vrot.slane %v1661, 4
    %v1663 = vmax.f32 %v1661, %v1662
    %v1664 = vrot.slane %v1663, 2
    %v1665 = vmax.f32 %v1663, %v1664
    %v1666 = vrot.slane %v1665, 1
    %v1667 = vmax.f32 %v1665, %v1666
    %v1668 = vsel %vm575, %v102, -inf
    %v1669 = vrot.slane %v1668, 4
    %v1670 = vmax.f32 %v1668, %v1669
    %v1671 = vrot.slane %v1670, 2
    %v1672 = vmax.f32 %v1670, %v1671
    %v1673 = vrot.slane %v1672, 1
    %v1674 = vmax.f32 %v1672, %v1673
    %v1675 = vsel %vm575, %v308, -inf
    %v1676 = vrot.slane %v1675, 4
    %v1677 = vmax.f32 %v1675, %v1676
    %v1678 = vrot.slane %v1677, 2
    %v1679 = vmax.f32 %v1677, %v1678
    %v1680 = vrot.slane %v1679, 1
    %v1681 = vmax.f32 %v1679, %v1680
    %v1682 = vsel %vm575, %v309, -inf
    %v1683 = vrot.slane %v1682, 4
    %v1684 = vmax.f32 %v1682, %v1683
    %v1685 = vrot.slane %v1684, 2
    %v1686 = vmax.f32 %v1684, %v1685
    %v1687 = vrot.slane %v1686, 1
    %v1688 = vmax.f32 %v1686, %v1687
    %v1689 = vsel %vm575, %v310, -inf
    %v1690 = vrot.slane %v1689, 4
    %v1691 = vmax.f32 %v1689, %v1690
    %v1692 = vrot.slane %v1691, 2
    %v1693 = vmax.f32 %v1691, %v1692
    %v1694 = vrot.slane %v1693, 1
    %v1695 = vmax.f32 %v1693, %v1694
    %v1696 = vsel %vm575, %v103, -inf
    %v1697 = vrot.slane %v1696, 4
    %v1698 = vmax.f32 %v1696, %v1697
    %v1699 = vrot.slane %v1698, 2
    %v1700 = vmax.f32 %v1698, %v1699
    %v1701 = vrot.slane %v1700, 1
    %v1702 = vmax.f32 %v1700, %v1701
    %v1703 = vsel %vm575, %v311, -inf
    %v1704 = vrot.slane %v1703, 4
    %v1705 = vmax.f32 %v1703, %v1704
    %v1706 = vrot.slane %v1705, 2
    %v1707 = vmax.f32 %v1705, %v1706
    %v1708 = vrot.slane %v1707, 1
    %v1709 = vmax.f32 %v1707, %v1708
    %v1710 = vsel %vm575, %v312, -inf
    %v1711 = vrot.slane %v1710, 4
    %v1712 = vmax.f32 %v1710, %v1711
    %v1713 = vrot.slane %v1712, 2
    %v1714 = vmax.f32 %v1712, %v1713
    %v1715 = vrot.slane %v1714, 1
    %v1716 = vmax.f32 %v1714, %v1715
    %v1717 = vsel %vm575, %v313, -inf
    %v1718 = vrot.slane %v1717, 4
    %v1719 = vmax.f32 %v1717, %v1718
    %v1720 = vrot.slane %v1719, 2
    %v1721 = vmax.f32 %v1719, %v1720
    %v1722 = vrot.slane %v1721, 1
    %v1723 = vmax.f32 %v1721, %v1722
    %v1724 = vsel %vm575, %v104, -inf
    %v1725 = vrot.slane %v1724, 4
    %v1726 = vmax.f32 %v1724, %v1725
    %v1727 = vrot.slane %v1726, 2
    %v1728 = vmax.f32 %v1726, %v1727
    %v1729 = vrot.slane %v1728, 1
    %v1730 = vmax.f32 %v1728, %v1729
    %v1731 = vsel %vm575, %v314, -inf
    %v1732 = vrot.slane %v1731, 4
    %v1733 = vmax.f32 %v1731, %v1732
    %v1734 = vrot.slane %v1733, 2
    %v1735 = vmax.f32 %v1733, %v1734
    %v1736 = vrot.slane %v1735, 1
    %v1737 = vmax.f32 %v1735, %v1736
    %v1738 = vsel %vm575, %v315, -inf
    %v1739 = vrot.slane %v1738, 4
    %v1740 = vmax.f32 %v1738, %v1739
    %v1741 = vrot.slane %v1740, 2
    %v1742 = vmax.f32 %v1740, %v1741
    %v1743 = vrot.slane %v1742, 1
    %v1744 = vmax.f32 %v1742, %v1743
    %v1745 = vsel %vm575, %v316, -inf
    %v1746 = vrot.slane %v1745, 4
    %v1747 = vmax.f32 %v1745, %v1746
    %v1748 = vrot.slane %v1747, 2
    %v1749 = vmax.f32 %v1747, %v1748
    %v1750 = vrot.slane %v1749, 1
    %v1751 = vmax.f32 %v1749, %v1750
    %v1752 = vsel %vm575, %v105, -inf
    %v1753 = vrot.slane %v1752, 4
    %v1754 = vmax.f32 %v1752, %v1753
    %v1755 = vrot.slane %v1754, 2
    %v1756 = vmax.f32 %v1754, %v1755
    %v1757 = vrot.slane %v1756, 1
    %v1758 = vmax.f32 %v1756, %v1757
    %v1759 = vsel %vm575, %v317, -inf
    %v1760 = vrot.slane %v1759, 4
    %v1761 = vmax.f32 %v1759, %v1760
    %v1762 = vrot.slane %v1761, 2
    %v1763 = vmax.f32 %v1761, %v1762
    %v1764 = vrot.slane %v1763, 1
    %v1765 = vmax.f32 %v1763, %v1764
    %v1766 = vsel %vm575, %v318, -inf
    %v1767 = vrot.slane %v1766, 4
    %v1768 = vmax.f32 %v1766, %v1767
    %v1769 = vrot.slane %v1768, 2
    %v1770 = vmax.f32 %v1768, %v1769
    %v1771 = vrot.slane %v1770, 1
    %v1772 = vmax.f32 %v1770, %v1771
    %v1773 = vsel %vm575, %v319, -inf
    %v1774 = vrot.slane %v1773, 4
    %v1775 = vmax.f32 %v1773, %v1774
    %v1776 = vrot.slane %v1775, 2
    %v1777 = vmax.f32 %v1775, %v1776
    %v1778 = vrot.slane %v1777, 1
    %v1779 = vmax.f32 %v1777, %v1778
    %v1780 = vsel %vm575, %v106, -inf
    %v1781 = vrot.slane %v1780, 4
    %v1782 = vmax.f32 %v1780, %v1781
    %v1783 = vrot.slane %v1782, 2
    %v1784 = vmax.f32 %v1782, %v1783
    %v1785 = vrot.slane %v1784, 1
    %v1786 = vmax.f32 %v1784, %v1785
    %v1787 = vsel %vm575, %v320, -inf
    %v1788 = vrot.slane %v1787, 4
    %v1789 = vmax.f32 %v1787, %v1788
    %v1790 = vrot.slane %v1789, 2
    %v1791 = vmax.f32 %v1789, %v1790
    %v1792 = vrot.slane %v1791, 1
    %v1793 = vmax.f32 %v1791, %v1792
    %v1794 = vsel %vm575, %v321, -inf
    %v1795 = vrot.slane %v1794, 4
    %v1796 = vmax.f32 %v1794, %v1795
    %v1797 = vrot.slane %v1796, 2
    %v1798 = vmax.f32 %v1796, %v1797
    %v1799 = vrot.slane %v1798, 1
    %v1800 = vmax.f32 %v1798, %v1799
    %v1801 = vsel %vm575, %v322, -inf
    %v1802 = vrot.slane %v1801, 4
    %v1803 = vmax.f32 %v1801, %v1802
    %v1804 = vrot.slane %v1803, 2
    %v1805 = vmax.f32 %v1803, %v1804
    %v1806 = vrot.slane %v1805, 1
    %v1807 = vmax.f32 %v1805, %v1806
    %v1808 = vsel %vm575, %v107, -inf
    %v1809 = vrot.slane %v1808, 4
    %v1810 = vmax.f32 %v1808, %v1809
    %v1811 = vrot.slane %v1810, 2
    %v1812 = vmax.f32 %v1810, %v1811
    %v1813 = vrot.slane %v1812, 1
    %v1814 = vmax.f32 %v1812, %v1813
    %v1815 = vsel %vm575, %v323, -inf
    %v1816 = vrot.slane %v1815, 4
    %v1817 = vmax.f32 %v1815, %v1816
    %v1818 = vrot.slane %v1817, 2
    %v1819 = vmax.f32 %v1817, %v1818
    %v1820 = vrot.slane %v1819, 1
    %v1821 = vmax.f32 %v1819, %v1820
    %v1822 = vsel %vm575, %v324, -inf
    %v1823 = vrot.slane %v1822, 4
    %v1824 = vmax.f32 %v1822, %v1823
    %v1825 = vrot.slane %v1824, 2
    %v1826 = vmax.f32 %v1824, %v1825
    %v1827 = vrot.slane %v1826, 1
    %v1828 = vmax.f32 %v1826, %v1827
    %v1829 = vsel %vm575, %v325, -inf
    %v1830 = vrot.slane %v1829, 4
    %v1831 = vmax.f32 %v1829, %v1830
    %v1832 = vrot.slane %v1831, 2
    %v1833 = vmax.f32 %v1831, %v1832
    %v1834 = vrot.slane %v1833, 1
    %v1835 = vmax.f32 %v1833, %v1834
    %v1836 = vsel %vm575, %v108, -inf
    %v1837 = vrot.slane %v1836, 4
    %v1838 = vmax.f32 %v1836, %v1837
    %v1839 = vrot.slane %v1838, 2
    %v1840 = vmax.f32 %v1838, %v1839
    %v1841 = vrot.slane %v1840, 1
    %v1842 = vmax.f32 %v1840, %v1841
    %v1843 = vsel %vm575, %v326, -inf
    %v1844 = vrot.slane %v1843, 4
    %v1845 = vmax.f32 %v1843, %v1844
    %v1846 = vrot.slane %v1845, 2
    %v1847 = vmax.f32 %v1845, %v1846
    %v1848 = vrot.slane %v1847, 1
    %v1849 = vmax.f32 %v1847, %v1848
    %v1850 = vsel %vm575, %v327, -inf
    %v1851 = vrot.slane %v1850, 4
    %v1852 = vmax.f32 %v1850, %v1851
    %v1853 = vrot.slane %v1852, 2
    %v1854 = vmax.f32 %v1852, %v1853
    %v1855 = vrot.slane %v1854, 1
    %v1856 = vmax.f32 %v1854, %v1855
    %v1857 = vsel %vm575, %v328, -inf
    %v1858 = vrot.slane %v1857, 4
    %v1859 = vmax.f32 %v1857, %v1858
    %v1860 = vrot.slane %v1859, 2
    %v1861 = vmax.f32 %v1859, %v1860
    %v1862 = vrot.slane %v1861, 1
    %v1863 = vmax.f32 %v1861, %v1862
    %v1864 = vsel %vm575, %v109, -inf
    %v1865 = vrot.slane %v1864, 4
    %v1866 = vmax.f32 %v1864, %v1865
    %v1867 = vrot.slane %v1866, 2
    %v1868 = vmax.f32 %v1866, %v1867
    %v1869 = vrot.slane %v1868, 1
    %v1870 = vmax.f32 %v1868, %v1869
    %v1871 = vsel %vm575, %v329, -inf
    %v1872 = vrot.slane %v1871, 4
    %v1873 = vmax.f32 %v1871, %v1872
    %v1874 = vrot.slane %v1873, 2
    %v1875 = vmax.f32 %v1873, %v1874
    %v1876 = vrot.slane %v1875, 1
    %v1877 = vmax.f32 %v1875, %v1876
    %v1878 = vsel %vm575, %v330, -inf
    %v1879 = vrot.slane %v1878, 4
    %v1880 = vmax.f32 %v1878, %v1879
    %v1881 = vrot.slane %v1880, 2
    %v1882 = vmax.f32 %v1880, %v1881
    %v1883 = vrot.slane %v1882, 1
    %v1884 = vmax.f32 %v1882, %v1883
    %v1885 = vsel %vm575, %v331, -inf
    %v1886 = vrot.slane %v1885, 4
    %v1887 = vmax.f32 %v1885, %v1886
    %v1888 = vrot.slane %v1887, 2
    %v1889 = vmax.f32 %v1887, %v1888
    %v1890 = vrot.slane %v1889, 1
    %v1891 = vmax.f32 %v1889, %v1890
    %v1892 = vsel %vm575, %v110, -inf
    %v1893 = vrot.slane %v1892, 4
    %v1894 = vmax.f32 %v1892, %v1893
    %v1895 = vrot.slane %v1894, 2
    %v1896 = vmax.f32 %v1894, %v1895
    %v1897 = vrot.slane %v1896, 1
    %v1898 = vmax.f32 %v1896, %v1897
    %v1899 = vsel %vm575, %v332, -inf
    %v1900 = vrot.slane %v1899, 4
    %v1901 = vmax.f32 %v1899, %v1900
    %v1902 = vrot.slane %v1901, 2
    %v1903 = vmax.f32 %v1901, %v1902
    %v1904 = vrot.slane %v1903, 1
    %v1905 = vmax.f32 %v1903, %v1904
    %v1906 = vsel %vm575, %v333, -inf
    %v1907 = vrot.slane %v1906, 4
    %v1908 = vmax.f32 %v1906, %v1907
    %v1909 = vrot.slane %v1908, 2
    %v1910 = vmax.f32 %v1908, %v1909
    %v1911 = vrot.slane %v1910, 1
    %v1912 = vmax.f32 %v1910, %v1911
    %v1913 = vsel %vm575, %v334, -inf
    %v1914 = vrot.slane %v1913, 4
    %v1915 = vmax.f32 %v1913, %v1914
    %v1916 = vrot.slane %v1915, 2
    %v1917 = vmax.f32 %v1915, %v1916
    %v1918 = vrot.slane %v1917, 1
    %v1919 = vmax.f32 %v1917, %v1918
    %v1920 = vsel %vm575, %v111, -inf
    %v1921 = vrot.slane %v1920, 4
    %v1922 = vmax.f32 %v1920, %v1921
    %v1923 = vrot.slane %v1922, 2
    %v1924 = vmax.f32 %v1922, %v1923
    %v1925 = vrot.slane %v1924, 1
    %v1926 = vmax.f32 %v1924, %v1925
    %v1927 = vsel %vm575, %v335, -inf
    %v1928 = vrot.slane %v1927, 4
    %v1929 = vmax.f32 %v1927, %v1928
    %v1930 = vrot.slane %v1929, 2
    %v1931 = vmax.f32 %v1929, %v1930
    %v1932 = vrot.slane %v1931, 1
    %v1933 = vmax.f32 %v1931, %v1932
    %v1934 = vsel %vm575, %v336, -inf
    %v1935 = vrot.slane %v1934, 4
    %v1936 = vmax.f32 %v1934, %v1935
    %v1937 = vrot.slane %v1936, 2
    %v1938 = vmax.f32 %v1936, %v1937
    %v1939 = vrot.slane %v1938, 1
    %v1940 = vmax.f32 %v1938, %v1939
    %v1941 = vsel %vm575, %v337, -inf
    %v1942 = vrot.slane %v1941, 4
    %v1943 = vmax.f32 %v1941, %v1942
    %v1944 = vrot.slane %v1943, 2
    %v1945 = vmax.f32 %v1943, %v1944
    %v1946 = vrot.slane %v1945, 1
    %v1947 = vmax.f32 %v1945, %v1946
    %v1948 = vsel %vm575, %v112, -inf
    %v1949 = vrot.slane %v1948, 4
    %v1950 = vmax.f32 %v1948, %v1949
    %v1951 = vrot.slane %v1950, 2
    %v1952 = vmax.f32 %v1950, %v1951
    %v1953 = vrot.slane %v1952, 1
    %v1954 = vmax.f32 %v1952, %v1953
    %v1955 = vsel %vm575, %v338, -inf
    %v1956 = vrot.slane %v1955, 4
    %v1957 = vmax.f32 %v1955, %v1956
    %v1958 = vrot.slane %v1957, 2
    %v1959 = vmax.f32 %v1957, %v1958
    %v1960 = vrot.slane %v1959, 1
    %v1961 = vmax.f32 %v1959, %v1960
    %v1962 = vsel %vm575, %v339, -inf
    %v1963 = vrot.slane %v1962, 4
    %v1964 = vmax.f32 %v1962, %v1963
    %v1965 = vrot.slane %v1964, 2
    %v1966 = vmax.f32 %v1964, %v1965
    %v1967 = vrot.slane %v1966, 1
    %v1968 = vmax.f32 %v1966, %v1967
    %v1969 = vsel %vm575, %v340, -inf
    %v1970 = vrot.slane %v1969, 4
    %v1971 = vmax.f32 %v1969, %v1970
    %v1972 = vrot.slane %v1971, 2
    %v1973 = vmax.f32 %v1971, %v1972
    %v1974 = vrot.slane %v1973, 1
    %v1975 = vmax.f32 %v1973, %v1974
    %v1976 = vsel %vm575, %v113, -inf
    %v1977 = vrot.slane %v1976, 4
    %v1978 = vmax.f32 %v1976, %v1977
    %v1979 = vrot.slane %v1978, 2
    %v1980 = vmax.f32 %v1978, %v1979
    %v1981 = vrot.slane %v1980, 1
    %v1982 = vmax.f32 %v1980, %v1981
    %v1983 = vsel %vm575, %v341, -inf
    %v1984 = vrot.slane %v1983, 4
    %v1985 = vmax.f32 %v1983, %v1984
    %v1986 = vrot.slane %v1985, 2
    %v1987 = vmax.f32 %v1985, %v1986
    %v1988 = vrot.slane %v1987, 1
    %v1989 = vmax.f32 %v1987, %v1988
    %v1990 = vsel %vm575, %v342, -inf
    %v1991 = vrot.slane %v1990, 4
    %v1992 = vmax.f32 %v1990, %v1991
    %v1993 = vrot.slane %v1992, 2
    %v1994 = vmax.f32 %v1992, %v1993
    %v1995 = vrot.slane %v1994, 1
    %v1996 = vmax.f32 %v1994, %v1995
    %v1997 = vsel %vm575, %v343, -inf
    %v1998 = vrot.slane %v1997, 4
    %v1999 = vmax.f32 %v1997, %v1998
    %v2000 = vrot.slane %v1999, 2
    %v2001 = vmax.f32 %v1999, %v2000
    %v2002 = vrot.slane %v2001, 1
    %v2003 = vmax.f32 %v2001, %v2002
    %v2004 = vsel %vm575, %v114, -inf
    %v2005 = vrot.slane %v2004, 4
    %v2006 = vmax.f32 %v2004, %v2005
    %v2007 = vrot.slane %v2006, 2
    %v2008 = vmax.f32 %v2006, %v2007
    %v2009 = vrot.slane %v2008, 1
    %v2010 = vmax.f32 %v2008, %v2009
    %v2011 = vsel %vm575, %v344, -inf
    %v2012 = vrot.slane %v2011, 4
    %v2013 = vmax.f32 %v2011, %v2012
    %v2014 = vrot.slane %v2013, 2
    %v2015 = vmax.f32 %v2013, %v2014
    %v2016 = vrot.slane %v2015, 1
    %v2017 = vmax.f32 %v2015, %v2016
    %v2018 = vsel %vm575, %v345, -inf
    %v2019 = vrot.slane %v2018, 4
    %v2020 = vmax.f32 %v2018, %v2019
    %v2021 = vrot.slane %v2020, 2
    %v2022 = vmax.f32 %v2020, %v2021
    %v2023 = vrot.slane %v2022, 1
    %v2024 = vmax.f32 %v2022, %v2023
    %v2025 = vsel %vm575, %v346, -inf
    %v2026 = vrot.slane %v2025, 4
    %v2027 = vmax.f32 %v2025, %v2026
    %v2028 = vrot.slane %v2027, 2
    %v2029 = vmax.f32 %v2027, %v2028
    %v2030 = vrot.slane %v2029, 1
    %v2031 = vmax.f32 %v2029, %v2030
    %v2032 = vsel %vm575, %v115, -inf
    %v2033 = vrot.slane %v2032, 4
    %v2034 = vmax.f32 %v2032, %v2033
    %v2035 = vrot.slane %v2034, 2
    %v2036 = vmax.f32 %v2034, %v2035
    %v2037 = vrot.slane %v2036, 1
    %v2038 = vmax.f32 %v2036, %v2037
    %v2039 = vsel %vm575, %v347, -inf
    %v2040 = vrot.slane %v2039, 4
    %v2041 = vmax.f32 %v2039, %v2040
    %v2042 = vrot.slane %v2041, 2
    %v2043 = vmax.f32 %v2041, %v2042
    %v2044 = vrot.slane %v2043, 1
    %v2045 = vmax.f32 %v2043, %v2044
    %v2046 = vsel %vm575, %v348, -inf
    %v2047 = vrot.slane %v2046, 4
    %v2048 = vmax.f32 %v2046, %v2047
    %v2049 = vrot.slane %v2048, 2
    %v2050 = vmax.f32 %v2048, %v2049
    %v2051 = vrot.slane %v2050, 1
    %v2052 = vmax.f32 %v2050, %v2051
    %v2053 = vsel %vm575, %v349, -inf
    %v2054 = vrot.slane %v2053, 4
    %v2055 = vmax.f32 %v2053, %v2054
    %v2056 = vrot.slane %v2055, 2
    %v2057 = vmax.f32 %v2055, %v2056
    %v2058 = vrot.slane %v2057, 1
    %v2059 = vmax.f32 %v2057, %v2058
    %v2060 = vsel %vm575, %v116, -inf
    %v2061 = vrot.slane %v2060, 4
    %v2062 = vmax.f32 %v2060, %v2061
    %v2063 = vrot.slane %v2062, 2
    %v2064 = vmax.f32 %v2062, %v2063
    %v2065 = vrot.slane %v2064, 1
    %v2066 = vmax.f32 %v2064, %v2065
    %v2067 = vsel %vm575, %v350, -inf
    %v2068 = vrot.slane %v2067, 4
    %v2069 = vmax.f32 %v2067, %v2068
    %v2070 = vrot.slane %v2069, 2
    %v2071 = vmax.f32 %v2069, %v2070
    %v2072 = vrot.slane %v2071, 1
    %v2073 = vmax.f32 %v2071, %v2072
    %v2074 = vsel %vm575, %v351, -inf
    %v2075 = vrot.slane %v2074, 4
    %v2076 = vmax.f32 %v2074, %v2075
    %v2077 = vrot.slane %v2076, 2
    %v2078 = vmax.f32 %v2076, %v2077
    %v2079 = vrot.slane %v2078, 1
    %v2080 = vmax.f32 %v2078, %v2079
    %v2081 = vsel %vm575, %v352, -inf
    %v2082 = vrot.slane %v2081, 4
    %v2083 = vmax.f32 %v2081, %v2082
    %v2084 = vrot.slane %v2083, 2
    %v2085 = vmax.f32 %v2083, %v2084
    %v2086 = vrot.slane %v2085, 1
    %v2087 = vmax.f32 %v2085, %v2086
    %v2088 = vsel %vm575, %v117, -inf
    %v2089 = vrot.slane %v2088, 4
    %v2090 = vmax.f32 %v2088, %v2089
    %v2091 = vrot.slane %v2090, 2
    %v2092 = vmax.f32 %v2090, %v2091
    %v2093 = vrot.slane %v2092, 1
    %v2094 = vmax.f32 %v2092, %v2093
    %v2095 = vsel %vm575, %v353, -inf
    %v2096 = vrot.slane %v2095, 4
    %v2097 = vmax.f32 %v2095, %v2096
    %v2098 = vrot.slane %v2097, 2
    %v2099 = vmax.f32 %v2097, %v2098
    %v2100 = vrot.slane %v2099, 1
    %v2101 = vmax.f32 %v2099, %v2100
    %v2102 = vsel %vm575, %v354, -inf
    %v2103 = vrot.slane %v2102, 4
    %v2104 = vmax.f32 %v2102, %v2103
    %v2105 = vrot.slane %v2104, 2
    %v2106 = vmax.f32 %v2104, %v2105
    %v2107 = vrot.slane %v2106, 1
    %v2108 = vmax.f32 %v2106, %v2107
    %v2109 = vsel %vm575, %v355, -inf
    %v2110 = vrot.slane %v2109, 4
    %v2111 = vmax.f32 %v2109, %v2110
    %v2112 = vrot.slane %v2111, 2
    %v2113 = vmax.f32 %v2111, %v2112
    %v2114 = vrot.slane %v2113, 1
    %v2115 = vmax.f32 %v2113, %v2114
    %v2116 = vsel %vm575, %v118, -inf
    %v2117 = vrot.slane %v2116, 4
    %v2118 = vmax.f32 %v2116, %v2117
    %v2119 = vrot.slane %v2118, 2
    %v2120 = vmax.f32 %v2118, %v2119
    %v2121 = vrot.slane %v2120, 1
    %v2122 = vmax.f32 %v2120, %v2121
    %v2123 = vsel %vm575, %v356, -inf
    %v2124 = vrot.slane %v2123, 4
    %v2125 = vmax.f32 %v2123, %v2124
    %v2126 = vrot.slane %v2125, 2
    %v2127 = vmax.f32 %v2125, %v2126
    %v2128 = vrot.slane %v2127, 1
    %v2129 = vmax.f32 %v2127, %v2128
    %v2130 = vsel %vm575, %v357, -inf
    %v2131 = vrot.slane %v2130, 4
    %v2132 = vmax.f32 %v2130, %v2131
    %v2133 = vrot.slane %v2132, 2
    %v2134 = vmax.f32 %v2132, %v2133
    %v2135 = vrot.slane %v2134, 1
    %v2136 = vmax.f32 %v2134, %v2135
    %v2137 = vsel %vm575, %v358, -inf
    %v2138 = vrot.slane %v2137, 4
    %v2139 = vmax.f32 %v2137, %v2138
    %v2140 = vrot.slane %v2139, 2
    %v2141 = vmax.f32 %v2139, %v2140
    %v2142 = vrot.slane %v2141, 1
    %v2143 = vmax.f32 %v2141, %v2142
    %v2144 = vsel %vm575, %v119, -inf
    %v2145 = vrot.slane %v2144, 4
    %v2146 = vmax.f32 %v2144, %v2145
    %v2147 = vrot.slane %v2146, 2
    %v2148 = vmax.f32 %v2146, %v2147
    %v2149 = vrot.slane %v2148, 1
    %v2150 = vmax.f32 %v2148, %v2149
    %v2151 = vsel %vm575, %v359, -inf
    %v2152 = vrot.slane %v2151, 4
    %v2153 = vmax.f32 %v2151, %v2152
    %v2154 = vrot.slane %v2153, 2
    %v2155 = vmax.f32 %v2153, %v2154
    %v2156 = vrot.slane %v2155, 1
    %v2157 = vmax.f32 %v2155, %v2156
    %v2158 = vsel %vm575, %v360, -inf
    %v2159 = vrot.slane %v2158, 4
    %v2160 = vmax.f32 %v2158, %v2159
    %v2161 = vrot.slane %v2160, 2
    %v2162 = vmax.f32 %v2160, %v2161
    %v2163 = vrot.slane %v2162, 1
    %v2164 = vmax.f32 %v2162, %v2163
    %v2165 = vsel %vm575, %v361, -inf
    %v2166 = vrot.slane %v2165, 4
    %v2167 = vmax.f32 %v2165, %v2166
    %v2168 = vrot.slane %v2167, 2
    %v2169 = vmax.f32 %v2167, %v2168
    %v2170 = vrot.slane %v2169, 1
    %v2171 = vmax.f32 %v2169, %v2170
    %v2172 = vsel %vm575, %v120, -inf
    %v2173 = vrot.slane %v2172, 4
    %v2174 = vmax.f32 %v2172, %v2173
    %v2175 = vrot.slane %v2174, 2
    %v2176 = vmax.f32 %v2174, %v2175
    %v2177 = vrot.slane %v2176, 1
    %v2178 = vmax.f32 %v2176, %v2177
    %v2179 = vsel %vm575, %v362, -inf
    %v2180 = vrot.slane %v2179, 4
    %v2181 = vmax.f32 %v2179, %v2180
    %v2182 = vrot.slane %v2181, 2
    %v2183 = vmax.f32 %v2181, %v2182
    %v2184 = vrot.slane %v2183, 1
    %v2185 = vmax.f32 %v2183, %v2184
    %v2186 = vsel %vm575, %v363, -inf
    %v2187 = vrot.slane %v2186, 4
    %v2188 = vmax.f32 %v2186, %v2187
    %v2189 = vrot.slane %v2188, 2
    %v2190 = vmax.f32 %v2188, %v2189
    %v2191 = vrot.slane %v2190, 1
    %v2192 = vmax.f32 %v2190, %v2191
    %v2193 = vsel %vm575, %v364, -inf
    %v2194 = vrot.slane %v2193, 4
    %v2195 = vmax.f32 %v2193, %v2194
    %v2196 = vrot.slane %v2195, 2
    %v2197 = vmax.f32 %v2195, %v2196
    %v2198 = vrot.slane %v2197, 1
    %v2199 = vmax.f32 %v2197, %v2198
    %v2200 = vsel %vm575, %v121, -inf
    %v2201 = vrot.slane %v2200, 4
    %v2202 = vmax.f32 %v2200, %v2201
    %v2203 = vrot.slane %v2202, 2
    %v2204 = vmax.f32 %v2202, %v2203
    %v2205 = vrot.slane %v2204, 1
    %v2206 = vmax.f32 %v2204, %v2205
    %v2207 = vsel %vm575, %v365, -inf
    %v2208 = vrot.slane %v2207, 4
    %v2209 = vmax.f32 %v2207, %v2208
    %v2210 = vrot.slane %v2209, 2
    %v2211 = vmax.f32 %v2209, %v2210
    %v2212 = vrot.slane %v2211, 1
    %v2213 = vmax.f32 %v2211, %v2212
    %v2214 = vsel %vm575, %v366, -inf
    %v2215 = vrot.slane %v2214, 4
    %v2216 = vmax.f32 %v2214, %v2215
    %v2217 = vrot.slane %v2216, 2
    %v2218 = vmax.f32 %v2216, %v2217
    %v2219 = vrot.slane %v2218, 1
    %v2220 = vmax.f32 %v2218, %v2219
    %v2221 = vsel %vm575, %v367, -inf
    %v2222 = vrot.slane %v2221, 4
    %v2223 = vmax.f32 %v2221, %v2222
    %v2224 = vrot.slane %v2223, 2
    %v2225 = vmax.f32 %v2223, %v2224
    %v2226 = vrot.slane %v2225, 1
    %v2227 = vmax.f32 %v2225, %v2226
    %v2228 = vsel %vm575, %v122, -inf
    %v2229 = vrot.slane %v2228, 4
    %v2230 = vmax.f32 %v2228, %v2229
    %v2231 = vrot.slane %v2230, 2
    %v2232 = vmax.f32 %v2230, %v2231
    %v2233 = vrot.slane %v2232, 1
    %v2234 = vmax.f32 %v2232, %v2233
    %v2235 = vsel %vm575, %v368, -inf
    %v2236 = vrot.slane %v2235, 4
    %v2237 = vmax.f32 %v2235, %v2236
    %v2238 = vrot.slane %v2237, 2
    %v2239 = vmax.f32 %v2237, %v2238
    %v2240 = vrot.slane %v2239, 1
    %v2241 = vmax.f32 %v2239, %v2240
    %v2242 = vsel %vm575, %v369, -inf
    %v2243 = vrot.slane %v2242, 4
    %v2244 = vmax.f32 %v2242, %v2243
    %v2245 = vrot.slane %v2244, 2
    %v2246 = vmax.f32 %v2244, %v2245
    %v2247 = vrot.slane %v2246, 1
    %v2248 = vmax.f32 %v2246, %v2247
    %v2249 = vsel %vm575, %v370, -inf
    %v2250 = vrot.slane %v2249, 4
    %v2251 = vmax.f32 %v2249, %v2250
    %v2252 = vrot.slane %v2251, 2
    %v2253 = vmax.f32 %v2251, %v2252
    %v2254 = vrot.slane %v2253, 1
    %v2255 = vmax.f32 %v2253, %v2254
    %v2256 = vsel %vm575, %v123, -inf
    %v2257 = vrot.slane %v2256, 4
    %v2258 = vmax.f32 %v2256, %v2257
    %v2259 = vrot.slane %v2258, 2
    %v2260 = vmax.f32 %v2258, %v2259
    %v2261 = vrot.slane %v2260, 1
    %v2262 = vmax.f32 %v2260, %v2261
    %v2263 = vsel %vm575, %v371, -inf
    %v2264 = vrot.slane %v2263, 4
    %v2265 = vmax.f32 %v2263, %v2264
    %v2266 = vrot.slane %v2265, 2
    %v2267 = vmax.f32 %v2265, %v2266
    %v2268 = vrot.slane %v2267, 1
    %v2269 = vmax.f32 %v2267, %v2268
    %v2270 = vsel %vm575, %v372, -inf
    %v2271 = vrot.slane %v2270, 4
    %v2272 = vmax.f32 %v2270, %v2271
    %v2273 = vrot.slane %v2272, 2
    %v2274 = vmax.f32 %v2272, %v2273
    %v2275 = vrot.slane %v2274, 1
    %v2276 = vmax.f32 %v2274, %v2275
    %v2277 = vsel %vm575, %v373, -inf
    %v2278 = vrot.slane %v2277, 4
    %v2279 = vmax.f32 %v2277, %v2278
    %v2280 = vrot.slane %v2279, 2
    %v2281 = vmax.f32 %v2279, %v2280
    %v2282 = vrot.slane %v2281, 1
    %v2283 = vmax.f32 %v2281, %v2282
    %v2284 = vsel %vm575, %v124, -inf
    %v2285 = vrot.slane %v2284, 4
    %v2286 = vmax.f32 %v2284, %v2285
    %v2287 = vrot.slane %v2286, 2
    %v2288 = vmax.f32 %v2286, %v2287
    %v2289 = vrot.slane %v2288, 1
    %v2290 = vmax.f32 %v2288, %v2289
    %v2291 = vsel %vm575, %v374, -inf
    %v2292 = vrot.slane %v2291, 4
    %v2293 = vmax.f32 %v2291, %v2292
    %v2294 = vrot.slane %v2293, 2
    %v2295 = vmax.f32 %v2293, %v2294
    %v2296 = vrot.slane %v2295, 1
    %v2297 = vmax.f32 %v2295, %v2296
    %v2298 = vsel %vm575, %v375, -inf
    %v2299 = vrot.slane %v2298, 4
    %v2300 = vmax.f32 %v2298, %v2299
    %v2301 = vrot.slane %v2300, 2
    %v2302 = vmax.f32 %v2300, %v2301
    %v2303 = vrot.slane %v2302, 1
    %v2304 = vmax.f32 %v2302, %v2303
    %v2305 = vsel %vm575, %v376, -inf
    %v2306 = vrot.slane %v2305, 4
    %v2307 = vmax.f32 %v2305, %v2306
    %v2308 = vrot.slane %v2307, 2
    %v2309 = vmax.f32 %v2307, %v2308
    %v2310 = vrot.slane %v2309, 1
    %v2311 = vmax.f32 %v2309, %v2310
    %v2312 = vsel %vm575, %v125, -inf
    %v2313 = vrot.slane %v2312, 4
    %v2314 = vmax.f32 %v2312, %v2313
    %v2315 = vrot.slane %v2314, 2
    %v2316 = vmax.f32 %v2314, %v2315
    %v2317 = vrot.slane %v2316, 1
    %v2318 = vmax.f32 %v2316, %v2317
    %v2319 = vsel %vm575, %v377, -inf
    %v2320 = vrot.slane %v2319, 4
    %v2321 = vmax.f32 %v2319, %v2320
    %v2322 = vrot.slane %v2321, 2
    %v2323 = vmax.f32 %v2321, %v2322
    %v2324 = vrot.slane %v2323, 1
    %v2325 = vmax.f32 %v2323, %v2324
    %v2326 = vsel %vm575, %v378, -inf
    %v2327 = vrot.slane %v2326, 4
    %v2328 = vmax.f32 %v2326, %v2327
    %v2329 = vrot.slane %v2328, 2
    %v2330 = vmax.f32 %v2328, %v2329
    %v2331 = vrot.slane %v2330, 1
    %v2332 = vmax.f32 %v2330, %v2331
    %v2333 = vsel %vm575, %v379, -inf
    %v2334 = vrot.slane %v2333, 4
    %v2335 = vmax.f32 %v2333, %v2334
    %v2336 = vrot.slane %v2335, 2
    %v2337 = vmax.f32 %v2335, %v2336
    %v2338 = vrot.slane %v2337, 1
    %v2339 = vmax.f32 %v2337, %v2338
    %v2340 = vsel %vm575, %v126, -inf
    %v2341 = vrot.slane %v2340, 4
    %v2342 = vmax.f32 %v2340, %v2341
    %v2343 = vrot.slane %v2342, 2
    %v2344 = vmax.f32 %v2342, %v2343
    %v2345 = vrot.slane %v2344, 1
    %v2346 = vmax.f32 %v2344, %v2345
    %v2347 = vsel %vm575, %v380, -inf
    %v2348 = vrot.slane %v2347, 4
    %v2349 = vmax.f32 %v2347, %v2348
    %v2350 = vrot.slane %v2349, 2
    %v2351 = vmax.f32 %v2349, %v2350
    %v2352 = vrot.slane %v2351, 1
    %v2353 = vmax.f32 %v2351, %v2352
    %v2354 = vsel %vm575, %v381, -inf
    %v2355 = vrot.slane %v2354, 4
    %v2356 = vmax.f32 %v2354, %v2355
    %v2357 = vrot.slane %v2356, 2
    %v2358 = vmax.f32 %v2356, %v2357
    %v2359 = vrot.slane %v2358, 1
    %v2360 = vmax.f32 %v2358, %v2359
    %v2361 = vsel %vm575, %v382, -inf
    %v2362 = vrot.slane %v2361, 4
    %v2363 = vmax.f32 %v2361, %v2362
    %v2364 = vrot.slane %v2363, 2
    %v2365 = vmax.f32 %v2363, %v2364
    %v2366 = vrot.slane %v2365, 1
    %v2367 = vmax.f32 %v2365, %v2366
    %v2368 = vmax.f32 %v582, %v638
    %v2369 = vmax.f32 %v589, %v645
    %v2370 = vmax.f32 %v596, %v652
    %v2371 = vmax.f32 %v603, %v659
    %v2372 = vmax.f32 %v610, %v666
    %v2373 = vmax.f32 %v617, %v673
    %v2374 = vmax.f32 %v624, %v680
    %v2375 = vmax.f32 %v631, %v687
    %v2376 = vmax.f32 %v694, %v750
    %v2377 = vmax.f32 %v701, %v757
    %v2378 = vmax.f32 %v708, %v764
    %v2379 = vmax.f32 %v715, %v771
    %v2380 = vmax.f32 %v722, %v778
    %v2381 = vmax.f32 %v729, %v785
    %v2382 = vmax.f32 %v736, %v792
    %v2383 = vmax.f32 %v743, %v799
    %v2384 = vmax.f32 %v806, %v862
    %v2385 = vmax.f32 %v813, %v869
    %v2386 = vmax.f32 %v820, %v876
    %v2387 = vmax.f32 %v827, %v883
    %v2388 = vmax.f32 %v834, %v890
    %v2389 = vmax.f32 %v841, %v897
    %v2390 = vmax.f32 %v848, %v904
    %v2391 = vmax.f32 %v855, %v911
    %v2392 = vmax.f32 %v918, %v974
    %v2393 = vmax.f32 %v925, %v981
    %v2394 = vmax.f32 %v932, %v988
    %v2395 = vmax.f32 %v939, %v995
    %v2396 = vmax.f32 %v946, %v1002
    %v2397 = vmax.f32 %v953, %v1009
    %v2398 = vmax.f32 %v960, %v1016
    %v2399 = vmax.f32 %v967, %v1023
    %v2400 = vmax.f32 %v1030, %v1086
    %v2401 = vmax.f32 %v1037, %v1093
    %v2402 = vmax.f32 %v1044, %v1100
    %v2403 = vmax.f32 %v1051, %v1107
    %v2404 = vmax.f32 %v1058, %v1114
    %v2405 = vmax.f32 %v1065, %v1121
    %v2406 = vmax.f32 %v1072, %v1128
    %v2407 = vmax.f32 %v1079, %v1135
    %v2408 = vmax.f32 %v1142, %v1198
    %v2409 = vmax.f32 %v1149, %v1205
    %v2410 = vmax.f32 %v1156, %v1212
    %v2411 = vmax.f32 %v1163, %v1219
    %v2412 = vmax.f32 %v1170, %v1226
    %v2413 = vmax.f32 %v1177, %v1233
    %v2414 = vmax.f32 %v1184, %v1240
    %v2415 = vmax.f32 %v1191, %v1247
    %v2416 = vmax.f32 %v1254, %v1310
    %v2417 = vmax.f32 %v1261, %v1317
    %v2418 = vmax.f32 %v1268, %v1324
    %v2419 = vmax.f32 %v1275, %v1331
    %v2420 = vmax.f32 %v1282, %v1338
    %v2421 = vmax.f32 %v1289, %v1345
    %v2422 = vmax.f32 %v1296, %v1352
    %v2423 = vmax.f32 %v1303, %v1359
    %v2424 = vmax.f32 %v1366, %v1422
    %v2425 = vmax.f32 %v1373, %v1429
    %v2426 = vmax.f32 %v1380, %v1436
    %v2427 = vmax.f32 %v1387, %v1443
    %v2428 = vmax.f32 %v1394, %v1450
    %v2429 = vmax.f32 %v1401, %v1457
    %v2430 = vmax.f32 %v1408, %v1464
    %v2431 = vmax.f32 %v1415, %v1471
    %v2432 = vmax.f32 %v1478, %v1534
    %v2433 = vmax.f32 %v1485, %v1541
    %v2434 = vmax.f32 %v1492, %v1548
    %v2435 = vmax.f32 %v1499, %v1555
    %v2436 = vmax.f32 %v1506, %v1562
    %v2437 = vmax.f32 %v1513, %v1569
    %v2438 = vmax.f32 %v1520, %v1576
    %v2439 = vmax.f32 %v1527, %v1583
    %v2440 = vmax.f32 %v1590, %v1646
    %v2441 = vmax.f32 %v1597, %v1653
    %v2442 = vmax.f32 %v1604, %v1660
    %v2443 = vmax.f32 %v1611, %v1667
    %v2444 = vmax.f32 %v1618, %v1674
    %v2445 = vmax.f32 %v1625, %v1681
    %v2446 = vmax.f32 %v1632, %v1688
    %v2447 = vmax.f32 %v1639, %v1695
    %v2448 = vmax.f32 %v1702, %v1758
    %v2449 = vmax.f32 %v1709, %v1765
    %v2450 = vmax.f32 %v1716, %v1772
    %v2451 = vmax.f32 %v1723, %v1779
    %v2452 = vmax.f32 %v1730, %v1786
    %v2453 = vmax.f32 %v1737, %v1793
    %v2454 = vmax.f32 %v1744, %v1800
    %v2455 = vmax.f32 %v1751, %v1807
    %v2456 = vmax.f32 %v1814, %v1870
    %v2457 = vmax.f32 %v1821, %v1877
    %v2458 = vmax.f32 %v1828, %v1884
    %v2459 = vmax.f32 %v1835, %v1891
    %v2460 = vmax.f32 %v1842, %v1898
    %v2461 = vmax.f32 %v1849, %v1905
    %v2462 = vmax.f32 %v1856, %v1912
    %v2463 = vmax.f32 %v1863, %v1919
    %v2464 = vmax.f32 %v1926, %v1982
    %v2465 = vmax.f32 %v1933, %v1989
    %v2466 = vmax.f32 %v1940, %v1996
    %v2467 = vmax.f32 %v1947, %v2003
    %v2468 = vmax.f32 %v1954, %v2010
    %v2469 = vmax.f32 %v1961, %v2017
    %v2470 = vmax.f32 %v1968, %v2024
    %v2471 = vmax.f32 %v1975, %v2031
    %v2472 = vmax.f32 %v2038, %v2094
    %v2473 = vmax.f32 %v2045, %v2101
    %v2474 = vmax.f32 %v2052, %v2108
    %v2475 = vmax.f32 %v2059, %v2115
    %v2476 = vmax.f32 %v2066, %v2122
    %v2477 = vmax.f32 %v2073, %v2129
    %v2478 = vmax.f32 %v2080, %v2136
    %v2479 = vmax.f32 %v2087, %v2143
    %v2480 = vmax.f32 %v2150, %v2206
    %v2481 = vmax.f32 %v2157, %v2213
    %v2482 = vmax.f32 %v2164, %v2220
    %v2483 = vmax.f32 %v2171, %v2227
    %v2484 = vmax.f32 %v2178, %v2234
    %v2485 = vmax.f32 %v2185, %v2241
    %v2486 = vmax.f32 %v2192, %v2248
    %v2487 = vmax.f32 %v2199, %v2255
    %v2488 = vmax.f32 %v2262, %v2318
    %v2489 = vmax.f32 %v2269, %v2325
    %v2490 = vmax.f32 %v2276, %v2332
    %v2491 = vmax.f32 %v2283, %v2339
    %v2492 = vmax.f32 %v2290, %v2346
    %v2493 = vmax.f32 %v2297, %v2353
    %v2494 = vmax.f32 %v2304, %v2360
    %v2495 = vmax.f32 %v2311, %v2367
    %2496 = vst [vmem:[#allocation2] sm:$0xff] 0.0
    %2497 = vst [vmem:[#allocation2 + $0x8] sm:$0x3] 0.0
    %2498 = vst [vmem:[#allocation2 + $0xa0] sm:$0xff] 0.0
    %2499 = vst [vmem:[#allocation2 + $0xa8] sm:$0x3] 0.0
    %s2500 = scalar_lea.vmem [#allocation2], 144
    %2501 = vst [vmem:[%s2500] sm:$0xff] 0.0
    %2502 = vst [vmem:[%s2500 + $0x8] sm:$0x3] 0.0
    %2503 = vst [vmem:[%s2500 + $0xa0] sm:$0xff] 0.0
    %2504 = vst [vmem:[%s2500 + $0xa8] sm:$0x3] 0.0
    %2505 = vst [vmem:[#allocation2] sm:$0x1] 0.0
    %2506 = vst [vmem:[#allocation2 + $0x10] sm:$0x1] 0.0
    %2507 = vst [vmem:[#allocation2 + $0x20] sm:$0x1] 0.0
    %2508 = vst [vmem:[#allocation2 + $0x30] sm:$0x1] 0.0
    %2509 = vst [vmem:[#allocation2 + $0x40] sm:$0x1] 0.0
    %2510 = vst [vmem:[#allocation2 + $0x50] sm:$0x1] 0.0
    %2511 = vst [vmem:[#allocation2 + $0x60] sm:$0x1] 0.0
    %2512 = vst [vmem:[#allocation2 + $0x70] sm:$0x1] 0.0
    %2513 = vst [vmem:[#allocation2 + $0x80] sm:$0x1] 0.0
    %2514 = vst [vmem:[#allocation2 + $0x90] sm:$0x1] 0.0
    %2515 = vst [vmem:[#allocation2 + $0xa0] sm:$0x1] 0.0
    %2516 = vst [vmem:[#allocation2 + $0xb0] sm:$0x1] 0.0
    %2517 = vst [vmem:[#allocation2 + $0xc0] sm:$0x1] 0.0
    %2518 = vst [vmem:[#allocation2 + $0xd0] sm:$0x1] 0.0
    %2519 = vst [vmem:[#allocation2 + $0xe0] sm:$0x1] 0.0
    %2520 = vst [vmem:[#allocation2 + $0xf0] sm:$0x1] 0.0
    %2521 = vst [vmem:[#allocation2 + $0x100] sm:$0x1] 0.0
    %2522 = vst [vmem:[#allocation2 + $0x110] sm:$0x1] 0.0
    %2523 = vst [vmem:[#allocation2 + $0x120] sm:$0x1] 0.0
    %2524 = vst [vmem:[#allocation2 + $0x130] sm:$0x1] 0.0
    %2525 = vst [vmem:[#allocation2 + $0x9] sm:$0x1] 0.0
    %2526 = vst [vmem:[#allocation2 + $0x19] sm:$0x1] 0.0
    %2527 = vst [vmem:[#allocation2 + $0x29] sm:$0x1] 0.0
    %2528 = vst [vmem:[#allocation2 + $0x39] sm:$0x1] 0.0
    %2529 = vst [vmem:[#allocation2 + $0x49] sm:$0x1] 0.0
    %2530 = vst [vmem:[#allocation2 + $0x59] sm:$0x1] 0.0
    %2531 = vst [vmem:[#allocation2 + $0x69] sm:$0x1] 0.0
    %2532 = vst [vmem:[#allocation2 + $0x79] sm:$0x1] 0.0
    %2533 = vst [vmem:[#allocation2 + $0x89] sm:$0x1] 0.0
    %2534 = vst [vmem:[#allocation2 + $0x99] sm:$0x1] 0.0
    %2535 = vst [vmem:[#allocation2 + $0xa9] sm:$0x1] 0.0
    %2536 = vst [vmem:[#allocation2 + $0xb9] sm:$0x1] 0.0
    %2537 = vst [vmem:[#allocation2 + $0xc9] sm:$0x1] 0.0
    %2538 = vst [vmem:[#allocation2 + $0xd9] sm:$0x1] 0.0
    %2539 = vst [vmem:[#allocation2 + $0xe9] sm:$0x1] 0.0
    %2540 = vst [vmem:[#allocation2 + $0xf9] sm:$0x1] 0.0
    %2541 = vst [vmem:[#allocation2 + $0x109] sm:$0x1] 0.0
    %2542 = vst [vmem:[#allocation2 + $0x119] sm:$0x1] 0.0
    %2543 = vst [vmem:[#allocation2 + $0x129] sm:$0x1] 0.0
    %2544 = vst [vmem:[#allocation2 + $0x139] sm:$0x1] 0.0
    %vm2673 = vcmask 1041409
    %v2674 = vsel %vm2673, %v2369, %v2368
    %vm2675 = vcmask 1042434
    %v2676 = vsel %vm2675, %v2370, %v2674
    %vm2677 = vcmask 1043459
    %v2678 = vsel %vm2677, %v2371, %v2676
    %vm2679 = vcmask 1044484
    %v2680 = vsel %vm2679, %v2372, %v2678
    %vm2681 = vcmask 1045509
    %v2682 = vsel %vm2681, %v2373, %v2680
    %vm2683 = vcmask 1046534
    %v2684 = vsel %vm2683, %v2374, %v2682
    %vm2685 = vcmask 1047559
    %v2686 = vsel %vm2685, %v2375, %v2684
    %v2687 = vsel %vm2673, %v2377, %v2376
    %v2688 = vsel %vm2675, %v2378, %v2687
    %v2689 = vsel %vm2677, %v2379, %v2688
    %v2690 = vsel %vm2679, %v2380, %v2689
    %v2691 = vsel %vm2681, %v2381, %v2690
    %v2692 = vsel %vm2683, %v2382, %v2691
    %v2693 = vsel %vm2685, %v2383, %v2692
    %v2694 = vsel %vm2673, %v2385, %v2384
    %v2695 = vsel %vm2675, %v2386, %v2694
    %v2696 = vsel %vm2677, %v2387, %v2695
    %v2697 = vsel %vm2679, %v2388, %v2696
    %v2698 = vsel %vm2681, %v2389, %v2697
    %v2699 = vsel %vm2683, %v2390, %v2698
    %v2700 = vsel %vm2685, %v2391, %v2699
    %v2701 = vsel %vm2673, %v2393, %v2392
    %v2702 = vsel %vm2675, %v2394, %v2701
    %v2703 = vsel %vm2677, %v2395, %v2702
    %v2704 = vsel %vm2679, %v2396, %v2703
    %v2705 = vsel %vm2681, %v2397, %v2704
    %v2706 = vsel %vm2683, %v2398, %v2705
    %v2707 = vsel %vm2685, %v2399, %v2706
    %v2708 = vsel %vm2673, %v2401, %v2400
    %v2709 = vsel %vm2675, %v2402, %v2708
    %v2710 = vsel %vm2677, %v2403, %v2709
    %v2711 = vsel %vm2679, %v2404, %v2710
    %v2712 = vsel %vm2681, %v2405, %v2711
    %v2713 = vsel %vm2683, %v2406, %v2712
    %v2714 = vsel %vm2685, %v2407, %v2713
    %v2715 = vsel %vm2673, %v2409, %v2408
    %v2716 = vsel %vm2675, %v2410, %v2715
    %v2717 = vsel %vm2677, %v2411, %v2716
    %v2718 = vsel %vm2679, %v2412, %v2717
    %v2719 = vsel %vm2681, %v2413, %v2718
    %v2720 = vsel %vm2683, %v2414, %v2719
    %v2721 = vsel %vm2685, %v2415, %v2720
    %v2722 = vsel %vm2673, %v2417, %v2416
    %v2723 = vsel %vm2675, %v2418, %v2722
    %v2724 = vsel %vm2677, %v2419, %v2723
    %v2725 = vsel %vm2679, %v2420, %v2724
    %v2726 = vsel %vm2681, %v2421, %v2725
    %v2727 = vsel %vm2683, %v2422, %v2726
    %v2728 = vsel %vm2685, %v2423, %v2727
    %v2729 = vsel %vm2673, %v2425, %v2424
    %v2730 = vsel %vm2675, %v2426, %v2729
    %v2731 = vsel %vm2677, %v2427, %v2730
    %v2732 = vsel %vm2679, %v2428, %v2731
    %v2733 = vsel %vm2681, %v2429, %v2732
    %v2734 = vsel %vm2683, %v2430, %v2733
    %v2735 = vsel %vm2685, %v2431, %v2734
    %v2736 = vsel %vm2673, %v2433, %v2432
    %v2737 = vsel %vm2675, %v2434, %v2736
    %v2738 = vsel %vm2677, %v2435, %v2737
    %v2739 = vsel %vm2679, %v2436, %v2738
    %v2740 = vsel %vm2681, %v2437, %v2739
    %v2741 = vsel %vm2683, %v2438, %v2740
    %v2742 = vsel %vm2685, %v2439, %v2741
    %v2743 = vsel %vm2673, %v2441, %v2440
    %v2744 = vsel %vm2675, %v2442, %v2743
    %v2745 = vsel %vm2677, %v2443, %v2744
    %v2746 = vsel %vm2679, %v2444, %v2745
    %v2747 = vsel %vm2681, %v2445, %v2746
    %v2748 = vsel %vm2683, %v2446, %v2747
    %v2749 = vsel %vm2685, %v2447, %v2748
    %v2750 = vsel %vm2673, %v2449, %v2448
    %v2751 = vsel %vm2675, %v2450, %v2750
    %v2752 = vsel %vm2677, %v2451, %v2751
    %v2753 = vsel %vm2679, %v2452, %v2752
    %v2754 = vsel %vm2681, %v2453, %v2753
    %v2755 = vsel %vm2683, %v2454, %v2754
    %v2756 = vsel %vm2685, %v2455, %v2755
    %v2757 = vsel %vm2673, %v2457, %v2456
    %v2758 = vsel %vm2675, %v2458, %v2757
    %v2759 = vsel %vm2677, %v2459, %v2758
    %v2760 = vsel %vm2679, %v2460, %v2759
    %v2761 = vsel %vm2681, %v2461, %v2760
    %v2762 = vsel %vm2683, %v2462, %v2761
    %v2763 = vsel %vm2685, %v2463, %v2762
    %v2764 = vsel %vm2673, %v2465, %v2464
    %v2765 = vsel %vm2675, %v2466, %v2764
    %v2766 = vsel %vm2677, %v2467, %v2765
    %v2767 = vsel %vm2679, %v2468, %v2766
    %v2768 = vsel %vm2681, %v2469, %v2767
    %v2769 = vsel %vm2683, %v2470, %v2768
    %v2770 = vsel %vm2685, %v2471, %v2769
    %v2771 = vsel %vm2673, %v2473, %v2472
    %v2772 = vsel %vm2675, %v2474, %v2771
    %v2773 = vsel %vm2677, %v2475, %v2772
    %v2774 = vsel %vm2679, %v2476, %v2773
    %v2775 = vsel %vm2681, %v2477, %v2774
    %v2776 = vsel %vm2683, %v2478, %v2775
    %v2777 = vsel %vm2685, %v2479, %v2776
    %v2778 = vsel %vm2673, %v2481, %v2480
    %v2779 = vsel %vm2675, %v2482, %v2778
    %v2780 = vsel %vm2677, %v2483, %v2779
    %v2781 = vsel %vm2679, %v2484, %v2780
    %v2782 = vsel %vm2681, %v2485, %v2781
    %v2783 = vsel %vm2683, %v2486, %v2782
    %v2784 = vsel %vm2685, %v2487, %v2783
    %v2785 = vsel %vm2673, %v2489, %v2488
    %v2786 = vsel %vm2675, %v2490, %v2785
    %v2787 = vsel %vm2677, %v2491, %v2786
    %v2788 = vsel %vm2679, %v2492, %v2787
    %v2789 = vsel %vm2681, %v2493, %v2788
    %v2790 = vsel %vm2683, %v2494, %v2789
    %v2791 = vsel %vm2685, %v2495, %v2790
    %s2808 = scalar_lea.vmem [#allocation2], 16
    %2809 = vst [vmem:[%s2808 + $0x1] sm:$0xff] %v2686
    %2810 = vst [vmem:[%s2808 + $0x11] sm:$0xff] %v2693
    %2811 = vst [vmem:[%s2808 + $0x21] sm:$0xff] %v2700
    %2812 = vst [vmem:[%s2808 + $0x31] sm:$0xff] %v2707
    %2813 = vst [vmem:[%s2808 + $0x41] sm:$0xff] %v2714
    %2814 = vst [vmem:[%s2808 + $0x51] sm:$0xff] %v2721
    %2815 = vst [vmem:[%s2808 + $0x61] sm:$0xff] %v2728
    %2816 = vst [vmem:[%s2808 + $0x71] sm:$0xff] %v2735
    %2817 = vst [vmem:[%s2808 + $0xa1] sm:$0xff] %v2742
    %2818 = vst [vmem:[%s2808 + $0xb1] sm:$0xff] %v2749
    %2819 = vst [vmem:[%s2808 + $0xc1] sm:$0xff] %v2756
    %2820 = vst [vmem:[%s2808 + $0xd1] sm:$0xff] %v2763
    %2821 = vst [vmem:[%s2808 + $0xe1] sm:$0xff] %v2770
    %2822 = vst [vmem:[%s2808 + $0xf1] sm:$0xff] %v2777
    %2823 = vst [vmem:[%s2808 + $0x101] sm:$0xff] %v2784
    %2824 = vst [vmem:[%s2808 + $0x111] sm:$0xff] %v2791
    %v2825 = vld [vmem:[#allocation2] sm:$0xff]
    %v2826 = vld [vmem:[#allocation2 + $0x10] sm:$0xff]
    %v2827 = vld [vmem:[#allocation2 + $0x20] sm:$0xff]
    %v2828 = vld [vmem:[#allocation2 + $0x30] sm:$0xff]
    %v2829 = vld [vmem:[#allocation2 + $0x40] sm:$0xff]
    %v2830 = vld [vmem:[#allocation2 + $0x50] sm:$0xff]
    %v2831 = vld [vmem:[#allocation2 + $0x60] sm:$0xff]
    %v2832 = vld [vmem:[#allocation2 + $0x70] sm:$0xff]
    %v2833 = vld [vmem:[#allocation2 + $0xa0] sm:$0xff]
    %v2834 = vld [vmem:[#allocation2 + $0xb0] sm:$0xff]
    %v2835 = vld [vmem:[#allocation2 + $0xc0] sm:$0xff]
    %v2836 = vld [vmem:[#allocation2 + $0xd0] sm:$0xff]
    %v2837 = vld [vmem:[#allocation2 + $0xe0] sm:$0xff]
    %v2838 = vld [vmem:[#allocation2 + $0xf0] sm:$0xff]
    %v2839 = vld [vmem:[#allocation2 + $0x100] sm:$0xff]
    %v2840 = vld [vmem:[#allocation2 + $0x110] sm:$0xff]
    %v2841 = vpack.c.bf16 %v2826, %v2825
    %v2842 = vpack.c.bf16 %v2828, %v2827
    %v2843 = vpack.c.bf16 %v2830, %v2829
    %v2844 = vpack.c.bf16 %v2832, %v2831
    %v2845 = vpack.c.bf16 %v2834, %v2833
    %v2846 = vpack.c.bf16 %v2836, %v2835
    %v2847 = vpack.c.bf16 %v2838, %v2837
    %v2848 = vpack.c.bf16 %v2840, %v2839
    %v2849 = vld [vmem:[#allocation5] sm:$0xf]
    %v2850 = vld [vmem:[#allocation5 + $0x4] sm:$0xf]
    %v2851 = vld [vmem:[#allocation5 + $0x8] sm:$0xf]
    %v2852 = vld [vmem:[#allocation5 + $0xc] sm:$0xf]
    %v2853 = vld [vmem:[#allocation5 + $0x10] sm:$0xf]
    %v2854 = vld [vmem:[#allocation5 + $0x14] sm:$0xf]
    %v2855 = vld [vmem:[#allocation5 + $0x18] sm:$0xf]
    %v2856 = vld [vmem:[#allocation5 + $0x1c] sm:$0xf]
    %v2857 = vld [vmem:[#allocation5 + $0x20] sm:$0xf]
    %v2858 = vld [vmem:[#allocation5 + $0x24] sm:$0xf]
    %v2859 = vld [vmem:[#allocation5 + $0x28] sm:$0xf]
    %v2860 = vld [vmem:[#allocation5 + $0x2c] sm:$0xf]
    %v2861 = vld [vmem:[#allocation5 + $0x30] sm:$0xf]
    %v2862 = vld [vmem:[#allocation5 + $0x34] sm:$0xf]
    %v2863 = vld [vmem:[#allocation5 + $0x38] sm:$0xf]
    %v2864 = vld [vmem:[#allocation5 + $0x3c] sm:$0xf]
    %v2865 = vld [vmem:[#allocation2 + $0x1] sm:$0xff]
    %v2866 = vld [vmem:[#allocation2 + $0x11] sm:$0xff]
    %v2867 = vld [vmem:[#allocation2 + $0x21] sm:$0xff]
    %v2868 = vld [vmem:[#allocation2 + $0x31] sm:$0xff]
    %v2869 = vld [vmem:[#allocation2 + $0x41] sm:$0xff]
    %v2870 = vld [vmem:[#allocation2 + $0x51] sm:$0xff]
    %v2871 = vld [vmem:[#allocation2 + $0x61] sm:$0xff]
    %v2872 = vld [vmem:[#allocation2 + $0x71] sm:$0xff]
    %v2873 = vld [vmem:[#allocation2 + $0xa1] sm:$0xff]
    %v2874 = vld [vmem:[#allocation2 + $0xb1] sm:$0xff]
    %v2875 = vld [vmem:[#allocation2 + $0xc1] sm:$0xff]
    %v2876 = vld [vmem:[#allocation2 + $0xd1] sm:$0xff]
    %v2877 = vld [vmem:[#allocation2 + $0xe1] sm:$0xff]
    %v2878 = vld [vmem:[#allocation2 + $0xf1] sm:$0xff]
    %v2879 = vld [vmem:[#allocation2 + $0x101] sm:$0xff]
    %v2880 = vld [vmem:[#allocation2 + $0x111] sm:$0xff]
    %v2881 = vpack.c.bf16 %v2866, %v2865
    %v2882 = vpack.c.bf16 %v2868, %v2867
    %v2883 = vpack.c.bf16 %v2870, %v2869
    %v2884 = vpack.c.bf16 %v2872, %v2871
    %v2885 = vpack.c.bf16 %v2874, %v2873
    %v2886 = vpack.c.bf16 %v2876, %v2875
    %v2887 = vpack.c.bf16 %v2878, %v2877
    %v2888 = vpack.c.bf16 %v2880, %v2879
    %s2889 = scalar_lea.vmem [#allocation5], 64
    %v2890 = vld [vmem:[%s2889] sm:$0xf]
    %v2891 = vld [vmem:[%s2889 + $0x4] sm:$0xf]
    %v2892 = vld [vmem:[%s2889 + $0x8] sm:$0xf]
    %v2893 = vld [vmem:[%s2889 + $0xc] sm:$0xf]
    %v2894 = vld [vmem:[%s2889 + $0x10] sm:$0xf]
    %v2895 = vld [vmem:[%s2889 + $0x14] sm:$0xf]
    %v2896 = vld [vmem:[%s2889 + $0x18] sm:$0xf]
    %v2897 = vld [vmem:[%s2889 + $0x1c] sm:$0xf]
    %v2898 = vld [vmem:[%s2889 + $0x20] sm:$0xf]
    %v2899 = vld [vmem:[%s2889 + $0x24] sm:$0xf]
    %v2900 = vld [vmem:[%s2889 + $0x28] sm:$0xf]
    %v2901 = vld [vmem:[%s2889 + $0x2c] sm:$0xf]
    %v2902 = vld [vmem:[%s2889 + $0x30] sm:$0xf]
    %v2903 = vld [vmem:[%s2889 + $0x34] sm:$0xf]
    %v2904 = vld [vmem:[%s2889 + $0x38] sm:$0xf]
    %v2905 = vld [vmem:[%s2889 + $0x3c] sm:$0xf]
    %v2922 = vunpack.c.l.b16 %v2890
    %v2923 = vunpack.c.l.b16 %v2891
    %v2924 = vunpack.c.l.b16 %v2892
    %v2925 = vunpack.c.l.b16 %v2893
    %v2926 = vunpack.c.l.b16 %v2894
    %v2927 = vunpack.c.l.b16 %v2895
    %v2928 = vunpack.c.l.b16 %v2896
    %v2929 = vunpack.c.l.b16 %v2897
    %v2930 = vunpack.c.l.b16 %v2898
    %v2931 = vunpack.c.l.b16 %v2899
    %v2932 = vunpack.c.l.b16 %v2900
    %v2933 = vunpack.c.l.b16 %v2901
    %v2934 = vunpack.c.l.b16 %v2902
    %v2935 = vunpack.c.l.b16 %v2903
    %v2936 = vunpack.c.l.b16 %v2904
    %v2937 = vunpack.c.l.b16 %v2905
    %v2938 = vpack.c.b16 %v2923, %v2922
    %v2939 = vpack.c.b16 %v2925, %v2924
    %v2940 = vpack.c.b16 %v2927, %v2926
    %v2941 = vpack.c.b16 %v2929, %v2928
    %v2942 = vpack.c.b16 %v2931, %v2930
    %v2943 = vpack.c.b16 %v2933, %v2932
    %v2944 = vpack.c.b16 %v2935, %v2934
    %v2945 = vpack.c.b16 %v2937, %v2936
    %2954 = vmatpush.bf16.msra.mxu0 %v2945
    %2955 = vmatpush.bf16.msra.mxu0 %v2944
    %2956 = vmatpush.bf16.msra.mxu0 %v2943
    %2957 = vmatpush.bf16.msra.mxu0 %v2942
    %2958 = vmatpush.bf16.msra.mxu0 %v2941
    %2959 = vmatpush.bf16.msra.mxu0 %v2940
    %2960 = vmatpush.bf16.msra.mxu0 %v2939
    %2961 = vmatpush.bf16.msra.mxu0 %v2938
    %2962 = vmatmul.bf16.gmra.mxu0 %v2881
    %v2963 = vpop.f32.mrf.mxu0
    %v2964 = vadd.f32 0.0, %v2963
    %v2965 = vpop.f32.mrf.mxu0
    %v2966 = vadd.f32 0.0, %v2965
    %2967 = vmatmul.bf16.gmra.mxu0 %v2882
    %v2968 = vpop.f32.mrf.mxu0
    %v2969 = vadd.f32 0.0, %v2968
    %v2970 = vpop.f32.mrf.mxu0
    %v2971 = vadd.f32 0.0, %v2970
    %2972 = vmatmul.bf16.gmra.mxu0 %v2883
    %v2973 = vpop.f32.mrf.mxu0
    %v2974 = vadd.f32 0.0, %v2973
    %v2975 = vpop.f32.mrf.mxu0
    %v2976 = vadd.f32 0.0, %v2975
    %2977 = vmatmul.bf16.gmra.mxu0 %v2884
    %v2978 = vpop.f32.mrf.mxu0
    %v2979 = vadd.f32 0.0, %v2978
    %v2980 = vpop.f32.mrf.mxu0
    %v2981 = vadd.f32 0.0, %v2980
    %2982 = vmatmul.bf16.gmra.mxu0 %v2885
    %v2983 = vpop.f32.mrf.mxu0
    %v2984 = vadd.f32 0.0, %v2983
    %v2985 = vpop.f32.mrf.mxu0
    %v2986 = vadd.f32 0.0, %v2985
    %2987 = vmatmul.bf16.gmra.mxu0 %v2886
    %v2988 = vpop.f32.mrf.mxu0
    %v2989 = vadd.f32 0.0, %v2988
    %v2990 = vpop.f32.mrf.mxu0
    %v2991 = vadd.f32 0.0, %v2990
    %2992 = vmatmul.bf16.gmra.mxu0 %v2887
    %v2993 = vpop.f32.mrf.mxu0
    %v2994 = vadd.f32 0.0, %v2993
    %v2995 = vpop.f32.mrf.mxu0
    %v2996 = vadd.f32 0.0, %v2995
    %2997 = vmatmul.bf16.gmra.mxu0 %v2888
    %v2998 = vpop.f32.mrf.mxu0
    %v2999 = vadd.f32 0.0, %v2998
    %v3000 = vpop.f32.mrf.mxu0
    %v3001 = vadd.f32 0.0, %v3000
    %3002 = vdwg.mxu0
    %v3019 = vunpack.c.l.b16 %v2849
    %v3020 = vunpack.c.l.b16 %v2850
    %v3021 = vunpack.c.l.b16 %v2851
    %v3022 = vunpack.c.l.b16 %v2852
    %v3023 = vunpack.c.l.b16 %v2853
    %v3024 = vunpack.c.l.b16 %v2854
    %v3025 = vunpack.c.l.b16 %v2855
    %v3026 = vunpack.c.l.b16 %v2856
    %v3027 = vunpack.c.l.b16 %v2857
    %v3028 = vunpack.c.l.b16 %v2858
    %v3029 = vunpack.c.l.b16 %v2859
    %v3030 = vunpack.c.l.b16 %v2860
    %v3031 = vunpack.c.l.b16 %v2861
    %v3032 = vunpack.c.l.b16 %v2862
    %v3033 = vunpack.c.l.b16 %v2863
    %v3034 = vunpack.c.l.b16 %v2864
    %v3035 = vpack.c.b16 %v3020, %v3019
    %v3036 = vpack.c.b16 %v3022, %v3021
    %v3037 = vpack.c.b16 %v3024, %v3023
    %v3038 = vpack.c.b16 %v3026, %v3025
    %v3039 = vpack.c.b16 %v3028, %v3027
    %v3040 = vpack.c.b16 %v3030, %v3029
    %v3041 = vpack.c.b16 %v3032, %v3031
    %v3042 = vpack.c.b16 %v3034, %v3033
    %3051 = vmatpush.bf16.msra.mxu0 %v3042
    %3052 = vmatpush.bf16.msra.mxu0 %v3041
    %3053 = vmatpush.bf16.msra.mxu0 %v3040
    %3054 = vmatpush.bf16.msra.mxu0 %v3039
    %3055 = vmatpush.bf16.msra.mxu0 %v3038
    %3056 = vmatpush.bf16.msra.mxu0 %v3037
    %3057 = vmatpush.bf16.msra.mxu0 %v3036
    %3058 = vmatpush.bf16.msra.mxu0 %v3035
    %3059 = vmatmul.bf16.gmra.mxu0 %v2841
    %v3060 = vpop.f32.mrf.mxu0
    %v3061 = vadd.f32 %v2964, %v3060
    %v3062 = vpop.f32.mrf.mxu0
    %v3063 = vadd.f32 %v2966, %v3062
    %3064 = vmatmul.bf16.gmra.mxu0 %v2842
    %v3065 = vpop.f32.mrf.mxu0
    %v3066 = vadd.f32 %v2969, %v3065
    %v3067 = vpop.f32.mrf.mxu0
    %v3068 = vadd.f32 %v2971, %v3067
    %3069 = vmatmul.bf16.gmra.mxu0 %v2843
    %v3070 = vpop.f32.mrf.mxu0
    %v3071 = vadd.f32 %v2974, %v3070
    %v3072 = vpop.f32.mrf.mxu0
    %v3073 = vadd.f32 %v2976, %v3072
    %3074 = vmatmul.bf16.gmra.mxu0 %v2844
    %v3075 = vpop.f32.mrf.mxu0
    %v3076 = vadd.f32 %v2979, %v3075
    %v3077 = vpop.f32.mrf.mxu0
    %v3078 = vadd.f32 %v2981, %v3077
    %3079 = vmatmul.bf16.gmra.mxu0 %v2845
    %v3080 = vpop.f32.mrf.mxu0
    %v3081 = vadd.f32 %v2984, %v3080
    %v3082 = vpop.f32.mrf.mxu0
    %v3083 = vadd.f32 %v2986, %v3082
    %3084 = vmatmul.bf16.gmra.mxu0 %v2846
    %v3085 = vpop.f32.mrf.mxu0
    %v3086 = vadd.f32 %v2989, %v3085
    %v3087 = vpop.f32.mrf.mxu0
    %v3088 = vadd.f32 %v2991, %v3087
    %3089 = vmatmul.bf16.gmra.mxu0 %v2847
    %v3090 = vpop.f32.mrf.mxu0
    %v3091 = vadd.f32 %v2994, %v3090
    %v3092 = vpop.f32.mrf.mxu0
    %v3093 = vadd.f32 %v2996, %v3092
    %3094 = vmatmul.bf16.gmra.mxu0 %v2848
    %v3095 = vpop.f32.mrf.mxu0
    %v3096 = vadd.f32 %v2999, %v3095
    %v3097 = vpop.f32.mrf.mxu0
    %v3098 = vadd.f32 %v3001, %v3097
    %3099 = vdwg.mxu0
    %v3100 = vld [vmem:[#allocation2 + $0x2] sm:$0xff]
    %v3101 = vld [vmem:[#allocation2 + $0x12] sm:$0xff]
    %v3102 = vld [vmem:[#allocation2 + $0x22] sm:$0xff]
    %v3103 = vld [vmem:[#allocation2 + $0x32] sm:$0xff]
    %v3104 = vld [vmem:[#allocation2 + $0x42] sm:$0xff]
    %v3105 = vld [vmem:[#allocation2 + $0x52] sm:$0xff]
    %v3106 = vld [vmem:[#allocation2 + $0x62] sm:$0xff]
    %v3107 = vld [vmem:[#allocation2 + $0x72] sm:$0xff]
    %v3108 = vld [vmem:[#allocation2 + $0xa2] sm:$0xff]
    %v3109 = vld [vmem:[#allocation2 + $0xb2] sm:$0xff]
    %v3110 = vld [vmem:[#allocation2 + $0xc2] sm:$0xff]
    %v3111 = vld [vmem:[#allocation2 + $0xd2] sm:$0xff]
    %v3112 = vld [vmem:[#allocation2 + $0xe2] sm:$0xff]
    %v3113 = vld [vmem:[#allocation2 + $0xf2] sm:$0xff]
    %v3114 = vld [vmem:[#allocation2 + $0x102] sm:$0xff]
    %v3115 = vld [vmem:[#allocation2 + $0x112] sm:$0xff]
    %v3116 = vpack.c.bf16 %v3101, %v3100
    %v3117 = vpack.c.bf16 %v3103, %v3102
    %v3118 = vpack.c.bf16 %v3105, %v3104
    %v3119 = vpack.c.bf16 %v3107, %v3106
    %v3120 = vpack.c.bf16 %v3109, %v3108
    %v3121 = vpack.c.bf16 %v3111, %v3110
    %v3122 = vpack.c.bf16 %v3113, %v3112
    %v3123 = vpack.c.bf16 %v3115, %v3114
    %s3124 = scalar_lea.vmem [#allocation5], 128
    %v3125 = vld [vmem:[%s3124] sm:$0xf]
    %v3126 = vld [vmem:[%s3124 + $0x4] sm:$0xf]
    %v3127 = vld [vmem:[%s3124 + $0x8] sm:$0xf]
    %v3128 = vld [vmem:[%s3124 + $0xc] sm:$0xf]
    %v3129 = vld [vmem:[%s3124 + $0x10] sm:$0xf]
    %v3130 = vld [vmem:[%s3124 + $0x14] sm:$0xf]
    %v3131 = vld [vmem:[%s3124 + $0x18] sm:$0xf]
    %v3132 = vld [vmem:[%s3124 + $0x1c] sm:$0xf]
    %v3133 = vld [vmem:[%s3124 + $0x20] sm:$0xf]
    %v3134 = vld [vmem:[%s3124 + $0x24] sm:$0xf]
    %v3135 = vld [vmem:[%s3124 + $0x28] sm:$0xf]
    %v3136 = vld [vmem:[%s3124 + $0x2c] sm:$0xf]
    %v3137 = vld [vmem:[%s3124 + $0x30] sm:$0xf]
    %v3138 = vld [vmem:[%s3124 + $0x34] sm:$0xf]
    %v3139 = vld [vmem:[%s3124 + $0x38] sm:$0xf]
    %v3140 = vld [vmem:[%s3124 + $0x3c] sm:$0xf]
    %v3157 = vunpack.c.l.b16 %v3125
    %v3158 = vunpack.c.l.b16 %v3126
    %v3159 = vunpack.c.l.b16 %v3127
    %v3160 = vunpack.c.l.b16 %v3128
    %v3161 = vunpack.c.l.b16 %v3129
    %v3162 = vunpack.c.l.b16 %v3130
    %v3163 = vunpack.c.l.b16 %v3131
    %v3164 = vunpack.c.l.b16 %v3132
    %v3165 = vunpack.c.l.b16 %v3133
    %v3166 = vunpack.c.l.b16 %v3134
    %v3167 = vunpack.c.l.b16 %v3135
    %v3168 = vunpack.c.l.b16 %v3136
    %v3169 = vunpack.c.l.b16 %v3137
    %v3170 = vunpack.c.l.b16 %v3138
    %v3171 = vunpack.c.l.b16 %v3139
    %v3172 = vunpack.c.l.b16 %v3140
    %v3173 = vpack.c.b16 %v3158, %v3157
    %v3174 = vpack.c.b16 %v3160, %v3159
    %v3175 = vpack.c.b16 %v3162, %v3161
    %v3176 = vpack.c.b16 %v3164, %v3163
    %v3177 = vpack.c.b16 %v3166, %v3165
    %v3178 = vpack.c.b16 %v3168, %v3167
    %v3179 = vpack.c.b16 %v3170, %v3169
    %v3180 = vpack.c.b16 %v3172, %v3171
    %3189 = vmatpush.bf16.msra.mxu0 %v3180
    %3190 = vmatpush.bf16.msra.mxu0 %v3179
    %3191 = vmatpush.bf16.msra.mxu0 %v3178
    %3192 = vmatpush.bf16.msra.mxu0 %v3177
    %3193 = vmatpush.bf16.msra.mxu0 %v3176
    %3194 = vmatpush.bf16.msra.mxu0 %v3175
    %3195 = vmatpush.bf16.msra.mxu0 %v3174
    %3196 = vmatpush.bf16.msra.mxu0 %v3173
    %3197 = vmatmul.bf16.gmra.mxu0 %v3116
    %v3198 = vpop.f32.mrf.mxu0
    %v3199 = vadd.f32 0.0, %v3198
    %v3200 = vpop.f32.mrf.mxu0
    %v3201 = vadd.f32 0.0, %v3200
    %3202 = vmatmul.bf16.gmra.mxu0 %v3117
    %v3203 = vpop.f32.mrf.mxu0
    %v3204 = vadd.f32 0.0, %v3203
    %v3205 = vpop.f32.mrf.mxu0
    %v3206 = vadd.f32 0.0, %v3205
    %3207 = vmatmul.bf16.gmra.mxu0 %v3118
    %v3208 = vpop.f32.mrf.mxu0
    %v3209 = vadd.f32 0.0, %v3208
    %v3210 = vpop.f32.mrf.mxu0
    %v3211 = vadd.f32 0.0, %v3210
    %3212 = vmatmul.bf16.gmra.mxu0 %v3119
    %v3213 = vpop.f32.mrf.mxu0
    %v3214 = vadd.f32 0.0, %v3213
    %v3215 = vpop.f32.mrf.mxu0
    %v3216 = vadd.f32 0.0, %v3215
    %3217 = vmatmul.bf16.gmra.mxu0 %v3120
    %v3218 = vpop.f32.mrf.mxu0
    %v3219 = vadd.f32 0.0, %v3218
    %v3220 = vpop.f32.mrf.mxu0
    %v3221 = vadd.f32 0.0, %v3220
    %3222 = vmatmul.bf16.gmra.mxu0 %v3121
    %v3223 = vpop.f32.mrf.mxu0
    %v3224 = vadd.f32 0.0, %v3223
    %v3225 = vpop.f32.mrf.mxu0
    %v3226 = vadd.f32 0.0, %v3225
    %3227 = vmatmul.bf16.gmra.mxu0 %v3122
    %v3228 = vpop.f32.mrf.mxu0
    %v3229 = vadd.f32 0.0, %v3228
    %v3230 = vpop.f32.mrf.mxu0
    %v3231 = vadd.f32 0.0, %v3230
    %3232 = vmatmul.bf16.gmra.mxu0 %v3123
    %v3233 = vpop.f32.mrf.mxu0
    %v3234 = vadd.f32 0.0, %v3233
    %v3235 = vpop.f32.mrf.mxu0
    %v3236 = vadd.f32 0.0, %v3235
    %3237 = vdwg.mxu0
    %v3238 = vadd.f32 %v3061, %v3199
    %v3239 = vadd.f32 %v3063, %v3201
    %v3240 = vadd.f32 %v3066, %v3204
    %v3241 = vadd.f32 %v3068, %v3206
    %v3242 = vadd.f32 %v3071, %v3209
    %v3243 = vadd.f32 %v3073, %v3211
    %v3244 = vadd.f32 %v3076, %v3214
    %v3245 = vadd.f32 %v3078, %v3216
    %v3246 = vadd.f32 %v3081, %v3219
    %v3247 = vadd.f32 %v3083, %v3221
    %v3248 = vadd.f32 %v3086, %v3224
    %v3249 = vadd.f32 %v3088, %v3226
    %v3250 = vadd.f32 %v3091, %v3229
    %v3251 = vadd.f32 %v3093, %v3231
    %v3252 = vadd.f32 %v3096, %v3234
    %v3253 = vadd.f32 %v3098, %v3236
    %v3254 = vld [vmem:[%s2808] sm:$0xff]
    %v3255 = vld [vmem:[%s2808 + $0x10] sm:$0xff]
    %v3256 = vld [vmem:[%s2808 + $0x20] sm:$0xff]
    %v3257 = vld [vmem:[%s2808 + $0x30] sm:$0xff]
    %v3258 = vld [vmem:[%s2808 + $0x40] sm:$0xff]
    %v3259 = vld [vmem:[%s2808 + $0x50] sm:$0xff]
    %v3260 = vld [vmem:[%s2808 + $0x60] sm:$0xff]
    %v3261 = vld [vmem:[%s2808 + $0x70] sm:$0xff]
    %v3262 = vld [vmem:[%s2808 + $0xa0] sm:$0xff]
    %v3263 = vld [vmem:[%s2808 + $0xb0] sm:$0xff]
    %v3264 = vld [vmem:[%s2808 + $0xc0] sm:$0xff]
    %v3265 = vld [vmem:[%s2808 + $0xd0] sm:$0xff]
    %v3266 = vld [vmem:[%s2808 + $0xe0] sm:$0xff]
    %v3267 = vld [vmem:[%s2808 + $0xf0] sm:$0xff]
    %v3268 = vld [vmem:[%s2808 + $0x100] sm:$0xff]
    %v3269 = vld [vmem:[%s2808 + $0x110] sm:$0xff]
    %v3270 = vpack.c.bf16 %v3255, %v3254
    %v3271 = vpack.c.bf16 %v3257, %v3256
    %v3272 = vpack.c.bf16 %v3259, %v3258
    %v3273 = vpack.c.bf16 %v3261, %v3260
    %v3274 = vpack.c.bf16 %v3263, %v3262
    %v3275 = vpack.c.bf16 %v3265, %v3264
    %v3276 = vpack.c.bf16 %v3267, %v3266
    %v3277 = vpack.c.bf16 %v3269, %v3268
    %s3278 = scalar_lea.vmem [#allocation5], 192
    %v3279 = vld [vmem:[%s3278] sm:$0xf]
    %v3280 = vld [vmem:[%s3278 + $0x4] sm:$0xf]
    %v3281 = vld [vmem:[%s3278 + $0x8] sm:$0xf]
    %v3282 = vld [vmem:[%s3278 + $0xc] sm:$0xf]
    %v3283 = vld [vmem:[%s3278 + $0x10] sm:$0xf]
    %v3284 = vld [vmem:[%s3278 + $0x14] sm:$0xf]
    %v3285 = vld [vmem:[%s3278 + $0x18] sm:$0xf]
    %v3286 = vld [vmem:[%s3278 + $0x1c] sm:$0xf]
    %v3287 = vld [vmem:[%s3278 + $0x20] sm:$0xf]
    %v3288 = vld [vmem:[%s3278 + $0x24] sm:$0xf]
    %v3289 = vld [vmem:[%s3278 + $0x28] sm:$0xf]
    %v3290 = vld [vmem:[%s3278 + $0x2c] sm:$0xf]
    %v3291 = vld [vmem:[%s3278 + $0x30] sm:$0xf]
    %v3292 = vld [vmem:[%s3278 + $0x34] sm:$0xf]
    %v3293 = vld [vmem:[%s3278 + $0x38] sm:$0xf]
    %v3294 = vld [vmem:[%s3278 + $0x3c] sm:$0xf]
    %v3311 = vunpack.c.l.b16 %v3279
    %v3312 = vunpack.c.l.b16 %v3280
    %v3313 = vunpack.c.l.b16 %v3281
    %v3314 = vunpack.c.l.b16 %v3282
    %v3315 = vunpack.c.l.b16 %v3283
    %v3316 = vunpack.c.l.b16 %v3284
    %v3317 = vunpack.c.l.b16 %v3285
    %v3318 = vunpack.c.l.b16 %v3286
    %v3319 = vunpack.c.l.b16 %v3287
    %v3320 = vunpack.c.l.b16 %v3288
    %v3321 = vunpack.c.l.b16 %v3289
    %v3322 = vunpack.c.l.b16 %v3290
    %v3323 = vunpack.c.l.b16 %v3291
    %v3324 = vunpack.c.l.b16 %v3292
    %v3325 = vunpack.c.l.b16 %v3293
    %v3326 = vunpack.c.l.b16 %v3294
    %v3327 = vpack.c.b16 %v3312, %v3311
    %v3328 = vpack.c.b16 %v3314, %v3313
    %v3329 = vpack.c.b16 %v3316, %v3315
    %v3330 = vpack.c.b16 %v3318, %v3317
    %v3331 = vpack.c.b16 %v3320, %v3319
    %v3332 = vpack.c.b16 %v3322, %v3321
    %v3333 = vpack.c.b16 %v3324, %v3323
    %v3334 = vpack.c.b16 %v3326, %v3325
    %3343 = vmatpush.bf16.msra.mxu0 %v3334
    %3344 = vmatpush.bf16.msra.mxu0 %v3333
    %3345 = vmatpush.bf16.msra.mxu0 %v3332
    %3346 = vmatpush.bf16.msra.mxu0 %v3331
    %3347 = vmatpush.bf16.msra.mxu0 %v3330
    %3348 = vmatpush.bf16.msra.mxu0 %v3329
    %3349 = vmatpush.bf16.msra.mxu0 %v3328
    %3350 = vmatpush.bf16.msra.mxu0 %v3327
    %3351 = vmatmul.bf16.gmra.mxu0 %v3270
    %v3352 = vpop.f32.mrf.mxu0
    %v3353 = vadd.f32 0.0, %v3352
    %v3354 = vpop.f32.mrf.mxu0
    %v3355 = vadd.f32 0.0, %v3354
    %3356 = vmatmul.bf16.gmra.mxu0 %v3271
    %v3357 = vpop.f32.mrf.mxu0
    %v3358 = vadd.f32 0.0, %v3357
    %v3359 = vpop.f32.mrf.mxu0
    %v3360 = vadd.f32 0.0, %v3359
    %3361 = vmatmul.bf16.gmra.mxu0 %v3272
    %v3362 = vpop.f32.mrf.mxu0
    %v3363 = vadd.f32 0.0, %v3362
    %v3364 = vpop.f32.mrf.mxu0
    %v3365 = vadd.f32 0.0, %v3364
    %3366 = vmatmul.bf16.gmra.mxu0 %v3273
    %v3367 = vpop.f32.mrf.mxu0
    %v3368 = vadd.f32 0.0, %v3367
    %v3369 = vpop.f32.mrf.mxu0
    %v3370 = vadd.f32 0.0, %v3369
    %3371 = vmatmul.bf16.gmra.mxu0 %v3274
    %v3372 = vpop.f32.mrf.mxu0
    %v3373 = vadd.f32 0.0, %v3372
    %v3374 = vpop.f32.mrf.mxu0
    %v3375 = vadd.f32 0.0, %v3374
    %3376 = vmatmul.bf16.gmra.mxu0 %v3275
    %v3377 = vpop.f32.mrf.mxu0
    %v3378 = vadd.f32 0.0, %v3377
    %v3379 = vpop.f32.mrf.mxu0
    %v3380 = vadd.f32 0.0, %v3379
    %3381 = vmatmul.bf16.gmra.mxu0 %v3276
    %v3382 = vpop.f32.mrf.mxu0
    %v3383 = vadd.f32 0.0, %v3382
    %v3384 = vpop.f32.mrf.mxu0
    %v3385 = vadd.f32 0.0, %v3384
    %3386 = vmatmul.bf16.gmra.mxu0 %v3277
    %v3387 = vpop.f32.mrf.mxu0
    %v3388 = vadd.f32 0.0, %v3387
    %v3389 = vpop.f32.mrf.mxu0
    %v3390 = vadd.f32 0.0, %v3389
    %3391 = vdwg.mxu0
    %v3392 = vadd.f32 %v3238, %v3353
    %v3393 = vadd.f32 %v3239, %v3355
    %v3394 = vadd.f32 %v3240, %v3358
    %v3395 = vadd.f32 %v3241, %v3360
    %v3396 = vadd.f32 %v3242, %v3363
    %v3397 = vadd.f32 %v3243, %v3365
    %v3398 = vadd.f32 %v3244, %v3368
    %v3399 = vadd.f32 %v3245, %v3370
    %v3400 = vadd.f32 %v3246, %v3373
    %v3401 = vadd.f32 %v3247, %v3375
    %v3402 = vadd.f32 %v3248, %v3378
    %v3403 = vadd.f32 %v3249, %v3380
    %v3404 = vadd.f32 %v3250, %v3383
    %v3405 = vadd.f32 %v3251, %v3385
    %v3406 = vadd.f32 %v3252, %v3388
    %v3407 = vadd.f32 %v3253, %v3390
    %v3408 = vld [vmem:[%s2808 + $0x1] sm:$0xff]
    %v3409 = vld [vmem:[%s2808 + $0x11] sm:$0xff]
    %v3410 = vld [vmem:[%s2808 + $0x21] sm:$0xff]
    %v3411 = vld [vmem:[%s2808 + $0x31] sm:$0xff]
    %v3412 = vld [vmem:[%s2808 + $0x41] sm:$0xff]
    %v3413 = vld [vmem:[%s2808 + $0x51] sm:$0xff]
    %v3414 = vld [vmem:[%s2808 + $0x61] sm:$0xff]
    %v3415 = vld [vmem:[%s2808 + $0x71] sm:$0xff]
    %v3416 = vld [vmem:[%s2808 + $0xa1] sm:$0xff]
    %v3417 = vld [vmem:[%s2808 + $0xb1] sm:$0xff]
    %v3418 = vld [vmem:[%s2808 + $0xc1] sm:$0xff]
    %v3419 = vld [vmem:[%s2808 + $0xd1] sm:$0xff]
    %v3420 = vld [vmem:[%s2808 + $0xe1] sm:$0xff]
    %v3421 = vld [vmem:[%s2808 + $0xf1] sm:$0xff]
    %v3422 = vld [vmem:[%s2808 + $0x101] sm:$0xff]
    %v3423 = vld [vmem:[%s2808 + $0x111] sm:$0xff]
    %v3424 = vpack.c.bf16 %v3409, %v3408
    %v3425 = vpack.c.bf16 %v3411, %v3410
    %v3426 = vpack.c.bf16 %v3413, %v3412
    %v3427 = vpack.c.bf16 %v3415, %v3414
    %v3428 = vpack.c.bf16 %v3417, %v3416
    %v3429 = vpack.c.bf16 %v3419, %v3418
    %v3430 = vpack.c.bf16 %v3421, %v3420
    %v3431 = vpack.c.bf16 %v3423, %v3422
    %s3432 = scalar_lea.vmem [#allocation5], 256
    %v3433 = vld [vmem:[%s3432] sm:$0xf]
    %v3434 = vld [vmem:[%s3432 + $0x4] sm:$0xf]
    %v3435 = vld [vmem:[%s3432 + $0x8] sm:$0xf]
    %v3436 = vld [vmem:[%s3432 + $0xc] sm:$0xf]
    %v3437 = vld [vmem:[%s3432 + $0x10] sm:$0xf]
    %v3438 = vld [vmem:[%s3432 + $0x14] sm:$0xf]
    %v3439 = vld [vmem:[%s3432 + $0x18] sm:$0xf]
    %v3440 = vld [vmem:[%s3432 + $0x1c] sm:$0xf]
    %v3441 = vld [vmem:[%s3432 + $0x20] sm:$0xf]
    %v3442 = vld [vmem:[%s3432 + $0x24] sm:$0xf]
    %v3443 = vld [vmem:[%s3432 + $0x28] sm:$0xf]
    %v3444 = vld [vmem:[%s3432 + $0x2c] sm:$0xf]
    %v3445 = vld [vmem:[%s3432 + $0x30] sm:$0xf]
    %v3446 = vld [vmem:[%s3432 + $0x34] sm:$0xf]
    %v3447 = vld [vmem:[%s3432 + $0x38] sm:$0xf]
    %v3448 = vld [vmem:[%s3432 + $0x3c] sm:$0xf]
    %v3465 = vunpack.c.l.b16 %v3433
    %v3466 = vunpack.c.l.b16 %v3434
    %v3467 = vunpack.c.l.b16 %v3435
    %v3468 = vunpack.c.l.b16 %v3436
    %v3469 = vunpack.c.l.b16 %v3437
    %v3470 = vunpack.c.l.b16 %v3438
    %v3471 = vunpack.c.l.b16 %v3439
    %v3472 = vunpack.c.l.b16 %v3440
    %v3473 = vunpack.c.l.b16 %v3441
    %v3474 = vunpack.c.l.b16 %v3442
    %v3475 = vunpack.c.l.b16 %v3443
    %v3476 = vunpack.c.l.b16 %v3444
    %v3477 = vunpack.c.l.b16 %v3445
    %v3478 = vunpack.c.l.b16 %v3446
    %v3479 = vunpack.c.l.b16 %v3447
    %v3480 = vunpack.c.l.b16 %v3448
    %v3481 = vpack.c.b16 %v3466, %v3465
    %v3482 = vpack.c.b16 %v3468, %v3467
    %v3483 = vpack.c.b16 %v3470, %v3469
    %v3484 = vpack.c.b16 %v3472, %v3471
    %v3485 = vpack.c.b16 %v3474, %v3473
    %v3486 = vpack.c.b16 %v3476, %v3475
    %v3487 = vpack.c.b16 %v3478, %v3477
    %v3488 = vpack.c.b16 %v3480, %v3479
    %3497 = vmatpush.bf16.msra.mxu0 %v3488
    %3498 = vmatpush.bf16.msra.mxu0 %v3487
    %3499 = vmatpush.bf16.msra.mxu0 %v3486
    %3500 = vmatpush.bf16.msra.mxu0 %v3485
    %3501 = vmatpush.bf16.msra.mxu0 %v3484
    %3502 = vmatpush.bf16.msra.mxu0 %v3483
    %3503 = vmatpush.bf16.msra.mxu0 %v3482
    %3504 = vmatpush.bf16.msra.mxu0 %v3481
    %3505 = vmatmul.bf16.gmra.mxu0 %v3424
    %v3506 = vpop.f32.mrf.mxu0
    %v3507 = vadd.f32 0.0, %v3506
    %v3508 = vpop.f32.mrf.mxu0
    %v3509 = vadd.f32 0.0, %v3508
    %3510 = vmatmul.bf16.gmra.mxu0 %v3425
    %v3511 = vpop.f32.mrf.mxu0
    %v3512 = vadd.f32 0.0, %v3511
    %v3513 = vpop.f32.mrf.mxu0
    %v3514 = vadd.f32 0.0, %v3513
    %3515 = vmatmul.bf16.gmra.mxu0 %v3426
    %v3516 = vpop.f32.mrf.mxu0
    %v3517 = vadd.f32 0.0, %v3516
    %v3518 = vpop.f32.mrf.mxu0
    %v3519 = vadd.f32 0.0, %v3518
    %3520 = vmatmul.bf16.gmra.mxu0 %v3427
    %v3521 = vpop.f32.mrf.mxu0
    %v3522 = vadd.f32 0.0, %v3521
    %v3523 = vpop.f32.mrf.mxu0
    %v3524 = vadd.f32 0.0, %v3523
    %3525 = vmatmul.bf16.gmra.mxu0 %v3428
    %v3526 = vpop.f32.mrf.mxu0
    %v3527 = vadd.f32 0.0, %v3526
    %v3528 = vpop.f32.mrf.mxu0
    %v3529 = vadd.f32 0.0, %v3528
    %3530 = vmatmul.bf16.gmra.mxu0 %v3429
    %v3531 = vpop.f32.mrf.mxu0
    %v3532 = vadd.f32 0.0, %v3531
    %v3533 = vpop.f32.mrf.mxu0
    %v3534 = vadd.f32 0.0, %v3533
    %3535 = vmatmul.bf16.gmra.mxu0 %v3430
    %v3536 = vpop.f32.mrf.mxu0
    %v3537 = vadd.f32 0.0, %v3536
    %v3538 = vpop.f32.mrf.mxu0
    %v3539 = vadd.f32 0.0, %v3538
    %3540 = vmatmul.bf16.gmra.mxu0 %v3431
    %v3541 = vpop.f32.mrf.mxu0
    %v3542 = vadd.f32 0.0, %v3541
    %v3543 = vpop.f32.mrf.mxu0
    %v3544 = vadd.f32 0.0, %v3543
    %3545 = vdwg.mxu0
    %v3546 = vadd.f32 %v3392, %v3507
    %v3547 = vadd.f32 %v3393, %v3509
    %v3548 = vadd.f32 %v3394, %v3512
    %v3549 = vadd.f32 %v3395, %v3514
    %v3550 = vadd.f32 %v3396, %v3517
    %v3551 = vadd.f32 %v3397, %v3519
    %v3552 = vadd.f32 %v3398, %v3522
    %v3553 = vadd.f32 %v3399, %v3524
    %v3554 = vadd.f32 %v3400, %v3527
    %v3555 = vadd.f32 %v3401, %v3529
    %v3556 = vadd.f32 %v3402, %v3532
    %v3557 = vadd.f32 %v3403, %v3534
    %v3558 = vadd.f32 %v3404, %v3537
    %v3559 = vadd.f32 %v3405, %v3539
    %v3560 = vadd.f32 %v3406, %v3542
    %v3561 = vadd.f32 %v3407, %v3544
    %v3562 = vld [vmem:[%s2808 + $0x2] sm:$0xff]
    %v3563 = vld [vmem:[%s2808 + $0x12] sm:$0xff]
    %v3564 = vld [vmem:[%s2808 + $0x22] sm:$0xff]
    %v3565 = vld [vmem:[%s2808 + $0x32] sm:$0xff]
    %v3566 = vld [vmem:[%s2808 + $0x42] sm:$0xff]
    %v3567 = vld [vmem:[%s2808 + $0x52] sm:$0xff]
    %v3568 = vld [vmem:[%s2808 + $0x62] sm:$0xff]
    %v3569 = vld [vmem:[%s2808 + $0x72] sm:$0xff]
    %v3570 = vld [vmem:[%s2808 + $0xa2] sm:$0xff]
    %v3571 = vld [vmem:[%s2808 + $0xb2] sm:$0xff]
    %v3572 = vld [vmem:[%s2808 + $0xc2] sm:$0xff]
    %v3573 = vld [vmem:[%s2808 + $0xd2] sm:$0xff]
    %v3574 = vld [vmem:[%s2808 + $0xe2] sm:$0xff]
    %v3575 = vld [vmem:[%s2808 + $0xf2] sm:$0xff]
    %v3576 = vld [vmem:[%s2808 + $0x102] sm:$0xff]
    %v3577 = vld [vmem:[%s2808 + $0x112] sm:$0xff]
    %v3578 = vpack.c.bf16 %v3563, %v3562
    %v3579 = vpack.c.bf16 %v3565, %v3564
    %v3580 = vpack.c.bf16 %v3567, %v3566
    %v3581 = vpack.c.bf16 %v3569, %v3568
    %v3582 = vpack.c.bf16 %v3571, %v3570
    %v3583 = vpack.c.bf16 %v3573, %v3572
    %v3584 = vpack.c.bf16 %v3575, %v3574
    %v3585 = vpack.c.bf16 %v3577, %v3576
    %s3586 = scalar_lea.vmem [#allocation5], 320
    %v3587 = vld [vmem:[%s3586] sm:$0xf]
    %v3588 = vld [vmem:[%s3586 + $0x4] sm:$0xf]
    %v3589 = vld [vmem:[%s3586 + $0x8] sm:$0xf]
    %v3590 = vld [vmem:[%s3586 + $0xc] sm:$0xf]
    %v3591 = vld [vmem:[%s3586 + $0x10] sm:$0xf]
    %v3592 = vld [vmem:[%s3586 + $0x14] sm:$0xf]
    %v3593 = vld [vmem:[%s3586 + $0x18] sm:$0xf]
    %v3594 = vld [vmem:[%s3586 + $0x1c] sm:$0xf]
    %v3595 = vld [vmem:[%s3586 + $0x20] sm:$0xf]
    %v3596 = vld [vmem:[%s3586 + $0x24] sm:$0xf]
    %v3597 = vld [vmem:[%s3586 + $0x28] sm:$0xf]
    %v3598 = vld [vmem:[%s3586 + $0x2c] sm:$0xf]
    %v3599 = vld [vmem:[%s3586 + $0x30] sm:$0xf]
    %v3600 = vld [vmem:[%s3586 + $0x34] sm:$0xf]
    %v3601 = vld [vmem:[%s3586 + $0x38] sm:$0xf]
    %v3602 = vld [vmem:[%s3586 + $0x3c] sm:$0xf]
    %v3619 = vunpack.c.l.b16 %v3587
    %v3620 = vunpack.c.l.b16 %v3588
    %v3621 = vunpack.c.l.b16 %v3589
    %v3622 = vunpack.c.l.b16 %v3590
    %v3623 = vunpack.c.l.b16 %v3591
    %v3624 = vunpack.c.l.b16 %v3592
    %v3625 = vunpack.c.l.b16 %v3593
    %v3626 = vunpack.c.l.b16 %v3594
    %v3627 = vunpack.c.l.b16 %v3595
    %v3628 = vunpack.c.l.b16 %v3596
    %v3629 = vunpack.c.l.b16 %v3597
    %v3630 = vunpack.c.l.b16 %v3598
    %v3631 = vunpack.c.l.b16 %v3599
    %v3632 = vunpack.c.l.b16 %v3600
    %v3633 = vunpack.c.l.b16 %v3601
    %v3634 = vunpack.c.l.b16 %v3602
    %v3635 = vpack.c.b16 %v3620, %v3619
    %v3636 = vpack.c.b16 %v3622, %v3621
    %v3637 = vpack.c.b16 %v3624, %v3623
    %v3638 = vpack.c.b16 %v3626, %v3625
    %v3639 = vpack.c.b16 %v3628, %v3627
    %v3640 = vpack.c.b16 %v3630, %v3629
    %v3641 = vpack.c.b16 %v3632, %v3631
    %v3642 = vpack.c.b16 %v3634, %v3633
    %3651 = vmatpush.bf16.msra.mxu0 %v3642
    %3652 = vmatpush.bf16.msra.mxu0 %v3641
    %3653 = vmatpush.bf16.msra.mxu0 %v3640
    %3654 = vmatpush.bf16.msra.mxu0 %v3639
    %3655 = vmatpush.bf16.msra.mxu0 %v3638
    %3656 = vmatpush.bf16.msra.mxu0 %v3637
    %3657 = vmatpush.bf16.msra.mxu0 %v3636
    %3658 = vmatpush.bf16.msra.mxu0 %v3635
    %3659 = vmatmul.bf16.gmra.mxu0 %v3578
    %v3660 = vpop.f32.mrf.mxu0
    %v3661 = vadd.f32 0.0, %v3660
    %v3662 = vpop.f32.mrf.mxu0
    %v3663 = vadd.f32 0.0, %v3662
    %3664 = vmatmul.bf16.gmra.mxu0 %v3579
    %v3665 = vpop.f32.mrf.mxu0
    %v3666 = vadd.f32 0.0, %v3665
    %v3667 = vpop.f32.mrf.mxu0
    %v3668 = vadd.f32 0.0, %v3667
    %3669 = vmatmul.bf16.gmra.mxu0 %v3580
    %v3670 = vpop.f32.mrf.mxu0
    %v3671 = vadd.f32 0.0, %v3670
    %v3672 = vpop.f32.mrf.mxu0
    %v3673 = vadd.f32 0.0, %v3672
    %3674 = vmatmul.bf16.gmra.mxu0 %v3581
    %v3675 = vpop.f32.mrf.mxu0
    %v3676 = vadd.f32 0.0, %v3675
    %v3677 = vpop.f32.mrf.mxu0
    %v3678 = vadd.f32 0.0, %v3677
    %3679 = vmatmul.bf16.gmra.mxu0 %v3582
    %v3680 = vpop.f32.mrf.mxu0
    %v3681 = vadd.f32 0.0, %v3680
    %v3682 = vpop.f32.mrf.mxu0
    %v3683 = vadd.f32 0.0, %v3682
    %3684 = vmatmul.bf16.gmra.mxu0 %v3583
    %v3685 = vpop.f32.mrf.mxu0
    %v3686 = vadd.f32 0.0, %v3685
    %v3687 = vpop.f32.mrf.mxu0
    %v3688 = vadd.f32 0.0, %v3687
    %3689 = vmatmul.bf16.gmra.mxu0 %v3584
    %v3690 = vpop.f32.mrf.mxu0
    %v3691 = vadd.f32 0.0, %v3690
    %v3692 = vpop.f32.mrf.mxu0
    %v3693 = vadd.f32 0.0, %v3692
    %3694 = vmatmul.bf16.gmra.mxu0 %v3585
    %v3695 = vpop.f32.mrf.mxu0
    %v3696 = vadd.f32 0.0, %v3695
    %v3697 = vpop.f32.mrf.mxu0
    %v3698 = vadd.f32 0.0, %v3697
    %3699 = vdwg.mxu0
    %v3700 = vadd.f32 %v3546, %v3661
    %v3701 = vadd.f32 %v3547, %v3663
    %v3702 = vadd.f32 %v3548, %v3666
    %v3703 = vadd.f32 %v3549, %v3668
    %v3704 = vadd.f32 %v3550, %v3671
    %v3705 = vadd.f32 %v3551, %v3673
    %v3706 = vadd.f32 %v3552, %v3676
    %v3707 = vadd.f32 %v3553, %v3678
    %v3708 = vadd.f32 %v3554, %v3681
    %v3709 = vadd.f32 %v3555, %v3683
    %v3710 = vadd.f32 %v3556, %v3686
    %v3711 = vadd.f32 %v3557, %v3688
    %v3712 = vadd.f32 %v3558, %v3691
    %v3713 = vadd.f32 %v3559, %v3693
    %v3714 = vadd.f32 %v3560, %v3696
    %v3715 = vadd.f32 %v3561, %v3698
    %s3716 = scalar_lea.vmem [#allocation2], 32
    %v3717 = vld [vmem:[%s3716] sm:$0xff]
    %v3718 = vld [vmem:[%s3716 + $0x10] sm:$0xff]
    %v3719 = vld [vmem:[%s3716 + $0x20] sm:$0xff]
    %v3720 = vld [vmem:[%s3716 + $0x30] sm:$0xff]
    %v3721 = vld [vmem:[%s3716 + $0x40] sm:$0xff]
    %v3722 = vld [vmem:[%s3716 + $0x50] sm:$0xff]
    %v3723 = vld [vmem:[%s3716 + $0x60] sm:$0xff]
    %v3724 = vld [vmem:[%s3716 + $0x70] sm:$0xff]
    %v3725 = vld [vmem:[%s3716 + $0xa0] sm:$0xff]
    %v3726 = vld [vmem:[%s3716 + $0xb0] sm:$0xff]
    %v3727 = vld [vmem:[%s3716 + $0xc0] sm:$0xff]
    %v3728 = vld [vmem:[%s3716 + $0xd0] sm:$0xff]
    %v3729 = vld [vmem:[%s3716 + $0xe0] sm:$0xff]
    %v3730 = vld [vmem:[%s3716 + $0xf0] sm:$0xff]
    %v3731 = vld [vmem:[%s3716 + $0x100] sm:$0xff]
    %v3732 = vld [vmem:[%s3716 + $0x110] sm:$0xff]
    %v3733 = vpack.c.bf16 %v3718, %v3717
    %v3734 = vpack.c.bf16 %v3720, %v3719
    %v3735 = vpack.c.bf16 %v3722, %v3721
    %v3736 = vpack.c.bf16 %v3724, %v3723
    %v3737 = vpack.c.bf16 %v3726, %v3725
    %v3738 = vpack.c.bf16 %v3728, %v3727
    %v3739 = vpack.c.bf16 %v3730, %v3729
    %v3740 = vpack.c.bf16 %v3732, %v3731
    %s3741 = scalar_lea.vmem [#allocation5], 384
    %v3742 = vld [vmem:[%s3741] sm:$0xf]
    %v3743 = vld [vmem:[%s3741 + $0x4] sm:$0xf]
    %v3744 = vld [vmem:[%s3741 + $0x8] sm:$0xf]
    %v3745 = vld [vmem:[%s3741 + $0xc] sm:$0xf]
    %v3746 = vld [vmem:[%s3741 + $0x10] sm:$0xf]
    %v3747 = vld [vmem:[%s3741 + $0x14] sm:$0xf]
    %v3748 = vld [vmem:[%s3741 + $0x18] sm:$0xf]
    %v3749 = vld [vmem:[%s3741 + $0x1c] sm:$0xf]
    %v3750 = vld [vmem:[%s3741 + $0x20] sm:$0xf]
    %v3751 = vld [vmem:[%s3741 + $0x24] sm:$0xf]
    %v3752 = vld [vmem:[%s3741 + $0x28] sm:$0xf]
    %v3753 = vld [vmem:[%s3741 + $0x2c] sm:$0xf]
    %v3754 = vld [vmem:[%s3741 + $0x30] sm:$0xf]
    %v3755 = vld [vmem:[%s3741 + $0x34] sm:$0xf]
    %v3756 = vld [vmem:[%s3741 + $0x38] sm:$0xf]
    %v3757 = vld [vmem:[%s3741 + $0x3c] sm:$0xf]
    %v3774 = vunpack.c.l.b16 %v3742
    %v3775 = vunpack.c.l.b16 %v3743
    %v3776 = vunpack.c.l.b16 %v3744
    %v3777 = vunpack.c.l.b16 %v3745
    %v3778 = vunpack.c.l.b16 %v3746
    %v3779 = vunpack.c.l.b16 %v3747
    %v3780 = vunpack.c.l.b16 %v3748
    %v3781 = vunpack.c.l.b16 %v3749
    %v3782 = vunpack.c.l.b16 %v3750
    %v3783 = vunpack.c.l.b16 %v3751
    %v3784 = vunpack.c.l.b16 %v3752
    %v3785 = vunpack.c.l.b16 %v3753
    %v3786 = vunpack.c.l.b16 %v3754
    %v3787 = vunpack.c.l.b16 %v3755
    %v3788 = vunpack.c.l.b16 %v3756
    %v3789 = vunpack.c.l.b16 %v3757
    %v3790 = vpack.c.b16 %v3775, %v3774
    %v3791 = vpack.c.b16 %v3777, %v3776
    %v3792 = vpack.c.b16 %v3779, %v3778
    %v3793 = vpack.c.b16 %v3781, %v3780
    %v3794 = vpack.c.b16 %v3783, %v3782
    %v3795 = vpack.c.b16 %v3785, %v3784
    %v3796 = vpack.c.b16 %v3787, %v3786
    %v3797 = vpack.c.b16 %v3789, %v3788
    %3806 = vmatpush.bf16.msra.mxu0 %v3797
    %3807 = vmatpush.bf16.msra.mxu0 %v3796
    %3808 = vmatpush.bf16.msra.mxu0 %v3795
    %3809 = vmatpush.bf16.msra.mxu0 %v3794
    %3810 = vmatpush.bf16.msra.mxu0 %v3793
    %3811 = vmatpush.bf16.msra.mxu0 %v3792
    %3812 = vmatpush.bf16.msra.mxu0 %v3791
    %3813 = vmatpush.bf16.msra.mxu0 %v3790
    %3814 = vmatmul.bf16.gmra.mxu0 %v3733
    %v3815 = vpop.f32.mrf.mxu0
    %v3816 = vadd.f32 0.0, %v3815
    %v3817 = vpop.f32.mrf.mxu0
    %v3818 = vadd.f32 0.0, %v3817
    %3819 = vmatmul.bf16.gmra.mxu0 %v3734
    %v3820 = vpop.f32.mrf.mxu0
    %v3821 = vadd.f32 0.0, %v3820
    %v3822 = vpop.f32.mrf.mxu0
    %v3823 = vadd.f32 0.0, %v3822
    %3824 = vmatmul.bf16.gmra.mxu0 %v3735
    %v3825 = vpop.f32.mrf.mxu0
    %v3826 = vadd.f32 0.0, %v3825
    %v3827 = vpop.f32.mrf.mxu0
    %v3828 = vadd.f32 0.0, %v3827
    %3829 = vmatmul.bf16.gmra.mxu0 %v3736
    %v3830 = vpop.f32.mrf.mxu0
    %v3831 = vadd.f32 0.0, %v3830
    %v3832 = vpop.f32.mrf.mxu0
    %v3833 = vadd.f32 0.0, %v3832
    %3834 = vmatmul.bf16.gmra.mxu0 %v3737
    %v3835 = vpop.f32.mrf.mxu0
    %v3836 = vadd.f32 0.0, %v3835
    %v3837 = vpop.f32.mrf.mxu0
    %v3838 = vadd.f32 0.0, %v3837
    %3839 = vmatmul.bf16.gmra.mxu0 %v3738
    %v3840 = vpop.f32.mrf.mxu0
    %v3841 = vadd.f32 0.0, %v3840
    %v3842 = vpop.f32.mrf.mxu0
    %v3843 = vadd.f32 0.0, %v3842
    %3844 = vmatmul.bf16.gmra.mxu0 %v3739
    %v3845 = vpop.f32.mrf.mxu0
    %v3846 = vadd.f32 0.0, %v3845
    %v3847 = vpop.f32.mrf.mxu0
    %v3848 = vadd.f32 0.0, %v3847
    %3849 = vmatmul.bf16.gmra.mxu0 %v3740
    %v3850 = vpop.f32.mrf.mxu0
    %v3851 = vadd.f32 0.0, %v3850
    %v3852 = vpop.f32.mrf.mxu0
    %v3853 = vadd.f32 0.0, %v3852
    %3854 = vdwg.mxu0
    %v3855 = vadd.f32 %v3700, %v3816
    %v3856 = vadd.f32 %v3701, %v3818
    %v3857 = vadd.f32 %v3702, %v3821
    %v3858 = vadd.f32 %v3703, %v3823
    %v3859 = vadd.f32 %v3704, %v3826
    %v3860 = vadd.f32 %v3705, %v3828
    %v3861 = vadd.f32 %v3706, %v3831
    %v3862 = vadd.f32 %v3707, %v3833
    %v3863 = vadd.f32 %v3708, %v3836
    %v3864 = vadd.f32 %v3709, %v3838
    %v3865 = vadd.f32 %v3710, %v3841
    %v3866 = vadd.f32 %v3711, %v3843
    %v3867 = vadd.f32 %v3712, %v3846
    %v3868 = vadd.f32 %v3713, %v3848
    %v3869 = vadd.f32 %v3714, %v3851
    %v3870 = vadd.f32 %v3715, %v3853
    %v3871 = vld [vmem:[%s3716 + $0x1] sm:$0xff]
    %v3872 = vld [vmem:[%s3716 + $0x11] sm:$0xff]
    %v3873 = vld [vmem:[%s3716 + $0x21] sm:$0xff]
    %v3874 = vld [vmem:[%s3716 + $0x31] sm:$0xff]
    %v3875 = vld [vmem:[%s3716 + $0x41] sm:$0xff]
    %v3876 = vld [vmem:[%s3716 + $0x51] sm:$0xff]
    %v3877 = vld [vmem:[%s3716 + $0x61] sm:$0xff]
    %v3878 = vld [vmem:[%s3716 + $0x71] sm:$0xff]
    %v3879 = vld [vmem:[%s3716 + $0xa1] sm:$0xff]
    %v3880 = vld [vmem:[%s3716 + $0xb1] sm:$0xff]
    %v3881 = vld [vmem:[%s3716 + $0xc1] sm:$0xff]
    %v3882 = vld [vmem:[%s3716 + $0xd1] sm:$0xff]
    %v3883 = vld [vmem:[%s3716 + $0xe1] sm:$0xff]
    %v3884 = vld [vmem:[%s3716 + $0xf1] sm:$0xff]
    %v3885 = vld [vmem:[%s3716 + $0x101] sm:$0xff]
    %v3886 = vld [vmem:[%s3716 + $0x111] sm:$0xff]
    %v3887 = vpack.c.bf16 %v3872, %v3871
    %v3888 = vpack.c.bf16 %v3874, %v3873
    %v3889 = vpack.c.bf16 %v3876, %v3875
    %v3890 = vpack.c.bf16 %v3878, %v3877
    %v3891 = vpack.c.bf16 %v3880, %v3879
    %v3892 = vpack.c.bf16 %v3882, %v3881
    %v3893 = vpack.c.bf16 %v3884, %v3883
    %v3894 = vpack.c.bf16 %v3886, %v3885
    %s3895 = scalar_lea.vmem [#allocation5], 448
    %v3896 = vld [vmem:[%s3895] sm:$0xf]
    %v3897 = vld [vmem:[%s3895 + $0x4] sm:$0xf]
    %v3898 = vld [vmem:[%s3895 + $0x8] sm:$0xf]
    %v3899 = vld [vmem:[%s3895 + $0xc] sm:$0xf]
    %v3900 = vld [vmem:[%s3895 + $0x10] sm:$0xf]
    %v3901 = vld [vmem:[%s3895 + $0x14] sm:$0xf]
    %v3902 = vld [vmem:[%s3895 + $0x18] sm:$0xf]
    %v3903 = vld [vmem:[%s3895 + $0x1c] sm:$0xf]
    %v3904 = vld [vmem:[%s3895 + $0x20] sm:$0xf]
    %v3905 = vld [vmem:[%s3895 + $0x24] sm:$0xf]
    %v3906 = vld [vmem:[%s3895 + $0x28] sm:$0xf]
    %v3907 = vld [vmem:[%s3895 + $0x2c] sm:$0xf]
    %v3908 = vld [vmem:[%s3895 + $0x30] sm:$0xf]
    %v3909 = vld [vmem:[%s3895 + $0x34] sm:$0xf]
    %v3910 = vld [vmem:[%s3895 + $0x38] sm:$0xf]
    %v3911 = vld [vmem:[%s3895 + $0x3c] sm:$0xf]
    %v3928 = vunpack.c.l.b16 %v3896
    %v3929 = vunpack.c.l.b16 %v3897
    %v3930 = vunpack.c.l.b16 %v3898
    %v3931 = vunpack.c.l.b16 %v3899
    %v3932 = vunpack.c.l.b16 %v3900
    %v3933 = vunpack.c.l.b16 %v3901
    %v3934 = vunpack.c.l.b16 %v3902
    %v3935 = vunpack.c.l.b16 %v3903
    %v3936 = vunpack.c.l.b16 %v3904
    %v3937 = vunpack.c.l.b16 %v3905
    %v3938 = vunpack.c.l.b16 %v3906
    %v3939 = vunpack.c.l.b16 %v3907
    %v3940 = vunpack.c.l.b16 %v3908
    %v3941 = vunpack.c.l.b16 %v3909
    %v3942 = vunpack.c.l.b16 %v3910
    %v3943 = vunpack.c.l.b16 %v3911
    %v3944 = vpack.c.b16 %v3929, %v3928
    %v3945 = vpack.c.b16 %v3931, %v3930
    %v3946 = vpack.c.b16 %v3933, %v3932
    %v3947 = vpack.c.b16 %v3935, %v3934
    %v3948 = vpack.c.b16 %v3937, %v3936
    %v3949 = vpack.c.b16 %v3939, %v3938
    %v3950 = vpack.c.b16 %v3941, %v3940
    %v3951 = vpack.c.b16 %v3943, %v3942
    %3960 = vmatpush.bf16.msra.mxu0 %v3951
    %3961 = vmatpush.bf16.msra.mxu0 %v3950
    %3962 = vmatpush.bf16.msra.mxu0 %v3949
    %3963 = vmatpush.bf16.msra.mxu0 %v3948
    %3964 = vmatpush.bf16.msra.mxu0 %v3947
    %3965 = vmatpush.bf16.msra.mxu0 %v3946
    %3966 = vmatpush.bf16.msra.mxu0 %v3945
    %3967 = vmatpush.bf16.msra.mxu0 %v3944
    %3968 = vmatmul.bf16.gmra.mxu0 %v3887
    %v3969 = vpop.f32.mrf.mxu0
    %v3970 = vadd.f32 0.0, %v3969
    %v3971 = vpop.f32.mrf.mxu0
    %v3972 = vadd.f32 0.0, %v3971
    %3973 = vmatmul.bf16.gmra.mxu0 %v3888
    %v3974 = vpop.f32.mrf.mxu0
    %v3975 = vadd.f32 0.0, %v3974
    %v3976 = vpop.f32.mrf.mxu0
    %v3977 = vadd.f32 0.0, %v3976
    %3978 = vmatmul.bf16.gmra.mxu0 %v3889
    %v3979 = vpop.f32.mrf.mxu0
    %v3980 = vadd.f32 0.0, %v3979
    %v3981 = vpop.f32.mrf.mxu0
    %v3982 = vadd.f32 0.0, %v3981
    %3983 = vmatmul.bf16.gmra.mxu0 %v3890
    %v3984 = vpop.f32.mrf.mxu0
    %v3985 = vadd.f32 0.0, %v3984
    %v3986 = vpop.f32.mrf.mxu0
    %v3987 = vadd.f32 0.0, %v3986
    %3988 = vmatmul.bf16.gmra.mxu0 %v3891
    %v3989 = vpop.f32.mrf.mxu0
    %v3990 = vadd.f32 0.0, %v3989
    %v3991 = vpop.f32.mrf.mxu0
    %v3992 = vadd.f32 0.0, %v3991
    %3993 = vmatmul.bf16.gmra.mxu0 %v3892
    %v3994 = vpop.f32.mrf.mxu0
    %v3995 = vadd.f32 0.0, %v3994
    %v3996 = vpop.f32.mrf.mxu0
    %v3997 = vadd.f32 0.0, %v3996
    %3998 = vmatmul.bf16.gmra.mxu0 %v3893
    %v3999 = vpop.f32.mrf.mxu0
    %v4000 = vadd.f32 0.0, %v3999
    %v4001 = vpop.f32.mrf.mxu0
    %v4002 = vadd.f32 0.0, %v4001
    %4003 = vmatmul.bf16.gmra.mxu0 %v3894
    %v4004 = vpop.f32.mrf.mxu0
    %v4005 = vadd.f32 0.0, %v4004
    %v4006 = vpop.f32.mrf.mxu0
    %v4007 = vadd.f32 0.0, %v4006
    %4008 = vdwg.mxu0
    %v4009 = vadd.f32 %v3855, %v3970
    %v4010 = vadd.f32 %v3856, %v3972
    %v4011 = vadd.f32 %v3857, %v3975
    %v4012 = vadd.f32 %v3858, %v3977
    %v4013 = vadd.f32 %v3859, %v3980
    %v4014 = vadd.f32 %v3860, %v3982
    %v4015 = vadd.f32 %v3861, %v3985
    %v4016 = vadd.f32 %v3862, %v3987
    %v4017 = vadd.f32 %v3863, %v3990
    %v4018 = vadd.f32 %v3864, %v3992
    %v4019 = vadd.f32 %v3865, %v3995
    %v4020 = vadd.f32 %v3866, %v3997
    %v4021 = vadd.f32 %v3867, %v4000
    %v4022 = vadd.f32 %v3868, %v4002
    %v4023 = vadd.f32 %v3869, %v4005
    %v4024 = vadd.f32 %v3870, %v4007
    %v4025 = vld [vmem:[%s3716 + $0x2] sm:$0xff]
    %v4026 = vld [vmem:[%s3716 + $0x12] sm:$0xff]
    %v4027 = vld [vmem:[%s3716 + $0x22] sm:$0xff]
    %v4028 = vld [vmem:[%s3716 + $0x32] sm:$0xff]
    %v4029 = vld [vmem:[%s3716 + $0x42] sm:$0xff]
    %v4030 = vld [vmem:[%s3716 + $0x52] sm:$0xff]
    %v4031 = vld [vmem:[%s3716 + $0x62] sm:$0xff]
    %v4032 = vld [vmem:[%s3716 + $0x72] sm:$0xff]
    %v4033 = vld [vmem:[%s3716 + $0xa2] sm:$0xff]
    %v4034 = vld [vmem:[%s3716 + $0xb2] sm:$0xff]
    %v4035 = vld [vmem:[%s3716 + $0xc2] sm:$0xff]
    %v4036 = vld [vmem:[%s3716 + $0xd2] sm:$0xff]
    %v4037 = vld [vmem:[%s3716 + $0xe2] sm:$0xff]
    %v4038 = vld [vmem:[%s3716 + $0xf2] sm:$0xff]
    %v4039 = vld [vmem:[%s3716 + $0x102] sm:$0xff]
    %v4040 = vld [vmem:[%s3716 + $0x112] sm:$0xff]
    %v4041 = vpack.c.bf16 %v4026, %v4025
    %v4042 = vpack.c.bf16 %v4028, %v4027
    %v4043 = vpack.c.bf16 %v4030, %v4029
    %v4044 = vpack.c.bf16 %v4032, %v4031
    %v4045 = vpack.c.bf16 %v4034, %v4033
    %v4046 = vpack.c.bf16 %v4036, %v4035
    %v4047 = vpack.c.bf16 %v4038, %v4037
    %v4048 = vpack.c.bf16 %v4040, %v4039
    %s4049 = scalar_lea.vmem [#allocation5], 512
    %v4050 = vld [vmem:[%s4049] sm:$0xf]
    %v4051 = vld [vmem:[%s4049 + $0x4] sm:$0xf]
    %v4052 = vld [vmem:[%s4049 + $0x8] sm:$0xf]
    %v4053 = vld [vmem:[%s4049 + $0xc] sm:$0xf]
    %v4054 = vld [vmem:[%s4049 + $0x10] sm:$0xf]
    %v4055 = vld [vmem:[%s4049 + $0x14] sm:$0xf]
    %v4056 = vld [vmem:[%s4049 + $0x18] sm:$0xf]
    %v4057 = vld [vmem:[%s4049 + $0x1c] sm:$0xf]
    %v4058 = vld [vmem:[%s4049 + $0x20] sm:$0xf]
    %v4059 = vld [vmem:[%s4049 + $0x24] sm:$0xf]
    %v4060 = vld [vmem:[%s4049 + $0x28] sm:$0xf]
    %v4061 = vld [vmem:[%s4049 + $0x2c] sm:$0xf]
    %v4062 = vld [vmem:[%s4049 + $0x30] sm:$0xf]
    %v4063 = vld [vmem:[%s4049 + $0x34] sm:$0xf]
    %v4064 = vld [vmem:[%s4049 + $0x38] sm:$0xf]
    %v4065 = vld [vmem:[%s4049 + $0x3c] sm:$0xf]
    %v4082 = vunpack.c.l.b16 %v4050
    %v4083 = vunpack.c.l.b16 %v4051
    %v4084 = vunpack.c.l.b16 %v4052
    %v4085 = vunpack.c.l.b16 %v4053
    %v4086 = vunpack.c.l.b16 %v4054
    %v4087 = vunpack.c.l.b16 %v4055
    %v4088 = vunpack.c.l.b16 %v4056
    %v4089 = vunpack.c.l.b16 %v4057
    %v4090 = vunpack.c.l.b16 %v4058
    %v4091 = vunpack.c.l.b16 %v4059
    %v4092 = vunpack.c.l.b16 %v4060
    %v4093 = vunpack.c.l.b16 %v4061
    %v4094 = vunpack.c.l.b16 %v4062
    %v4095 = vunpack.c.l.b16 %v4063
    %v4096 = vunpack.c.l.b16 %v4064
    %v4097 = vunpack.c.l.b16 %v4065
    %v4098 = vpack.c.b16 %v4083, %v4082
    %v4099 = vpack.c.b16 %v4085, %v4084
    %v4100 = vpack.c.b16 %v4087, %v4086
    %v4101 = vpack.c.b16 %v4089, %v4088
    %v4102 = vpack.c.b16 %v4091, %v4090
    %v4103 = vpack.c.b16 %v4093, %v4092
    %v4104 = vpack.c.b16 %v4095, %v4094
    %v4105 = vpack.c.b16 %v4097, %v4096
    %4114 = vmatpush.bf16.msra.mxu0 %v4105
    %4115 = vmatpush.bf16.msra.mxu0 %v4104
    %4116 = vmatpush.bf16.msra.mxu0 %v4103
    %4117 = vmatpush.bf16.msra.mxu0 %v4102
    %4118 = vmatpush.bf16.msra.mxu0 %v4101
    %4119 = vmatpush.bf16.msra.mxu0 %v4100
    %4120 = vmatpush.bf16.msra.mxu0 %v4099
    %4121 = vmatpush.bf16.msra.mxu0 %v4098
    %4122 = vmatmul.bf16.gmra.mxu0 %v4041
    %v4123 = vpop.f32.mrf.mxu0
    %v4124 = vadd.f32 0.0, %v4123
    %v4125 = vpop.f32.mrf.mxu0
    %v4126 = vadd.f32 0.0, %v4125
    %4127 = vmatmul.bf16.gmra.mxu0 %v4042
    %v4128 = vpop.f32.mrf.mxu0
    %v4129 = vadd.f32 0.0, %v4128
    %v4130 = vpop.f32.mrf.mxu0
    %v4131 = vadd.f32 0.0, %v4130
    %4132 = vmatmul.bf16.gmra.mxu0 %v4043
    %v4133 = vpop.f32.mrf.mxu0
    %v4134 = vadd.f32 0.0, %v4133
    %v4135 = vpop.f32.mrf.mxu0
    %v4136 = vadd.f32 0.0, %v4135
    %4137 = vmatmul.bf16.gmra.mxu0 %v4044
    %v4138 = vpop.f32.mrf.mxu0
    %v4139 = vadd.f32 0.0, %v4138
    %v4140 = vpop.f32.mrf.mxu0
    %v4141 = vadd.f32 0.0, %v4140
    %4142 = vmatmul.bf16.gmra.mxu0 %v4045
    %v4143 = vpop.f32.mrf.mxu0
    %v4144 = vadd.f32 0.0, %v4143
    %v4145 = vpop.f32.mrf.mxu0
    %v4146 = vadd.f32 0.0, %v4145
    %4147 = vmatmul.bf16.gmra.mxu0 %v4046
    %v4148 = vpop.f32.mrf.mxu0
    %v4149 = vadd.f32 0.0, %v4148
    %v4150 = vpop.f32.mrf.mxu0
    %v4151 = vadd.f32 0.0, %v4150
    %4152 = vmatmul.bf16.gmra.mxu0 %v4047
    %v4153 = vpop.f32.mrf.mxu0
    %v4154 = vadd.f32 0.0, %v4153
    %v4155 = vpop.f32.mrf.mxu0
    %v4156 = vadd.f32 0.0, %v4155
    %4157 = vmatmul.bf16.gmra.mxu0 %v4048
    %v4158 = vpop.f32.mrf.mxu0
    %v4159 = vadd.f32 0.0, %v4158
    %v4160 = vpop.f32.mrf.mxu0
    %v4161 = vadd.f32 0.0, %v4160
    %4162 = vdwg.mxu0
    %v4163 = vadd.f32 %v4009, %v4124
    %v4164 = vadd.f32 %v4010, %v4126
    %v4165 = vadd.f32 %v4011, %v4129
    %v4166 = vadd.f32 %v4012, %v4131
    %v4167 = vadd.f32 %v4013, %v4134
    %v4168 = vadd.f32 %v4014, %v4136
    %v4169 = vadd.f32 %v4015, %v4139
    %v4170 = vadd.f32 %v4016, %v4141
    %v4171 = vadd.f32 %v4017, %v4144
    %v4172 = vadd.f32 %v4018, %v4146
    %v4173 = vadd.f32 %v4019, %v4149
    %v4174 = vadd.f32 %v4020, %v4151
    %v4175 = vadd.f32 %v4021, %v4154
    %v4176 = vadd.f32 %v4022, %v4156
    %v4177 = vadd.f32 %v4023, %v4159
    %v4178 = vadd.f32 %v4024, %v4161
    %v4179 = vadd.f32 %v4163, %v4164
    %v4180 = vadd.f32 %v4179, %v4165
    %v4181 = vadd.f32 %v4180, %v4166
    %v4182 = vadd.f32 %v4181, %v4167
    %v4183 = vadd.f32 %v4182, %v4168
    %v4184 = vadd.f32 %v4183, %v4169
    %v4185 = vadd.f32 %v4184, %v4170
    %v4186 = vadd.f32 %v4185, %v4171
    %v4187 = vadd.f32 %v4186, %v4172
    %v4188 = vadd.f32 %v4187, %v4173
    %v4189 = vadd.f32 %v4188, %v4174
    %v4190 = vadd.f32 %v4189, %v4175
    %v4191 = vadd.f32 %v4190, %v4176
    %v4192 = vadd.f32 %v4191, %v4177
    %v4193 = vadd.f32 %v4192, %v4178
    %v4194 = vrot.slane %v4193, 4
    %v4195 = vadd.f32 %v4193, %v4194
    %v4196 = vrot.slane %v4195, 2
    %v4197 = vadd.f32 %v4195, %v4196
    %v4198 = vrot.slane %v4197, 1
    %v4199 = vadd.f32 %v4197, %v4198
    %v4200 = vmul.f32 %v4163, %v4163
    %v4201 = vmul.f32 %v4164, %v4164
    %v4202 = vmul.f32 %v4165, %v4165
    %v4203 = vmul.f32 %v4166, %v4166
    %v4204 = vmul.f32 %v4167, %v4167
    %v4205 = vmul.f32 %v4168, %v4168
    %v4206 = vmul.f32 %v4169, %v4169
    %v4207 = vmul.f32 %v4170, %v4170
    %v4208 = vmul.f32 %v4171, %v4171
    %v4209 = vmul.f32 %v4172, %v4172
    %v4210 = vmul.f32 %v4173, %v4173
    %v4211 = vmul.f32 %v4174, %v4174
    %v4212 = vmul.f32 %v4175, %v4175
    %v4213 = vmul.f32 %v4176, %v4176
    %v4214 = vmul.f32 %v4177, %v4177
    %v4215 = vmul.f32 %v4178, %v4178
    %v4216 = vadd.f32 %v4200, %v4201
    %v4217 = vadd.f32 %v4216, %v4202
    %v4218 = vadd.f32 %v4217, %v4203
    %v4219 = vadd.f32 %v4218, %v4204
    %v4220 = vadd.f32 %v4219, %v4205
    %v4221 = vadd.f32 %v4220, %v4206
    %v4222 = vadd.f32 %v4221, %v4207
    %v4223 = vadd.f32 %v4222, %v4208
    %v4224 = vadd.f32 %v4223, %v4209
    %v4225 = vadd.f32 %v4224, %v4210
    %v4226 = vadd.f32 %v4225, %v4211
    %v4227 = vadd.f32 %v4226, %v4212
    %v4228 = vadd.f32 %v4227, %v4213
    %v4229 = vadd.f32 %v4228, %v4214
    %v4230 = vadd.f32 %v4229, %v4215
    %v4231 = vrot.slane %v4230, 4
    %v4232 = vadd.f32 %v4230, %v4231
    %v4233 = vrot.slane %v4232, 2
    %v4234 = vadd.f32 %v4232, %v4233
    %v4235 = vrot.slane %v4234, 1
    %v4236 = vadd.f32 %v4234, %v4235
    %v4237 = vmul.f32 %v4199, 0.0078125
    %v4238 = vmul.f32 %v4236, 0.0078125
    %v4239 = vmul.f32 %v4237, %v4237
    %v4240 = vsub.f32 %v4238, %v4239
    %v4241 = vmax.f32 %v4240, 0.0
    %v4242 = vld [vmem:[#allocation7] sm:$0x1]
    %v4243 = vadd.f32 %v4241, 1e-05
    %v4244 = vrsqrt.pop %v4243
    %v4245 = vmul.f32 %v4244, %v4243
    %v4246 = vmul.f32 %v4245, %v4244
    %v4247 = vmul.f32 0.5, %v4246
    %v4248 = vsub.f32 1.5, %v4247
    %v4249 = vmul.f32 %v4244, %v4248
    %vm4250 = vweird.f32 %v4243
    %vm4251 = vweird.f32 %v4244
    %vm4252 = vmor %vm4250, %vm4251
    %v4253 = vsel %vm4252, %v4244, %v4249
    %v4254 = vmul.f32 %v4242, %v4253
    %v4255 = vld [vmem:[#allocation9] sm:$0x1]
    %v4256 = vmul.f32 %v4237, %v4254
    %v4257 = vsub.f32 %v4255, %v4256
    %v4258 = vperm.slane %v4254, 0
    %v4259 = vmul.f32 %v4163, %v4258
    %v4260 = vmul.f32 %v4164, %v4258
    %v4261 = vmul.f32 %v4165, %v4258
    %v4262 = vmul.f32 %v4166, %v4258
    %v4263 = vmul.f32 %v4167, %v4258
    %v4264 = vmul.f32 %v4168, %v4258
    %v4265 = vmul.f32 %v4169, %v4258
    %v4266 = vmul.f32 %v4170, %v4258
    %v4267 = vmul.f32 %v4171, %v4258
    %v4268 = vmul.f32 %v4172, %v4258
    %v4269 = vmul.f32 %v4173, %v4258
    %v4270 = vmul.f32 %v4174, %v4258
    %v4271 = vmul.f32 %v4175, %v4258
    %v4272 = vmul.f32 %v4176, %v4258
    %v4273 = vmul.f32 %v4177, %v4258
    %v4274 = vmul.f32 %v4178, %v4258
    %v4275 = vperm.slane %v4257, 0
    %v4276 = vadd.f32 %v4259, %v4275
    %v4277 = vadd.f32 %v4260, %v4275
    %v4278 = vadd.f32 %v4261, %v4275
    %v4279 = vadd.f32 %v4262, %v4275
    %v4280 = vadd.f32 %v4263, %v4275
    %v4281 = vadd.f32 %v4264, %v4275
    %v4282 = vadd.f32 %v4265, %v4275
    %v4283 = vadd.f32 %v4266, %v4275
    %v4284 = vadd.f32 %v4267, %v4275
    %v4285 = vadd.f32 %v4268, %v4275
    %v4286 = vadd.f32 %v4269, %v4275
    %v4287 = vadd.f32 %v4270, %v4275
    %v4288 = vadd.f32 %v4271, %v4275
    %v4289 = vadd.f32 %v4272, %v4275
    %v4290 = vadd.f32 %v4273, %v4275
    %v4291 = vadd.f32 %v4274, %v4275
    %v4292 = vmax.f32 %v4276, 0.0
    %v4293 = vmax.f32 %v4277, 0.0
    %v4294 = vmax.f32 %v4278, 0.0
    %v4295 = vmax.f32 %v4279, 0.0
    %v4296 = vmax.f32 %v4280, 0.0
    %v4297 = vmax.f32 %v4281, 0.0
    %v4298 = vmax.f32 %v4282, 0.0
    %v4299 = vmax.f32 %v4283, 0.0
    %v4300 = vmax.f32 %v4284, 0.0
    %v4301 = vmax.f32 %v4285, 0.0
    %v4302 = vmax.f32 %v4286, 0.0
    %v4303 = vmax.f32 %v4287, 0.0
    %v4304 = vmax.f32 %v4288, 0.0
    %v4305 = vmax.f32 %v4289, 0.0
    %v4306 = vmax.f32 %v4290, 0.0
    %v4307 = vmax.f32 %v4291, 0.0
    %4308 = vst [vmem:[%s2808 + $0x1] sm:$0xff] %v4292
    %4309 = vst [vmem:[%s2808 + $0x11] sm:$0xff] %v4293
    %4310 = vst [vmem:[%s2808 + $0x21] sm:$0xff] %v4294
    %4311 = vst [vmem:[%s2808 + $0x31] sm:$0xff] %v4295
    %4312 = vst [vmem:[%s2808 + $0x41] sm:$0xff] %v4296
    %4313 = vst [vmem:[%s2808 + $0x51] sm:$0xff] %v4297
    %4314 = vst [vmem:[%s2808 + $0x61] sm:$0xff] %v4298
    %4315 = vst [vmem:[%s2808 + $0x71] sm:$0xff] %v4299
    %4316 = vst [vmem:[%s2808 + $0xa1] sm:$0xff] %v4300
    %4317 = vst [vmem:[%s2808 + $0xb1] sm:$0xff] %v4301
    %4318 = vst [vmem:[%s2808 + $0xc1] sm:$0xff] %v4302
    %4319 = vst [vmem:[%s2808 + $0xd1] sm:$0xff] %v4303
    %4320 = vst [vmem:[%s2808 + $0xe1] sm:$0xff] %v4304
    %4321 = vst [vmem:[%s2808 + $0xf1] sm:$0xff] %v4305
    %4322 = vst [vmem:[%s2808 + $0x101] sm:$0xff] %v4306
    %4323 = vst [vmem:[%s2808 + $0x111] sm:$0xff] %v4307
    %v4324 = vld [vmem:[#allocation2] sm:$0xff]
    %v4325 = vld [vmem:[#allocation2 + $0x10] sm:$0xff]
    %v4326 = vld [vmem:[#allocation2 + $0x20] sm:$0xff]
    %v4327 = vld [vmem:[#allocation2 + $0x30] sm:$0xff]
    %v4328 = vld [vmem:[#allocation2 + $0x40] sm:$0xff]
    %v4329 = vld [vmem:[#allocation2 + $0x50] sm:$0xff]
    %v4330 = vld [vmem:[#allocation2 + $0x60] sm:$0xff]
    %v4331 = vld [vmem:[#allocation2 + $0x70] sm:$0xff]
    %v4332 = vld [vmem:[#allocation2 + $0xa0] sm:$0xff]
    %v4333 = vld [vmem:[#allocation2 + $0xb0] sm:$0xff]
    %v4334 = vld [vmem:[#allocation2 + $0xc0] sm:$0xff]
    %v4335 = vld [vmem:[#allocation2 + $0xd0] sm:$0xff]
    %v4336 = vld [vmem:[#allocation2 + $0xe0] sm:$0xff]
    %v4337 = vld [vmem:[#allocation2 + $0xf0] sm:$0xff]
    %v4338 = vld [vmem:[#allocation2 + $0x100] sm:$0xff]
    %v4339 = vld [vmem:[#allocation2 + $0x110] sm:$0xff]
    %v4340 = vpack.c.bf16 %v4325, %v4324
    %v4341 = vpack.c.bf16 %v4327, %v4326
    %v4342 = vpack.c.bf16 %v4329, %v4328
    %v4343 = vpack.c.bf16 %v4331, %v4330
    %v4344 = vpack.c.bf16 %v4333, %v4332
    %v4345 = vpack.c.bf16 %v4335, %v4334
    %v4346 = vpack.c.bf16 %v4337, %v4336
    %v4347 = vpack.c.bf16 %v4339, %v4338
    %s4348 = scalar_lea.vmem [#allocation5], 576
    %v4349 = vld [vmem:[%s4348] sm:$0xf]
    %v4350 = vld [vmem:[%s4348 + $0x4] sm:$0xf]
    %v4351 = vld [vmem:[%s4348 + $0x8] sm:$0xf]
    %v4352 = vld [vmem:[%s4348 + $0xc] sm:$0xf]
    %v4353 = vld [vmem:[%s4348 + $0x10] sm:$0xf]
    %v4354 = vld [vmem:[%s4348 + $0x14] sm:$0xf]
    %v4355 = vld [vmem:[%s4348 + $0x18] sm:$0xf]
    %v4356 = vld [vmem:[%s4348 + $0x1c] sm:$0xf]
    %v4357 = vld [vmem:[%s4348 + $0x20] sm:$0xf]
    %v4358 = vld [vmem:[%s4348 + $0x24] sm:$0xf]
    %v4359 = vld [vmem:[%s4348 + $0x28] sm:$0xf]
    %v4360 = vld [vmem:[%s4348 + $0x2c] sm:$0xf]
    %v4361 = vld [vmem:[%s4348 + $0x30] sm:$0xf]
    %v4362 = vld [vmem:[%s4348 + $0x34] sm:$0xf]
    %v4363 = vld [vmem:[%s4348 + $0x38] sm:$0xf]
    %v4364 = vld [vmem:[%s4348 + $0x3c] sm:$0xf]
    %v4365 = vld [vmem:[#allocation2 + $0x1] sm:$0xff]
    %v4366 = vld [vmem:[#allocation2 + $0x11] sm:$0xff]
    %v4367 = vld [vmem:[#allocation2 + $0x21] sm:$0xff]
    %v4368 = vld [vmem:[#allocation2 + $0x31] sm:$0xff]
    %v4369 = vld [vmem:[#allocation2 + $0x41] sm:$0xff]
    %v4370 = vld [vmem:[#allocation2 + $0x51] sm:$0xff]
    %v4371 = vld [vmem:[#allocation2 + $0x61] sm:$0xff]
    %v4372 = vld [vmem:[#allocation2 + $0x71] sm:$0xff]
    %v4373 = vld [vmem:[#allocation2 + $0xa1] sm:$0xff]
    %v4374 = vld [vmem:[#allocation2 + $0xb1] sm:$0xff]
    %v4375 = vld [vmem:[#allocation2 + $0xc1] sm:$0xff]
    %v4376 = vld [vmem:[#allocation2 + $0xd1] sm:$0xff]
    %v4377 = vld [vmem:[#allocation2 + $0xe1] sm:$0xff]
    %v4378 = vld [vmem:[#allocation2 + $0xf1] sm:$0xff]
    %v4379 = vld [vmem:[#allocation2 + $0x101] sm:$0xff]
    %v4380 = vld [vmem:[#allocation2 + $0x111] sm:$0xff]
    %v4381 = vpack.c.bf16 %v4366, %v4365
    %v4382 = vpack.c.bf16 %v4368, %v4367
    %v4383 = vpack.c.bf16 %v4370, %v4369
    %v4384 = vpack.c.bf16 %v4372, %v4371
    %v4385 = vpack.c.bf16 %v4374, %v4373
    %v4386 = vpack.c.bf16 %v4376, %v4375
    %v4387 = vpack.c.bf16 %v4378, %v4377
    %v4388 = vpack.c.bf16 %v4380, %v4379
    %s4389 = scalar_lea.vmem [#allocation5], 640
    %v4390 = vld [vmem:[%s4389] sm:$0xf]
    %v4391 = vld [vmem:[%s4389 + $0x4] sm:$0xf]
    %v4392 = vld [vmem:[%s4389 + $0x8] sm:$0xf]
    %v4393 = vld [vmem:[%s4389 + $0xc] sm:$0xf]
    %v4394 = vld [vmem:[%s4389 + $0x10] sm:$0xf]
    %v4395 = vld [vmem:[%s4389 + $0x14] sm:$0xf]
    %v4396 = vld [vmem:[%s4389 + $0x18] sm:$0xf]
    %v4397 = vld [vmem:[%s4389 + $0x1c] sm:$0xf]
    %v4398 = vld [vmem:[%s4389 + $0x20] sm:$0xf]
    %v4399 = vld [vmem:[%s4389 + $0x24] sm:$0xf]
    %v4400 = vld [vmem:[%s4389 + $0x28] sm:$0xf]
    %v4401 = vld [vmem:[%s4389 + $0x2c] sm:$0xf]
    %v4402 = vld [vmem:[%s4389 + $0x30] sm:$0xf]
    %v4403 = vld [vmem:[%s4389 + $0x34] sm:$0xf]
    %v4404 = vld [vmem:[%s4389 + $0x38] sm:$0xf]
    %v4405 = vld [vmem:[%s4389 + $0x3c] sm:$0xf]
    %v4422 = vunpack.c.l.b16 %v4390
    %v4423 = vunpack.c.l.b16 %v4391
    %v4424 = vunpack.c.l.b16 %v4392
    %v4425 = vunpack.c.l.b16 %v4393
    %v4426 = vunpack.c.l.b16 %v4394
    %v4427 = vunpack.c.l.b16 %v4395
    %v4428 = vunpack.c.l.b16 %v4396
    %v4429 = vunpack.c.l.b16 %v4397
    %v4430 = vunpack.c.l.b16 %v4398
    %v4431 = vunpack.c.l.b16 %v4399
    %v4432 = vunpack.c.l.b16 %v4400
    %v4433 = vunpack.c.l.b16 %v4401
    %v4434 = vunpack.c.l.b16 %v4402
    %v4435 = vunpack.c.l.b16 %v4403
    %v4436 = vunpack.c.l.b16 %v4404
    %v4437 = vunpack.c.l.b16 %v4405
    %v4438 = vpack.c.b16 %v4423, %v4422
    %v4439 = vpack.c.b16 %v4425, %v4424
    %v4440 = vpack.c.b16 %v4427, %v4426
    %v4441 = vpack.c.b16 %v4429, %v4428
    %v4442 = vpack.c.b16 %v4431, %v4430
    %v4443 = vpack.c.b16 %v4433, %v4432
    %v4444 = vpack.c.b16 %v4435, %v4434
    %v4445 = vpack.c.b16 %v4437, %v4436
    %4454 = vmatpush.bf16.msra.mxu0 %v4445
    %4455 = vmatpush.bf16.msra.mxu0 %v4444
    %4456 = vmatpush.bf16.msra.mxu0 %v4443
    %4457 = vmatpush.bf16.msra.mxu0 %v4442
    %4458 = vmatpush.bf16.msra.mxu0 %v4441
    %4459 = vmatpush.bf16.msra.mxu0 %v4440
    %4460 = vmatpush.bf16.msra.mxu0 %v4439
    %4461 = vmatpush.bf16.msra.mxu0 %v4438
    %4462 = vmatmul.bf16.gmra.mxu0 %v4381
    %v4463 = vpop.f32.mrf.mxu0
    %v4464 = vadd.f32 0.0, %v4463
    %v4465 = vpop.f32.mrf.mxu0
    %v4466 = vadd.f32 0.0, %v4465
    %4467 = vmatmul.bf16.gmra.mxu0 %v4382
    %v4468 = vpop.f32.mrf.mxu0
    %v4469 = vadd.f32 0.0, %v4468
    %v4470 = vpop.f32.mrf.mxu0
    %v4471 = vadd.f32 0.0, %v4470
    %4472 = vmatmul.bf16.gmra.mxu0 %v4383
    %v4473 = vpop.f32.mrf.mxu0
    %v4474 = vadd.f32 0.0, %v4473
    %v4475 = vpop.f32.mrf.mxu0
    %v4476 = vadd.f32 0.0, %v4475
    %4477 = vmatmul.bf16.gmra.mxu0 %v4384
    %v4478 = vpop.f32.mrf.mxu0
    %v4479 = vadd.f32 0.0, %v4478
    %v4480 = vpop.f32.mrf.mxu0
    %v4481 = vadd.f32 0.0, %v4480
    %4482 = vmatmul.bf16.gmra.mxu0 %v4385
    %v4483 = vpop.f32.mrf.mxu0
    %v4484 = vadd.f32 0.0, %v4483
    %v4485 = vpop.f32.mrf.mxu0
    %v4486 = vadd.f32 0.0, %v4485
    %4487 = vmatmul.bf16.gmra.mxu0 %v4386
    %v4488 = vpop.f32.mrf.mxu0
    %v4489 = vadd.f32 0.0, %v4488
    %v4490 = vpop.f32.mrf.mxu0
    %v4491 = vadd.f32 0.0, %v4490
    %4492 = vmatmul.bf16.gmra.mxu0 %v4387
    %v4493 = vpop.f32.mrf.mxu0
    %v4494 = vadd.f32 0.0, %v4493
    %v4495 = vpop.f32.mrf.mxu0
    %v4496 = vadd.f32 0.0, %v4495
    %4497 = vmatmul.bf16.gmra.mxu0 %v4388
    %v4498 = vpop.f32.mrf.mxu0
    %v4499 = vadd.f32 0.0, %v4498
    %v4500 = vpop.f32.mrf.mxu0
    %v4501 = vadd.f32 0.0, %v4500
    %4502 = vdwg.mxu0
    %v4519 = vunpack.c.l.b16 %v4349
    %v4520 = vunpack.c.l.b16 %v4350
    %v4521 = vunpack.c.l.b16 %v4351
    %v4522 = vunpack.c.l.b16 %v4352
    %v4523 = vunpack.c.l.b16 %v4353
    %v4524 = vunpack.c.l.b16 %v4354
    %v4525 = vunpack.c.l.b16 %v4355
    %v4526 = vunpack.c.l.b16 %v4356
    %v4527 = vunpack.c.l.b16 %v4357
    %v4528 = vunpack.c.l.b16 %v4358
    %v4529 = vunpack.c.l.b16 %v4359
    %v4530 = vunpack.c.l.b16 %v4360
    %v4531 = vunpack.c.l.b16 %v4361
    %v4532 = vunpack.c.l.b16 %v4362
    %v4533 = vunpack.c.l.b16 %v4363
    %v4534 = vunpack.c.l.b16 %v4364
    %v4535 = vpack.c.b16 %v4520, %v4519
    %v4536 = vpack.c.b16 %v4522, %v4521
    %v4537 = vpack.c.b16 %v4524, %v4523
    %v4538 = vpack.c.b16 %v4526, %v4525
    %v4539 = vpack.c.b16 %v4528, %v4527
    %v4540 = vpack.c.b16 %v4530, %v4529
    %v4541 = vpack.c.b16 %v4532, %v4531
    %v4542 = vpack.c.b16 %v4534, %v4533
    %4551 = vmatpush.bf16.msra.mxu0 %v4542
    %4552 = vmatpush.bf16.msra.mxu0 %v4541
    %4553 = vmatpush.bf16.msra.mxu0 %v4540
    %4554 = vmatpush.bf16.msra.mxu0 %v4539
    %4555 = vmatpush.bf16.msra.mxu0 %v4538
    %4556 = vmatpush.bf16.msra.mxu0 %v4537
    %4557 = vmatpush.bf16.msra.mxu0 %v4536
    %4558 = vmatpush.bf16.msra.mxu0 %v4535
    %4559 = vmatmul.bf16.gmra.mxu0 %v4340
    %v4560 = vpop.f32.mrf.mxu0
    %v4561 = vadd.f32 %v4464, %v4560
    %v4562 = vpop.f32.mrf.mxu0
    %v4563 = vadd.f32 %v4466, %v4562
    %4564 = vmatmul.bf16.gmra.mxu0 %v4341
    %v4565 = vpop.f32.mrf.mxu0
    %v4566 = vadd.f32 %v4469, %v4565
    %v4567 = vpop.f32.mrf.mxu0
    %v4568 = vadd.f32 %v4471, %v4567
    %4569 = vmatmul.bf16.gmra.mxu0 %v4342
    %v4570 = vpop.f32.mrf.mxu0
    %v4571 = vadd.f32 %v4474, %v4570
    %v4572 = vpop.f32.mrf.mxu0
    %v4573 = vadd.f32 %v4476, %v4572
    %4574 = vmatmul.bf16.gmra.mxu0 %v4343
    %v4575 = vpop.f32.mrf.mxu0
    %v4576 = vadd.f32 %v4479, %v4575
    %v4577 = vpop.f32.mrf.mxu0
    %v4578 = vadd.f32 %v4481, %v4577
    %4579 = vmatmul.bf16.gmra.mxu0 %v4344
    %v4580 = vpop.f32.mrf.mxu0
    %v4581 = vadd.f32 %v4484, %v4580
    %v4582 = vpop.f32.mrf.mxu0
    %v4583 = vadd.f32 %v4486, %v4582
    %4584 = vmatmul.bf16.gmra.mxu0 %v4345
    %v4585 = vpop.f32.mrf.mxu0
    %v4586 = vadd.f32 %v4489, %v4585
    %v4587 = vpop.f32.mrf.mxu0
    %v4588 = vadd.f32 %v4491, %v4587
    %4589 = vmatmul.bf16.gmra.mxu0 %v4346
    %v4590 = vpop.f32.mrf.mxu0
    %v4591 = vadd.f32 %v4494, %v4590
    %v4592 = vpop.f32.mrf.mxu0
    %v4593 = vadd.f32 %v4496, %v4592
    %4594 = vmatmul.bf16.gmra.mxu0 %v4347
    %v4595 = vpop.f32.mrf.mxu0
    %v4596 = vadd.f32 %v4499, %v4595
    %v4597 = vpop.f32.mrf.mxu0
    %v4598 = vadd.f32 %v4501, %v4597
    %4599 = vdwg.mxu0
    %v4600 = vld [vmem:[#allocation2 + $0x2] sm:$0xff]
    %v4601 = vld [vmem:[#allocation2 + $0x12] sm:$0xff]
    %v4602 = vld [vmem:[#allocation2 + $0x22] sm:$0xff]
    %v4603 = vld [vmem:[#allocation2 + $0x32] sm:$0xff]
    %v4604 = vld [vmem:[#allocation2 + $0x42] sm:$0xff]
    %v4605 = vld [vmem:[#allocation2 + $0x52] sm:$0xff]
    %v4606 = vld [vmem:[#allocation2 + $0x62] sm:$0xff]
    %v4607 = vld [vmem:[#allocation2 + $0x72] sm:$0xff]
    %v4608 = vld [vmem:[#allocation2 + $0xa2] sm:$0xff]
    %v4609 = vld [vmem:[#allocation2 + $0xb2] sm:$0xff]
    %v4610 = vld [vmem:[#allocation2 + $0xc2] sm:$0xff]
    %v4611 = vld [vmem:[#allocation2 + $0xd2] sm:$0xff]
    %v4612 = vld [vmem:[#allocation2 + $0xe2] sm:$0xff]
    %v4613 = vld [vmem:[#allocation2 + $0xf2] sm:$0xff]
    %v4614 = vld [vmem:[#allocation2 + $0x102] sm:$0xff]
    %v4615 = vld [vmem:[#allocation2 + $0x112] sm:$0xff]
    %v4616 = vpack.c.bf16 %v4601, %v4600
    %v4617 = vpack.c.bf16 %v4603, %v4602
    %v4618 = vpack.c.bf16 %v4605, %v4604
    %v4619 = vpack.c.bf16 %v4607, %v4606
    %v4620 = vpack.c.bf16 %v4609, %v4608
    %v4621 = vpack.c.bf16 %v4611, %v4610
    %v4622 = vpack.c.bf16 %v4613, %v4612
    %v4623 = vpack.c.bf16 %v4615, %v4614
    %s4624 = scalar_lea.vmem [#allocation5], 704
    %v4625 = vld [vmem:[%s4624] sm:$0xf]
    %v4626 = vld [vmem:[%s4624 + $0x4] sm:$0xf]
    %v4627 = vld [vmem:[%s4624 + $0x8] sm:$0xf]
    %v4628 = vld [vmem:[%s4624 + $0xc] sm:$0xf]
    %v4629 = vld [vmem:[%s4624 + $0x10] sm:$0xf]
    %v4630 = vld [vmem:[%s4624 + $0x14] sm:$0xf]
    %v4631 = vld [vmem:[%s4624 + $0x18] sm:$0xf]
    %v4632 = vld [vmem:[%s4624 + $0x1c] sm:$0xf]
    %v4633 = vld [vmem:[%s4624 + $0x20] sm:$0xf]
    %v4634 = vld [vmem:[%s4624 + $0x24] sm:$0xf]
    %v4635 = vld [vmem:[%s4624 + $0x28] sm:$0xf]
    %v4636 = vld [vmem:[%s4624 + $0x2c] sm:$0xf]
    %v4637 = vld [vmem:[%s4624 + $0x30] sm:$0xf]
    %v4638 = vld [vmem:[%s4624 + $0x34] sm:$0xf]
    %v4639 = vld [vmem:[%s4624 + $0x38] sm:$0xf]
    %v4640 = vld [vmem:[%s4624 + $0x3c] sm:$0xf]
    %v4657 = vunpack.c.l.b16 %v4625
    %v4658 = vunpack.c.l.b16 %v4626
    %v4659 = vunpack.c.l.b16 %v4627
    %v4660 = vunpack.c.l.b16 %v4628
    %v4661 = vunpack.c.l.b16 %v4629
    %v4662 = vunpack.c.l.b16 %v4630
    %v4663 = vunpack.c.l.b16 %v4631
    %v4664 = vunpack.c.l.b16 %v4632
    %v4665 = vunpack.c.l.b16 %v4633
    %v4666 = vunpack.c.l.b16 %v4634
    %v4667 = vunpack.c.l.b16 %v4635
    %v4668 = vunpack.c.l.b16 %v4636
    %v4669 = vunpack.c.l.b16 %v4637
    %v4670 = vunpack.c.l.b16 %v4638
    %v4671 = vunpack.c.l.b16 %v4639
    %v4672 = vunpack.c.l.b16 %v4640
    %v4673 = vpack.c.b16 %v4658, %v4657
    %v4674 = vpack.c.b16 %v4660, %v4659
    %v4675 = vpack.c.b16 %v4662, %v4661
    %v4676 = vpack.c.b16 %v4664, %v4663
    %v4677 = vpack.c.b16 %v4666, %v4665
    %v4678 = vpack.c.b16 %v4668, %v4667
    %v4679 = vpack.c.b16 %v4670, %v4669
    %v4680 = vpack.c.b16 %v4672, %v4671
    %4689 = vmatpush.bf16.msra.mxu0 %v4680
    %4690 = vmatpush.bf16.msra.mxu0 %v4679
    %4691 = vmatpush.bf16.msra.mxu0 %v4678
    %4692 = vmatpush.bf16.msra.mxu0 %v4677
    %4693 = vmatpush.bf16.msra.mxu0 %v4676
    %4694 = vmatpush.bf16.msra.mxu0 %v4675
    %4695 = vmatpush.bf16.msra.mxu0 %v4674
    %4696 = vmatpush.bf16.msra.mxu0 %v4673
    %4697 = vmatmul.bf16.gmra.mxu0 %v4616
    %v4698 = vpop.f32.mrf.mxu0
    %v4699 = vadd.f32 0.0, %v4698
    %v4700 = vpop.f32.mrf.mxu0
    %v4701 = vadd.f32 0.0, %v4700
    %4702 = vmatmul.bf16.gmra.mxu0 %v4617
    %v4703 = vpop.f32.mrf.mxu0
    %v4704 = vadd.f32 0.0, %v4703
    %v4705 = vpop.f32.mrf.mxu0
    %v4706 = vadd.f32 0.0, %v4705
    %4707 = vmatmul.bf16.gmra.mxu0 %v4618
    %v4708 = vpop.f32.mrf.mxu0
    %v4709 = vadd.f32 0.0, %v4708
    %v4710 = vpop.f32.mrf.mxu0
    %v4711 = vadd.f32 0.0, %v4710
    %4712 = vmatmul.bf16.gmra.mxu0 %v4619
    %v4713 = vpop.f32.mrf.mxu0
    %v4714 = vadd.f32 0.0, %v4713
    %v4715 = vpop.f32.mrf.mxu0
    %v4716 = vadd.f32 0.0, %v4715
    %4717 = vmatmul.bf16.gmra.mxu0 %v4620
    %v4718 = vpop.f32.mrf.mxu0
    %v4719 = vadd.f32 0.0, %v4718
    %v4720 = vpop.f32.mrf.mxu0
    %v4721 = vadd.f32 0.0, %v4720
    %4722 = vmatmul.bf16.gmra.mxu0 %v4621
    %v4723 = vpop.f32.mrf.mxu0
    %v4724 = vadd.f32 0.0, %v4723
    %v4725 = vpop.f32.mrf.mxu0
    %v4726 = vadd.f32 0.0, %v4725
    %4727 = vmatmul.bf16.gmra.mxu0 %v4622
    %v4728 = vpop.f32.mrf.mxu0
    %v4729 = vadd.f32 0.0, %v4728
    %v4730 = vpop.f32.mrf.mxu0
    %v4731 = vadd.f32 0.0, %v4730
    %4732 = vmatmul.bf16.gmra.mxu0 %v4623
    %v4733 = vpop.f32.mrf.mxu0
    %v4734 = vadd.f32 0.0, %v4733
    %v4735 = vpop.f32.mrf.mxu0
    %v4736 = vadd.f32 0.0, %v4735
    %4737 = vdwg.mxu0
    %v4738 = vadd.f32 %v4561, %v4699
    %v4739 = vadd.f32 %v4563, %v4701
    %v4740 = vadd.f32 %v4566, %v4704
    %v4741 = vadd.f32 %v4568, %v4706
    %v4742 = vadd.f32 %v4571, %v4709
    %v4743 = vadd.f32 %v4573, %v4711
    %v4744 = vadd.f32 %v4576, %v4714
    %v4745 = vadd.f32 %v4578, %v4716
    %v4746 = vadd.f32 %v4581, %v4719
    %v4747 = vadd.f32 %v4583, %v4721
    %v4748 = vadd.f32 %v4586, %v4724
    %v4749 = vadd.f32 %v4588, %v4726
    %v4750 = vadd.f32 %v4591, %v4729
    %v4751 = vadd.f32 %v4593, %v4731
    %v4752 = vadd.f32 %v4596, %v4734
    %v4753 = vadd.f32 %v4598, %v4736
    %v4754 = vld [vmem:[%s2808] sm:$0xff]
    %v4755 = vld [vmem:[%s2808 + $0x10] sm:$0xff]
    %v4756 = vld [vmem:[%s2808 + $0x20] sm:$0xff]
    %v4757 = vld [vmem:[%s2808 + $0x30] sm:$0xff]
    %v4758 = vld [vmem:[%s2808 + $0x40] sm:$0xff]
    %v4759 = vld [vmem:[%s2808 + $0x50] sm:$0xff]
    %v4760 = vld [vmem:[%s2808 + $0x60] sm:$0xff]
    %v4761 = vld [vmem:[%s2808 + $0x70] sm:$0xff]
    %v4762 = vld [vmem:[%s2808 + $0xa0] sm:$0xff]
    %v4763 = vld [vmem:[%s2808 + $0xb0] sm:$0xff]
    %v4764 = vld [vmem:[%s2808 + $0xc0] sm:$0xff]
    %v4765 = vld [vmem:[%s2808 + $0xd0] sm:$0xff]
    %v4766 = vld [vmem:[%s2808 + $0xe0] sm:$0xff]
    %v4767 = vld [vmem:[%s2808 + $0xf0] sm:$0xff]
    %v4768 = vld [vmem:[%s2808 + $0x100] sm:$0xff]
    %v4769 = vld [vmem:[%s2808 + $0x110] sm:$0xff]
    %v4770 = vpack.c.bf16 %v4755, %v4754
    %v4771 = vpack.c.bf16 %v4757, %v4756
    %v4772 = vpack.c.bf16 %v4759, %v4758
    %v4773 = vpack.c.bf16 %v4761, %v4760
    %v4774 = vpack.c.bf16 %v4763, %v4762
    %v4775 = vpack.c.bf16 %v4765, %v4764
    %v4776 = vpack.c.bf16 %v4767, %v4766
    %v4777 = vpack.c.bf16 %v4769, %v4768
    %s4778 = scalar_lea.vmem [#allocation5], 768
    %v4779 = vld [vmem:[%s4778] sm:$0xf]
    %v4780 = vld [vmem:[%s4778 + $0x4] sm:$0xf]
    %v4781 = vld [vmem:[%s4778 + $0x8] sm:$0xf]
    %v4782 = vld [vmem:[%s4778 + $0xc] sm:$0xf]
    %v4783 = vld [vmem:[%s4778 + $0x10] sm:$0xf]
    %v4784 = vld [vmem:[%s4778 + $0x14] sm:$0xf]
    %v4785 = vld [vmem:[%s4778 + $0x18] sm:$0xf]
    %v4786 = vld [vmem:[%s4778 + $0x1c] sm:$0xf]
    %v4787 = vld [vmem:[%s4778 + $0x20] sm:$0xf]
    %v4788 = vld [vmem:[%s4778 + $0x24] sm:$0xf]
    %v4789 = vld [vmem:[%s4778 + $0x28] sm:$0xf]
    %v4790 = vld [vmem:[%s4778 + $0x2c] sm:$0xf]
    %v4791 = vld [vmem:[%s4778 + $0x30] sm:$0xf]
    %v4792 = vld [vmem:[%s4778 + $0x34] sm:$0xf]
    %v4793 = vld [vmem:[%s4778 + $0x38] sm:$0xf]
    %v4794 = vld [vmem:[%s4778 + $0x3c] sm:$0xf]
    %v4811 = vunpack.c.l.b16 %v4779
    %v4812 = vunpack.c.l.b16 %v4780
    %v4813 = vunpack.c.l.b16 %v4781
    %v4814 = vunpack.c.l.b16 %v4782
    %v4815 = vunpack.c.l.b16 %v4783
    %v4816 = vunpack.c.l.b16 %v4784
    %v4817 = vunpack.c.l.b16 %v4785
    %v4818 = vunpack.c.l.b16 %v4786
    %v4819 = vunpack.c.l.b16 %v4787
    %v4820 = vunpack.c.l.b16 %v4788
    %v4821 = vunpack.c.l.b16 %v4789
    %v4822 = vunpack.c.l.b16 %v4790
    %v4823 = vunpack.c.l.b16 %v4791
    %v4824 = vunpack.c.l.b16 %v4792
    %v4825 = vunpack.c.l.b16 %v4793
    %v4826 = vunpack.c.l.b16 %v4794
    %v4827 = vpack.c.b16 %v4812, %v4811
    %v4828 = vpack.c.b16 %v4814, %v4813
    %v4829 = vpack.c.b16 %v4816, %v4815
    %v4830 = vpack.c.b16 %v4818, %v4817
    %v4831 = vpack.c.b16 %v4820, %v4819
    %v4832 = vpack.c.b16 %v4822, %v4821
    %v4833 = vpack.c.b16 %v4824, %v4823
    %v4834 = vpack.c.b16 %v4826, %v4825
    %4843 = vmatpush.bf16.msra.mxu0 %v4834
    %4844 = vmatpush.bf16.msra.mxu0 %v4833
    %4845 = vmatpush.bf16.msra.mxu0 %v4832
    %4846 = vmatpush.bf16.msra.mxu0 %v4831
    %4847 = vmatpush.bf16.msra.mxu0 %v4830
    %4848 = vmatpush.bf16.msra.mxu0 %v4829
    %4849 = vmatpush.bf16.msra.mxu0 %v4828
    %4850 = vmatpush.bf16.msra.mxu0 %v4827
    %4851 = vmatmul.bf16.gmra.mxu0 %v4770
    %v4852 = vpop.f32.mrf.mxu0
    %v4853 = vadd.f32 0.0, %v4852
    %v4854 = vpop.f32.mrf.mxu0
    %v4855 = vadd.f32 0.0, %v4854
    %4856 = vmatmul.bf16.gmra.mxu0 %v4771
    %v4857 = vpop.f32.mrf.mxu0
    %v4858 = vadd.f32 0.0, %v4857
    %v4859 = vpop.f32.mrf.mxu0
    %v4860 = vadd.f32 0.0, %v4859
    %4861 = vmatmul.bf16.gmra.mxu0 %v4772
    %v4862 = vpop.f32.mrf.mxu0
    %v4863 = vadd.f32 0.0, %v4862
    %v4864 = vpop.f32.mrf.mxu0
    %v4865 = vadd.f32 0.0, %v4864
    %4866 = vmatmul.bf16.gmra.mxu0 %v4773
    %v4867 = vpop.f32.mrf.mxu0
    %v4868 = vadd.f32 0.0, %v4867
    %v4869 = vpop.f32.mrf.mxu0
    %v4870 = vadd.f32 0.0, %v4869
    %4871 = vmatmul.bf16.gmra.mxu0 %v4774
    %v4872 = vpop.f32.mrf.mxu0
    %v4873 = vadd.f32 0.0, %v4872
    %v4874 = vpop.f32.mrf.mxu0
    %v4875 = vadd.f32 0.0, %v4874
    %4876 = vmatmul.bf16.gmra.mxu0 %v4775
    %v4877 = vpop.f32.mrf.mxu0
    %v4878 = vadd.f32 0.0, %v4877
    %v4879 = vpop.f32.mrf.mxu0
    %v4880 = vadd.f32 0.0, %v4879
    %4881 = vmatmul.bf16.gmra.mxu0 %v4776
    %v4882 = vpop.f32.mrf.mxu0
    %v4883 = vadd.f32 0.0, %v4882
    %v4884 = vpop.f32.mrf.mxu0
    %v4885 = vadd.f32 0.0, %v4884
    %4886 = vmatmul.bf16.gmra.mxu0 %v4777
    %v4887 = vpop.f32.mrf.mxu0
    %v4888 = vadd.f32 0.0, %v4887
    %v4889 = vpop.f32.mrf.mxu0
    %v4890 = vadd.f32 0.0, %v4889
    %4891 = vdwg.mxu0
    %v4892 = vadd.f32 %v4738, %v4853
    %v4893 = vadd.f32 %v4739, %v4855
    %v4894 = vadd.f32 %v4740, %v4858
    %v4895 = vadd.f32 %v4741, %v4860
    %v4896 = vadd.f32 %v4742, %v4863
    %v4897 = vadd.f32 %v4743, %v4865
    %v4898 = vadd.f32 %v4744, %v4868
    %v4899 = vadd.f32 %v4745, %v4870
    %v4900 = vadd.f32 %v4746, %v4873
    %v4901 = vadd.f32 %v4747, %v4875
    %v4902 = vadd.f32 %v4748, %v4878
    %v4903 = vadd.f32 %v4749, %v4880
    %v4904 = vadd.f32 %v4750, %v4883
    %v4905 = vadd.f32 %v4751, %v4885
    %v4906 = vadd.f32 %v4752, %v4888
    %v4907 = vadd.f32 %v4753, %v4890
    %v4908 = vld [vmem:[%s2808 + $0x1] sm:$0xff]
    %v4909 = vld [vmem:[%s2808 + $0x11] sm:$0xff]
    %v4910 = vld [vmem:[%s2808 + $0x21] sm:$0xff]
    %v4911 = vld [vmem:[%s2808 + $0x31] sm:$0xff]
    %v4912 = vld [vmem:[%s2808 + $0x41] sm:$0xff]
    %v4913 = vld [vmem:[%s2808 + $0x51] sm:$0xff]
    %v4914 = vld [vmem:[%s2808 + $0x61] sm:$0xff]
    %v4915 = vld [vmem:[%s2808 + $0x71] sm:$0xff]
    %v4916 = vld [vmem:[%s2808 + $0xa1] sm:$0xff]
    %v4917 = vld [vmem:[%s2808 + $0xb1] sm:$0xff]
    %v4918 = vld [vmem:[%s2808 + $0xc1] sm:$0xff]
    %v4919 = vld [vmem:[%s2808 + $0xd1] sm:$0xff]
    %v4920 = vld [vmem:[%s2808 + $0xe1] sm:$0xff]
    %v4921 = vld [vmem:[%s2808 + $0xf1] sm:$0xff]
    %v4922 = vld [vmem:[%s2808 + $0x101] sm:$0xff]
    %v4923 = vld [vmem:[%s2808 + $0x111] sm:$0xff]
    %v4924 = vpack.c.bf16 %v4909, %v4908
    %v4925 = vpack.c.bf16 %v4911, %v4910
    %v4926 = vpack.c.bf16 %v4913, %v4912
    %v4927 = vpack.c.bf16 %v4915, %v4914
    %v4928 = vpack.c.bf16 %v4917, %v4916
    %v4929 = vpack.c.bf16 %v4919, %v4918
    %v4930 = vpack.c.bf16 %v4921, %v4920
    %v4931 = vpack.c.bf16 %v4923, %v4922
    %s4932 = scalar_lea.vmem [#allocation5], 832
    %v4933 = vld [vmem:[%s4932] sm:$0xf]
    %v4934 = vld [vmem:[%s4932 + $0x4] sm:$0xf]
    %v4935 = vld [vmem:[%s4932 + $0x8] sm:$0xf]
    %v4936 = vld [vmem:[%s4932 + $0xc] sm:$0xf]
    %v4937 = vld [vmem:[%s4932 + $0x10] sm:$0xf]
    %v4938 = vld [vmem:[%s4932 + $0x14] sm:$0xf]
    %v4939 = vld [vmem:[%s4932 + $0x18] sm:$0xf]
    %v4940 = vld [vmem:[%s4932 + $0x1c] sm:$0xf]
    %v4941 = vld [vmem:[%s4932 + $0x20] sm:$0xf]
    %v4942 = vld [vmem:[%s4932 + $0x24] sm:$0xf]
    %v4943 = vld [vmem:[%s4932 + $0x28] sm:$0xf]
    %v4944 = vld [vmem:[%s4932 + $0x2c] sm:$0xf]
    %v4945 = vld [vmem:[%s4932 + $0x30] sm:$0xf]
    %v4946 = vld [vmem:[%s4932 + $0x34] sm:$0xf]
    %v4947 = vld [vmem:[%s4932 + $0x38] sm:$0xf]
    %v4948 = vld [vmem:[%s4932 + $0x3c] sm:$0xf]
    %v4965 = vunpack.c.l.b16 %v4933
    %v4966 = vunpack.c.l.b16 %v4934
    %v4967 = vunpack.c.l.b16 %v4935
    %v4968 = vunpack.c.l.b16 %v4936
    %v4969 = vunpack.c.l.b16 %v4937
    %v4970 = vunpack.c.l.b16 %v4938
    %v4971 = vunpack.c.l.b16 %v4939
    %v4972 = vunpack.c.l.b16 %v4940
    %v4973 = vunpack.c.l.b16 %v4941
    %v4974 = vunpack.c.l.b16 %v4942
    %v4975 = vunpack.c.l.b16 %v4943
    %v4976 = vunpack.c.l.b16 %v4944
    %v4977 = vunpack.c.l.b16 %v4945
    %v4978 = vunpack.c.l.b16 %v4946
    %v4979 = vunpack.c.l.b16 %v4947
    %v4980 = vunpack.c.l.b16 %v4948
    %v4981 = vpack.c.b16 %v4966, %v4965
    %v4982 = vpack.c.b16 %v4968, %v4967
    %v4983 = vpack.c.b16 %v4970, %v4969
    %v4984 = vpack.c.b16 %v4972, %v4971
    %v4985 = vpack.c.b16 %v4974, %v4973
    %v4986 = vpack.c.b16 %v4976, %v4975
    %v4987 = vpack.c.b16 %v4978, %v4977
    %v4988 = vpack.c.b16 %v4980, %v4979
    %4997 = vmatpush.bf16.msra.mxu0 %v4988
    %4998 = vmatpush.bf16.msra.mxu0 %v4987
    %4999 = vmatpush.bf16.msra.mxu0 %v4986
    %5000 = vmatpush.bf16.msra.mxu0 %v4985
    %5001 = vmatpush.bf16.msra.mxu0 %v4984
    %5002 = vmatpush.bf16.msra.mxu0 %v4983
    %5003 = vmatpush.bf16.msra.mxu0 %v4982
    %5004 = vmatpush.bf16.msra.mxu0 %v4981
    %5005 = vmatmul.bf16.gmra.mxu0 %v4924
    %v5006 = vpop.f32.mrf.mxu0
    %v5007 = vadd.f32 0.0, %v5006
    %v5008 = vpop.f32.mrf.mxu0
    %v5009 = vadd.f32 0.0, %v5008
    %5010 = vmatmul.bf16.gmra.mxu0 %v4925
    %v5011 = vpop.f32.mrf.mxu0
    %v5012 = vadd.f32 0.0, %v5011
    %v5013 = vpop.f32.mrf.mxu0
    %v5014 = vadd.f32 0.0, %v5013
    %5015 = vmatmul.bf16.gmra.mxu0 %v4926
    %v5016 = vpop.f32.mrf.mxu0
    %v5017 = vadd.f32 0.0, %v5016
    %v5018 = vpop.f32.mrf.mxu0
    %v5019 = vadd.f32 0.0, %v5018
    %5020 = vmatmul.bf16.gmra.mxu0 %v4927
    %v5021 = vpop.f32.mrf.mxu0
    %v5022 = vadd.f32 0.0, %v5021
    %v5023 = vpop.f32.mrf.mxu0
    %v5024 = vadd.f32 0.0, %v5023
    %5025 = vmatmul.bf16.gmra.mxu0 %v4928
    %v5026 = vpop.f32.mrf.mxu0
    %v5027 = vadd.f32 0.0, %v5026
    %v5028 = vpop.f32.mrf.mxu0
    %v5029 = vadd.f32 0.0, %v5028
    %5030 = vmatmul.bf16.gmra.mxu0 %v4929
    %v5031 = vpop.f32.mrf.mxu0
    %v5032 = vadd.f32 0.0, %v5031
    %v5033 = vpop.f32.mrf.mxu0
    %v5034 = vadd.f32 0.0, %v5033
    %5035 = vmatmul.bf16.gmra.mxu0 %v4930
    %v5036 = vpop.f32.mrf.mxu0
    %v5037 = vadd.f32 0.0, %v5036
    %v5038 = vpop.f32.mrf.mxu0
    %v5039 = vadd.f32 0.0, %v5038
    %5040 = vmatmul.bf16.gmra.mxu0 %v4931
    %v5041 = vpop.f32.mrf.mxu0
    %v5042 = vadd.f32 0.0, %v5041
    %v5043 = vpop.f32.mrf.mxu0
    %v5044 = vadd.f32 0.0, %v5043
    %5045 = vdwg.mxu0
    %v5046 = vadd.f32 %v4892, %v5007
    %v5047 = vadd.f32 %v4893, %v5009
    %v5048 = vadd.f32 %v4894, %v5012
    %v5049 = vadd.f32 %v4895, %v5014
    %v5050 = vadd.f32 %v4896, %v5017
    %v5051 = vadd.f32 %v4897, %v5019
    %v5052 = vadd.f32 %v4898, %v5022
    %v5053 = vadd.f32 %v4899, %v5024
    %v5054 = vadd.f32 %v4900, %v5027
    %v5055 = vadd.f32 %v4901, %v5029
    %v5056 = vadd.f32 %v4902, %v5032
    %v5057 = vadd.f32 %v4903, %v5034
    %v5058 = vadd.f32 %v4904, %v5037
    %v5059 = vadd.f32 %v4905, %v5039
    %v5060 = vadd.f32 %v4906, %v5042
    %v5061 = vadd.f32 %v4907, %v5044
    %v5062 = vld [vmem:[%s2808 + $0x2] sm:$0xff]
    %v5063 = vld [vmem:[%s2808 + $0x12] sm:$0xff]
    %v5064 = vld [vmem:[%s2808 + $0x22] sm:$0xff]
    %v5065 = vld [vmem:[%s2808 + $0x32] sm:$0xff]
    %v5066 = vld [vmem:[%s2808 + $0x42] sm:$0xff]
    %v5067 = vld [vmem:[%s2808 + $0x52] sm:$0xff]
    %v5068 = vld [vmem:[%s2808 + $0x62] sm:$0xff]
    %v5069 = vld [vmem:[%s2808 + $0x72] sm:$0xff]
    %v5070 = vld [vmem:[%s2808 + $0xa2] sm:$0xff]
    %v5071 = vld [vmem:[%s2808 + $0xb2] sm:$0xff]
    %v5072 = vld [vmem:[%s2808 + $0xc2] sm:$0xff]
    %v5073 = vld [vmem:[%s2808 + $0xd2] sm:$0xff]
    %v5074 = vld [vmem:[%s2808 + $0xe2] sm:$0xff]
    %v5075 = vld [vmem:[%s2808 + $0xf2] sm:$0xff]
    %v5076 = vld [vmem:[%s2808 + $0x102] sm:$0xff]
    %v5077 = vld [vmem:[%s2808 + $0x112] sm:$0xff]
    %v5078 = vpack.c.bf16 %v5063, %v5062
    %v5079 = vpack.c.bf16 %v5065, %v5064
    %v5080 = vpack.c.bf16 %v5067, %v5066
    %v5081 = vpack.c.bf16 %v5069, %v5068
    %v5082 = vpack.c.bf16 %v5071, %v5070
    %v5083 = vpack.c.bf16 %v5073, %v5072
    %v5084 = vpack.c.bf16 %v5075, %v5074
    %v5085 = vpack.c.bf16 %v5077, %v5076
    %s5086 = scalar_lea.vmem [#allocation5], 896
    %v5087 = vld [vmem:[%s5086] sm:$0xf]
    %v5088 = vld [vmem:[%s5086 + $0x4] sm:$0xf]
    %v5089 = vld [vmem:[%s5086 + $0x8] sm:$0xf]
    %v5090 = vld [vmem:[%s5086 + $0xc] sm:$0xf]
    %v5091 = vld [vmem:[%s5086 + $0x10] sm:$0xf]
    %v5092 = vld [vmem:[%s5086 + $0x14] sm:$0xf]
    %v5093 = vld [vmem:[%s5086 + $0x18] sm:$0xf]
    %v5094 = vld [vmem:[%s5086 + $0x1c] sm:$0xf]
    %v5095 = vld [vmem:[%s5086 + $0x20] sm:$0xf]
    %v5096 = vld [vmem:[%s5086 + $0x24] sm:$0xf]
    %v5097 = vld [vmem:[%s5086 + $0x28] sm:$0xf]
    %v5098 = vld [vmem:[%s5086 + $0x2c] sm:$0xf]
    %v5099 = vld [vmem:[%s5086 + $0x30] sm:$0xf]
    %v5100 = vld [vmem:[%s5086 + $0x34] sm:$0xf]
    %v5101 = vld [vmem:[%s5086 + $0x38] sm:$0xf]
    %v5102 = vld [vmem:[%s5086 + $0x3c] sm:$0xf]
    %v5119 = vunpack.c.l.b16 %v5087
    %v5120 = vunpack.c.l.b16 %v5088
    %v5121 = vunpack.c.l.b16 %v5089
    %v5122 = vunpack.c.l.b16 %v5090
    %v5123 = vunpack.c.l.b16 %v5091
    %v5124 = vunpack.c.l.b16 %v5092
    %v5125 = vunpack.c.l.b16 %v5093
    %v5126 = vunpack.c.l.b16 %v5094
    %v5127 = vunpack.c.l.b16 %v5095
    %v5128 = vunpack.c.l.b16 %v5096
    %v5129 = vunpack.c.l.b16 %v5097
    %v5130 = vunpack.c.l.b16 %v5098
    %v5131 = vunpack.c.l.b16 %v5099
    %v5132 = vunpack.c.l.b16 %v5100
    %v5133 = vunpack.c.l.b16 %v5101
    %v5134 = vunpack.c.l.b16 %v5102
    %v5135 = vpack.c.b16 %v5120, %v5119
    %v5136 = vpack.c.b16 %v5122, %v5121
    %v5137 = vpack.c.b16 %v5124, %v5123
    %v5138 = vpack.c.b16 %v5126, %v5125
    %v5139 = vpack.c.b16 %v5128, %v5127
    %v5140 = vpack.c.b16 %v5130, %v5129
    %v5141 = vpack.c.b16 %v5132, %v5131
    %v5142 = vpack.c.b16 %v5134, %v5133
    %5151 = vmatpush.bf16.msra.mxu0 %v5142
    %5152 = vmatpush.bf16.msra.mxu0 %v5141
    %5153 = vmatpush.bf16.msra.mxu0 %v5140
    %5154 = vmatpush.bf16.msra.mxu0 %v5139
    %5155 = vmatpush.bf16.msra.mxu0 %v5138
    %5156 = vmatpush.bf16.msra.mxu0 %v5137
    %5157 = vmatpush.bf16.msra.mxu0 %v5136
    %5158 = vmatpush.bf16.msra.mxu0 %v5135
    %5159 = vmatmul.bf16.gmra.mxu0 %v5078
    %v5160 = vpop.f32.mrf.mxu0
    %v5161 = vadd.f32 0.0, %v5160
    %v5162 = vpop.f32.mrf.mxu0
    %v5163 = vadd.f32 0.0, %v5162
    %5164 = vmatmul.bf16.gmra.mxu0 %v5079
    %v5165 = vpop.f32.mrf.mxu0
    %v5166 = vadd.f32 0.0, %v5165
    %v5167 = vpop.f32.mrf.mxu0
    %v5168 = vadd.f32 0.0, %v5167
    %5169 = vmatmul.bf16.gmra.mxu0 %v5080
    %v5170 = vpop.f32.mrf.mxu0
    %v5171 = vadd.f32 0.0, %v5170
    %v5172 = vpop.f32.mrf.mxu0
    %v5173 = vadd.f32 0.0, %v5172
    %5174 = vmatmul.bf16.gmra.mxu0 %v5081
    %v5175 = vpop.f32.mrf.mxu0
    %v5176 = vadd.f32 0.0, %v5175
    %v5177 = vpop.f32.mrf.mxu0
    %v5178 = vadd.f32 0.0, %v5177
    %5179 = vmatmul.bf16.gmra.mxu0 %v5082
    %v5180 = vpop.f32.mrf.mxu0
    %v5181 = vadd.f32 0.0, %v5180
    %v5182 = vpop.f32.mrf.mxu0
    %v5183 = vadd.f32 0.0, %v5182
    %5184 = vmatmul.bf16.gmra.mxu0 %v5083
    %v5185 = vpop.f32.mrf.mxu0
    %v5186 = vadd.f32 0.0, %v5185
    %v5187 = vpop.f32.mrf.mxu0
    %v5188 = vadd.f32 0.0, %v5187
    %5189 = vmatmul.bf16.gmra.mxu0 %v5084
    %v5190 = vpop.f32.mrf.mxu0
    %v5191 = vadd.f32 0.0, %v5190
    %v5192 = vpop.f32.mrf.mxu0
    %v5193 = vadd.f32 0.0, %v5192
    %5194 = vmatmul.bf16.gmra.mxu0 %v5085
    %v5195 = vpop.f32.mrf.mxu0
    %v5196 = vadd.f32 0.0, %v5195
    %v5197 = vpop.f32.mrf.mxu0
    %v5198 = vadd.f32 0.0, %v5197
    %5199 = vdwg.mxu0
    %v5200 = vadd.f32 %v5046, %v5161
    %v5201 = vadd.f32 %v5047, %v5163
    %v5202 = vadd.f32 %v5048, %v5166
    %v5203 = vadd.f32 %v5049, %v5168
    %v5204 = vadd.f32 %v5050, %v5171
    %v5205 = vadd.f32 %v5051, %v5173
    %v5206 = vadd.f32 %v5052, %v5176
    %v5207 = vadd.f32 %v5053, %v5178
    %v5208 = vadd.f32 %v5054, %v5181
    %v5209 = vadd.f32 %v5055, %v5183
    %v5210 = vadd.f32 %v5056, %v5186
    %v5211 = vadd.f32 %v5057, %v5188
    %v5212 = vadd.f32 %v5058, %v5191
    %v5213 = vadd.f32 %v5059, %v5193
    %v5214 = vadd.f32 %v5060, %v5196
    %v5215 = vadd.f32 %v5061, %v5198
    %v5216 = vld [vmem:[%s3716] sm:$0xff]
    %v5217 = vld [vmem:[%s3716 + $0x10] sm:$0xff]
    %v5218 = vld [vmem:[%s3716 + $0x20] sm:$0xff]
    %v5219 = vld [vmem:[%s3716 + $0x30] sm:$0xff]
    %v5220 = vld [vmem:[%s3716 + $0x40] sm:$0xff]
    %v5221 = vld [vmem:[%s3716 + $0x50] sm:$0xff]
    %v5222 = vld [vmem:[%s3716 + $0x60] sm:$0xff]
    %v5223 = vld [vmem:[%s3716 + $0x70] sm:$0xff]
    %v5224 = vld [vmem:[%s3716 + $0xa0] sm:$0xff]
    %v5225 = vld [vmem:[%s3716 + $0xb0] sm:$0xff]
    %v5226 = vld [vmem:[%s3716 + $0xc0] sm:$0xff]
    %v5227 = vld [vmem:[%s3716 + $0xd0] sm:$0xff]
    %v5228 = vld [vmem:[%s3716 + $0xe0] sm:$0xff]
    %v5229 = vld [vmem:[%s3716 + $0xf0] sm:$0xff]
    %v5230 = vld [vmem:[%s3716 + $0x100] sm:$0xff]
    %v5231 = vld [vmem:[%s3716 + $0x110] sm:$0xff]
    %v5232 = vpack.c.bf16 %v5217, %v5216
    %v5233 = vpack.c.bf16 %v5219, %v5218
    %v5234 = vpack.c.bf16 %v5221, %v5220
    %v5235 = vpack.c.bf16 %v5223, %v5222
    %v5236 = vpack.c.bf16 %v5225, %v5224
    %v5237 = vpack.c.bf16 %v5227, %v5226
    %v5238 = vpack.c.bf16 %v5229, %v5228
    %v5239 = vpack.c.bf16 %v5231, %v5230
    %s5240 = scalar_lea.vmem [#allocation5], 960
    %v5241 = vld [vmem:[%s5240] sm:$0xf]
    %v5242 = vld [vmem:[%s5240 + $0x4] sm:$0xf]
    %v5243 = vld [vmem:[%s5240 + $0x8] sm:$0xf]
    %v5244 = vld [vmem:[%s5240 + $0xc] sm:$0xf]
    %v5245 = vld [vmem:[%s5240 + $0x10] sm:$0xf]
    %v5246 = vld [vmem:[%s5240 + $0x14] sm:$0xf]
    %v5247 = vld [vmem:[%s5240 + $0x18] sm:$0xf]
    %v5248 = vld [vmem:[%s5240 + $0x1c] sm:$0xf]
    %v5249 = vld [vmem:[%s5240 + $0x20] sm:$0xf]
    %v5250 = vld [vmem:[%s5240 + $0x24] sm:$0xf]
    %v5251 = vld [vmem:[%s5240 + $0x28] sm:$0xf]
    %v5252 = vld [vmem:[%s5240 + $0x2c] sm:$0xf]
    %v5253 = vld [vmem:[%s5240 + $0x30] sm:$0xf]
    %v5254 = vld [vmem:[%s5240 + $0x34] sm:$0xf]
    %v5255 = vld [vmem:[%s5240 + $0x38] sm:$0xf]
    %v5256 = vld [vmem:[%s5240 + $0x3c] sm:$0xf]
    %v5273 = vunpack.c.l.b16 %v5241
    %v5274 = vunpack.c.l.b16 %v5242
    %v5275 = vunpack.c.l.b16 %v5243
    %v5276 = vunpack.c.l.b16 %v5244
    %v5277 = vunpack.c.l.b16 %v5245
    %v5278 = vunpack.c.l.b16 %v5246
    %v5279 = vunpack.c.l.b16 %v5247
    %v5280 = vunpack.c.l.b16 %v5248
    %v5281 = vunpack.c.l.b16 %v5249
    %v5282 = vunpack.c.l.b16 %v5250
    %v5283 = vunpack.c.l.b16 %v5251
    %v5284 = vunpack.c.l.b16 %v5252
    %v5285 = vunpack.c.l.b16 %v5253
    %v5286 = vunpack.c.l.b16 %v5254
    %v5287 = vunpack.c.l.b16 %v5255
    %v5288 = vunpack.c.l.b16 %v5256
    %v5289 = vpack.c.b16 %v5274, %v5273
    %v5290 = vpack.c.b16 %v5276, %v5275
    %v5291 = vpack.c.b16 %v5278, %v5277
    %v5292 = vpack.c.b16 %v5280, %v5279
    %v5293 = vpack.c.b16 %v5282, %v5281
    %v5294 = vpack.c.b16 %v5284, %v5283
    %v5295 = vpack.c.b16 %v5286, %v5285
    %v5296 = vpack.c.b16 %v5288, %v5287
    %5305 = vmatpush.bf16.msra.mxu0 %v5296
    %5306 = vmatpush.bf16.msra.mxu0 %v5295
    %5307 = vmatpush.bf16.msra.mxu0 %v5294
    %5308 = vmatpush.bf16.msra.mxu0 %v5293
    %5309 = vmatpush.bf16.msra.mxu0 %v5292
    %5310 = vmatpush.bf16.msra.mxu0 %v5291
    %5311 = vmatpush.bf16.msra.mxu0 %v5290
    %5312 = vmatpush.bf16.msra.mxu0 %v5289
    %5313 = vmatmul.bf16.gmra.mxu0 %v5232
    %v5314 = vpop.f32.mrf.mxu0
    %v5315 = vadd.f32 0.0, %v5314
    %v5316 = vpop.f32.mrf.mxu0
    %v5317 = vadd.f32 0.0, %v5316
    %5318 = vmatmul.bf16.gmra.mxu0 %v5233
    %v5319 = vpop.f32.mrf.mxu0
    %v5320 = vadd.f32 0.0, %v5319
    %v5321 = vpop.f32.mrf.mxu0
    %v5322 = vadd.f32 0.0, %v5321
    %5323 = vmatmul.bf16.gmra.mxu0 %v5234
    %v5324 = vpop.f32.mrf.mxu0
    %v5325 = vadd.f32 0.0, %v5324
    %v5326 = vpop.f32.mrf.mxu0
    %v5327 = vadd.f32 0.0, %v5326
    %5328 = vmatmul.bf16.gmra.mxu0 %v5235
    %v5329 = vpop.f32.mrf.mxu0
    %v5330 = vadd.f32 0.0, %v5329
    %v5331 = vpop.f32.mrf.mxu0
    %v5332 = vadd.f32 0.0, %v5331
    %5333 = vmatmul.bf16.gmra.mxu0 %v5236
    %v5334 = vpop.f32.mrf.mxu0
    %v5335 = vadd.f32 0.0, %v5334
    %v5336 = vpop.f32.mrf.mxu0
    %v5337 = vadd.f32 0.0, %v5336
    %5338 = vmatmul.bf16.gmra.mxu0 %v5237
    %v5339 = vpop.f32.mrf.mxu0
    %v5340 = vadd.f32 0.0, %v5339
    %v5341 = vpop.f32.mrf.mxu0
    %v5342 = vadd.f32 0.0, %v5341
    %5343 = vmatmul.bf16.gmra.mxu0 %v5238
    %v5344 = vpop.f32.mrf.mxu0
    %v5345 = vadd.f32 0.0, %v5344
    %v5346 = vpop.f32.mrf.mxu0
    %v5347 = vadd.f32 0.0, %v5346
    %5348 = vmatmul.bf16.gmra.mxu0 %v5239
    %v5349 = vpop.f32.mrf.mxu0
    %v5350 = vadd.f32 0.0, %v5349
    %v5351 = vpop.f32.mrf.mxu0
    %v5352 = vadd.f32 0.0, %v5351
    %5353 = vdwg.mxu0
    %v5354 = vadd.f32 %v5200, %v5315
    %v5355 = vadd.f32 %v5201, %v5317
    %v5356 = vadd.f32 %v5202, %v5320
    %v5357 = vadd.f32 %v5203, %v5322
    %v5358 = vadd.f32 %v5204, %v5325
    %v5359 = vadd.f32 %v5205, %v5327
    %v5360 = vadd.f32 %v5206, %v5330
    %v5361 = vadd.f32 %v5207, %v5332
    %v5362 = vadd.f32 %v5208, %v5335
    %v5363 = vadd.f32 %v5209, %v5337
    %v5364 = vadd.f32 %v5210, %v5340
    %v5365 = vadd.f32 %v5211, %v5342
    %v5366 = vadd.f32 %v5212, %v5345
    %v5367 = vadd.f32 %v5213, %v5347
    %v5368 = vadd.f32 %v5214, %v5350
    %v5369 = vadd.f32 %v5215, %v5352
    %v5370 = vld [vmem:[%s3716 + $0x1] sm:$0xff]
    %v5371 = vld [vmem:[%s3716 + $0x11] sm:$0xff]
    %v5372 = vld [vmem:[%s3716 + $0x21] sm:$0xff]
    %v5373 = vld [vmem:[%s3716 + $0x31] sm:$0xff]
    %v5374 = vld [vmem:[%s3716 + $0x41] sm:$0xff]
    %v5375 = vld [vmem:[%s3716 + $0x51] sm:$0xff]
    %v5376 = vld [vmem:[%s3716 + $0x61] sm:$0xff]
    %v5377 = vld [vmem:[%s3716 + $0x71] sm:$0xff]
    %v5378 = vld [vmem:[%s3716 + $0xa1] sm:$0xff]
    %v5379 = vld [vmem:[%s3716 + $0xb1] sm:$0xff]
    %v5380 = vld [vmem:[%s3716 + $0xc1] sm:$0xff]
    %v5381 = vld [vmem:[%s3716 + $0xd1] sm:$0xff]
    %v5382 = vld [vmem:[%s3716 + $0xe1] sm:$0xff]
    %v5383 = vld [vmem:[%s3716 + $0xf1] sm:$0xff]
    %v5384 = vld [vmem:[%s3716 + $0x101] sm:$0xff]
    %v5385 = vld [vmem:[%s3716 + $0x111] sm:$0xff]
    %v5386 = vpack.c.bf16 %v5371, %v5370
    %v5387 = vpack.c.bf16 %v5373, %v5372
    %v5388 = vpack.c.bf16 %v5375, %v5374
    %v5389 = vpack.c.bf16 %v5377, %v5376
    %v5390 = vpack.c.bf16 %v5379, %v5378
    %v5391 = vpack.c.bf16 %v5381, %v5380
    %v5392 = vpack.c.bf16 %v5383, %v5382
    %v5393 = vpack.c.bf16 %v5385, %v5384
    %s5394 = scalar_lea.vmem [#allocation5], 1024
    %v5395 = vld [vmem:[%s5394] sm:$0xf]
    %v5396 = vld [vmem:[%s5394 + $0x4] sm:$0xf]
    %v5397 = vld [vmem:[%s5394 + $0x8] sm:$0xf]
    %v5398 = vld [vmem:[%s5394 + $0xc] sm:$0xf]
    %v5399 = vld [vmem:[%s5394 + $0x10] sm:$0xf]
    %v5400 = vld [vmem:[%s5394 + $0x14] sm:$0xf]
    %v5401 = vld [vmem:[%s5394 + $0x18] sm:$0xf]
    %v5402 = vld [vmem:[%s5394 + $0x1c] sm:$0xf]
    %v5403 = vld [vmem:[%s5394 + $0x20] sm:$0xf]
    %v5404 = vld [vmem:[%s5394 + $0x24] sm:$0xf]
    %v5405 = vld [vmem:[%s5394 + $0x28] sm:$0xf]
    %v5406 = vld [vmem:[%s5394 + $0x2c] sm:$0xf]
    %v5407 = vld [vmem:[%s5394 + $0x30] sm:$0xf]
    %v5408 = vld [vmem:[%s5394 + $0x34] sm:$0xf]
    %v5409 = vld [vmem:[%s5394 + $0x38] sm:$0xf]
    %v5410 = vld [vmem:[%s5394 + $0x3c] sm:$0xf]
    %v5427 = vunpack.c.l.b16 %v5395
    %v5428 = vunpack.c.l.b16 %v5396
    %v5429 = vunpack.c.l.b16 %v5397
    %v5430 = vunpack.c.l.b16 %v5398
    %v5431 = vunpack.c.l.b16 %v5399
    %v5432 = vunpack.c.l.b16 %v5400
    %v5433 = vunpack.c.l.b16 %v5401
    %v5434 = vunpack.c.l.b16 %v5402
    %v5435 = vunpack.c.l.b16 %v5403
    %v5436 = vunpack.c.l.b16 %v5404
    %v5437 = vunpack.c.l.b16 %v5405
    %v5438 = vunpack.c.l.b16 %v5406
    %v5439 = vunpack.c.l.b16 %v5407
    %v5440 = vunpack.c.l.b16 %v5408
    %v5441 = vunpack.c.l.b16 %v5409
    %v5442 = vunpack.c.l.b16 %v5410
    %v5443 = vpack.c.b16 %v5428, %v5427
    %v5444 = vpack.c.b16 %v5430, %v5429
    %v5445 = vpack.c.b16 %v5432, %v5431
    %v5446 = vpack.c.b16 %v5434, %v5433
    %v5447 = vpack.c.b16 %v5436, %v5435
    %v5448 = vpack.c.b16 %v5438, %v5437
    %v5449 = vpack.c.b16 %v5440, %v5439
    %v5450 = vpack.c.b16 %v5442, %v5441
    %5459 = vmatpush.bf16.msra.mxu0 %v5450
    %5460 = vmatpush.bf16.msra.mxu0 %v5449
    %5461 = vmatpush.bf16.msra.mxu0 %v5448
    %5462 = vmatpush.bf16.msra.mxu0 %v5447
    %5463 = vmatpush.bf16.msra.mxu0 %v5446
    %5464 = vmatpush.bf16.msra.mxu0 %v5445
    %5465 = vmatpush.bf16.msra.mxu0 %v5444
    %5466 = vmatpush.bf16.msra.mxu0 %v5443
    %5467 = vmatmul.bf16.gmra.mxu0 %v5386
    %v5468 = vpop.f32.mrf.mxu0
    %v5469 = vadd.f32 0.0, %v5468
    %v5470 = vpop.f32.mrf.mxu0
    %v5471 = vadd.f32 0.0, %v5470
    %5472 = vmatmul.bf16.gmra.mxu0 %v5387
    %v5473 = vpop.f32.mrf.mxu0
    %v5474 = vadd.f32 0.0, %v5473
    %v5475 = vpop.f32.mrf.mxu0
    %v5476 = vadd.f32 0.0, %v5475
    %5477 = vmatmul.bf16.gmra.mxu0 %v5388
    %v5478 = vpop.f32.mrf.mxu0
    %v5479 = vadd.f32 0.0, %v5478
    %v5480 = vpop.f32.mrf.mxu0
    %v5481 = vadd.f32 0.0, %v5480
    %5482 = vmatmul.bf16.gmra.mxu0 %v5389
    %v5483 = vpop.f32.mrf.mxu0
    %v5484 = vadd.f32 0.0, %v5483
    %v5485 = vpop.f32.mrf.mxu0
    %v5486 = vadd.f32 0.0, %v5485
    %5487 = vmatmul.bf16.gmra.mxu0 %v5390
    %v5488 = vpop.f32.mrf.mxu0
    %v5489 = vadd.f32 0.0, %v5488
    %v5490 = vpop.f32.mrf.mxu0
    %v5491 = vadd.f32 0.0, %v5490
    %5492 = vmatmul.bf16.gmra.mxu0 %v5391
    %v5493 = vpop.f32.mrf.mxu0
    %v5494 = vadd.f32 0.0, %v5493
    %v5495 = vpop.f32.mrf.mxu0
    %v5496 = vadd.f32 0.0, %v5495
    %5497 = vmatmul.bf16.gmra.mxu0 %v5392
    %v5498 = vpop.f32.mrf.mxu0
    %v5499 = vadd.f32 0.0, %v5498
    %v5500 = vpop.f32.mrf.mxu0
    %v5501 = vadd.f32 0.0, %v5500
    %5502 = vmatmul.bf16.gmra.mxu0 %v5393
    %v5503 = vpop.f32.mrf.mxu0
    %v5504 = vadd.f32 0.0, %v5503
    %v5505 = vpop.f32.mrf.mxu0
    %v5506 = vadd.f32 0.0, %v5505
    %5507 = vdwg.mxu0
    %v5508 = vadd.f32 %v5354, %v5469
    %v5509 = vadd.f32 %v5355, %v5471
    %v5510 = vadd.f32 %v5356, %v5474
    %v5511 = vadd.f32 %v5357, %v5476
    %v5512 = vadd.f32 %v5358, %v5479
    %v5513 = vadd.f32 %v5359, %v5481
    %v5514 = vadd.f32 %v5360, %v5484
    %v5515 = vadd.f32 %v5361, %v5486
    %v5516 = vadd.f32 %v5362, %v5489
    %v5517 = vadd.f32 %v5363, %v5491
    %v5518 = vadd.f32 %v5364, %v5494
    %v5519 = vadd.f32 %v5365, %v5496
    %v5520 = vadd.f32 %v5366, %v5499
    %v5521 = vadd.f32 %v5367, %v5501
    %v5522 = vadd.f32 %v5368, %v5504
    %v5523 = vadd.f32 %v5369, %v5506
    %v5524 = vld [vmem:[%s3716 + $0x2] sm:$0xff]
    %v5525 = vld [vmem:[%s3716 + $0x12] sm:$0xff]
    %v5526 = vld [vmem:[%s3716 + $0x22] sm:$0xff]
    %v5527 = vld [vmem:[%s3716 + $0x32] sm:$0xff]
    %v5528 = vld [vmem:[%s3716 + $0x42] sm:$0xff]
    %v5529 = vld [vmem:[%s3716 + $0x52] sm:$0xff]
    %v5530 = vld [vmem:[%s3716 + $0x62] sm:$0xff]
    %v5531 = vld [vmem:[%s3716 + $0x72] sm:$0xff]
    %v5532 = vld [vmem:[%s3716 + $0xa2] sm:$0xff]
    %v5533 = vld [vmem:[%s3716 + $0xb2] sm:$0xff]
    %v5534 = vld [vmem:[%s3716 + $0xc2] sm:$0xff]
    %v5535 = vld [vmem:[%s3716 + $0xd2] sm:$0xff]
    %v5536 = vld [vmem:[%s3716 + $0xe2] sm:$0xff]
    %v5537 = vld [vmem:[%s3716 + $0xf2] sm:$0xff]
    %v5538 = vld [vmem:[%s3716 + $0x102] sm:$0xff]
    %v5539 = vld [vmem:[%s3716 + $0x112] sm:$0xff]
    %v5540 = vpack.c.bf16 %v5525, %v5524
    %v5541 = vpack.c.bf16 %v5527, %v5526
    %v5542 = vpack.c.bf16 %v5529, %v5528
    %v5543 = vpack.c.bf16 %v5531, %v5530
    %v5544 = vpack.c.bf16 %v5533, %v5532
    %v5545 = vpack.c.bf16 %v5535, %v5534
    %v5546 = vpack.c.bf16 %v5537, %v5536
    %v5547 = vpack.c.bf16 %v5539, %v5538
    %s5548 = scalar_lea.vmem [#allocation5], 1088
    %v5549 = vld [vmem:[%s5548] sm:$0xf]
    %v5550 = vld [vmem:[%s5548 + $0x4] sm:$0xf]
    %v5551 = vld [vmem:[%s5548 + $0x8] sm:$0xf]
    %v5552 = vld [vmem:[%s5548 + $0xc] sm:$0xf]
    %v5553 = vld [vmem:[%s5548 + $0x10] sm:$0xf]
    %v5554 = vld [vmem:[%s5548 + $0x14] sm:$0xf]
    %v5555 = vld [vmem:[%s5548 + $0x18] sm:$0xf]
    %v5556 = vld [vmem:[%s5548 + $0x1c] sm:$0xf]
    %v5557 = vld [vmem:[%s5548 + $0x20] sm:$0xf]
    %v5558 = vld [vmem:[%s5548 + $0x24] sm:$0xf]
    %v5559 = vld [vmem:[%s5548 + $0x28] sm:$0xf]
    %v5560 = vld [vmem:[%s5548 + $0x2c] sm:$0xf]
    %v5561 = vld [vmem:[%s5548 + $0x30] sm:$0xf]
    %v5562 = vld [vmem:[%s5548 + $0x34] sm:$0xf]
    %v5563 = vld [vmem:[%s5548 + $0x38] sm:$0xf]
    %v5564 = vld [vmem:[%s5548 + $0x3c] sm:$0xf]
    %v5581 = vunpack.c.l.b16 %v5549
    %v5582 = vunpack.c.l.b16 %v5550
    %v5583 = vunpack.c.l.b16 %v5551
    %v5584 = vunpack.c.l.b16 %v5552
    %v5585 = vunpack.c.l.b16 %v5553
    %v5586 = vunpack.c.l.b16 %v5554
    %v5587 = vunpack.c.l.b16 %v5555
    %v5588 = vunpack.c.l.b16 %v5556
    %v5589 = vunpack.c.l.b16 %v5557
    %v5590 = vunpack.c.l.b16 %v5558
    %v5591 = vunpack.c.l.b16 %v5559
    %v5592 = vunpack.c.l.b16 %v5560
    %v5593 = vunpack.c.l.b16 %v5561
    %v5594 = vunpack.c.l.b16 %v5562
    %v5595 = vunpack.c.l.b16 %v5563
    %v5596 = vunpack.c.l.b16 %v5564
    %v5597 = vpack.c.b16 %v5582, %v5581
    %v5598 = vpack.c.b16 %v5584, %v5583
    %v5599 = vpack.c.b16 %v5586, %v5585
    %v5600 = vpack.c.b16 %v5588, %v5587
    %v5601 = vpack.c.b16 %v5590, %v5589
    %v5602 = vpack.c.b16 %v5592, %v5591
    %v5603 = vpack.c.b16 %v5594, %v5593
    %v5604 = vpack.c.b16 %v5596, %v5595
    %5613 = vmatpush.bf16.msra.mxu0 %v5604
    %5614 = vmatpush.bf16.msra.mxu0 %v5603
    %5615 = vmatpush.bf16.msra.mxu0 %v5602
    %5616 = vmatpush.bf16.msra.mxu0 %v5601
    %5617 = vmatpush.bf16.msra.mxu0 %v5600
    %5618 = vmatpush.bf16.msra.mxu0 %v5599
    %5619 = vmatpush.bf16.msra.mxu0 %v5598
    %5620 = vmatpush.bf16.msra.mxu0 %v5597
    %5621 = vmatmul.bf16.gmra.mxu0 %v5540
    %v5622 = vpop.f32.mrf.mxu0
    %v5623 = vadd.f32 0.0, %v5622
    %v5624 = vpop.f32.mrf.mxu0
    %v5625 = vadd.f32 0.0, %v5624
    %5626 = vmatmul.bf16.gmra.mxu0 %v5541
    %v5627 = vpop.f32.mrf.mxu0
    %v5628 = vadd.f32 0.0, %v5627
    %v5629 = vpop.f32.mrf.mxu0
    %v5630 = vadd.f32 0.0, %v5629
    %5631 = vmatmul.bf16.gmra.mxu0 %v5542
    %v5632 = vpop.f32.mrf.mxu0
    %v5633 = vadd.f32 0.0, %v5632
    %v5634 = vpop.f32.mrf.mxu0
    %v5635 = vadd.f32 0.0, %v5634
    %5636 = vmatmul.bf16.gmra.mxu0 %v5543
    %v5637 = vpop.f32.mrf.mxu0
    %v5638 = vadd.f32 0.0, %v5637
    %v5639 = vpop.f32.mrf.mxu0
    %v5640 = vadd.f32 0.0, %v5639
    %5641 = vmatmul.bf16.gmra.mxu0 %v5544
    %v5642 = vpop.f32.mrf.mxu0
    %v5643 = vadd.f32 0.0, %v5642
    %v5644 = vpop.f32.mrf.mxu0
    %v5645 = vadd.f32 0.0, %v5644
    %5646 = vmatmul.bf16.gmra.mxu0 %v5545
    %v5647 = vpop.f32.mrf.mxu0
    %v5648 = vadd.f32 0.0, %v5647
    %v5649 = vpop.f32.mrf.mxu0
    %v5650 = vadd.f32 0.0, %v5649
    %5651 = vmatmul.bf16.gmra.mxu0 %v5546
    %v5652 = vpop.f32.mrf.mxu0
    %v5653 = vadd.f32 0.0, %v5652
    %v5654 = vpop.f32.mrf.mxu0
    %v5655 = vadd.f32 0.0, %v5654
    %5656 = vmatmul.bf16.gmra.mxu0 %v5547
    %v5657 = vpop.f32.mrf.mxu0
    %v5658 = vadd.f32 0.0, %v5657
    %v5659 = vpop.f32.mrf.mxu0
    %v5660 = vadd.f32 0.0, %v5659
    %5661 = vdwg.mxu0
    %v5662 = vadd.f32 %v5508, %v5623
    %v5663 = vadd.f32 %v5509, %v5625
    %v5664 = vadd.f32 %v5510, %v5628
    %v5665 = vadd.f32 %v5511, %v5630
    %v5666 = vadd.f32 %v5512, %v5633
    %v5667 = vadd.f32 %v5513, %v5635
    %v5668 = vadd.f32 %v5514, %v5638
    %v5669 = vadd.f32 %v5515, %v5640
    %v5670 = vadd.f32 %v5516, %v5643
    %v5671 = vadd.f32 %v5517, %v5645
    %v5672 = vadd.f32 %v5518, %v5648
    %v5673 = vadd.f32 %v5519, %v5650
    %v5674 = vadd.f32 %v5520, %v5653
    %v5675 = vadd.f32 %v5521, %v5655
    %v5676 = vadd.f32 %v5522, %v5658
    %v5677 = vadd.f32 %v5523, %v5660
    %v5678 = vadd.f32 %v5662, %v5663
    %v5679 = vadd.f32 %v5678, %v5664
    %v5680 = vadd.f32 %v5679, %v5665
    %v5681 = vadd.f32 %v5680, %v5666
    %v5682 = vadd.f32 %v5681, %v5667
    %v5683 = vadd.f32 %v5682, %v5668
    %v5684 = vadd.f32 %v5683, %v5669
    %v5685 = vadd.f32 %v5684, %v5670
    %v5686 = vadd.f32 %v5685, %v5671
    %v5687 = vadd.f32 %v5686, %v5672
    %v5688 = vadd.f32 %v5687, %v5673
    %v5689 = vadd.f32 %v5688, %v5674
    %v5690 = vadd.f32 %v5689, %v5675
    %v5691 = vadd.f32 %v5690, %v5676
    %v5692 = vadd.f32 %v5691, %v5677
    %v5693 = vrot.slane %v5692, 4
    %v5694 = vadd.f32 %v5692, %v5693
    %v5695 = vrot.slane %v5694, 2
    %v5696 = vadd.f32 %v5694, %v5695
    %v5697 = vrot.slane %v5696, 1
    %v5698 = vadd.f32 %v5696, %v5697
    %v5699 = vmul.f32 %v5662, %v5662
    %v5700 = vmul.f32 %v5663, %v5663
    %v5701 = vmul.f32 %v5664, %v5664
    %v5702 = vmul.f32 %v5665, %v5665
    %v5703 = vmul.f32 %v5666, %v5666
    %v5704 = vmul.f32 %v5667, %v5667
    %v5705 = vmul.f32 %v5668, %v5668
    %v5706 = vmul.f32 %v5669, %v5669
    %v5707 = vmul.f32 %v5670, %v5670
    %v5708 = vmul.f32 %v5671, %v5671
    %v5709 = vmul.f32 %v5672, %v5672
    %v5710 = vmul.f32 %v5673, %v5673
    %v5711 = vmul.f32 %v5674, %v5674
    %v5712 = vmul.f32 %v5675, %v5675
    %v5713 = vmul.f32 %v5676, %v5676
    %v5714 = vmul.f32 %v5677, %v5677
    %v5715 = vadd.f32 %v5699, %v5700
    %v5716 = vadd.f32 %v5715, %v5701
    %v5717 = vadd.f32 %v5716, %v5702
    %v5718 = vadd.f32 %v5717, %v5703
    %v5719 = vadd.f32 %v5718, %v5704
    %v5720 = vadd.f32 %v5719, %v5705
    %v5721 = vadd.f32 %v5720, %v5706
    %v5722 = vadd.f32 %v5721, %v5707
    %v5723 = vadd.f32 %v5722, %v5708
    %v5724 = vadd.f32 %v5723, %v5709
    %v5725 = vadd.f32 %v5724, %v5710
    %v5726 = vadd.f32 %v5725, %v5711
    %v5727 = vadd.f32 %v5726, %v5712
    %v5728 = vadd.f32 %v5727, %v5713
    %v5729 = vadd.f32 %v5728, %v5714
    %v5730 = vrot.slane %v5729, 4
    %v5731 = vadd.f32 %v5729, %v5730
    %v5732 = vrot.slane %v5731, 2
    %v5733 = vadd.f32 %v5731, %v5732
    %v5734 = vrot.slane %v5733, 1
    %v5735 = vadd.f32 %v5733, %v5734
    %v5736 = vmul.f32 %v5698, 0.0078125
    %v5737 = vmul.f32 %v5735, 0.0078125
    %v5738 = vmul.f32 %v5736, %v5736
    %v5739 = vsub.f32 %v5737, %v5738
    %v5740 = vmax.f32 %v5739, 0.0
    %v5741 = vld [vmem:[#allocation7 + $0x1] sm:$0x1]
    %v5742 = vadd.f32 %v5740, 1e-05
    %v5743 = vrsqrt.pop %v5742
    %v5744 = vmul.f32 %v5743, %v5742
    %v5745 = vmul.f32 %v5744, %v5743
    %v5746 = vmul.f32 0.5, %v5745
    %v5747 = vsub.f32 1.5, %v5746
    %v5748 = vmul.f32 %v5743, %v5747
    %vm5749 = vweird.f32 %v5742
    %vm5750 = vweird.f32 %v5743
    %vm5751 = vmor %vm5749, %vm5750
    %v5752 = vsel %vm5751, %v5743, %v5748
    %v5753 = vmul.f32 %v5741, %v5752
    %v5754 = vld [vmem:[#allocation9 + $0x1] sm:$0x1]
    %v5755 = vmul.f32 %v5736, %v5753
    %v5756 = vsub.f32 %v5754, %v5755
    %v5757 = vperm.slane %v5753, 0
    %v5758 = vmul.f32 %v5662, %v5757
    %v5759 = vmul.f32 %v5663, %v5757
    %v5760 = vmul.f32 %v5664, %v5757
    %v5761 = vmul.f32 %v5665, %v5757
    %v5762 = vmul.f32 %v5666, %v5757
    %v5763 = vmul.f32 %v5667, %v5757
    %v5764 = vmul.f32 %v5668, %v5757
    %v5765 = vmul.f32 %v5669, %v5757
    %v5766 = vmul.f32 %v5670, %v5757
    %v5767 = vmul.f32 %v5671, %v5757
    %v5768 = vmul.f32 %v5672, %v5757
    %v5769 = vmul.f32 %v5673, %v5757
    %v5770 = vmul.f32 %v5674, %v5757
    %v5771 = vmul.f32 %v5675, %v5757
    %v5772 = vmul.f32 %v5676, %v5757
    %v5773 = vmul.f32 %v5677, %v5757
    %v5774 = vperm.slane %v5756, 0
    %v5775 = vadd.f32 %v5758, %v5774
    %v5776 = vadd.f32 %v5759, %v5774
    %v5777 = vadd.f32 %v5760, %v5774
    %v5778 = vadd.f32 %v5761, %v5774
    %v5779 = vadd.f32 %v5762, %v5774
    %v5780 = vadd.f32 %v5763, %v5774
    %v5781 = vadd.f32 %v5764, %v5774
    %v5782 = vadd.f32 %v5765, %v5774
    %v5783 = vadd.f32 %v5766, %v5774
    %v5784 = vadd.f32 %v5767, %v5774
    %v5785 = vadd.f32 %v5768, %v5774
    %v5786 = vadd.f32 %v5769, %v5774
    %v5787 = vadd.f32 %v5770, %v5774
    %v5788 = vadd.f32 %v5771, %v5774
    %v5789 = vadd.f32 %v5772, %v5774
    %v5790 = vadd.f32 %v5773, %v5774
    %v5791 = vmax.f32 %v5775, 0.0
    %v5792 = vmax.f32 %v5776, 0.0
    %v5793 = vmax.f32 %v5777, 0.0
    %v5794 = vmax.f32 %v5778, 0.0
    %v5795 = vmax.f32 %v5779, 0.0
    %v5796 = vmax.f32 %v5780, 0.0
    %v5797 = vmax.f32 %v5781, 0.0
    %v5798 = vmax.f32 %v5782, 0.0
    %v5799 = vmax.f32 %v5783, 0.0
    %v5800 = vmax.f32 %v5784, 0.0
    %v5801 = vmax.f32 %v5785, 0.0
    %v5802 = vmax.f32 %v5786, 0.0
    %v5803 = vmax.f32 %v5787, 0.0
    %v5804 = vmax.f32 %v5788, 0.0
    %v5805 = vmax.f32 %v5789, 0.0
    %v5806 = vmax.f32 %v5790, 0.0
    %5807 = vst [vmem:[%s4] sm:$0xff] %v5791
    %5808 = vst [vmem:[%s4 + $0x8] sm:$0xff] %v5792
    %5809 = vst [vmem:[%s4 + $0x10] sm:$0xff] %v5793
    %5810 = vst [vmem:[%s4 + $0x18] sm:$0xff] %v5794
    %5811 = vst [vmem:[%s4 + $0x20] sm:$0xff] %v5795
    %5812 = vst [vmem:[%s4 + $0x28] sm:$0xff] %v5796
    %5813 = vst [vmem:[%s4 + $0x30] sm:$0xff] %v5797
    %5814 = vst [vmem:[%s4 + $0x38] sm:$0xff] %v5798
    %5815 = vst [vmem:[%s4 + $0x40] sm:$0xff] %v5799
    %5816 = vst [vmem:[%s4 + $0x48] sm:$0xff] %v5800
    %5817 = vst [vmem:[%s4 + $0x50] sm:$0xff] %v5801
    %5818 = vst [vmem:[%s4 + $0x58] sm:$0xff] %v5802
    %5819 = vst [vmem:[%s4 + $0x60] sm:$0xff] %v5803
    %5820 = vst [vmem:[%s4 + $0x68] sm:$0xff] %v5804
    %5821 = vst [vmem:[%s4 + $0x70] sm:$0xff] %v5805
    %5822 = vst [vmem:[%s4 + $0x78] sm:$0xff] %v5806
    %v5839 = vrot.slane %v5791, 2
    %v5840 = vrot.slane %v5791, 4
    %v5841 = vrot.slane %v5791, 6
    %v5842 = vrot.slane %v5792, 2
    %v5843 = vrot.slane %v5792, 4
    %v5844 = vrot.slane %v5792, 6
    %v5845 = vrot.slane %v5793, 2
    %v5846 = vrot.slane %v5793, 4
    %v5847 = vrot.slane %v5793, 6
    %v5848 = vrot.slane %v5794, 2
    %v5849 = vrot.slane %v5794, 4
    %v5850 = vrot.slane %v5794, 6
    %v5851 = vrot.slane %v5795, 2
    %v5852 = vrot.slane %v5795, 4
    %v5853 = vrot.slane %v5795, 6
    %v5854 = vrot.slane %v5796, 2
    %v5855 = vrot.slane %v5796, 4
    %v5856 = vrot.slane %v5796, 6
    %v5857 = vrot.slane %v5797, 2
    %v5858 = vrot.slane %v5797, 4
    %v5859 = vrot.slane %v5797, 6
    %v5860 = vrot.slane %v5798, 2
    %v5861 = vrot.slane %v5798, 4
    %v5862 = vrot.slane %v5798, 6
    %v5863 = vrot.slane %v5799, 2
    %v5864 = vrot.slane %v5799, 4
    %v5865 = vrot.slane %v5799, 6
    %v5866 = vrot.slane %v5800, 2
    %v5867 = vrot.slane %v5800, 4
    %v5868 = vrot.slane %v5800, 6
    %v5869 = vrot.slane %v5801, 2
    %v5870 = vrot.slane %v5801, 4
    %v5871 = vrot.slane %v5801, 6
    %v5872 = vrot.slane %v5802, 2
    %v5873 = vrot.slane %v5802, 4
    %v5874 = vrot.slane %v5802, 6
    %v5875 = vrot.slane %v5803, 2
    %v5876 = vrot.slane %v5803, 4
    %v5877 = vrot.slane %v5803, 6
    %v5878 = vrot.slane %v5804, 2
    %v5879 = vrot.slane %v5804, 4
    %v5880 = vrot.slane %v5804, 6
    %v5881 = vrot.slane %v5805, 2
    %v5882 = vrot.slane %v5805, 4
    %v5883 = vrot.slane %v5805, 6
    %v5884 = vrot.slane %v5806, 2
    %v5885 = vrot.slane %v5806, 4
    %v5886 = vrot.slane %v5806, 6
    %v5935 = vsel %vm575, %v5791, -inf
    %v5936 = vrot.slane %v5935, 4
    %v5937 = vmax.f32 %v5935, %v5936
    %v5938 = vrot.slane %v5937, 2
    %v5939 = vmax.f32 %v5937, %v5938
    %v5940 = vrot.slane %v5939, 1
    %v5941 = vmax.f32 %v5939, %v5940
    %v5942 = vsel %vm575, %v5839, -inf
    %v5943 = vrot.slane %v5942, 4
    %v5944 = vmax.f32 %v5942, %v5943
    %v5945 = vrot.slane %v5944, 2
    %v5946 = vmax.f32 %v5944, %v5945
    %v5947 = vrot.slane %v5946, 1
    %v5948 = vmax.f32 %v5946, %v5947
    %v5949 = vsel %vm575, %v5840, -inf
    %v5950 = vrot.slane %v5949, 4
    %v5951 = vmax.f32 %v5949, %v5950
    %v5952 = vrot.slane %v5951, 2
    %v5953 = vmax.f32 %v5951, %v5952
    %v5954 = vrot.slane %v5953, 1
    %v5955 = vmax.f32 %v5953, %v5954
    %v5956 = vsel %vm575, %v5841, -inf
    %v5957 = vrot.slane %v5956, 4
    %v5958 = vmax.f32 %v5956, %v5957
    %v5959 = vrot.slane %v5958, 2
    %v5960 = vmax.f32 %v5958, %v5959
    %v5961 = vrot.slane %v5960, 1
    %v5962 = vmax.f32 %v5960, %v5961
    %v5963 = vsel %vm575, %v5792, -inf
    %v5964 = vrot.slane %v5963, 4
    %v5965 = vmax.f32 %v5963, %v5964
    %v5966 = vrot.slane %v5965, 2
    %v5967 = vmax.f32 %v5965, %v5966
    %v5968 = vrot.slane %v5967, 1
    %v5969 = vmax.f32 %v5967, %v5968
    %v5970 = vsel %vm575, %v5842, -inf
    %v5971 = vrot.slane %v5970, 4
    %v5972 = vmax.f32 %v5970, %v5971
    %v5973 = vrot.slane %v5972, 2
    %v5974 = vmax.f32 %v5972, %v5973
    %v5975 = vrot.slane %v5974, 1
    %v5976 = vmax.f32 %v5974, %v5975
    %v5977 = vsel %vm575, %v5843, -inf
    %v5978 = vrot.slane %v5977, 4
    %v5979 = vmax.f32 %v5977, %v5978
    %v5980 = vrot.slane %v5979, 2
    %v5981 = vmax.f32 %v5979, %v5980
    %v5982 = vrot.slane %v5981, 1
    %v5983 = vmax.f32 %v5981, %v5982
    %v5984 = vsel %vm575, %v5844, -inf
    %v5985 = vrot.slane %v5984, 4
    %v5986 = vmax.f32 %v5984, %v5985
    %v5987 = vrot.slane %v5986, 2
    %v5988 = vmax.f32 %v5986, %v5987
    %v5989 = vrot.slane %v5988, 1
    %v5990 = vmax.f32 %v5988, %v5989
    %v5991 = vsel %vm575, %v5793, -inf
    %v5992 = vrot.slane %v5991, 4
    %v5993 = vmax.f32 %v5991, %v5992
    %v5994 = vrot.slane %v5993, 2
    %v5995 = vmax.f32 %v5993, %v5994
    %v5996 = vrot.slane %v5995, 1
    %v5997 = vmax.f32 %v5995, %v5996
    %v5998 = vsel %vm575, %v5845, -inf
    %v5999 = vrot.slane %v5998, 4
    %v6000 = vmax.f32 %v5998, %v5999
    %v6001 = vrot.slane %v6000, 2
    %v6002 = vmax.f32 %v6000, %v6001
    %v6003 = vrot.slane %v6002, 1
    %v6004 = vmax.f32 %v6002, %v6003
    %v6005 = vsel %vm575, %v5846, -inf
    %v6006 = vrot.slane %v6005, 4
    %v6007 = vmax.f32 %v6005, %v6006
    %v6008 = vrot.slane %v6007, 2
    %v6009 = vmax.f32 %v6007, %v6008
    %v6010 = vrot.slane %v6009, 1
    %v6011 = vmax.f32 %v6009, %v6010
    %v6012 = vsel %vm575, %v5847, -inf
    %v6013 = vrot.slane %v6012, 4
    %v6014 = vmax.f32 %v6012, %v6013
    %v6015 = vrot.slane %v6014, 2
    %v6016 = vmax.f32 %v6014, %v6015
    %v6017 = vrot.slane %v6016, 1
    %v6018 = vmax.f32 %v6016, %v6017
    %v6019 = vsel %vm575, %v5794, -inf
    %v6020 = vrot.slane %v6019, 4
    %v6021 = vmax.f32 %v6019, %v6020
    %v6022 = vrot.slane %v6021, 2
    %v6023 = vmax.f32 %v6021, %v6022
    %v6024 = vrot.slane %v6023, 1
    %v6025 = vmax.f32 %v6023, %v6024
    %v6026 = vsel %vm575, %v5848, -inf
    %v6027 = vrot.slane %v6026, 4
    %v6028 = vmax.f32 %v6026, %v6027
    %v6029 = vrot.slane %v6028, 2
    %v6030 = vmax.f32 %v6028, %v6029
    %v6031 = vrot.slane %v6030, 1
    %v6032 = vmax.f32 %v6030, %v6031
    %v6033 = vsel %vm575, %v5849, -inf
    %v6034 = vrot.slane %v6033, 4
    %v6035 = vmax.f32 %v6033, %v6034
    %v6036 = vrot.slane %v6035, 2
    %v6037 = vmax.f32 %v6035, %v6036
    %v6038 = vrot.slane %v6037, 1
    %v6039 = vmax.f32 %v6037, %v6038
    %v6040 = vsel %vm575, %v5850, -inf
    %v6041 = vrot.slane %v6040, 4
    %v6042 = vmax.f32 %v6040, %v6041
    %v6043 = vrot.slane %v6042, 2
    %v6044 = vmax.f32 %v6042, %v6043
    %v6045 = vrot.slane %v6044, 1
    %v6046 = vmax.f32 %v6044, %v6045
    %v6047 = vsel %vm575, %v5795, -inf
    %v6048 = vrot.slane %v6047, 4
    %v6049 = vmax.f32 %v6047, %v6048
    %v6050 = vrot.slane %v6049, 2
    %v6051 = vmax.f32 %v6049, %v6050
    %v6052 = vrot.slane %v6051, 1
    %v6053 = vmax.f32 %v6051, %v6052
    %v6054 = vsel %vm575, %v5851, -inf
    %v6055 = vrot.slane %v6054, 4
    %v6056 = vmax.f32 %v6054, %v6055
    %v6057 = vrot.slane %v6056, 2
    %v6058 = vmax.f32 %v6056, %v6057
    %v6059 = vrot.slane %v6058, 1
    %v6060 = vmax.f32 %v6058, %v6059
    %v6061 = vsel %vm575, %v5852, -inf
    %v6062 = vrot.slane %v6061, 4
    %v6063 = vmax.f32 %v6061, %v6062
    %v6064 = vrot.slane %v6063, 2
    %v6065 = vmax.f32 %v6063, %v6064
    %v6066 = vrot.slane %v6065, 1
    %v6067 = vmax.f32 %v6065, %v6066
    %v6068 = vsel %vm575, %v5853, -inf
    %v6069 = vrot.slane %v6068, 4
    %v6070 = vmax.f32 %v6068, %v6069
    %v6071 = vrot.slane %v6070, 2
    %v6072 = vmax.f32 %v6070, %v6071
    %v6073 = vrot.slane %v6072, 1
    %v6074 = vmax.f32 %v6072, %v6073
    %v6075 = vsel %vm575, %v5796, -inf
    %v6076 = vrot.slane %v6075, 4
    %v6077 = vmax.f32 %v6075, %v6076
    %v6078 = vrot.slane %v6077, 2
    %v6079 = vmax.f32 %v6077, %v6078
    %v6080 = vrot.slane %v6079, 1
    %v6081 = vmax.f32 %v6079, %v6080
    %v6082 = vsel %vm575, %v5854, -inf
    %v6083 = vrot.slane %v6082, 4
    %v6084 = vmax.f32 %v6082, %v6083
    %v6085 = vrot.slane %v6084, 2
    %v6086 = vmax.f32 %v6084, %v6085
    %v6087 = vrot.slane %v6086, 1
    %v6088 = vmax.f32 %v6086, %v6087
    %v6089 = vsel %vm575, %v5855, -inf
    %v6090 = vrot.slane %v6089, 4
    %v6091 = vmax.f32 %v6089, %v6090
    %v6092 = vrot.slane %v6091, 2
    %v6093 = vmax.f32 %v6091, %v6092
    %v6094 = vrot.slane %v6093, 1
    %v6095 = vmax.f32 %v6093, %v6094
    %v6096 = vsel %vm575, %v5856, -inf
    %v6097 = vrot.slane %v6096, 4
    %v6098 = vmax.f32 %v6096, %v6097
    %v6099 = vrot.slane %v6098, 2
    %v6100 = vmax.f32 %v6098, %v6099
    %v6101 = vrot.slane %v6100, 1
    %v6102 = vmax.f32 %v6100, %v6101
    %v6103 = vsel %vm575, %v5797, -inf
    %v6104 = vrot.slane %v6103, 4
    %v6105 = vmax.f32 %v6103, %v6104
    %v6106 = vrot.slane %v6105, 2
    %v6107 = vmax.f32 %v6105, %v6106
    %v6108 = vrot.slane %v6107, 1
    %v6109 = vmax.f32 %v6107, %v6108
    %v6110 = vsel %vm575, %v5857, -inf
    %v6111 = vrot.slane %v6110, 4
    %v6112 = vmax.f32 %v6110, %v6111
    %v6113 = vrot.slane %v6112, 2
    %v6114 = vmax.f32 %v6112, %v6113
    %v6115 = vrot.slane %v6114, 1
    %v6116 = vmax.f32 %v6114, %v6115
    %v6117 = vsel %vm575, %v5858, -inf
    %v6118 = vrot.slane %v6117, 4
    %v6119 = vmax.f32 %v6117, %v6118
    %v6120 = vrot.slane %v6119, 2
    %v6121 = vmax.f32 %v6119, %v6120
    %v6122 = vrot.slane %v6121, 1
    %v6123 = vmax.f32 %v6121, %v6122
    %v6124 = vsel %vm575, %v5859, -inf
    %v6125 = vrot.slane %v6124, 4
    %v6126 = vmax.f32 %v6124, %v6125
    %v6127 = vrot.slane %v6126, 2
    %v6128 = vmax.f32 %v6126, %v6127
    %v6129 = vrot.slane %v6128, 1
    %v6130 = vmax.f32 %v6128, %v6129
    %v6131 = vsel %vm575, %v5798, -inf
    %v6132 = vrot.slane %v6131, 4
    %v6133 = vmax.f32 %v6131, %v6132
    %v6134 = vrot.slane %v6133, 2
    %v6135 = vmax.f32 %v6133, %v6134
    %v6136 = vrot.slane %v6135, 1
    %v6137 = vmax.f32 %v6135, %v6136
    %v6138 = vsel %vm575, %v5860, -inf
    %v6139 = vrot.slane %v6138, 4
    %v6140 = vmax.f32 %v6138, %v6139
    %v6141 = vrot.slane %v6140, 2
    %v6142 = vmax.f32 %v6140, %v6141
    %v6143 = vrot.slane %v6142, 1
    %v6144 = vmax.f32 %v6142, %v6143
    %v6145 = vsel %vm575, %v5861, -inf
    %v6146 = vrot.slane %v6145, 4
    %v6147 = vmax.f32 %v6145, %v6146
    %v6148 = vrot.slane %v6147, 2
    %v6149 = vmax.f32 %v6147, %v6148
    %v6150 = vrot.slane %v6149, 1
    %v6151 = vmax.f32 %v6149, %v6150
    %v6152 = vsel %vm575, %v5862, -inf
    %v6153 = vrot.slane %v6152, 4
    %v6154 = vmax.f32 %v6152, %v6153
    %v6155 = vrot.slane %v6154, 2
    %v6156 = vmax.f32 %v6154, %v6155
    %v6157 = vrot.slane %v6156, 1
    %v6158 = vmax.f32 %v6156, %v6157
    %v6159 = vsel %vm575, %v5799, -inf
    %v6160 = vrot.slane %v6159, 4
    %v6161 = vmax.f32 %v6159, %v6160
    %v6162 = vrot.slane %v6161, 2
    %v6163 = vmax.f32 %v6161, %v6162
    %v6164 = vrot.slane %v6163, 1
    %v6165 = vmax.f32 %v6163, %v6164
    %v6166 = vsel %vm575, %v5863, -inf
    %v6167 = vrot.slane %v6166, 4
    %v6168 = vmax.f32 %v6166, %v6167
    %v6169 = vrot.slane %v6168, 2
    %v6170 = vmax.f32 %v6168, %v6169
    %v6171 = vrot.slane %v6170, 1
    %v6172 = vmax.f32 %v6170, %v6171
    %v6173 = vsel %vm575, %v5864, -inf
    %v6174 = vrot.slane %v6173, 4
    %v6175 = vmax.f32 %v6173, %v6174
    %v6176 = vrot.slane %v6175, 2
    %v6177 = vmax.f32 %v6175, %v6176
    %v6178 = vrot.slane %v6177, 1
    %v6179 = vmax.f32 %v6177, %v6178
    %v6180 = vsel %vm575, %v5865, -inf
    %v6181 = vrot.slane %v6180, 4
    %v6182 = vmax.f32 %v6180, %v6181
    %v6183 = vrot.slane %v6182, 2
    %v6184 = vmax.f32 %v6182, %v6183
    %v6185 = vrot.slane %v6184, 1
    %v6186 = vmax.f32 %v6184, %v6185
    %v6187 = vsel %vm575, %v5800, -inf
    %v6188 = vrot.slane %v6187, 4
    %v6189 = vmax.f32 %v6187, %v6188
    %v6190 = vrot.slane %v6189, 2
    %v6191 = vmax.f32 %v6189, %v6190
    %v6192 = vrot.slane %v6191, 1
    %v6193 = vmax.f32 %v6191, %v6192
    %v6194 = vsel %vm575, %v5866, -inf
    %v6195 = vrot.slane %v6194, 4
    %v6196 = vmax.f32 %v6194, %v6195
    %v6197 = vrot.slane %v6196, 2
    %v6198 = vmax.f32 %v6196, %v6197
    %v6199 = vrot.slane %v6198, 1
    %v6200 = vmax.f32 %v6198, %v6199
    %v6201 = vsel %vm575, %v5867, -inf
    %v6202 = vrot.slane %v6201, 4
    %v6203 = vmax.f32 %v6201, %v6202
    %v6204 = vrot.slane %v6203, 2
    %v6205 = vmax.f32 %v6203, %v6204
    %v6206 = vrot.slane %v6205, 1
    %v6207 = vmax.f32 %v6205, %v6206
    %v6208 = vsel %vm575, %v5868, -inf
    %v6209 = vrot.slane %v6208, 4
    %v6210 = vmax.f32 %v6208, %v6209
    %v6211 = vrot.slane %v6210, 2
    %v6212 = vmax.f32 %v6210, %v6211
    %v6213 = vrot.slane %v6212, 1
    %v6214 = vmax.f32 %v6212, %v6213
    %v6215 = vsel %vm575, %v5801, -inf
    %v6216 = vrot.slane %v6215, 4
    %v6217 = vmax.f32 %v6215, %v6216
    %v6218 = vrot.slane %v6217, 2
    %v6219 = vmax.f32 %v6217, %v6218
    %v6220 = vrot.slane %v6219, 1
    %v6221 = vmax.f32 %v6219, %v6220
    %v6222 = vsel %vm575, %v5869, -inf
    %v6223 = vrot.slane %v6222, 4
    %v6224 = vmax.f32 %v6222, %v6223
    %v6225 = vrot.slane %v6224, 2
    %v6226 = vmax.f32 %v6224, %v6225
    %v6227 = vrot.slane %v6226, 1
    %v6228 = vmax.f32 %v6226, %v6227
    %v6229 = vsel %vm575, %v5870, -inf
    %v6230 = vrot.slane %v6229, 4
    %v6231 = vmax.f32 %v6229, %v6230
    %v6232 = vrot.slane %v6231, 2
    %v6233 = vmax.f32 %v6231, %v6232
    %v6234 = vrot.slane %v6233, 1
    %v6235 = vmax.f32 %v6233, %v6234
    %v6236 = vsel %vm575, %v5871, -inf
    %v6237 = vrot.slane %v6236, 4
    %v6238 = vmax.f32 %v6236, %v6237
    %v6239 = vrot.slane %v6238, 2
    %v6240 = vmax.f32 %v6238, %v6239
    %v6241 = vrot.slane %v6240, 1
    %v6242 = vmax.f32 %v6240, %v6241
    %v6243 = vsel %vm575, %v5802, -inf
    %v6244 = vrot.slane %v6243, 4
    %v6245 = vmax.f32 %v6243, %v6244
    %v6246 = vrot.slane %v6245, 2
    %v6247 = vmax.f32 %v6245, %v6246
    %v6248 = vrot.slane %v6247, 1
    %v6249 = vmax.f32 %v6247, %v6248
    %v6250 = vsel %vm575, %v5872, -inf
    %v6251 = vrot.slane %v6250, 4
    %v6252 = vmax.f32 %v6250, %v6251
    %v6253 = vrot.slane %v6252, 2
    %v6254 = vmax.f32 %v6252, %v6253
    %v6255 = vrot.slane %v6254, 1
    %v6256 = vmax.f32 %v6254, %v6255
    %v6257 = vsel %vm575, %v5873, -inf
    %v6258 = vrot.slane %v6257, 4
    %v6259 = vmax.f32 %v6257, %v6258
    %v6260 = vrot.slane %v6259, 2
    %v6261 = vmax.f32 %v6259, %v6260
    %v6262 = vrot.slane %v6261, 1
    %v6263 = vmax.f32 %v6261, %v6262
    %v6264 = vsel %vm575, %v5874, -inf
    %v6265 = vrot.slane %v6264, 4
    %v6266 = vmax.f32 %v6264, %v6265
    %v6267 = vrot.slane %v6266, 2
    %v6268 = vmax.f32 %v6266, %v6267
    %v6269 = vrot.slane %v6268, 1
    %v6270 = vmax.f32 %v6268, %v6269
    %v6271 = vsel %vm575, %v5803, -inf
    %v6272 = vrot.slane %v6271, 4
    %v6273 = vmax.f32 %v6271, %v6272
    %v6274 = vrot.slane %v6273, 2
    %v6275 = vmax.f32 %v6273, %v6274
    %v6276 = vrot.slane %v6275, 1
    %v6277 = vmax.f32 %v6275, %v6276
    %v6278 = vsel %vm575, %v5875, -inf
    %v6279 = vrot.slane %v6278, 4
    %v6280 = vmax.f32 %v6278, %v6279
    %v6281 = vrot.slane %v6280, 2
    %v6282 = vmax.f32 %v6280, %v6281
    %v6283 = vrot.slane %v6282, 1
    %v6284 = vmax.f32 %v6282, %v6283
    %v6285 = vsel %vm575, %v5876, -inf
    %v6286 = vrot.slane %v6285, 4
    %v6287 = vmax.f32 %v6285, %v6286
    %v6288 = vrot.slane %v6287, 2
    %v6289 = vmax.f32 %v6287, %v6288
    %v6290 = vrot.slane %v6289, 1
    %v6291 = vmax.f32 %v6289, %v6290
    %v6292 = vsel %vm575, %v5877, -inf
    %v6293 = vrot.slane %v6292, 4
    %v6294 = vmax.f32 %v6292, %v6293
    %v6295 = vrot.slane %v6294, 2
    %v6296 = vmax.f32 %v6294, %v6295
    %v6297 = vrot.slane %v6296, 1
    %v6298 = vmax.f32 %v6296, %v6297
    %v6299 = vsel %vm575, %v5804, -inf
    %v6300 = vrot.slane %v6299, 4
    %v6301 = vmax.f32 %v6299, %v6300
    %v6302 = vrot.slane %v6301, 2
    %v6303 = vmax.f32 %v6301, %v6302
    %v6304 = vrot.slane %v6303, 1
    %v6305 = vmax.f32 %v6303, %v6304
    %v6306 = vsel %vm575, %v5878, -inf
    %v6307 = vrot.slane %v6306, 4
    %v6308 = vmax.f32 %v6306, %v6307
    %v6309 = vrot.slane %v6308, 2
    %v6310 = vmax.f32 %v6308, %v6309
    %v6311 = vrot.slane %v6310, 1
    %v6312 = vmax.f32 %v6310, %v6311
    %v6313 = vsel %vm575, %v5879, -inf
    %v6314 = vrot.slane %v6313, 4
    %v6315 = vmax.f32 %v6313, %v6314
    %v6316 = vrot.slane %v6315, 2
    %v6317 = vmax.f32 %v6315, %v6316
    %v6318 = vrot.slane %v6317, 1
    %v6319 = vmax.f32 %v6317, %v6318
    %v6320 = vsel %vm575, %v5880, -inf
    %v6321 = vrot.slane %v6320, 4
    %v6322 = vmax.f32 %v6320, %v6321
    %v6323 = vrot.slane %v6322, 2
    %v6324 = vmax.f32 %v6322, %v6323
    %v6325 = vrot.slane %v6324, 1
    %v6326 = vmax.f32 %v6324, %v6325
    %v6327 = vsel %vm575, %v5805, -inf
    %v6328 = vrot.slane %v6327, 4
    %v6329 = vmax.f32 %v6327, %v6328
    %v6330 = vrot.slane %v6329, 2
    %v6331 = vmax.f32 %v6329, %v6330
    %v6332 = vrot.slane %v6331, 1
    %v6333 = vmax.f32 %v6331, %v6332
    %v6334 = vsel %vm575, %v5881, -inf
    %v6335 = vrot.slane %v6334, 4
    %v6336 = vmax.f32 %v6334, %v6335
    %v6337 = vrot.slane %v6336, 2
    %v6338 = vmax.f32 %v6336, %v6337
    %v6339 = vrot.slane %v6338, 1
    %v6340 = vmax.f32 %v6338, %v6339
    %v6341 = vsel %vm575, %v5882, -inf
    %v6342 = vrot.slane %v6341, 4
    %v6343 = vmax.f32 %v6341, %v6342
    %v6344 = vrot.slane %v6343, 2
    %v6345 = vmax.f32 %v6343, %v6344
    %v6346 = vrot.slane %v6345, 1
    %v6347 = vmax.f32 %v6345, %v6346
    %v6348 = vsel %vm575, %v5883, -inf
    %v6349 = vrot.slane %v6348, 4
    %v6350 = vmax.f32 %v6348, %v6349
    %v6351 = vrot.slane %v6350, 2
    %v6352 = vmax.f32 %v6350, %v6351
    %v6353 = vrot.slane %v6352, 1
    %v6354 = vmax.f32 %v6352, %v6353
    %v6355 = vsel %vm575, %v5806, -inf
    %v6356 = vrot.slane %v6355, 4
    %v6357 = vmax.f32 %v6355, %v6356
    %v6358 = vrot.slane %v6357, 2
    %v6359 = vmax.f32 %v6357, %v6358
    %v6360 = vrot.slane %v6359, 1
    %v6361 = vmax.f32 %v6359, %v6360
    %v6362 = vsel %vm575, %v5884, -inf
    %v6363 = vrot.slane %v6362, 4
    %v6364 = vmax.f32 %v6362, %v6363
    %v6365 = vrot.slane %v6364, 2
    %v6366 = vmax.f32 %v6364, %v6365
    %v6367 = vrot.slane %v6366, 1
    %v6368 = vmax.f32 %v6366, %v6367
    %v6369 = vsel %vm575, %v5885, -inf
    %v6370 = vrot.slane %v6369, 4
    %v6371 = vmax.f32 %v6369, %v6370
    %v6372 = vrot.slane %v6371, 2
    %v6373 = vmax.f32 %v6371, %v6372
    %v6374 = vrot.slane %v6373, 1
    %v6375 = vmax.f32 %v6373, %v6374
    %v6376 = vsel %vm575, %v5886, -inf
    %v6377 = vrot.slane %v6376, 4
    %v6378 = vmax.f32 %v6376, %v6377
    %v6379 = vrot.slane %v6378, 2
    %v6380 = vmax.f32 %v6378, %v6379
    %v6381 = vrot.slane %v6380, 1
    %v6382 = vmax.f32 %v6380, %v6381
    %v6383 = vmax.f32 %v5941, %v5969
    %v6384 = vmax.f32 %v5948, %v5976
    %v6385 = vmax.f32 %v5955, %v5983
    %v6386 = vmax.f32 %v5962, %v5990
    %v6387 = vmax.f32 %v5997, %v6025
    %v6388 = vmax.f32 %v6004, %v6032
    %v6389 = vmax.f32 %v6011, %v6039
    %v6390 = vmax.f32 %v6018, %v6046
    %v6391 = vmax.f32 %v6053, %v6081
    %v6392 = vmax.f32 %v6060, %v6088
    %v6393 = vmax.f32 %v6067, %v6095
    %v6394 = vmax.f32 %v6074, %v6102
    %v6395 = vmax.f32 %v6109, %v6137
    %v6396 = vmax.f32 %v6116, %v6144
    %v6397 = vmax.f32 %v6123, %v6151
    %v6398 = vmax.f32 %v6130, %v6158
    %v6399 = vmax.f32 %v6165, %v6193
    %v6400 = vmax.f32 %v6172, %v6200
    %v6401 = vmax.f32 %v6179, %v6207
    %v6402 = vmax.f32 %v6186, %v6214
    %v6403 = vmax.f32 %v6221, %v6249
    %v6404 = vmax.f32 %v6228, %v6256
    %v6405 = vmax.f32 %v6235, %v6263
    %v6406 = vmax.f32 %v6242, %v6270
    %v6407 = vmax.f32 %v6277, %v6305
    %v6408 = vmax.f32 %v6284, %v6312
    %v6409 = vmax.f32 %v6291, %v6319
    %v6410 = vmax.f32 %v6298, %v6326
    %v6411 = vmax.f32 %v6333, %v6361
    %v6412 = vmax.f32 %v6340, %v6368
    %v6413 = vmax.f32 %v6347, %v6375
    %v6414 = vmax.f32 %v6354, %v6382
    %6415 = vst [vmem:[#allocation3] sm:$0x3f] 0.0
    %6416 = vst [vmem:[#allocation3 + $0x30] sm:$0x3f] 0.0
    %s6417 = scalar_lea.vmem [#allocation3], 40
    %6418 = vst [vmem:[%s6417] sm:$0x3f] 0.0
    %6419 = vst [vmem:[%s6417 + $0x30] sm:$0x3f] 0.0
    %6420 = vst [vmem:[#allocation3] sm:$0x1] 0.0
    %6421 = vst [vmem:[#allocation3 + $0x8] sm:$0x1] 0.0
    %6422 = vst [vmem:[#allocation3 + $0x10] sm:$0x1] 0.0
    %6423 = vst [vmem:[#allocation3 + $0x18] sm:$0x1] 0.0
    %6424 = vst [vmem:[#allocation3 + $0x20] sm:$0x1] 0.0
    %6425 = vst [vmem:[#allocation3 + $0x28] sm:$0x1] 0.0
    %6426 = vst [vmem:[#allocation3 + $0x30] sm:$0x1] 0.0
    %6427 = vst [vmem:[#allocation3 + $0x38] sm:$0x1] 0.0
    %6428 = vst [vmem:[#allocation3 + $0x40] sm:$0x1] 0.0
    %6429 = vst [vmem:[#allocation3 + $0x48] sm:$0x1] 0.0
    %6430 = vst [vmem:[#allocation3 + $0x50] sm:$0x1] 0.0
    %6431 = vst [vmem:[#allocation3 + $0x58] sm:$0x1] 0.0
    %6432 = vst [vmem:[#allocation3 + $0x5] sm:$0x1] 0.0
    %6433 = vst [vmem:[#allocation3 + $0xd] sm:$0x1] 0.0
    %6434 = vst [vmem:[#allocation3 + $0x15] sm:$0x1] 0.0
    %6435 = vst [vmem:[#allocation3 + $0x1d] sm:$0x1] 0.0
    %6436 = vst [vmem:[#allocation3 + $0x25] sm:$0x1] 0.0
    %6437 = vst [vmem:[#allocation3 + $0x2d] sm:$0x1] 0.0
    %6438 = vst [vmem:[#allocation3 + $0x35] sm:$0x1] 0.0
    %6439 = vst [vmem:[#allocation3 + $0x3d] sm:$0x1] 0.0
    %6440 = vst [vmem:[#allocation3 + $0x45] sm:$0x1] 0.0
    %6441 = vst [vmem:[#allocation3 + $0x4d] sm:$0x1] 0.0
    %6442 = vst [vmem:[#allocation3 + $0x55] sm:$0x1] 0.0
    %6443 = vst [vmem:[#allocation3 + $0x5d] sm:$0x1] 0.0
    %v6476 = vsel %vm2673, %v6384, %v6383
    %v6477 = vsel %vm2675, %v6385, %v6476
    %v6478 = vsel %vm2677, %v6386, %v6477
    %v6479 = vsel %vm2673, %v6388, %v6387
    %v6480 = vsel %vm2675, %v6389, %v6479
    %v6481 = vsel %vm2677, %v6390, %v6480
    %v6482 = vsel %vm2673, %v6392, %v6391
    %v6483 = vsel %vm2675, %v6393, %v6482
    %v6484 = vsel %vm2677, %v6394, %v6483
    %v6485 = vsel %vm2673, %v6396, %v6395
    %v6486 = vsel %vm2675, %v6397, %v6485
    %v6487 = vsel %vm2677, %v6398, %v6486
    %v6488 = vsel %vm2673, %v6400, %v6399
    %v6489 = vsel %vm2675, %v6401, %v6488
    %v6490 = vsel %vm2677, %v6402, %v6489
    %v6491 = vsel %vm2673, %v6404, %v6403
    %v6492 = vsel %vm2675, %v6405, %v6491
    %v6493 = vsel %vm2677, %v6406, %v6492
    %v6494 = vsel %vm2673, %v6408, %v6407
    %v6495 = vsel %vm2675, %v6409, %v6494
    %v6496 = vsel %vm2677, %v6410, %v6495
    %v6497 = vsel %vm2673, %v6412, %v6411
    %v6498 = vsel %vm2675, %v6413, %v6497
    %v6499 = vsel %vm2677, %v6414, %v6498
    %s6508 = scalar_lea.vmem [#allocation3], 8
    %6509 = vst [vmem:[%s6508 + $0x1] sm:$0xf] %v6478
    %6510 = vst [vmem:[%s6508 + $0x9] sm:$0xf] %v6481
    %6511 = vst [vmem:[%s6508 + $0x11] sm:$0xf] %v6484
    %6512 = vst [vmem:[%s6508 + $0x19] sm:$0xf] %v6487
    %6513 = vst [vmem:[%s6508 + $0x31] sm:$0xf] %v6490
    %6514 = vst [vmem:[%s6508 + $0x39] sm:$0xf] %v6493
    %6515 = vst [vmem:[%s6508 + $0x41] sm:$0xf] %v6496
    %6516 = vst [vmem:[%s6508 + $0x49] sm:$0xf] %v6499
    %v6517 = vld [vmem:[#allocation3] sm:$0xf]
    %v6518 = vld [vmem:[#allocation3 + $0x8] sm:$0xf]
    %v6519 = vld [vmem:[#allocation3 + $0x10] sm:$0xf]
    %v6520 = vld [vmem:[#allocation3 + $0x18] sm:$0xf]
    %v6521 = vld [vmem:[#allocation3 + $0x30] sm:$0xf]
    %v6522 = vld [vmem:[#allocation3 + $0x38] sm:$0xf]
    %v6523 = vld [vmem:[#allocation3 + $0x40] sm:$0xf]
    %v6524 = vld [vmem:[#allocation3 + $0x48] sm:$0xf]
    %6533 = vst [vmem:[#allocation1] ss:$2 sm:$0xff] %v6517
    %s6534 = scalar_lea.vmem [#allocation1], 1
    %6535 = vst [vmem:[%s6534] ss:$2 sm:$0xff] %v6518
    %s6536 = scalar_lea.vmem [#allocation1], 16
    %6537 = vst [vmem:[%s6536] ss:$2 sm:$0xff] %v6519
    %s6538 = scalar_lea.vmem [#allocation1], 17
    %6539 = vst [vmem:[%s6538] ss:$2 sm:$0xff] %v6520
    %s6540 = scalar_lea.vmem [#allocation1], 32
    %6541 = vst [vmem:[%s6540] ss:$2 sm:$0xff] %v6521
    %s6542 = scalar_lea.vmem [#allocation1], 33
    %6543 = vst [vmem:[%s6542] ss:$2 sm:$0xff] %v6522
    %s6544 = scalar_lea.vmem [#allocation1], 48
    %6545 = vst [vmem:[%s6544] ss:$2 sm:$0xff] %v6523
    %s6546 = scalar_lea.vmem [#allocation1], 49
    %6547 = vst [vmem:[%s6546] ss:$2 sm:$0xff] %v6524
    %v6548 = vld.sshfl [vmem:[#allocation1] sm:$0xff pattern:$0x75316420]
    %v6549 = vld.sshfl [vmem:[#allocation1 + $0x10] sm:$0xff pattern:$0x75316420]
    %v6550 = vld.sshfl [vmem:[#allocation1 + $0x20] sm:$0xff pattern:$0x75316420]
    %v6551 = vld.sshfl [vmem:[#allocation1 + $0x30] sm:$0xff pattern:$0x75316420]
    %v6556 = vpack.c.bf16 %v6549, %v6548
    %v6557 = vpack.c.bf16 %v6551, %v6550
    %s6558 = scalar_lea.vmem [#allocation5], 1152
    %v6559 = vld [vmem:[%s6558] sm:$0xf]
    %v6560 = vld [vmem:[%s6558 + $0x4] sm:$0xf]
    %v6561 = vld [vmem:[%s6558 + $0x8] sm:$0xf]
    %v6562 = vld [vmem:[%s6558 + $0xc] sm:$0xf]
    %v6563 = vld [vmem:[%s6558 + $0x10] sm:$0xf]
    %v6564 = vld [vmem:[%s6558 + $0x14] sm:$0xf]
    %v6565 = vld [vmem:[%s6558 + $0x18] sm:$0xf]
    %v6566 = vld [vmem:[%s6558 + $0x1c] sm:$0xf]
    %v6567 = vld [vmem:[%s6558 + $0x20] sm:$0xf]
    %v6568 = vld [vmem:[%s6558 + $0x24] sm:$0xf]
    %v6569 = vld [vmem:[%s6558 + $0x28] sm:$0xf]
    %v6570 = vld [vmem:[%s6558 + $0x2c] sm:$0xf]
    %v6571 = vld [vmem:[%s6558 + $0x30] sm:$0xf]
    %v6572 = vld [vmem:[%s6558 + $0x34] sm:$0xf]
    %v6573 = vld [vmem:[%s6558 + $0x38] sm:$0xf]
    %v6574 = vld [vmem:[%s6558 + $0x3c] sm:$0xf]
    %v6575 = vld [vmem:[#allocation3 + $0x1] sm:$0xf]
    %v6576 = vld [vmem:[#allocation3 + $0x9] sm:$0xf]
    %v6577 = vld [vmem:[#allocation3 + $0x11] sm:$0xf]
    %v6578 = vld [vmem:[#allocation3 + $0x19] sm:$0xf]
    %v6579 = vld [vmem:[#allocation3 + $0x31] sm:$0xf]
    %v6580 = vld [vmem:[#allocation3 + $0x39] sm:$0xf]
    %v6581 = vld [vmem:[#allocation3 + $0x41] sm:$0xf]
    %v6582 = vld [vmem:[#allocation3 + $0x49] sm:$0xf]
    %6591 = vst [vmem:[#allocation1] ss:$2 sm:$0xff] %v6575
    %s6592 = scalar_lea.vmem [#allocation1], 1
    %6593 = vst [vmem:[%s6592] ss:$2 sm:$0xff] %v6576
    %s6594 = scalar_lea.vmem [#allocation1], 16
    %6595 = vst [vmem:[%s6594] ss:$2 sm:$0xff] %v6577
    %s6596 = scalar_lea.vmem [#allocation1], 17
    %6597 = vst [vmem:[%s6596] ss:$2 sm:$0xff] %v6578
    %s6598 = scalar_lea.vmem [#allocation1], 32
    %6599 = vst [vmem:[%s6598] ss:$2 sm:$0xff] %v6579
    %s6600 = scalar_lea.vmem [#allocation1], 33
    %6601 = vst [vmem:[%s6600] ss:$2 sm:$0xff] %v6580
    %s6602 = scalar_lea.vmem [#allocation1], 48
    %6603 = vst [vmem:[%s6602] ss:$2 sm:$0xff] %v6581
    %s6604 = scalar_lea.vmem [#allocation1], 49
    %6605 = vst [vmem:[%s6604] ss:$2 sm:$0xff] %v6582
    %v6606 = vld.sshfl [vmem:[#allocation1] sm:$0xff pattern:$0x75316420]
    %v6607 = vld.sshfl [vmem:[#allocation1 + $0x10] sm:$0xff pattern:$0x75316420]
    %v6608 = vld.sshfl [vmem:[#allocation1 + $0x20] sm:$0xff pattern:$0x75316420]
    %v6609 = vld.sshfl [vmem:[#allocation1 + $0x30] sm:$0xff pattern:$0x75316420]
    %v6614 = vpack.c.bf16 %v6607, %v6606
    %v6615 = vpack.c.bf16 %v6609, %v6608
    %s6616 = scalar_lea.vmem [#allocation5], 1216
    %v6617 = vld [vmem:[%s6616] sm:$0xf]
    %v6618 = vld [vmem:[%s6616 + $0x4] sm:$0xf]
    %v6619 = vld [vmem:[%s6616 + $0x8] sm:$0xf]
    %v6620 = vld [vmem:[%s6616 + $0xc] sm:$0xf]
    %v6621 = vld [vmem:[%s6616 + $0x10] sm:$0xf]
    %v6622 = vld [vmem:[%s6616 + $0x14] sm:$0xf]
    %v6623 = vld [vmem:[%s6616 + $0x18] sm:$0xf]
    %v6624 = vld [vmem:[%s6616 + $0x1c] sm:$0xf]
    %v6625 = vld [vmem:[%s6616 + $0x20] sm:$0xf]
    %v6626 = vld [vmem:[%s6616 + $0x24] sm:$0xf]
    %v6627 = vld [vmem:[%s6616 + $0x28] sm:$0xf]
    %v6628 = vld [vmem:[%s6616 + $0x2c] sm:$0xf]
    %v6629 = vld [vmem:[%s6616 + $0x30] sm:$0xf]
    %v6630 = vld [vmem:[%s6616 + $0x34] sm:$0xf]
    %v6631 = vld [vmem:[%s6616 + $0x38] sm:$0xf]
    %v6632 = vld [vmem:[%s6616 + $0x3c] sm:$0xf]
    %v6649 = vunpack.c.l.b16 %v6617
    %v6650 = vunpack.c.l.b16 %v6618
    %v6651 = vunpack.c.l.b16 %v6619
    %v6652 = vunpack.c.l.b16 %v6620
    %v6653 = vunpack.c.l.b16 %v6621
    %v6654 = vunpack.c.l.b16 %v6622
    %v6655 = vunpack.c.l.b16 %v6623
    %v6656 = vunpack.c.l.b16 %v6624
    %v6657 = vunpack.c.l.b16 %v6625
    %v6658 = vunpack.c.l.b16 %v6626
    %v6659 = vunpack.c.l.b16 %v6627
    %v6660 = vunpack.c.l.b16 %v6628
    %v6661 = vunpack.c.l.b16 %v6629
    %v6662 = vunpack.c.l.b16 %v6630
    %v6663 = vunpack.c.l.b16 %v6631
    %v6664 = vunpack.c.l.b16 %v6632
    %v6665 = vpack.c.b16 %v6650, %v6649
    %v6666 = vpack.c.b16 %v6652, %v6651
    %v6667 = vpack.c.b16 %v6654, %v6653
    %v6668 = vpack.c.b16 %v6656, %v6655
    %v6669 = vpack.c.b16 %v6658, %v6657
    %v6670 = vpack.c.b16 %v6660, %v6659
    %v6671 = vpack.c.b16 %v6662, %v6661
    %v6672 = vpack.c.b16 %v6664, %v6663
    %6681 = vmatpush.bf16.msra.mxu0 %v6672
    %6682 = vmatpush.bf16.msra.mxu0 %v6671
    %6683 = vmatpush.bf16.msra.mxu0 %v6670
    %6684 = vmatpush.bf16.msra.mxu0 %v6669
    %6685 = vmatpush.bf16.msra.mxu0 %v6668
    %6686 = vmatpush.bf16.msra.mxu0 %v6667
    %6687 = vmatpush.bf16.msra.mxu0 %v6666
    %6688 = vmatpush.bf16.msra.mxu0 %v6665
    %6689 = vmatmul.bf16.gmra.mxu0 %v6614
    %v6690 = vpop.f32.mrf.mxu0
    %v6691 = vadd.f32 0.0, %v6690
    %v6692 = vpop.f32.mrf.mxu0
    %v6693 = vadd.f32 0.0, %v6692
    %6694 = vmatmul.bf16.gmra.mxu0 %v6615
    %v6695 = vpop.f32.mrf.mxu0
    %v6696 = vadd.f32 0.0, %v6695
    %v6697 = vpop.f32.mrf.mxu0
    %v6698 = vadd.f32 0.0, %v6697
    %6699 = vdwg.mxu0
    %v6716 = vunpack.c.l.b16 %v6559
    %v6717 = vunpack.c.l.b16 %v6560
    %v6718 = vunpack.c.l.b16 %v6561
    %v6719 = vunpack.c.l.b16 %v6562
    %v6720 = vunpack.c.l.b16 %v6563
    %v6721 = vunpack.c.l.b16 %v6564
    %v6722 = vunpack.c.l.b16 %v6565
    %v6723 = vunpack.c.l.b16 %v6566
    %v6724 = vunpack.c.l.b16 %v6567
    %v6725 = vunpack.c.l.b16 %v6568
    %v6726 = vunpack.c.l.b16 %v6569
    %v6727 = vunpack.c.l.b16 %v6570
    %v6728 = vunpack.c.l.b16 %v6571
    %v6729 = vunpack.c.l.b16 %v6572
    %v6730 = vunpack.c.l.b16 %v6573
    %v6731 = vunpack.c.l.b16 %v6574
    %v6732 = vpack.c.b16 %v6717, %v6716
    %v6733 = vpack.c.b16 %v6719, %v6718
    %v6734 = vpack.c.b16 %v6721, %v6720
    %v6735 = vpack.c.b16 %v6723, %v6722
    %v6736 = vpack.c.b16 %v6725, %v6724
    %v6737 = vpack.c.b16 %v6727, %v6726
    %v6738 = vpack.c.b16 %v6729, %v6728
    %v6739 = vpack.c.b16 %v6731, %v6730
    %6748 = vmatpush.bf16.msra.mxu0 %v6739
    %6749 = vmatpush.bf16.msra.mxu0 %v6738
    %6750 = vmatpush.bf16.msra.mxu0 %v6737
    %6751 = vmatpush.bf16.msra.mxu0 %v6736
    %6752 = vmatpush.bf16.msra.mxu0 %v6735
    %6753 = vmatpush.bf16.msra.mxu0 %v6734
    %6754 = vmatpush.bf16.msra.mxu0 %v6733
    %6755 = vmatpush.bf16.msra.mxu0 %v6732
    %6756 = vmatmul.bf16.gmra.mxu0 %v6556
    %v6757 = vpop.f32.mrf.mxu0
    %v6758 = vadd.f32 %v6691, %v6757
    %v6759 = vpop.f32.mrf.mxu0
    %v6760 = vadd.f32 %v6693, %v6759
    %6761 = vmatmul.bf16.gmra.mxu0 %v6557
    %v6762 = vpop.f32.mrf.mxu0
    %v6763 = vadd.f32 %v6696, %v6762
    %v6764 = vpop.f32.mrf.mxu0
    %v6765 = vadd.f32 %v6698, %v6764
    %6766 = vdwg.mxu0
    %v6767 = vld [vmem:[#allocation3 + $0x2] sm:$0xf]
    %v6768 = vld [vmem:[#allocation3 + $0xa] sm:$0xf]
    %v6769 = vld [vmem:[#allocation3 + $0x12] sm:$0xf]
    %v6770 = vld [vmem:[#allocation3 + $0x1a] sm:$0xf]
    %v6771 = vld [vmem:[#allocation3 + $0x32] sm:$0xf]
    %v6772 = vld [vmem:[#allocation3 + $0x3a] sm:$0xf]
    %v6773 = vld [vmem:[#allocation3 + $0x42] sm:$0xf]
    %v6774 = vld [vmem:[#allocation3 + $0x4a] sm:$0xf]
    %6783 = vst [vmem:[#allocation1] ss:$2 sm:$0xff] %v6767
    %s6784 = scalar_lea.vmem [#allocation1], 1
    %6785 = vst [vmem:[%s6784] ss:$2 sm:$0xff] %v6768
    %s6786 = scalar_lea.vmem [#allocation1], 16
    %6787 = vst [vmem:[%s6786] ss:$2 sm:$0xff] %v6769
    %s6788 = scalar_lea.vmem [#allocation1], 17
    %6789 = vst [vmem:[%s6788] ss:$2 sm:$0xff] %v6770
    %s6790 = scalar_lea.vmem [#allocation1], 32
    %6791 = vst [vmem:[%s6790] ss:$2 sm:$0xff] %v6771
    %s6792 = scalar_lea.vmem [#allocation1], 33
    %6793 = vst [vmem:[%s6792] ss:$2 sm:$0xff] %v6772
    %s6794 = scalar_lea.vmem [#allocation1], 48
    %6795 = vst [vmem:[%s6794] ss:$2 sm:$0xff] %v6773
    %s6796 = scalar_lea.vmem [#allocation1], 49
    %6797 = vst [vmem:[%s6796] ss:$2 sm:$0xff] %v6774
    %v6798 = vld.sshfl [vmem:[#allocation1] sm:$0xff pattern:$0x75316420]
    %v6799 = vld.sshfl [vmem:[#allocation1 + $0x10] sm:$0xff pattern:$0x75316420]
    %v6800 = vld.sshfl [vmem:[#allocation1 + $0x20] sm:$0xff pattern:$0x75316420]
    %v6801 = vld.sshfl [vmem:[#allocation1 + $0x30] sm:$0xff pattern:$0x75316420]
    %v6806 = vpack.c.bf16 %v6799, %v6798
    %v6807 = vpack.c.bf16 %v6801, %v6800
    %s6808 = scalar_lea.vmem [#allocation5], 1280
    %v6809 = vld [vmem:[%s6808] sm:$0xf]
    %v6810 = vld [vmem:[%s6808 + $0x4] sm:$0xf]
    %v6811 = vld [vmem:[%s6808 + $0x8] sm:$0xf]
    %v6812 = vld [vmem:[%s6808 + $0xc] sm:$0xf]
    %v6813 = vld [vmem:[%s6808 + $0x10] sm:$0xf]
    %v6814 = vld [vmem:[%s6808 + $0x14] sm:$0xf]
    %v6815 = vld [vmem:[%s6808 + $0x18] sm:$0xf]
    %v6816 = vld [vmem:[%s6808 + $0x1c] sm:$0xf]
    %v6817 = vld [vmem:[%s6808 + $0x20] sm:$0xf]
    %v6818 = vld [vmem:[%s6808 + $0x24] sm:$0xf]
    %v6819 = vld [vmem:[%s6808 + $0x28] sm:$0xf]
    %v6820 = vld [vmem:[%s6808 + $0x2c] sm:$0xf]
    %v6821 = vld [vmem:[%s6808 + $0x30] sm:$0xf]
    %v6822 = vld [vmem:[%s6808 + $0x34] sm:$0xf]
    %v6823 = vld [vmem:[%s6808 + $0x38] sm:$0xf]
    %v6824 = vld [vmem:[%s6808 + $0x3c] sm:$0xf]
    %v6841 = vunpack.c.l.b16 %v6809
    %v6842 = vunpack.c.l.b16 %v6810
    %v6843 = vunpack.c.l.b16 %v6811
    %v6844 = vunpack.c.l.b16 %v6812
    %v6845 = vunpack.c.l.b16 %v6813
    %v6846 = vunpack.c.l.b16 %v6814
    %v6847 = vunpack.c.l.b16 %v6815
    %v6848 = vunpack.c.l.b16 %v6816
    %v6849 = vunpack.c.l.b16 %v6817
    %v6850 = vunpack.c.l.b16 %v6818
    %v6851 = vunpack.c.l.b16 %v6819
    %v6852 = vunpack.c.l.b16 %v6820
    %v6853 = vunpack.c.l.b16 %v6821
    %v6854 = vunpack.c.l.b16 %v6822
    %v6855 = vunpack.c.l.b16 %v6823
    %v6856 = vunpack.c.l.b16 %v6824
    %v6857 = vpack.c.b16 %v6842, %v6841
    %v6858 = vpack.c.b16 %v6844, %v6843
    %v6859 = vpack.c.b16 %v6846, %v6845
    %v6860 = vpack.c.b16 %v6848, %v6847
    %v6861 = vpack.c.b16 %v6850, %v6849
    %v6862 = vpack.c.b16 %v6852, %v6851
    %v6863 = vpack.c.b16 %v6854, %v6853
    %v6864 = vpack.c.b16 %v6856, %v6855
    %6873 = vmatpush.bf16.msra.mxu0 %v6864
    %6874 = vmatpush.bf16.msra.mxu0 %v6863
    %6875 = vmatpush.bf16.msra.mxu0 %v6862
    %6876 = vmatpush.bf16.msra.mxu0 %v6861
    %6877 = vmatpush.bf16.msra.mxu0 %v6860
    %6878 = vmatpush.bf16.msra.mxu0 %v6859
    %6879 = vmatpush.bf16.msra.mxu0 %v6858
    %6880 = vmatpush.bf16.msra.mxu0 %v6857
    %6881 = vmatmul.bf16.gmra.mxu0 %v6806
    %v6882 = vpop.f32.mrf.mxu0
    %v6883 = vadd.f32 0.0, %v6882
    %v6884 = vpop.f32.mrf.mxu0
    %v6885 = vadd.f32 0.0, %v6884
    %6886 = vmatmul.bf16.gmra.mxu0 %v6807
    %v6887 = vpop.f32.mrf.mxu0
    %v6888 = vadd.f32 0.0, %v6887
    %v6889 = vpop.f32.mrf.mxu0
    %v6890 = vadd.f32 0.0, %v6889
    %6891 = vdwg.mxu0
    %v6892 = vadd.f32 %v6758, %v6883
    %v6893 = vadd.f32 %v6760, %v6885
    %v6894 = vadd.f32 %v6763, %v6888
    %v6895 = vadd.f32 %v6765, %v6890
    %v6896 = vld [vmem:[%s6508] sm:$0xf]
    %v6897 = vld [vmem:[%s6508 + $0x8] sm:$0xf]
    %v6898 = vld [vmem:[%s6508 + $0x10] sm:$0xf]
    %v6899 = vld [vmem:[%s6508 + $0x18] sm:$0xf]
    %v6900 = vld [vmem:[%s6508 + $0x30] sm:$0xf]
    %v6901 = vld [vmem:[%s6508 + $0x38] sm:$0xf]
    %v6902 = vld [vmem:[%s6508 + $0x40] sm:$0xf]
    %v6903 = vld [vmem:[%s6508 + $0x48] sm:$0xf]
    %6912 = vst [vmem:[#allocation1] ss:$2 sm:$0xff] %v6896
    %s6913 = scalar_lea.vmem [#allocation1], 1
    %6914 = vst [vmem:[%s6913] ss:$2 sm:$0xff] %v6897
    %s6915 = scalar_lea.vmem [#allocation1], 16
    %6916 = vst [vmem:[%s6915] ss:$2 sm:$0xff] %v6898
    %s6917 = scalar_lea.vmem [#allocation1], 17
    %6918 = vst [vmem:[%s6917] ss:$2 sm:$0xff] %v6899
    %s6919 = scalar_lea.vmem [#allocation1], 32
    %6920 = vst [vmem:[%s6919] ss:$2 sm:$0xff] %v6900
    %s6921 = scalar_lea.vmem [#allocation1], 33
    %6922 = vst [vmem:[%s6921] ss:$2 sm:$0xff] %v6901
    %s6923 = scalar_lea.vmem [#allocation1], 48
    %6924 = vst [vmem:[%s6923] ss:$2 sm:$0xff] %v6902
    %s6925 = scalar_lea.vmem [#allocation1], 49
    %6926 = vst [vmem:[%s6925] ss:$2 sm:$0xff] %v6903
    %v6927 = vld.sshfl [vmem:[#allocation1] sm:$0xff pattern:$0x75316420]
    %v6928 = vld.sshfl [vmem:[#allocation1 + $0x10] sm:$0xff pattern:$0x75316420]
    %v6929 = vld.sshfl [vmem:[#allocation1 + $0x20] sm:$0xff pattern:$0x75316420]
    %v6930 = vld.sshfl [vmem:[#allocation1 + $0x30] sm:$0xff pattern:$0x75316420]
    %v6935 = vpack.c.bf16 %v6928, %v6927
    %v6936 = vpack.c.bf16 %v6930, %v6929
    %s6937 = scalar_lea.vmem [#allocation5], 1344
    %v6938 = vld [vmem:[%s6937] sm:$0xf]
    %v6939 = vld [vmem:[%s6937 + $0x4] sm:$0xf]
    %v6940 = vld [vmem:[%s6937 + $0x8] sm:$0xf]
    %v6941 = vld [vmem:[%s6937 + $0xc] sm:$0xf]
    %v6942 = vld [vmem:[%s6937 + $0x10] sm:$0xf]
    %v6943 = vld [vmem:[%s6937 + $0x14] sm:$0xf]
    %v6944 = vld [vmem:[%s6937 + $0x18] sm:$0xf]
    %v6945 = vld [vmem:[%s6937 + $0x1c] sm:$0xf]
    %v6946 = vld [vmem:[%s6937 + $0x20] sm:$0xf]
    %v6947 = vld [vmem:[%s6937 + $0x24] sm:$0xf]
    %v6948 = vld [vmem:[%s6937 + $0x28] sm:$0xf]
    %v6949 = vld [vmem:[%s6937 + $0x2c] sm:$0xf]
    %v6950 = vld [vmem:[%s6937 + $0x30] sm:$0xf]
    %v6951 = vld [vmem:[%s6937 + $0x34] sm:$0xf]
    %v6952 = vld [vmem:[%s6937 + $0x38] sm:$0xf]
    %v6953 = vld [vmem:[%s6937 + $0x3c] sm:$0xf]
    %v6970 = vunpack.c.l.b16 %v6938
    %v6971 = vunpack.c.l.b16 %v6939
    %v6972 = vunpack.c.l.b16 %v6940
    %v6973 = vunpack.c.l.b16 %v6941
    %v6974 = vunpack.c.l.b16 %v6942
    %v6975 = vunpack.c.l.b16 %v6943
    %v6976 = vunpack.c.l.b16 %v6944
    %v6977 = vunpack.c.l.b16 %v6945
    %v6978 = vunpack.c.l.b16 %v6946
    %v6979 = vunpack.c.l.b16 %v6947
    %v6980 = vunpack.c.l.b16 %v6948
    %v6981 = vunpack.c.l.b16 %v6949
    %v6982 = vunpack.c.l.b16 %v6950
    %v6983 = vunpack.c.l.b16 %v6951
    %v6984 = vunpack.c.l.b16 %v6952
    %v6985 = vunpack.c.l.b16 %v6953
    %v6986 = vpack.c.b16 %v6971, %v6970
    %v6987 = vpack.c.b16 %v6973, %v6972
    %v6988 = vpack.c.b16 %v6975, %v6974
    %v6989 = vpack.c.b16 %v6977, %v6976
    %v6990 = vpack.c.b16 %v6979, %v6978
    %v6991 = vpack.c.b16 %v6981, %v6980
    %v6992 = vpack.c.b16 %v6983, %v6982
    %v6993 = vpack.c.b16 %v6985, %v6984
    %7002 = vmatpush.bf16.msra.mxu0 %v6993
    %7003 = vmatpush.bf16.msra.mxu0 %v6992
    %7004 = vmatpush.bf16.msra.mxu0 %v6991
    %7005 = vmatpush.bf16.msra.mxu0 %v6990
    %7006 = vmatpush.bf16.msra.mxu0 %v6989
    %7007 = vmatpush.bf16.msra.mxu0 %v6988
    %7008 = vmatpush.bf16.msra.mxu0 %v6987
    %7009 = vmatpush.bf16.msra.mxu0 %v6986
    %7010 = vmatmul.bf16.gmra.mxu0 %v6935
    %v7011 = vpop.f32.mrf.mxu0
    %v7012 = vadd.f32 0.0, %v7011
    %v7013 = vpop.f32.mrf.mxu0
    %v7014 = vadd.f32 0.0, %v7013
    %7015 = vmatmul.bf16.gmra.mxu0 %v6936
    %v7016 = vpop.f32.mrf.mxu0
    %v7017 = vadd.f32 0.0, %v7016
    %v7018 = vpop.f32.mrf.mxu0
    %v7019 = vadd.f32 0.0, %v7018
    %7020 = vdwg.mxu0
    %v7021 = vadd.f32 %v6892, %v7012
    %v7022 = vadd.f32 %v6893, %v7014
    %v7023 = vadd.f32 %v6894, %v7017
    %v7024 = vadd.f32 %v6895, %v7019
    %v7025 = vld [vmem:[%s6508 + $0x1] sm:$0xf]
    %v7026 = vld [vmem:[%s6508 + $0x9] sm:$0xf]
    %v7027 = vld [vmem:[%s6508 + $0x11] sm:$0xf]
    %v7028 = vld [vmem:[%s6508 + $0x19] sm:$0xf]
    %v7029 = vld [vmem:[%s6508 + $0x31] sm:$0xf]
    %v7030 = vld [vmem:[%s6508 + $0x39] sm:$0xf]
    %v7031 = vld [vmem:[%s6508 + $0x41] sm:$0xf]
    %v7032 = vld [vmem:[%s6508 + $0x49] sm:$0xf]
    %7041 = vst [vmem:[#allocation1] ss:$2 sm:$0xff] %v7025
    %s7042 = scalar_lea.vmem [#allocation1], 1
    %7043 = vst [vmem:[%s7042] ss:$2 sm:$0xff] %v7026
    %s7044 = scalar_lea.vmem [#allocation1], 16
    %7045 = vst [vmem:[%s7044] ss:$2 sm:$0xff] %v7027
    %s7046 = scalar_lea.vmem [#allocation1], 17
    %7047 = vst [vmem:[%s7046] ss:$2 sm:$0xff] %v7028
    %s7048 = scalar_lea.vmem [#allocation1], 32
    %7049 = vst [vmem:[%s7048] ss:$2 sm:$0xff] %v7029
    %s7050 = scalar_lea.vmem [#allocation1], 33
    %7051 = vst [vmem:[%s7050] ss:$2 sm:$0xff] %v7030
    %s7052 = scalar_lea.vmem [#allocation1], 48
    %7053 = vst [vmem:[%s7052] ss:$2 sm:$0xff] %v7031
    %s7054 = scalar_lea.vmem [#allocation1], 49
    %7055 = vst [vmem:[%s7054] ss:$2 sm:$0xff] %v7032
    %v7056 = vld.sshfl [vmem:[#allocation1] sm:$0xff pattern:$0x75316420]
    %v7057 = vld.sshfl [vmem:[#allocation1 + $0x10] sm:$0xff pattern:$0x75316420]
    %v7058 = vld.sshfl [vmem:[#allocation1 + $0x20] sm:$0xff pattern:$0x75316420]
    %v7059 = vld.sshfl [vmem:[#allocation1 + $0x30] sm:$0xff pattern:$0x75316420]
    %v7064 = vpack.c.bf16 %v7057, %v7056
    %v7065 = vpack.c.bf16 %v7059, %v7058
    %s7066 = scalar_lea.vmem [#allocation5], 1408
    %v7067 = vld [vmem:[%s7066] sm:$0xf]
    %v7068 = vld [vmem:[%s7066 + $0x4] sm:$0xf]
    %v7069 = vld [vmem:[%s7066 + $0x8] sm:$0xf]
    %v7070 = vld [vmem:[%s7066 + $0xc] sm:$0xf]
    %v7071 = vld [vmem:[%s7066 + $0x10] sm:$0xf]
    %v7072 = vld [vmem:[%s7066 + $0x14] sm:$0xf]
    %v7073 = vld [vmem:[%s7066 + $0x18] sm:$0xf]
    %v7074 = vld [vmem:[%s7066 + $0x1c] sm:$0xf]
    %v7075 = vld [vmem:[%s7066 + $0x20] sm:$0xf]
    %v7076 = vld [vmem:[%s7066 + $0x24] sm:$0xf]
    %v7077 = vld [vmem:[%s7066 + $0x28] sm:$0xf]
    %v7078 = vld [vmem:[%s7066 + $0x2c] sm:$0xf]
    %v7079 = vld [vmem:[%s7066 + $0x30] sm:$0xf]
    %v7080 = vld [vmem:[%s7066 + $0x34] sm:$0xf]
    %v7081 = vld [vmem:[%s7066 + $0x38] sm:$0xf]
    %v7082 = vld [vmem:[%s7066 + $0x3c] sm:$0xf]
    %v7099 = vunpack.c.l.b16 %v7067
    %v7100 = vunpack.c.l.b16 %v7068
    %v7101 = vunpack.c.l.b16 %v7069
    %v7102 = vunpack.c.l.b16 %v7070
    %v7103 = vunpack.c.l.b16 %v7071
    %v7104 = vunpack.c.l.b16 %v7072
    %v7105 = vunpack.c.l.b16 %v7073
    %v7106 = vunpack.c.l.b16 %v7074
    %v7107 = vunpack.c.l.b16 %v7075
    %v7108 = vunpack.c.l.b16 %v7076
    %v7109 = vunpack.c.l.b16 %v7077
    %v7110 = vunpack.c.l.b16 %v7078
    %v7111 = vunpack.c.l.b16 %v7079
    %v7112 = vunpack.c.l.b16 %v7080
    %v7113 = vunpack.c.l.b16 %v7081
    %v7114 = vunpack.c.l.b16 %v7082
    %v7115 = vpack.c.b16 %v7100, %v7099
    %v7116 = vpack.c.b16 %v7102, %v7101
    %v7117 = vpack.c.b16 %v7104, %v7103
    %v7118 = vpack.c.b16 %v7106, %v7105
    %v7119 = vpack.c.b16 %v7108, %v7107
    %v7120 = vpack.c.b16 %v7110, %v7109
    %v7121 = vpack.c.b16 %v7112, %v7111
    %v7122 = vpack.c.b16 %v7114, %v7113
    %7131 = vmatpush.bf16.msra.mxu0 %v7122
    %7132 = vmatpush.bf16.msra.mxu0 %v7121
    %7133 = vmatpush.bf16.msra.mxu0 %v7120
    %7134 = vmatpush.bf16.msra.mxu0 %v7119
    %7135 = vmatpush.bf16.msra.mxu0 %v7118
    %7136 = vmatpush.bf16.msra.mxu0 %v7117
    %7137 = vmatpush.bf16.msra.mxu0 %v7116
    %7138 = vmatpush.bf16.msra.mxu0 %v7115
    %7139 = vmatmul.bf16.gmra.mxu0 %v7064
    %v7140 = vpop.f32.mrf.mxu0
    %v7141 = vadd.f32 0.0, %v7140
    %v7142 = vpop.f32.mrf.mxu0
    %v7143 = vadd.f32 0.0, %v7142
    %7144 = vmatmul.bf16.gmra.mxu0 %v7065
    %v7145 = vpop.f32.mrf.mxu0
    %v7146 = vadd.f32 0.0, %v7145
    %v7147 = vpop.f32.mrf.mxu0
    %v7148 = vadd.f32 0.0, %v7147
    %7149 = vdwg.mxu0
    %v7150 = vadd.f32 %v7021, %v7141
    %v7151 = vadd.f32 %v7022, %v7143
    %v7152 = vadd.f32 %v7023, %v7146
    %v7153 = vadd.f32 %v7024, %v7148
    %v7154 = vld [vmem:[%s6508 + $0x2] sm:$0xf]
    %v7155 = vld [vmem:[%s6508 + $0xa] sm:$0xf]
    %v7156 = vld [vmem:[%s6508 + $0x12] sm:$0xf]
    %v7157 = vld [vmem:[%s6508 + $0x1a] sm:$0xf]
    %v7158 = vld [vmem:[%s6508 + $0x32] sm:$0xf]
    %v7159 = vld [vmem:[%s6508 + $0x3a] sm:$0xf]
    %v7160 = vld [vmem:[%s6508 + $0x42] sm:$0xf]
    %v7161 = vld [vmem:[%s6508 + $0x4a] sm:$0xf]
    %7170 = vst [vmem:[#allocation1] ss:$2 sm:$0xff] %v7154
    %s7171 = scalar_lea.vmem [#allocation1], 1
    %7172 = vst [vmem:[%s7171] ss:$2 sm:$0xff] %v7155
    %s7173 = scalar_lea.vmem [#allocation1], 16
    %7174 = vst [vmem:[%s7173] ss:$2 sm:$0xff] %v7156
    %s7175 = scalar_lea.vmem [#allocation1], 17
    %7176 = vst [vmem:[%s7175] ss:$2 sm:$0xff] %v7157
    %s7177 = scalar_lea.vmem [#allocation1], 32
    %7178 = vst [vmem:[%s7177] ss:$2 sm:$0xff] %v7158
    %s7179 = scalar_lea.vmem [#allocation1], 33
    %7180 = vst [vmem:[%s7179] ss:$2 sm:$0xff] %v7159
    %s7181 = scalar_lea.vmem [#allocation1], 48
    %7182 = vst [vmem:[%s7181] ss:$2 sm:$0xff] %v7160
    %s7183 = scalar_lea.vmem [#allocation1], 49
    %7184 = vst [vmem:[%s7183] ss:$2 sm:$0xff] %v7161
    %v7185 = vld.sshfl [vmem:[#allocation1] sm:$0xff pattern:$0x75316420]
    %v7186 = vld.sshfl [vmem:[#allocation1 + $0x10] sm:$0xff pattern:$0x75316420]
    %v7187 = vld.sshfl [vmem:[#allocation1 + $0x20] sm:$0xff pattern:$0x75316420]
    %v7188 = vld.sshfl [vmem:[#allocation1 + $0x30] sm:$0xff pattern:$0x75316420]
    %v7193 = vpack.c.bf16 %v7186, %v7185
    %v7194 = vpack.c.bf16 %v7188, %v7187
    %s7195 = scalar_lea.vmem [#allocation5], 1472
    %v7196 = vld [vmem:[%s7195] sm:$0xf]
    %v7197 = vld [vmem:[%s7195 + $0x4] sm:$0xf]
    %v7198 = vld [vmem:[%s7195 + $0x8] sm:$0xf]
    %v7199 = vld [vmem:[%s7195 + $0xc] sm:$0xf]
    %v7200 = vld [vmem:[%s7195 + $0x10] sm:$0xf]
    %v7201 = vld [vmem:[%s7195 + $0x14] sm:$0xf]
    %v7202 = vld [vmem:[%s7195 + $0x18] sm:$0xf]
    %v7203 = vld [vmem:[%s7195 + $0x1c] sm:$0xf]
    %v7204 = vld [vmem:[%s7195 + $0x20] sm:$0xf]
    %v7205 = vld [vmem:[%s7195 + $0x24] sm:$0xf]
    %v7206 = vld [vmem:[%s7195 + $0x28] sm:$0xf]
    %v7207 = vld [vmem:[%s7195 + $0x2c] sm:$0xf]
    %v7208 = vld [vmem:[%s7195 + $0x30] sm:$0xf]
    %v7209 = vld [vmem:[%s7195 + $0x34] sm:$0xf]
    %v7210 = vld [vmem:[%s7195 + $0x38] sm:$0xf]
    %v7211 = vld [vmem:[%s7195 + $0x3c] sm:$0xf]
    %v7228 = vunpack.c.l.b16 %v7196
    %v7229 = vunpack.c.l.b16 %v7197
    %v7230 = vunpack.c.l.b16 %v7198
    %v7231 = vunpack.c.l.b16 %v7199
    %v7232 = vunpack.c.l.b16 %v7200
    %v7233 = vunpack.c.l.b16 %v7201
    %v7234 = vunpack.c.l.b16 %v7202
    %v7235 = vunpack.c.l.b16 %v7203
    %v7236 = vunpack.c.l.b16 %v7204
    %v7237 = vunpack.c.l.b16 %v7205
    %v7238 = vunpack.c.l.b16 %v7206
    %v7239 = vunpack.c.l.b16 %v7207
    %v7240 = vunpack.c.l.b16 %v7208
    %v7241 = vunpack.c.l.b16 %v7209
    %v7242 = vunpack.c.l.b16 %v7210
    %v7243 = vunpack.c.l.b16 %v7211
    %v7244 = vpack.c.b16 %v7229, %v7228
    %v7245 = vpack.c.b16 %v7231, %v7230
    %v7246 = vpack.c.b16 %v7233, %v7232
    %v7247 = vpack.c.b16 %v7235, %v7234
    %v7248 = vpack.c.b16 %v7237, %v7236
    %v7249 = vpack.c.b16 %v7239, %v7238
    %v7250 = vpack.c.b16 %v7241, %v7240
    %v7251 = vpack.c.b16 %v7243, %v7242
    %7260 = vmatpush.bf16.msra.mxu0 %v7251
    %7261 = vmatpush.bf16.msra.mxu0 %v7250
    %7262 = vmatpush.bf16.msra.mxu0 %v7249
    %7263 = vmatpush.bf16.msra.mxu0 %v7248
    %7264 = vmatpush.bf16.msra.mxu0 %v7247
    %7265 = vmatpush.bf16.msra.mxu0 %v7246
    %7266 = vmatpush.bf16.msra.mxu0 %v7245
    %7267 = vmatpush.bf16.msra.mxu0 %v7244
    %7268 = vmatmul.bf16.gmra.mxu0 %v7193
    %v7269 = vpop.f32.mrf.mxu0
    %v7270 = vadd.f32 0.0, %v7269
    %v7271 = vpop.f32.mrf.mxu0
    %v7272 = vadd.f32 0.0, %v7271
    %7273 = vmatmul.bf16.gmra.mxu0 %v7194
    %v7274 = vpop.f32.mrf.mxu0
    %v7275 = vadd.f32 0.0, %v7274
    %v7276 = vpop.f32.mrf.mxu0
    %v7277 = vadd.f32 0.0, %v7276
    %7278 = vdwg.mxu0
    %v7279 = vadd.f32 %v7150, %v7270
    %v7280 = vadd.f32 %v7151, %v7272
    %v7281 = vadd.f32 %v7152, %v7275
    %v7282 = vadd.f32 %v7153, %v7277
    %s7283 = scalar_lea.vmem [#allocation3], 16
    %v7284 = vld [vmem:[%s7283] sm:$0xf]
    %v7285 = vld [vmem:[%s7283 + $0x8] sm:$0xf]
    %v7286 = vld [vmem:[%s7283 + $0x10] sm:$0xf]
    %v7287 = vld [vmem:[%s7283 + $0x18] sm:$0xf]
    %v7288 = vld [vmem:[%s7283 + $0x30] sm:$0xf]
    %v7289 = vld [vmem:[%s7283 + $0x38] sm:$0xf]
    %v7290 = vld [vmem:[%s7283 + $0x40] sm:$0xf]
    %v7291 = vld [vmem:[%s7283 + $0x48] sm:$0xf]
    %7300 = vst [vmem:[#allocation1] ss:$2 sm:$0xff] %v7284
    %s7301 = scalar_lea.vmem [#allocation1], 1
    %7302 = vst [vmem:[%s7301] ss:$2 sm:$0xff] %v7285
    %s7303 = scalar_lea.vmem [#allocation1], 16
    %7304 = vst [vmem:[%s7303] ss:$2 sm:$0xff] %v7286
    %s7305 = scalar_lea.vmem [#allocation1], 17
    %7306 = vst [vmem:[%s7305] ss:$2 sm:$0xff] %v7287
    %s7307 = scalar_lea.vmem [#allocation1], 32
    %7308 = vst [vmem:[%s7307] ss:$2 sm:$0xff] %v7288
    %s7309 = scalar_lea.vmem [#allocation1], 33
    %7310 = vst [vmem:[%s7309] ss:$2 sm:$0xff] %v7289
    %s7311 = scalar_lea.vmem [#allocation1], 48
    %7312 = vst [vmem:[%s7311] ss:$2 sm:$0xff] %v7290
    %s7313 = scalar_lea.vmem [#allocation1], 49
    %7314 = vst [vmem:[%s7313] ss:$2 sm:$0xff] %v7291
    %v7315 = vld.sshfl [vmem:[#allocation1] sm:$0xff pattern:$0x75316420]
    %v7316 = vld.sshfl [vmem:[#allocation1 + $0x10] sm:$0xff pattern:$0x75316420]
    %v7317 = vld.sshfl [vmem:[#allocation1 + $0x20] sm:$0xff pattern:$0x75316420]
    %v7318 = vld.sshfl [vmem:[#allocation1 + $0x30] sm:$0xff pattern:$0x75316420]
    %v7323 = vpack.c.bf16 %v7316, %v7315
    %v7324 = vpack.c.bf16 %v7318, %v7317
    %s7325 = scalar_lea.vmem [#allocation5], 1536
    %v7326 = vld [vmem:[%s7325] sm:$0xf]
    %v7327 = vld [vmem:[%s7325 + $0x4] sm:$0xf]
    %v7328 = vld [vmem:[%s7325 + $0x8] sm:$0xf]
    %v7329 = vld [vmem:[%s7325 + $0xc] sm:$0xf]
    %v7330 = vld [vmem:[%s7325 + $0x10] sm:$0xf]
    %v7331 = vld [vmem:[%s7325 + $0x14] sm:$0xf]
    %v7332 = vld [vmem:[%s7325 + $0x18] sm:$0xf]
    %v7333 = vld [vmem:[%s7325 + $0x1c] sm:$0xf]
    %v7334 = vld [vmem:[%s7325 + $0x20] sm:$0xf]
    %v7335 = vld [vmem:[%s7325 + $0x24] sm:$0xf]
    %v7336 = vld [vmem:[%s7325 + $0x28] sm:$0xf]
    %v7337 = vld [vmem:[%s7325 + $0x2c] sm:$0xf]
    %v7338 = vld [vmem:[%s7325 + $0x30] sm:$0xf]
    %v7339 = vld [vmem:[%s7325 + $0x34] sm:$0xf]
    %v7340 = vld [vmem:[%s7325 + $0x38] sm:$0xf]
    %v7341 = vld [vmem:[%s7325 + $0x3c] sm:$0xf]
    %v7358 = vunpack.c.l.b16 %v7326
    %v7359 = vunpack.c.l.b16 %v7327
    %v7360 = vunpack.c.l.b16 %v7328
    %v7361 = vunpack.c.l.b16 %v7329
    %v7362 = vunpack.c.l.b16 %v7330
    %v7363 = vunpack.c.l.b16 %v7331
    %v7364 = vunpack.c.l.b16 %v7332
    %v7365 = vunpack.c.l.b16 %v7333
    %v7366 = vunpack.c.l.b16 %v7334
    %v7367 = vunpack.c.l.b16 %v7335
    %v7368 = vunpack.c.l.b16 %v7336
    %v7369 = vunpack.c.l.b16 %v7337
    %v7370 = vunpack.c.l.b16 %v7338
    %v7371 = vunpack.c.l.b16 %v7339
    %v7372 = vunpack.c.l.b16 %v7340
    %v7373 = vunpack.c.l.b16 %v7341
    %v7374 = vpack.c.b16 %v7359, %v7358
    %v7375 = vpack.c.b16 %v7361, %v7360
    %v7376 = vpack.c.b16 %v7363, %v7362
    %v7377 = vpack.c.b16 %v7365, %v7364
    %v7378 = vpack.c.b16 %v7367, %v7366
    %v7379 = vpack.c.b16 %v7369, %v7368
    %v7380 = vpack.c.b16 %v7371, %v7370
    %v7381 = vpack.c.b16 %v7373, %v7372
    %7390 = vmatpush.bf16.msra.mxu0 %v7381
    %7391 = vmatpush.bf16.msra.mxu0 %v7380
    %7392 = vmatpush.bf16.msra.mxu0 %v7379
    %7393 = vmatpush.bf16.msra.mxu0 %v7378
    %7394 = vmatpush.bf16.msra.mxu0 %v7377
    %7395 = vmatpush.bf16.msra.mxu0 %v7376
    %7396 = vmatpush.bf16.msra.mxu0 %v7375
    %7397 = vmatpush.bf16.msra.mxu0 %v7374
    %7398 = vmatmul.bf16.gmra.mxu0 %v7323
    %v7399 = vpop.f32.mrf.mxu0
    %v7400 = vadd.f32 0.0, %v7399
    %v7401 = vpop.f32.mrf.mxu0
    %v7402 = vadd.f32 0.0, %v7401
    %7403 = vmatmul.bf16.gmra.mxu0 %v7324
    %v7404 = vpop.f32.mrf.mxu0
    %v7405 = vadd.f32 0.0, %v7404
    %v7406 = vpop.f32.mrf.mxu0
    %v7407 = vadd.f32 0.0, %v7406
    %7408 = vdwg.mxu0
    %v7409 = vadd.f32 %v7279, %v7400
    %v7410 = vadd.f32 %v7280, %v7402
    %v7411 = vadd.f32 %v7281, %v7405
    %v7412 = vadd.f32 %v7282, %v7407
    %v7413 = vld [vmem:[%s7283 + $0x1] sm:$0xf]
    %v7414 = vld [vmem:[%s7283 + $0x9] sm:$0xf]
    %v7415 = vld [vmem:[%s7283 + $0x11] sm:$0xf]
    %v7416 = vld [vmem:[%s7283 + $0x19] sm:$0xf]
    %v7417 = vld [vmem:[%s7283 + $0x31] sm:$0xf]
    %v7418 = vld [vmem:[%s7283 + $0x39] sm:$0xf]
    %v7419 = vld [vmem:[%s7283 + $0x41] sm:$0xf]
    %v7420 = vld [vmem:[%s7283 + $0x49] sm:$0xf]
    %7429 = vst [vmem:[#allocation1] ss:$2 sm:$0xff] %v7413
    %s7430 = scalar_lea.vmem [#allocation1], 1
    %7431 = vst [vmem:[%s7430] ss:$2 sm:$0xff] %v7414
    %s7432 = scalar_lea.vmem [#allocation1], 16
    %7433 = vst [vmem:[%s7432] ss:$2 sm:$0xff] %v7415
    %s7434 = scalar_lea.vmem [#allocation1], 17
    %7435 = vst [vmem:[%s7434] ss:$2 sm:$0xff] %v7416
    %s7436 = scalar_lea.vmem [#allocation1], 32
    %7437 = vst [vmem:[%s7436] ss:$2 sm:$0xff] %v7417
    %s7438 = scalar_lea.vmem [#allocation1], 33
    %7439 = vst [vmem:[%s7438] ss:$2 sm:$0xff] %v7418
    %s7440 = scalar_lea.vmem [#allocation1], 48
    %7441 = vst [vmem:[%s7440] ss:$2 sm:$0xff] %v7419
    %s7442 = scalar_lea.vmem [#allocation1], 49
    %7443 = vst [vmem:[%s7442] ss:$2 sm:$0xff] %v7420
    %v7444 = vld.sshfl [vmem:[#allocation1] sm:$0xff pattern:$0x75316420]
    %v7445 = vld.sshfl [vmem:[#allocation1 + $0x10] sm:$0xff pattern:$0x75316420]
    %v7446 = vld.sshfl [vmem:[#allocation1 + $0x20] sm:$0xff pattern:$0x75316420]
    %v7447 = vld.sshfl [vmem:[#allocation1 + $0x30] sm:$0xff pattern:$0x75316420]
    %v7452 = vpack.c.bf16 %v7445, %v7444
    %v7453 = vpack.c.bf16 %v7447, %v7446
    %s7454 = scalar_lea.vmem [#allocation5], 1600
    %v7455 = vld [vmem:[%s7454] sm:$0xf]
    %v7456 = vld [vmem:[%s7454 + $0x4] sm:$0xf]
    %v7457 = vld [vmem:[%s7454 + $0x8] sm:$0xf]
    %v7458 = vld [vmem:[%s7454 + $0xc] sm:$0xf]
    %v7459 = vld [vmem:[%s7454 + $0x10] sm:$0xf]
    %v7460 = vld [vmem:[%s7454 + $0x14] sm:$0xf]
    %v7461 = vld [vmem:[%s7454 + $0x18] sm:$0xf]
    %v7462 = vld [vmem:[%s7454 + $0x1c] sm:$0xf]
    %v7463 = vld [vmem:[%s7454 + $0x20] sm:$0xf]
    %v7464 = vld [vmem:[%s7454 + $0x24] sm:$0xf]
    %v7465 = vld [vmem:[%s7454 + $0x28] sm:$0xf]
    %v7466 = vld [vmem:[%s7454 + $0x2c] sm:$0xf]
    %v7467 = vld [vmem:[%s7454 + $0x30] sm:$0xf]
    %v7468 = vld [vmem:[%s7454 + $0x34] sm:$0xf]
    %v7469 = vld [vmem:[%s7454 + $0x38] sm:$0xf]
    %v7470 = vld [vmem:[%s7454 + $0x3c] sm:$0xf]
    %v7487 = vunpack.c.l.b16 %v7455
    %v7488 = vunpack.c.l.b16 %v7456
    %v7489 = vunpack.c.l.b16 %v7457
    %v7490 = vunpack.c.l.b16 %v7458
    %v7491 = vunpack.c.l.b16 %v7459
    %v7492 = vunpack.c.l.b16 %v7460
    %v7493 = vunpack.c.l.b16 %v7461
    %v7494 = vunpack.c.l.b16 %v7462
    %v7495 = vunpack.c.l.b16 %v7463
    %v7496 = vunpack.c.l.b16 %v7464
    %v7497 = vunpack.c.l.b16 %v7465
    %v7498 = vunpack.c.l.b16 %v7466
    %v7499 = vunpack.c.l.b16 %v7467
    %v7500 = vunpack.c.l.b16 %v7468
    %v7501 = vunpack.c.l.b16 %v7469
    %v7502 = vunpack.c.l.b16 %v7470
    %v7503 = vpack.c.b16 %v7488, %v7487
    %v7504 = vpack.c.b16 %v7490, %v7489
    %v7505 = vpack.c.b16 %v7492, %v7491
    %v7506 = vpack.c.b16 %v7494, %v7493
    %v7507 = vpack.c.b16 %v7496, %v7495
    %v7508 = vpack.c.b16 %v7498, %v7497
    %v7509 = vpack.c.b16 %v7500, %v7499
    %v7510 = vpack.c.b16 %v7502, %v7501
    %7519 = vmatpush.bf16.msra.mxu0 %v7510
    %7520 = vmatpush.bf16.msra.mxu0 %v7509
    %7521 = vmatpush.bf16.msra.mxu0 %v7508
    %7522 = vmatpush.bf16.msra.mxu0 %v7507
    %7523 = vmatpush.bf16.msra.mxu0 %v7506
    %7524 = vmatpush.bf16.msra.mxu0 %v7505
    %7525 = vmatpush.bf16.msra.mxu0 %v7504
    %7526 = vmatpush.bf16.msra.mxu0 %v7503
    %7527 = vmatmul.bf16.gmra.mxu0 %v7452
    %v7528 = vpop.f32.mrf.mxu0
    %v7529 = vadd.f32 0.0, %v7528
    %v7530 = vpop.f32.mrf.mxu0
    %v7531 = vadd.f32 0.0, %v7530
    %7532 = vmatmul.bf16.gmra.mxu0 %v7453
    %v7533 = vpop.f32.mrf.mxu0
    %v7534 = vadd.f32 0.0, %v7533
    %v7535 = vpop.f32.mrf.mxu0
    %v7536 = vadd.f32 0.0, %v7535
    %7537 = vdwg.mxu0
    %v7538 = vadd.f32 %v7409, %v7529
    %v7539 = vadd.f32 %v7410, %v7531
    %v7540 = vadd.f32 %v7411, %v7534
    %v7541 = vadd.f32 %v7412, %v7536
    %v7542 = vld [vmem:[%s7283 + $0x2] sm:$0xf]
    %v7543 = vld [vmem:[%s7283 + $0xa] sm:$0xf]
    %v7544 = vld [vmem:[%s7283 + $0x12] sm:$0xf]
    %v7545 = vld [vmem:[%s7283 + $0x1a] sm:$0xf]
    %v7546 = vld [vmem:[%s7283 + $0x32] sm:$0xf]
    %v7547 = vld [vmem:[%s7283 + $0x3a] sm:$0xf]
    %v7548 = vld [vmem:[%s7283 + $0x42] sm:$0xf]
    %v7549 = vld [vmem:[%s7283 + $0x4a] sm:$0xf]
    %7558 = vst [vmem:[#allocation1] ss:$2 sm:$0xff] %v7542
    %s7559 = scalar_lea.vmem [#allocation1], 1
    %7560 = vst [vmem:[%s7559] ss:$2 sm:$0xff] %v7543
    %s7561 = scalar_lea.vmem [#allocation1], 16
    %7562 = vst [vmem:[%s7561] ss:$2 sm:$0xff] %v7544
    %s7563 = scalar_lea.vmem [#allocation1], 17
    %7564 = vst [vmem:[%s7563] ss:$2 sm:$0xff] %v7545
    %s7565 = scalar_lea.vmem [#allocation1], 32
    %7566 = vst [vmem:[%s7565] ss:$2 sm:$0xff] %v7546
    %s7567 = scalar_lea.vmem [#allocation1], 33
    %7568 = vst [vmem:[%s7567] ss:$2 sm:$0xff] %v7547
    %s7569 = scalar_lea.vmem [#allocation1], 48
    %7570 = vst [vmem:[%s7569] ss:$2 sm:$0xff] %v7548
    %s7571 = scalar_lea.vmem [#allocation1], 49
    %7572 = vst [vmem:[%s7571] ss:$2 sm:$0xff] %v7549
    %v7573 = vld.sshfl [vmem:[#allocation1] sm:$0xff pattern:$0x75316420]
    %v7574 = vld.sshfl [vmem:[#allocation1 + $0x10] sm:$0xff pattern:$0x75316420]
    %v7575 = vld.sshfl [vmem:[#allocation1 + $0x20] sm:$0xff pattern:$0x75316420]
    %v7576 = vld.sshfl [vmem:[#allocation1 + $0x30] sm:$0xff pattern:$0x75316420]
    %v7581 = vpack.c.bf16 %v7574, %v7573
    %v7582 = vpack.c.bf16 %v7576, %v7575
    %s7583 = scalar_lea.vmem [#allocation5], 1664
    %v7584 = vld [vmem:[%s7583] sm:$0xf]
    %v7585 = vld [vmem:[%s7583 + $0x4] sm:$0xf]
    %v7586 = vld [vmem:[%s7583 + $0x8] sm:$0xf]
    %v7587 = vld [vmem:[%s7583 + $0xc] sm:$0xf]
    %v7588 = vld [vmem:[%s7583 + $0x10] sm:$0xf]
    %v7589 = vld [vmem:[%s7583 + $0x14] sm:$0xf]
    %v7590 = vld [vmem:[%s7583 + $0x18] sm:$0xf]
    %v7591 = vld [vmem:[%s7583 + $0x1c] sm:$0xf]
    %v7592 = vld [vmem:[%s7583 + $0x20] sm:$0xf]
    %v7593 = vld [vmem:[%s7583 + $0x24] sm:$0xf]
    %v7594 = vld [vmem:[%s7583 + $0x28] sm:$0xf]
    %v7595 = vld [vmem:[%s7583 + $0x2c] sm:$0xf]
    %v7596 = vld [vmem:[%s7583 + $0x30] sm:$0xf]
    %v7597 = vld [vmem:[%s7583 + $0x34] sm:$0xf]
    %v7598 = vld [vmem:[%s7583 + $0x38] sm:$0xf]
    %v7599 = vld [vmem:[%s7583 + $0x3c] sm:$0xf]
    %v7616 = vunpack.c.l.b16 %v7584
    %v7617 = vunpack.c.l.b16 %v7585
    %v7618 = vunpack.c.l.b16 %v7586
    %v7619 = vunpack.c.l.b16 %v7587
    %v7620 = vunpack.c.l.b16 %v7588
    %v7621 = vunpack.c.l.b16 %v7589
    %v7622 = vunpack.c.l.b16 %v7590
    %v7623 = vunpack.c.l.b16 %v7591
    %v7624 = vunpack.c.l.b16 %v7592
    %v7625 = vunpack.c.l.b16 %v7593
    %v7626 = vunpack.c.l.b16 %v7594
    %v7627 = vunpack.c.l.b16 %v7595
    %v7628 = vunpack.c.l.b16 %v7596
    %v7629 = vunpack.c.l.b16 %v7597
    %v7630 = vunpack.c.l.b16 %v7598
    %v7631 = vunpack.c.l.b16 %v7599
    %v7632 = vpack.c.b16 %v7617, %v7616
    %v7633 = vpack.c.b16 %v7619, %v7618
    %v7634 = vpack.c.b16 %v7621, %v7620
    %v7635 = vpack.c.b16 %v7623, %v7622
    %v7636 = vpack.c.b16 %v7625, %v7624
    %v7637 = vpack.c.b16 %v7627, %v7626
    %v7638 = vpack.c.b16 %v7629, %v7628
    %v7639 = vpack.c.b16 %v7631, %v7630
    %7648 = vmatpush.bf16.msra.mxu0 %v7639
    %7649 = vmatpush.bf16.msra.mxu0 %v7638
    %7650 = vmatpush.bf16.msra.mxu0 %v7637
    %7651 = vmatpush.bf16.msra.mxu0 %v7636
    %7652 = vmatpush.bf16.msra.mxu0 %v7635
    %7653 = vmatpush.bf16.msra.mxu0 %v7634
    %7654 = vmatpush.bf16.msra.mxu0 %v7633
    %7655 = vmatpush.bf16.msra.mxu0 %v7632
    %7656 = vmatmul.bf16.gmra.mxu0 %v7581
    %v7657 = vpop.f32.mrf.mxu0
    %v7658 = vadd.f32 0.0, %v7657
    %v7659 = vpop.f32.mrf.mxu0
    %v7660 = vadd.f32 0.0, %v7659
    %7661 = vmatmul.bf16.gmra.mxu0 %v7582
    %v7662 = vpop.f32.mrf.mxu0
    %v7663 = vadd.f32 0.0, %v7662
    %v7664 = vpop.f32.mrf.mxu0
    %v7665 = vadd.f32 0.0, %v7664
    %7666 = vdwg.mxu0
    %v7667 = vadd.f32 %v7538, %v7658
    %v7668 = vadd.f32 %v7539, %v7660
    %v7669 = vadd.f32 %v7540, %v7663
    %v7670 = vadd.f32 %v7541, %v7665
    %v7671 = vadd.f32 %v7667, %v7668
    %v7672 = vadd.f32 %v7671, %v7669
    %v7673 = vadd.f32 %v7672, %v7670
    %v7674 = vrot.slane %v7673, 4
    %v7675 = vadd.f32 %v7673, %v7674
    %v7676 = vrot.slane %v7675, 2
    %v7677 = vadd.f32 %v7675, %v7676
    %v7678 = vrot.slane %v7677, 1
    %v7679 = vadd.f32 %v7677, %v7678
    %v7680 = vmul.f32 %v7667, %v7667
    %v7681 = vmul.f32 %v7668, %v7668
    %v7682 = vmul.f32 %v7669, %v7669
    %v7683 = vmul.f32 %v7670, %v7670
    %v7684 = vadd.f32 %v7680, %v7681
    %v7685 = vadd.f32 %v7684, %v7682
    %v7686 = vadd.f32 %v7685, %v7683
    %v7687 = vrot.slane %v7686, 4
    %v7688 = vadd.f32 %v7686, %v7687
    %v7689 = vrot.slane %v7688, 2
    %v7690 = vadd.f32 %v7688, %v7689
    %v7691 = vrot.slane %v7690, 1
    %v7692 = vadd.f32 %v7690, %v7691
    %v7693 = vmul.f32 %v7679, 0.03125
    %v7694 = vmul.f32 %v7692, 0.03125
    %v7695 = vmul.f32 %v7693, %v7693
    %v7696 = vsub.f32 %v7694, %v7695
    %v7697 = vmax.f32 %v7696, 0.0
    %v7698 = vld [vmem:[#allocation7 + $0x2] sm:$0x1]
    %v7699 = vadd.f32 %v7697, 1e-05
    %v7700 = vrsqrt.pop %v7699
    %v7701 = vmul.f32 %v7700, %v7699
    %v7702 = vmul.f32 %v7701, %v7700
    %v7703 = vmul.f32 0.5, %v7702
    %v7704 = vsub.f32 1.5, %v7703
    %v7705 = vmul.f32 %v7700, %v7704
    %vm7706 = vweird.f32 %v7699
    %vm7707 = vweird.f32 %v7700
    %vm7708 = vmor %vm7706, %vm7707
    %v7709 = vsel %vm7708, %v7700, %v7705
    %v7710 = vmul.f32 %v7698, %v7709
    %v7711 = vld [vmem:[#allocation9 + $0x2] sm:$0x1]
    %v7712 = vmul.f32 %v7693, %v7710
    %v7713 = vsub.f32 %v7711, %v7712
    %v7714 = vperm.slane %v7710, 0
    %v7715 = vmul.f32 %v7667, %v7714
    %v7716 = vmul.f32 %v7668, %v7714
    %v7717 = vmul.f32 %v7669, %v7714
    %v7718 = vmul.f32 %v7670, %v7714
    %v7719 = vperm.slane %v7713, 0
    %v7720 = vadd.f32 %v7715, %v7719
    %v7721 = vadd.f32 %v7716, %v7719
    %v7722 = vadd.f32 %v7717, %v7719
    %v7723 = vadd.f32 %v7718, %v7719
    %v7724 = vmax.f32 %v7720, 0.0
    %v7725 = vmax.f32 %v7721, 0.0
    %v7726 = vmax.f32 %v7722, 0.0
    %v7727 = vmax.f32 %v7723, 0.0
    %v7732 = vrot.slane %v7724, 4
    %v7733 = vrot.slane %v7725, 4
    %v7734 = vrot.slane %v7726, 4
    %v7735 = vrot.slane %v7727, 4
    %7740 = vst [vmem:[%s6508 + $0x1] sm:$0xf] %v7724
    %7741 = vst [vmem:[%s6508 + $0x9] sm:$0xf] %v7732
    %7742 = vst [vmem:[%s6508 + $0x11] sm:$0xf] %v7725
    %7743 = vst [vmem:[%s6508 + $0x19] sm:$0xf] %v7733
    %7744 = vst [vmem:[%s6508 + $0x31] sm:$0xf] %v7726
    %7745 = vst [vmem:[%s6508 + $0x39] sm:$0xf] %v7734
    %7746 = vst [vmem:[%s6508 + $0x41] sm:$0xf] %v7727
    %7747 = vst [vmem:[%s6508 + $0x49] sm:$0xf] %v7735
    %v7748 = vld [vmem:[#allocation3] sm:$0xf]
    %v7749 = vld [vmem:[#allocation3 + $0x8] sm:$0xf]
    %v7750 = vld [vmem:[#allocation3 + $0x10] sm:$0xf]
    %v7751 = vld [vmem:[#allocation3 + $0x18] sm:$0xf]
    %v7752 = vld [vmem:[#allocation3 + $0x30] sm:$0xf]
    %v7753 = vld [vmem:[#allocation3 + $0x38] sm:$0xf]
    %v7754 = vld [vmem:[#allocation3 + $0x40] sm:$0xf]
    %v7755 = vld [vmem:[#allocation3 + $0x48] sm:$0xf]
    %7764 = vst [vmem:[#allocation1] ss:$2 sm:$0xff] %v7748
    %s7765 = scalar_lea.vmem [#allocation1], 1
    %7766 = vst [vmem:[%s7765] ss:$2 sm:$0xff] %v7749
    %s7767 = scalar_lea.vmem [#allocation1], 16
    %7768 = vst [vmem:[%s7767] ss:$2 sm:$0xff] %v7750
    %s7769 = scalar_lea.vmem [#allocation1], 17
    %7770 = vst [vmem:[%s7769] ss:$2 sm:$0xff] %v7751
    %s7771 = scalar_lea.vmem [#allocation1], 32
    %7772 = vst [vmem:[%s7771] ss:$2 sm:$0xff] %v7752
    %s7773 = scalar_lea.vmem [#allocation1], 33
    %7774 = vst [vmem:[%s7773] ss:$2 sm:$0xff] %v7753
    %s7775 = scalar_lea.vmem [#allocation1], 48
    %7776 = vst [vmem:[%s7775] ss:$2 sm:$0xff] %v7754
    %s7777 = scalar_lea.vmem [#allocation1], 49
    %7778 = vst [vmem:[%s7777] ss:$2 sm:$0xff] %v7755
    %v7779 = vld.sshfl [vmem:[#allocation1] sm:$0xff pattern:$0x75316420]
    %v7780 = vld.sshfl [vmem:[#allocation1 + $0x10] sm:$0xff pattern:$0x75316420]
    %v7781 = vld.sshfl [vmem:[#allocation1 + $0x20] sm:$0xff pattern:$0x75316420]
    %v7782 = vld.sshfl [vmem:[#allocation1 + $0x30] sm:$0xff pattern:$0x75316420]
    %v7787 = vpack.c.bf16 %v7780, %v7779
    %v7788 = vpack.c.bf16 %v7782, %v7781
    %s7789 = scalar_lea.vmem [#allocation5], 1728
    %v7790 = vld [vmem:[%s7789] sm:$0xf]
    %v7791 = vld [vmem:[%s7789 + $0x4] sm:$0xf]
    %v7792 = vld [vmem:[%s7789 + $0x8] sm:$0xf]
    %v7793 = vld [vmem:[%s7789 + $0xc] sm:$0xf]
    %v7794 = vld [vmem:[%s7789 + $0x10] sm:$0xf]
    %v7795 = vld [vmem:[%s7789 + $0x14] sm:$0xf]
    %v7796 = vld [vmem:[%s7789 + $0x18] sm:$0xf]
    %v7797 = vld [vmem:[%s7789 + $0x1c] sm:$0xf]
    %v7798 = vld [vmem:[%s7789 + $0x20] sm:$0xf]
    %v7799 = vld [vmem:[%s7789 + $0x24] sm:$0xf]
    %v7800 = vld [vmem:[%s7789 + $0x28] sm:$0xf]
    %v7801 = vld [vmem:[%s7789 + $0x2c] sm:$0xf]
    %v7802 = vld [vmem:[%s7789 + $0x30] sm:$0xf]
    %v7803 = vld [vmem:[%s7789 + $0x34] sm:$0xf]
    %v7804 = vld [vmem:[%s7789 + $0x38] sm:$0xf]
    %v7805 = vld [vmem:[%s7789 + $0x3c] sm:$0xf]
    %v7806 = vld [vmem:[#allocation3 + $0x1] sm:$0xf]
    %v7807 = vld [vmem:[#allocation3 + $0x9] sm:$0xf]
    %v7808 = vld [vmem:[#allocation3 + $0x11] sm:$0xf]
    %v7809 = vld [vmem:[#allocation3 + $0x19] sm:$0xf]
    %v7810 = vld [vmem:[#allocation3 + $0x31] sm:$0xf]
    %v7811 = vld [vmem:[#allocation3 + $0x39] sm:$0xf]
    %v7812 = vld [vmem:[#allocation3 + $0x41] sm:$0xf]
    %v7813 = vld [vmem:[#allocation3 + $0x49] sm:$0xf]
    %7822 = vst [vmem:[#allocation1] ss:$2 sm:$0xff] %v7806
    %s7823 = scalar_lea.vmem [#allocation1], 1
    %7824 = vst [vmem:[%s7823] ss:$2 sm:$0xff] %v7807
    %s7825 = scalar_lea.vmem [#allocation1], 16
    %7826 = vst [vmem:[%s7825] ss:$2 sm:$0xff] %v7808
    %s7827 = scalar_lea.vmem [#allocation1], 17
    %7828 = vst [vmem:[%s7827] ss:$2 sm:$0xff] %v7809
    %s7829 = scalar_lea.vmem [#allocation1], 32
    %7830 = vst [vmem:[%s7829] ss:$2 sm:$0xff] %v7810
    %s7831 = scalar_lea.vmem [#allocation1], 33
    %7832 = vst [vmem:[%s7831] ss:$2 sm:$0xff] %v7811
    %s7833 = scalar_lea.vmem [#allocation1], 48
    %7834 = vst [vmem:[%s7833] ss:$2 sm:$0xff] %v7812
    %s7835 = scalar_lea.vmem [#allocation1], 49
    %7836 = vst [vmem:[%s7835] ss:$2 sm:$0xff] %v7813
    %v7837 = vld.sshfl [vmem:[#allocation1] sm:$0xff pattern:$0x75316420]
    %v7838 = vld.sshfl [vmem:[#allocation1 + $0x10] sm:$0xff pattern:$0x75316420]
    %v7839 = vld.sshfl [vmem:[#allocation1 + $0x20] sm:$0xff pattern:$0x75316420]
    %v7840 = vld.sshfl [vmem:[#allocation1 + $0x30] sm:$0xff pattern:$0x75316420]
    %v7845 = vpack.c.bf16 %v7838, %v7837
    %v7846 = vpack.c.bf16 %v7840, %v7839
    %s7847 = scalar_lea.vmem [#allocation5], 1792
    %v7848 = vld [vmem:[%s7847] sm:$0xf]
    %v7849 = vld [vmem:[%s7847 + $0x4] sm:$0xf]
    %v7850 = vld [vmem:[%s7847 + $0x8] sm:$0xf]
    %v7851 = vld [vmem:[%s7847 + $0xc] sm:$0xf]
    %v7852 = vld [vmem:[%s7847 + $0x10] sm:$0xf]
    %v7853 = vld [vmem:[%s7847 + $0x14] sm:$0xf]
    %v7854 = vld [vmem:[%s7847 + $0x18] sm:$0xf]
    %v7855 = vld [vmem:[%s7847 + $0x1c] sm:$0xf]
    %v7856 = vld [vmem:[%s7847 + $0x20] sm:$0xf]
    %v7857 = vld [vmem:[%s7847 + $0x24] sm:$0xf]
    %v7858 = vld [vmem:[%s7847 + $0x28] sm:$0xf]
    %v7859 = vld [vmem:[%s7847 + $0x2c] sm:$0xf]
    %v7860 = vld [vmem:[%s7847 + $0x30] sm:$0xf]
    %v7861 = vld [vmem:[%s7847 + $0x34] sm:$0xf]
    %v7862 = vld [vmem:[%s7847 + $0x38] sm:$0xf]
    %v7863 = vld [vmem:[%s7847 + $0x3c] sm:$0xf]
    %v7880 = vunpack.c.l.b16 %v7848
    %v7881 = vunpack.c.l.b16 %v7849
    %v7882 = vunpack.c.l.b16 %v7850
    %v7883 = vunpack.c.l.b16 %v7851
    %v7884 = vunpack.c.l.b16 %v7852
    %v7885 = vunpack.c.l.b16 %v7853
    %v7886 = vunpack.c.l.b16 %v7854
    %v7887 = vunpack.c.l.b16 %v7855
    %v7888 = vunpack.c.l.b16 %v7856
    %v7889 = vunpack.c.l.b16 %v7857
    %v7890 = vunpack.c.l.b16 %v7858
    %v7891 = vunpack.c.l.b16 %v7859
    %v7892 = vunpack.c.l.b16 %v7860
    %v7893 = vunpack.c.l.b16 %v7861
    %v7894 = vunpack.c.l.b16 %v7862
    %v7895 = vunpack.c.l.b16 %v7863
    %v7896 = vpack.c.b16 %v7881, %v7880
    %v7897 = vpack.c.b16 %v7883, %v7882
    %v7898 = vpack.c.b16 %v7885, %v7884
    %v7899 = vpack.c.b16 %v7887, %v7886
    %v7900 = vpack.c.b16 %v7889, %v7888
    %v7901 = vpack.c.b16 %v7891, %v7890
    %v7902 = vpack.c.b16 %v7893, %v7892
    %v7903 = vpack.c.b16 %v7895, %v7894
    %7912 = vmatpush.bf16.msra.mxu0 %v7903
    %7913 = vmatpush.bf16.msra.mxu0 %v7902
    %7914 = vmatpush.bf16.msra.mxu0 %v7901
    %7915 = vmatpush.bf16.msra.mxu0 %v7900
    %7916 = vmatpush.bf16.msra.mxu0 %v7899
    %7917 = vmatpush.bf16.msra.mxu0 %v7898
    %7918 = vmatpush.bf16.msra.mxu0 %v7897
    %7919 = vmatpush.bf16.msra.mxu0 %v7896
    %7920 = vmatmul.bf16.gmra.mxu0 %v7845
    %v7921 = vpop.f32.mrf.mxu0
    %v7922 = vadd.f32 0.0, %v7921
    %v7923 = vpop.f32.mrf.mxu0
    %v7924 = vadd.f32 0.0, %v7923
    %7925 = vmatmul.bf16.gmra.mxu0 %v7846
    %v7926 = vpop.f32.mrf.mxu0
    %v7927 = vadd.f32 0.0, %v7926
    %v7928 = vpop.f32.mrf.mxu0
    %v7929 = vadd.f32 0.0, %v7928
    %7930 = vdwg.mxu0
    %v7947 = vunpack.c.l.b16 %v7790
    %v7948 = vunpack.c.l.b16 %v7791
    %v7949 = vunpack.c.l.b16 %v7792
    %v7950 = vunpack.c.l.b16 %v7793
    %v7951 = vunpack.c.l.b16 %v7794
    %v7952 = vunpack.c.l.b16 %v7795
    %v7953 = vunpack.c.l.b16 %v7796
    %v7954 = vunpack.c.l.b16 %v7797
    %v7955 = vunpack.c.l.b16 %v7798
    %v7956 = vunpack.c.l.b16 %v7799
    %v7957 = vunpack.c.l.b16 %v7800
    %v7958 = vunpack.c.l.b16 %v7801
    %v7959 = vunpack.c.l.b16 %v7802
    %v7960 = vunpack.c.l.b16 %v7803
    %v7961 = vunpack.c.l.b16 %v7804
    %v7962 = vunpack.c.l.b16 %v7805
    %v7963 = vpack.c.b16 %v7948, %v7947
    %v7964 = vpack.c.b16 %v7950, %v7949
    %v7965 = vpack.c.b16 %v7952, %v7951
    %v7966 = vpack.c.b16 %v7954, %v7953
    %v7967 = vpack.c.b16 %v7956, %v7955
    %v7968 = vpack.c.b16 %v7958, %v7957
    %v7969 = vpack.c.b16 %v7960, %v7959
    %v7970 = vpack.c.b16 %v7962, %v7961
    %7979 = vmatpush.bf16.msra.mxu0 %v7970
    %7980 = vmatpush.bf16.msra.mxu0 %v7969
    %7981 = vmatpush.bf16.msra.mxu0 %v7968
    %7982 = vmatpush.bf16.msra.mxu0 %v7967
    %7983 = vmatpush.bf16.msra.mxu0 %v7966
    %7984 = vmatpush.bf16.msra.mxu0 %v7965
    %7985 = vmatpush.bf16.msra.mxu0 %v7964
    %7986 = vmatpush.bf16.msra.mxu0 %v7963
    %7987 = vmatmul.bf16.gmra.mxu0 %v7787
    %v7988 = vpop.f32.mrf.mxu0
    %v7989 = vadd.f32 %v7922, %v7988
    %v7990 = vpop.f32.mrf.mxu0
    %v7991 = vadd.f32 %v7924, %v7990
    %7992 = vmatmul.bf16.gmra.mxu0 %v7788
    %v7993 = vpop.f32.mrf.mxu0
    %v7994 = vadd.f32 %v7927, %v7993
    %v7995 = vpop.f32.mrf.mxu0
    %v7996 = vadd.f32 %v7929, %v7995
    %7997 = vdwg.mxu0
    %v7998 = vld [vmem:[#allocation3 + $0x2] sm:$0xf]
    %v7999 = vld [vmem:[#allocation3 + $0xa] sm:$0xf]
    %v8000 = vld [vmem:[#allocation3 + $0x12] sm:$0xf]
    %v8001 = vld [vmem:[#allocation3 + $0x1a] sm:$0xf]
    %v8002 = vld [vmem:[#allocation3 + $0x32] sm:$0xf]
    %v8003 = vld [vmem:[#allocation3 + $0x3a] sm:$0xf]
    %v8004 = vld [vmem:[#allocation3 + $0x42] sm:$0xf]
    %v8005 = vld [vmem:[#allocation3 + $0x4a] sm:$0xf]
    %8014 = vst [vmem:[#allocation1] ss:$2 sm:$0xff] %v7998
    %s8015 = scalar_lea.vmem [#allocation1], 1
    %8016 = vst [vmem:[%s8015] ss:$2 sm:$0xff] %v7999
    %s8017 = scalar_lea.vmem [#allocation1], 16
    %8018 = vst [vmem:[%s8017] ss:$2 sm:$0xff] %v8000
    %s8019 = scalar_lea.vmem [#allocation1], 17
    %8020 = vst [vmem:[%s8019] ss:$2 sm:$0xff] %v8001
    %s8021 = scalar_lea.vmem [#allocation1], 32
    %8022 = vst [vmem:[%s8021] ss:$2 sm:$0xff] %v8002
    %s8023 = scalar_lea.vmem [#allocation1], 33
    %8024 = vst [vmem:[%s8023] ss:$2 sm:$0xff] %v8003
    %s8025 = scalar_lea.vmem [#allocation1], 48
    %8026 = vst [vmem:[%s8025] ss:$2 sm:$0xff] %v8004
    %s8027 = scalar_lea.vmem [#allocation1], 49
    %8028 = vst [vmem:[%s8027] ss:$2 sm:$0xff] %v8005
    %v8029 = vld.sshfl [vmem:[#allocation1] sm:$0xff pattern:$0x75316420]
    %v8030 = vld.sshfl [vmem:[#allocation1 + $0x10] sm:$0xff pattern:$0x75316420]
    %v8031 = vld.sshfl [vmem:[#allocation1 + $0x20] sm:$0xff pattern:$0x75316420]
    %v8032 = vld.sshfl [vmem:[#allocation1 + $0x30] sm:$0xff pattern:$0x75316420]
    %v8037 = vpack.c.bf16 %v8030, %v8029
    %v8038 = vpack.c.bf16 %v8032, %v8031
    %s8039 = scalar_lea.vmem [#allocation5], 1856
    %v8040 = vld [vmem:[%s8039] sm:$0xf]
    %v8041 = vld [vmem:[%s8039 + $0x4] sm:$0xf]
    %v8042 = vld [vmem:[%s8039 + $0x8] sm:$0xf]
    %v8043 = vld [vmem:[%s8039 + $0xc] sm:$0xf]
    %v8044 = vld [vmem:[%s8039 + $0x10] sm:$0xf]
    %v8045 = vld [vmem:[%s8039 + $0x14] sm:$0xf]
    %v8046 = vld [vmem:[%s8039 + $0x18] sm:$0xf]
    %v8047 = vld [vmem:[%s8039 + $0x1c] sm:$0xf]
    %v8048 = vld [vmem:[%s8039 + $0x20] sm:$0xf]
    %v8049 = vld [vmem:[%s8039 + $0x24] sm:$0xf]
    %v8050 = vld [vmem:[%s8039 + $0x28] sm:$0xf]
    %v8051 = vld [vmem:[%s8039 + $0x2c] sm:$0xf]
    %v8052 = vld [vmem:[%s8039 + $0x30] sm:$0xf]
    %v8053 = vld [vmem:[%s8039 + $0x34] sm:$0xf]
    %v8054 = vld [vmem:[%s8039 + $0x38] sm:$0xf]
    %v8055 = vld [vmem:[%s8039 + $0x3c] sm:$0xf]
    %v8072 = vunpack.c.l.b16 %v8040
    %v8073 = vunpack.c.l.b16 %v8041
    %v8074 = vunpack.c.l.b16 %v8042
    %v8075 = vunpack.c.l.b16 %v8043
    %v8076 = vunpack.c.l.b16 %v8044
    %v8077 = vunpack.c.l.b16 %v8045
    %v8078 = vunpack.c.l.b16 %v8046
    %v8079 = vunpack.c.l.b16 %v8047
    %v8080 = vunpack.c.l.b16 %v8048
    %v8081 = vunpack.c.l.b16 %v8049
    %v8082 = vunpack.c.l.b16 %v8050
    %v8083 = vunpack.c.l.b16 %v8051
    %v8084 = vunpack.c.l.b16 %v8052
    %v8085 = vunpack.c.l.b16 %v8053
    %v8086 = vunpack.c.l.b16 %v8054
    %v8087 = vunpack.c.l.b16 %v8055
    %v8088 = vpack.c.b16 %v8073, %v8072
    %v8089 = vpack.c.b16 %v8075, %v8074
    %v8090 = vpack.c.b16 %v8077, %v8076
    %v8091 = vpack.c.b16 %v8079, %v8078
    %v8092 = vpack.c.b16 %v8081, %v8080
    %v8093 = vpack.c.b16 %v8083, %v8082
    %v8094 = vpack.c.b16 %v8085, %v8084
    %v8095 = vpack.c.b16 %v8087, %v8086
    %8104 = vmatpush.bf16.msra.mxu0 %v8095
    %8105 = vmatpush.bf16.msra.mxu0 %v8094
    %8106 = vmatpush.bf16.msra.mxu0 %v8093
    %8107 = vmatpush.bf16.msra.mxu0 %v8092
    %8108 = vmatpush.bf16.msra.mxu0 %v8091
    %8109 = vmatpush.bf16.msra.mxu0 %v8090
    %8110 = vmatpush.bf16.msra.mxu0 %v8089
    %8111 = vmatpush.bf16.msra.mxu0 %v8088
    %8112 = vmatmul.bf16.gmra.mxu0 %v8037
    %v8113 = vpop.f32.mrf.mxu0
    %v8114 = vadd.f32 0.0, %v8113
    %v8115 = vpop.f32.mrf.mxu0
    %v8116 = vadd.f32 0.0, %v8115
    %8117 = vmatmul.bf16.gmra.mxu0 %v8038
    %v8118 = vpop.f32.mrf.mxu0
    %v8119 = vadd.f32 0.0, %v8118
    %v8120 = vpop.f32.mrf.mxu0
    %v8121 = vadd.f32 0.0, %v8120
    %8122 = vdwg.mxu0
    %v8123 = vadd.f32 %v7989, %v8114
    %v8124 = vadd.f32 %v7991, %v8116
    %v8125 = vadd.f32 %v7994, %v8119
    %v8126 = vadd.f32 %v7996, %v8121
    %v8127 = vld [vmem:[%s6508] sm:$0xf]
    %v8128 = vld [vmem:[%s6508 + $0x8] sm:$0xf]
    %v8129 = vld [vmem:[%s6508 + $0x10] sm:$0xf]
    %v8130 = vld [vmem:[%s6508 + $0x18] sm:$0xf]
    %v8131 = vld [vmem:[%s6508 + $0x30] sm:$0xf]
    %v8132 = vld [vmem:[%s6508 + $0x38] sm:$0xf]
    %v8133 = vld [vmem:[%s6508 + $0x40] sm:$0xf]
    %v8134 = vld [vmem:[%s6508 + $0x48] sm:$0xf]
    %8143 = vst [vmem:[#allocation1] ss:$2 sm:$0xff] %v8127
    %s8144 = scalar_lea.vmem [#allocation1], 1
    %8145 = vst [vmem:[%s8144] ss:$2 sm:$0xff] %v8128
    %s8146 = scalar_lea.vmem [#allocation1], 16
    %8147 = vst [vmem:[%s8146] ss:$2 sm:$0xff] %v8129
    %s8148 = scalar_lea.vmem [#allocation1], 17
    %8149 = vst [vmem:[%s8148] ss:$2 sm:$0xff] %v8130
    %s8150 = scalar_lea.vmem [#allocation1], 32
    %8151 = vst [vmem:[%s8150] ss:$2 sm:$0xff] %v8131
    %s8152 = scalar_lea.vmem [#allocation1], 33
    %8153 = vst [vmem:[%s8152] ss:$2 sm:$0xff] %v8132
    %s8154 = scalar_lea.vmem [#allocation1], 48
    %8155 = vst [vmem:[%s8154] ss:$2 sm:$0xff] %v8133
    %s8156 = scalar_lea.vmem [#allocation1], 49
    %8157 = vst [vmem:[%s8156] ss:$2 sm:$0xff] %v8134
    %v8158 = vld.sshfl [vmem:[#allocation1] sm:$0xff pattern:$0x75316420]
    %v8159 = vld.sshfl [vmem:[#allocation1 + $0x10] sm:$0xff pattern:$0x75316420]
    %v8160 = vld.sshfl [vmem:[#allocation1 + $0x20] sm:$0xff pattern:$0x75316420]
    %v8161 = vld.sshfl [vmem:[#allocation1 + $0x30] sm:$0xff pattern:$0x75316420]
    %v8166 = vpack.c.bf16 %v8159, %v8158
    %v8167 = vpack.c.bf16 %v8161, %v8160
    %s8168 = scalar_lea.vmem [#allocation5], 1920
    %v8169 = vld [vmem:[%s8168] sm:$0xf]
    %v8170 = vld [vmem:[%s8168 + $0x4] sm:$0xf]
    %v8171 = vld [vmem:[%s8168 + $0x8] sm:$0xf]
    %v8172 = vld [vmem:[%s8168 + $0xc] sm:$0xf]
    %v8173 = vld [vmem:[%s8168 + $0x10] sm:$0xf]
    %v8174 = vld [vmem:[%s8168 + $0x14] sm:$0xf]
    %v8175 = vld [vmem:[%s8168 + $0x18] sm:$0xf]
    %v8176 = vld [vmem:[%s8168 + $0x1c] sm:$0xf]
    %v8177 = vld [vmem:[%s8168 + $0x20] sm:$0xf]
    %v8178 = vld [vmem:[%s8168 + $0x24] sm:$0xf]
    %v8179 = vld [vmem:[%s8168 + $0x28] sm:$0xf]
    %v8180 = vld [vmem:[%s8168 + $0x2c] sm:$0xf]
    %v8181 = vld [vmem:[%s8168 + $0x30] sm:$0xf]
    %v8182 = vld [vmem:[%s8168 + $0x34] sm:$0xf]
    %v8183 = vld [vmem:[%s8168 + $0x38] sm:$0xf]
    %v8184 = vld [vmem:[%s8168 + $0x3c] sm:$0xf]
    %v8201 = vunpack.c.l.b16 %v8169
    %v8202 = vunpack.c.l.b16 %v8170
    %v8203 = vunpack.c.l.b16 %v8171
    %v8204 = vunpack.c.l.b16 %v8172
    %v8205 = vunpack.c.l.b16 %v8173
    %v8206 = vunpack.c.l.b16 %v8174
    %v8207 = vunpack.c.l.b16 %v8175
    %v8208 = vunpack.c.l.b16 %v8176
    %v8209 = vunpack.c.l.b16 %v8177
    %v8210 = vunpack.c.l.b16 %v8178
    %v8211 = vunpack.c.l.b16 %v8179
    %v8212 = vunpack.c.l.b16 %v8180
    %v8213 = vunpack.c.l.b16 %v8181
    %v8214 = vunpack.c.l.b16 %v8182
    %v8215 = vunpack.c.l.b16 %v8183
    %v8216 = vunpack.c.l.b16 %v8184
    %v8217 = vpack.c.b16 %v8202, %v8201
    %v8218 = vpack.c.b16 %v8204, %v8203
    %v8219 = vpack.c.b16 %v8206, %v8205
    %v8220 = vpack.c.b16 %v8208, %v8207
    %v8221 = vpack.c.b16 %v8210, %v8209
    %v8222 = vpack.c.b16 %v8212, %v8211
    %v8223 = vpack.c.b16 %v8214, %v8213
    %v8224 = vpack.c.b16 %v8216, %v8215
    %8233 = vmatpush.bf16.msra.mxu0 %v8224
    %8234 = vmatpush.bf16.msra.mxu0 %v8223
    %8235 = vmatpush.bf16.msra.mxu0 %v8222
    %8236 = vmatpush.bf16.msra.mxu0 %v8221
    %8237 = vmatpush.bf16.msra.mxu0 %v8220
    %8238 = vmatpush.bf16.msra.mxu0 %v8219
    %8239 = vmatpush.bf16.msra.mxu0 %v8218
    %8240 = vmatpush.bf16.msra.mxu0 %v8217
    %8241 = vmatmul.bf16.gmra.mxu0 %v8166
    %v8242 = vpop.f32.mrf.mxu0
    %v8243 = vadd.f32 0.0, %v8242
    %v8244 = vpop.f32.mrf.mxu0
    %v8245 = vadd.f32 0.0, %v8244
    %8246 = vmatmul.bf16.gmra.mxu0 %v8167
    %v8247 = vpop.f32.mrf.mxu0
    %v8248 = vadd.f32 0.0, %v8247
    %v8249 = vpop.f32.mrf.mxu0
    %v8250 = vadd.f32 0.0, %v8249
    %8251 = vdwg.mxu0
    %v8252 = vadd.f32 %v8123, %v8243
    %v8253 = vadd.f32 %v8124, %v8245
    %v8254 = vadd.f32 %v8125, %v8248
    %v8255 = vadd.f32 %v8126, %v8250
    %v8256 = vld [vmem:[%s6508 + $0x1] sm:$0xf]
    %v8257 = vld [vmem:[%s6508 + $0x9] sm:$0xf]
    %v8258 = vld [vmem:[%s6508 + $0x11] sm:$0xf]
    %v8259 = vld [vmem:[%s6508 + $0x19] sm:$0xf]
    %v8260 = vld [vmem:[%s6508 + $0x31] sm:$0xf]
    %v8261 = vld [vmem:[%s6508 + $0x39] sm:$0xf]
    %v8262 = vld [vmem:[%s6508 + $0x41] sm:$0xf]
    %v8263 = vld [vmem:[%s6508 + $0x49] sm:$0xf]
    %8272 = vst [vmem:[#allocation1] ss:$2 sm:$0xff] %v8256
    %s8273 = scalar_lea.vmem [#allocation1], 1
    %8274 = vst [vmem:[%s8273] ss:$2 sm:$0xff] %v8257
    %s8275 = scalar_lea.vmem [#allocation1], 16
    %8276 = vst [vmem:[%s8275] ss:$2 sm:$0xff] %v8258
    %s8277 = scalar_lea.vmem [#allocation1], 17
    %8278 = vst [vmem:[%s8277] ss:$2 sm:$0xff] %v8259
    %s8279 = scalar_lea.vmem [#allocation1], 32
    %8280 = vst [vmem:[%s8279] ss:$2 sm:$0xff] %v8260
    %s8281 = scalar_lea.vmem [#allocation1], 33
    %8282 = vst [vmem:[%s8281] ss:$2 sm:$0xff] %v8261
    %s8283 = scalar_lea.vmem [#allocation1], 48
    %8284 = vst [vmem:[%s8283] ss:$2 sm:$0xff] %v8262
    %s8285 = scalar_lea.vmem [#allocation1], 49
    %8286 = vst [vmem:[%s8285] ss:$2 sm:$0xff] %v8263
    %v8287 = vld.sshfl [vmem:[#allocation1] sm:$0xff pattern:$0x75316420]
    %v8288 = vld.sshfl [vmem:[#allocation1 + $0x10] sm:$0xff pattern:$0x75316420]
    %v8289 = vld.sshfl [vmem:[#allocation1 + $0x20] sm:$0xff pattern:$0x75316420]
    %v8290 = vld.sshfl [vmem:[#allocation1 + $0x30] sm:$0xff pattern:$0x75316420]
    %v8295 = vpack.c.bf16 %v8288, %v8287
    %v8296 = vpack.c.bf16 %v8290, %v8289
    %s8297 = scalar_lea.vmem [#allocation5], 1984
    %v8298 = vld [vmem:[%s8297] sm:$0xf]
    %v8299 = vld [vmem:[%s8297 + $0x4] sm:$0xf]
    %v8300 = vld [vmem:[%s8297 + $0x8] sm:$0xf]
    %v8301 = vld [vmem:[%s8297 + $0xc] sm:$0xf]
    %v8302 = vld [vmem:[%s8297 + $0x10] sm:$0xf]
    %v8303 = vld [vmem:[%s8297 + $0x14] sm:$0xf]
    %v8304 = vld [vmem:[%s8297 + $0x18] sm:$0xf]
    %v8305 = vld [vmem:[%s8297 + $0x1c] sm:$0xf]
    %v8306 = vld [vmem:[%s8297 + $0x20] sm:$0xf]
    %v8307 = vld [vmem:[%s8297 + $0x24] sm:$0xf]
    %v8308 = vld [vmem:[%s8297 + $0x28] sm:$0xf]
    %v8309 = vld [vmem:[%s8297 + $0x2c] sm:$0xf]
    %v8310 = vld [vmem:[%s8297 + $0x30] sm:$0xf]
    %v8311 = vld [vmem:[%s8297 + $0x34] sm:$0xf]
    %v8312 = vld [vmem:[%s8297 + $0x38] sm:$0xf]
    %v8313 = vld [vmem:[%s8297 + $0x3c] sm:$0xf]
    %v8330 = vunpack.c.l.b16 %v8298
    %v8331 = vunpack.c.l.b16 %v8299
    %v8332 = vunpack.c.l.b16 %v8300
    %v8333 = vunpack.c.l.b16 %v8301
    %v8334 = vunpack.c.l.b16 %v8302
    %v8335 = vunpack.c.l.b16 %v8303
    %v8336 = vunpack.c.l.b16 %v8304
    %v8337 = vunpack.c.l.b16 %v8305
    %v8338 = vunpack.c.l.b16 %v8306
    %v8339 = vunpack.c.l.b16 %v8307
    %v8340 = vunpack.c.l.b16 %v8308
    %v8341 = vunpack.c.l.b16 %v8309
    %v8342 = vunpack.c.l.b16 %v8310
    %v8343 = vunpack.c.l.b16 %v8311
    %v8344 = vunpack.c.l.b16 %v8312
    %v8345 = vunpack.c.l.b16 %v8313
    %v8346 = vpack.c.b16 %v8331, %v8330
    %v8347 = vpack.c.b16 %v8333, %v8332
    %v8348 = vpack.c.b16 %v8335, %v8334
    %v8349 = vpack.c.b16 %v8337, %v8336
    %v8350 = vpack.c.b16 %v8339, %v8338
    %v8351 = vpack.c.b16 %v8341, %v8340
    %v8352 = vpack.c.b16 %v8343, %v8342
    %v8353 = vpack.c.b16 %v8345, %v8344
    %8362 = vmatpush.bf16.msra.mxu0 %v8353
    %8363 = vmatpush.bf16.msra.mxu0 %v8352
    %8364 = vmatpush.bf16.msra.mxu0 %v8351
    %8365 = vmatpush.bf16.msra.mxu0 %v8350
    %8366 = vmatpush.bf16.msra.mxu0 %v8349
    %8367 = vmatpush.bf16.msra.mxu0 %v8348
    %8368 = vmatpush.bf16.msra.mxu0 %v8347
    %8369 = vmatpush.bf16.msra.mxu0 %v8346
    %8370 = vmatmul.bf16.gmra.mxu0 %v8295
    %v8371 = vpop.f32.mrf.mxu0
    %v8372 = vadd.f32 0.0, %v8371
    %v8373 = vpop.f32.mrf.mxu0
    %v8374 = vadd.f32 0.0, %v8373
    %8375 = vmatmul.bf16.gmra.mxu0 %v8296
    %v8376 = vpop.f32.mrf.mxu0
    %v8377 = vadd.f32 0.0, %v8376
    %v8378 = vpop.f32.mrf.mxu0
    %v8379 = vadd.f32 0.0, %v8378
    %8380 = vdwg.mxu0
    %v8381 = vadd.f32 %v8252, %v8372
    %v8382 = vadd.f32 %v8253, %v8374
    %v8383 = vadd.f32 %v8254, %v8377
    %v8384 = vadd.f32 %v8255, %v8379
    %v8385 = vld [vmem:[%s6508 + $0x2] sm:$0xf]
    %v8386 = vld [vmem:[%s6508 + $0xa] sm:$0xf]
    %v8387 = vld [vmem:[%s6508 + $0x12] sm:$0xf]
    %v8388 = vld [vmem:[%s6508 + $0x1a] sm:$0xf]
    %v8389 = vld [vmem:[%s6508 + $0x32] sm:$0xf]
    %v8390 = vld [vmem:[%s6508 + $0x3a] sm:$0xf]
    %v8391 = vld [vmem:[%s6508 + $0x42] sm:$0xf]
    %v8392 = vld [vmem:[%s6508 + $0x4a] sm:$0xf]
    %8401 = vst [vmem:[#allocation1] ss:$2 sm:$0xff] %v8385
    %s8402 = scalar_lea.vmem [#allocation1], 1
    %8403 = vst [vmem:[%s8402] ss:$2 sm:$0xff] %v8386
    %s8404 = scalar_lea.vmem [#allocation1], 16
    %8405 = vst [vmem:[%s8404] ss:$2 sm:$0xff] %v8387
    %s8406 = scalar_lea.vmem [#allocation1], 17
    %8407 = vst [vmem:[%s8406] ss:$2 sm:$0xff] %v8388
    %s8408 = scalar_lea.vmem [#allocation1], 32
    %8409 = vst [vmem:[%s8408] ss:$2 sm:$0xff] %v8389
    %s8410 = scalar_lea.vmem [#allocation1], 33
    %8411 = vst [vmem:[%s8410] ss:$2 sm:$0xff] %v8390
    %s8412 = scalar_lea.vmem [#allocation1], 48
    %8413 = vst [vmem:[%s8412] ss:$2 sm:$0xff] %v8391
    %s8414 = scalar_lea.vmem [#allocation1], 49
    %8415 = vst [vmem:[%s8414] ss:$2 sm:$0xff] %v8392
    %v8416 = vld.sshfl [vmem:[#allocation1] sm:$0xff pattern:$0x75316420]
    %v8417 = vld.sshfl [vmem:[#allocation1 + $0x10] sm:$0xff pattern:$0x75316420]
    %v8418 = vld.sshfl [vmem:[#allocation1 + $0x20] sm:$0xff pattern:$0x75316420]
    %v8419 = vld.sshfl [vmem:[#allocation1 + $0x30] sm:$0xff pattern:$0x75316420]
    %v8424 = vpack.c.bf16 %v8417, %v8416
    %v8425 = vpack.c.bf16 %v8419, %v8418
    %s8426 = scalar_lea.vmem [#allocation5], 2048
    %v8427 = vld [vmem:[%s8426] sm:$0xf]
    %v8428 = vld [vmem:[%s8426 + $0x4] sm:$0xf]
    %v8429 = vld [vmem:[%s8426 + $0x8] sm:$0xf]
    %v8430 = vld [vmem:[%s8426 + $0xc] sm:$0xf]
    %v8431 = vld [vmem:[%s8426 + $0x10] sm:$0xf]
    %v8432 = vld [vmem:[%s8426 + $0x14] sm:$0xf]
    %v8433 = vld [vmem:[%s8426 + $0x18] sm:$0xf]
    %v8434 = vld [vmem:[%s8426 + $0x1c] sm:$0xf]
    %v8435 = vld [vmem:[%s8426 + $0x20] sm:$0xf]
    %v8436 = vld [vmem:[%s8426 + $0x24] sm:$0xf]
    %v8437 = vld [vmem:[%s8426 + $0x28] sm:$0xf]
    %v8438 = vld [vmem:[%s8426 + $0x2c] sm:$0xf]
    %v8439 = vld [vmem:[%s8426 + $0x30] sm:$0xf]
    %v8440 = vld [vmem:[%s8426 + $0x34] sm:$0xf]
    %v8441 = vld [vmem:[%s8426 + $0x38] sm:$0xf]
    %v8442 = vld [vmem:[%s8426 + $0x3c] sm:$0xf]
    %v8459 = vunpack.c.l.b16 %v8427
    %v8460 = vunpack.c.l.b16 %v8428
    %v8461 = vunpack.c.l.b16 %v8429
    %v8462 = vunpack.c.l.b16 %v8430
    %v8463 = vunpack.c.l.b16 %v8431
    %v8464 = vunpack.c.l.b16 %v8432
    %v8465 = vunpack.c.l.b16 %v8433
    %v8466 = vunpack.c.l.b16 %v8434
    %v8467 = vunpack.c.l.b16 %v8435
    %v8468 = vunpack.c.l.b16 %v8436
    %v8469 = vunpack.c.l.b16 %v8437
    %v8470 = vunpack.c.l.b16 %v8438
    %v8471 = vunpack.c.l.b16 %v8439
    %v8472 = vunpack.c.l.b16 %v8440
    %v8473 = vunpack.c.l.b16 %v8441
    %v8474 = vunpack.c.l.b16 %v8442
    %v8475 = vpack.c.b16 %v8460, %v8459
    %v8476 = vpack.c.b16 %v8462, %v8461
    %v8477 = vpack.c.b16 %v8464, %v8463
    %v8478 = vpack.c.b16 %v8466, %v8465
    %v8479 = vpack.c.b16 %v8468, %v8467
    %v8480 = vpack.c.b16 %v8470, %v8469
    %v8481 = vpack.c.b16 %v8472, %v8471
    %v8482 = vpack.c.b16 %v8474, %v8473
    %8491 = vmatpush.bf16.msra.mxu0 %v8482
    %8492 = vmatpush.bf16.msra.mxu0 %v8481
    %8493 = vmatpush.bf16.msra.mxu0 %v8480
    %8494 = vmatpush.bf16.msra.mxu0 %v8479
    %8495 = vmatpush.bf16.msra.mxu0 %v8478
    %8496 = vmatpush.bf16.msra.mxu0 %v8477
    %8497 = vmatpush.bf16.msra.mxu0 %v8476
    %8498 = vmatpush.bf16.msra.mxu0 %v8475
    %8499 = vmatmul.bf16.gmra.mxu0 %v8424
    %v8500 = vpop.f32.mrf.mxu0
    %v8501 = vadd.f32 0.0, %v8500
    %v8502 = vpop.f32.mrf.mxu0
    %v8503 = vadd.f32 0.0, %v8502
    %8504 = vmatmul.bf16.gmra.mxu0 %v8425
    %v8505 = vpop.f32.mrf.mxu0
    %v8506 = vadd.f32 0.0, %v8505
    %v8507 = vpop.f32.mrf.mxu0
    %v8508 = vadd.f32 0.0, %v8507
    %8509 = vdwg.mxu0
    %v8510 = vadd.f32 %v8381, %v8501
    %v8511 = vadd.f32 %v8382, %v8503
    %v8512 = vadd.f32 %v8383, %v8506
    %v8513 = vadd.f32 %v8384, %v8508
    %v8514 = vld [vmem:[%s7283] sm:$0xf]
    %v8515 = vld [vmem:[%s7283 + $0x8] sm:$0xf]
    %v8516 = vld [vmem:[%s7283 + $0x10] sm:$0xf]
    %v8517 = vld [vmem:[%s7283 + $0x18] sm:$0xf]
    %v8518 = vld [vmem:[%s7283 + $0x30] sm:$0xf]
    %v8519 = vld [vmem:[%s7283 + $0x38] sm:$0xf]
    %v8520 = vld [vmem:[%s7283 + $0x40] sm:$0xf]
    %v8521 = vld [vmem:[%s7283 + $0x48] sm:$0xf]
    %8530 = vst [vmem:[#allocation1] ss:$2 sm:$0xff] %v8514
    %s8531 = scalar_lea.vmem [#allocation1], 1
    %8532 = vst [vmem:[%s8531] ss:$2 sm:$0xff] %v8515
    %s8533 = scalar_lea.vmem [#allocation1], 16
    %8534 = vst [vmem:[%s8533] ss:$2 sm:$0xff] %v8516
    %s8535 = scalar_lea.vmem [#allocation1], 17
    %8536 = vst [vmem:[%s8535] ss:$2 sm:$0xff] %v8517
    %s8537 = scalar_lea.vmem [#allocation1], 32
    %8538 = vst [vmem:[%s8537] ss:$2 sm:$0xff] %v8518
    %s8539 = scalar_lea.vmem [#allocation1], 33
    %8540 = vst [vmem:[%s8539] ss:$2 sm:$0xff] %v8519
    %s8541 = scalar_lea.vmem [#allocation1], 48
    %8542 = vst [vmem:[%s8541] ss:$2 sm:$0xff] %v8520
    %s8543 = scalar_lea.vmem [#allocation1], 49
    %8544 = vst [vmem:[%s8543] ss:$2 sm:$0xff] %v8521
    %v8545 = vld.sshfl [vmem:[#allocation1] sm:$0xff pattern:$0x75316420]
    %v8546 = vld.sshfl [vmem:[#allocation1 + $0x10] sm:$0xff pattern:$0x75316420]
    %v8547 = vld.sshfl [vmem:[#allocation1 + $0x20] sm:$0xff pattern:$0x75316420]
    %v8548 = vld.sshfl [vmem:[#allocation1 + $0x30] sm:$0xff pattern:$0x75316420]
    %v8553 = vpack.c.bf16 %v8546, %v8545
    %v8554 = vpack.c.bf16 %v8548, %v8547
    %s8555 = scalar_lea.vmem [#allocation5], 2112
    %v8556 = vld [vmem:[%s8555] sm:$0xf]
    %v8557 = vld [vmem:[%s8555 + $0x4] sm:$0xf]
    %v8558 = vld [vmem:[%s8555 + $0x8] sm:$0xf]
    %v8559 = vld [vmem:[%s8555 + $0xc] sm:$0xf]
    %v8560 = vld [vmem:[%s8555 + $0x10] sm:$0xf]
    %v8561 = vld [vmem:[%s8555 + $0x14] sm:$0xf]
    %v8562 = vld [vmem:[%s8555 + $0x18] sm:$0xf]
    %v8563 = vld [vmem:[%s8555 + $0x1c] sm:$0xf]
    %v8564 = vld [vmem:[%s8555 + $0x20] sm:$0xf]
    %v8565 = vld [vmem:[%s8555 + $0x24] sm:$0xf]
    %v8566 = vld [vmem:[%s8555 + $0x28] sm:$0xf]
    %v8567 = vld [vmem:[%s8555 + $0x2c] sm:$0xf]
    %v8568 = vld [vmem:[%s8555 + $0x30] sm:$0xf]
    %v8569 = vld [vmem:[%s8555 + $0x34] sm:$0xf]
    %v8570 = vld [vmem:[%s8555 + $0x38] sm:$0xf]
    %v8571 = vld [vmem:[%s8555 + $0x3c] sm:$0xf]
    %v8588 = vunpack.c.l.b16 %v8556
    %v8589 = vunpack.c.l.b16 %v8557
    %v8590 = vunpack.c.l.b16 %v8558
    %v8591 = vunpack.c.l.b16 %v8559
    %v8592 = vunpack.c.l.b16 %v8560
    %v8593 = vunpack.c.l.b16 %v8561
    %v8594 = vunpack.c.l.b16 %v8562
    %v8595 = vunpack.c.l.b16 %v8563
    %v8596 = vunpack.c.l.b16 %v8564
    %v8597 = vunpack.c.l.b16 %v8565
    %v8598 = vunpack.c.l.b16 %v8566
    %v8599 = vunpack.c.l.b16 %v8567
    %v8600 = vunpack.c.l.b16 %v8568
    %v8601 = vunpack.c.l.b16 %v8569
    %v8602 = vunpack.c.l.b16 %v8570
    %v8603 = vunpack.c.l.b16 %v8571
    %v8604 = vpack.c.b16 %v8589, %v8588
    %v8605 = vpack.c.b16 %v8591, %v8590
    %v8606 = vpack.c.b16 %v8593, %v8592
    %v8607 = vpack.c.b16 %v8595, %v8594
    %v8608 = vpack.c.b16 %v8597, %v8596
    %v8609 = vpack.c.b16 %v8599, %v8598
    %v8610 = vpack.c.b16 %v8601, %v8600
    %v8611 = vpack.c.b16 %v8603, %v8602
    %8620 = vmatpush.bf16.msra.mxu0 %v8611
    %8621 = vmatpush.bf16.msra.mxu0 %v8610
    %8622 = vmatpush.bf16.msra.mxu0 %v8609
    %8623 = vmatpush.bf16.msra.mxu0 %v8608
    %8624 = vmatpush.bf16.msra.mxu0 %v8607
    %8625 = vmatpush.bf16.msra.mxu0 %v8606
    %8626 = vmatpush.bf16.msra.mxu0 %v8605
    %8627 = vmatpush.bf16.msra.mxu0 %v8604
    %8628 = vmatmul.bf16.gmra.mxu0 %v8553
    %v8629 = vpop.f32.mrf.mxu0
    %v8630 = vadd.f32 0.0, %v8629
    %v8631 = vpop.f32.mrf.mxu0
    %v8632 = vadd.f32 0.0, %v8631
    %8633 = vmatmul.bf16.gmra.mxu0 %v8554
    %v8634 = vpop.f32.mrf.mxu0
    %v8635 = vadd.f32 0.0, %v8634
    %v8636 = vpop.f32.mrf.mxu0
    %v8637 = vadd.f32 0.0, %v8636
    %8638 = vdwg.mxu0
    %v8639 = vadd.f32 %v8510, %v8630
    %v8640 = vadd.f32 %v8511, %v8632
    %v8641 = vadd.f32 %v8512, %v8635
    %v8642 = vadd.f32 %v8513, %v8637
    %v8643 = vld [vmem:[%s7283 + $0x1] sm:$0xf]
    %v8644 = vld [vmem:[%s7283 + $0x9] sm:$0xf]
    %v8645 = vld [vmem:[%s7283 + $0x11] sm:$0xf]
    %v8646 = vld [vmem:[%s7283 + $0x19] sm:$0xf]
    %v8647 = vld [vmem:[%s7283 + $0x31] sm:$0xf]
    %v8648 = vld [vmem:[%s7283 + $0x39] sm:$0xf]
    %v8649 = vld [vmem:[%s7283 + $0x41] sm:$0xf]
    %v8650 = vld [vmem:[%s7283 + $0x49] sm:$0xf]
    %8659 = vst [vmem:[#allocation1] ss:$2 sm:$0xff] %v8643
    %s8660 = scalar_lea.vmem [#allocation1], 1
    %8661 = vst [vmem:[%s8660] ss:$2 sm:$0xff] %v8644
    %s8662 = scalar_lea.vmem [#allocation1], 16
    %8663 = vst [vmem:[%s8662] ss:$2 sm:$0xff] %v8645
    %s8664 = scalar_lea.vmem [#allocation1], 17
    %8665 = vst [vmem:[%s8664] ss:$2 sm:$0xff] %v8646
    %s8666 = scalar_lea.vmem [#allocation1], 32
    %8667 = vst [vmem:[%s8666] ss:$2 sm:$0xff] %v8647
    %s8668 = scalar_lea.vmem [#allocation1], 33
    %8669 = vst [vmem:[%s8668] ss:$2 sm:$0xff] %v8648
    %s8670 = scalar_lea.vmem [#allocation1], 48
    %8671 = vst [vmem:[%s8670] ss:$2 sm:$0xff] %v8649
    %s8672 = scalar_lea.vmem [#allocation1], 49
    %8673 = vst [vmem:[%s8672] ss:$2 sm:$0xff] %v8650
    %v8674 = vld.sshfl [vmem:[#allocation1] sm:$0xff pattern:$0x75316420]
    %v8675 = vld.sshfl [vmem:[#allocation1 + $0x10] sm:$0xff pattern:$0x75316420]
    %v8676 = vld.sshfl [vmem:[#allocation1 + $0x20] sm:$0xff pattern:$0x75316420]
    %v8677 = vld.sshfl [vmem:[#allocation1 + $0x30] sm:$0xff pattern:$0x75316420]
    %v8682 = vpack.c.bf16 %v8675, %v8674
    %v8683 = vpack.c.bf16 %v8677, %v8676
    %s8684 = scalar_lea.vmem [#allocation5], 2176
    %v8685 = vld [vmem:[%s8684] sm:$0xf]
    %v8686 = vld [vmem:[%s8684 + $0x4] sm:$0xf]
    %v8687 = vld [vmem:[%s8684 + $0x8] sm:$0xf]
    %v8688 = vld [vmem:[%s8684 + $0xc] sm:$0xf]
    %v8689 = vld [vmem:[%s8684 + $0x10] sm:$0xf]
    %v8690 = vld [vmem:[%s8684 + $0x14] sm:$0xf]
    %v8691 = vld [vmem:[%s8684 + $0x18] sm:$0xf]
    %v8692 = vld [vmem:[%s8684 + $0x1c] sm:$0xf]
    %v8693 = vld [vmem:[%s8684 + $0x20] sm:$0xf]
    %v8694 = vld [vmem:[%s8684 + $0x24] sm:$0xf]
    %v8695 = vld [vmem:[%s8684 + $0x28] sm:$0xf]
    %v8696 = vld [vmem:[%s8684 + $0x2c] sm:$0xf]
    %v8697 = vld [vmem:[%s8684 + $0x30] sm:$0xf]
    %v8698 = vld [vmem:[%s8684 + $0x34] sm:$0xf]
    %v8699 = vld [vmem:[%s8684 + $0x38] sm:$0xf]
    %v8700 = vld [vmem:[%s8684 + $0x3c] sm:$0xf]
    %v8717 = vunpack.c.l.b16 %v8685
    %v8718 = vunpack.c.l.b16 %v8686
    %v8719 = vunpack.c.l.b16 %v8687
    %v8720 = vunpack.c.l.b16 %v8688
    %v8721 = vunpack.c.l.b16 %v8689
    %v8722 = vunpack.c.l.b16 %v8690
    %v8723 = vunpack.c.l.b16 %v8691
    %v8724 = vunpack.c.l.b16 %v8692
    %v8725 = vunpack.c.l.b16 %v8693
    %v8726 = vunpack.c.l.b16 %v8694
    %v8727 = vunpack.c.l.b16 %v8695
    %v8728 = vunpack.c.l.b16 %v8696
    %v8729 = vunpack.c.l.b16 %v8697
    %v8730 = vunpack.c.l.b16 %v8698
    %v8731 = vunpack.c.l.b16 %v8699
    %v8732 = vunpack.c.l.b16 %v8700
    %v8733 = vpack.c.b16 %v8718, %v8717
    %v8734 = vpack.c.b16 %v8720, %v8719
    %v8735 = vpack.c.b16 %v8722, %v8721
    %v8736 = vpack.c.b16 %v8724, %v8723
    %v8737 = vpack.c.b16 %v8726, %v8725
    %v8738 = vpack.c.b16 %v8728, %v8727
    %v8739 = vpack.c.b16 %v8730, %v8729
    %v8740 = vpack.c.b16 %v8732, %v8731
    %8749 = vmatpush.bf16.msra.mxu0 %v8740
    %8750 = vmatpush.bf16.msra.mxu0 %v8739
    %8751 = vmatpush.bf16.msra.mxu0 %v8738
    %8752 = vmatpush.bf16.msra.mxu0 %v8737
    %8753 = vmatpush.bf16.msra.mxu0 %v8736
    %8754 = vmatpush.bf16.msra.mxu0 %v8735
    %8755 = vmatpush.bf16.msra.mxu0 %v8734
    %8756 = vmatpush.bf16.msra.mxu0 %v8733
    %8757 = vmatmul.bf16.gmra.mxu0 %v8682
    %v8758 = vpop.f32.mrf.mxu0
    %v8759 = vadd.f32 0.0, %v8758
    %v8760 = vpop.f32.mrf.mxu0
    %v8761 = vadd.f32 0.0, %v8760
    %8762 = vmatmul.bf16.gmra.mxu0 %v8683
    %v8763 = vpop.f32.mrf.mxu0
    %v8764 = vadd.f32 0.0, %v8763
    %v8765 = vpop.f32.mrf.mxu0
    %v8766 = vadd.f32 0.0, %v8765
    %8767 = vdwg.mxu0
    %v8768 = vadd.f32 %v8639, %v8759
    %v8769 = vadd.f32 %v8640, %v8761
    %v8770 = vadd.f32 %v8641, %v8764
    %v8771 = vadd.f32 %v8642, %v8766
    %v8772 = vld [vmem:[%s7283 + $0x2] sm:$0xf]
    %v8773 = vld [vmem:[%s7283 + $0xa] sm:$0xf]
    %v8774 = vld [vmem:[%s7283 + $0x12] sm:$0xf]
    %v8775 = vld [vmem:[%s7283 + $0x1a] sm:$0xf]
    %v8776 = vld [vmem:[%s7283 + $0x32] sm:$0xf]
    %v8777 = vld [vmem:[%s7283 + $0x3a] sm:$0xf]
    %v8778 = vld [vmem:[%s7283 + $0x42] sm:$0xf]
    %v8779 = vld [vmem:[%s7283 + $0x4a] sm:$0xf]
    %8788 = vst [vmem:[#allocation1] ss:$2 sm:$0xff] %v8772
    %s8789 = scalar_lea.vmem [#allocation1], 1
    %8790 = vst [vmem:[%s8789] ss:$2 sm:$0xff] %v8773
    %s8791 = scalar_lea.vmem [#allocation1], 16
    %8792 = vst [vmem:[%s8791] ss:$2 sm:$0xff] %v8774
    %s8793 = scalar_lea.vmem [#allocation1], 17
    %8794 = vst [vmem:[%s8793] ss:$2 sm:$0xff] %v8775
    %s8795 = scalar_lea.vmem [#allocation1], 32
    %8796 = vst [vmem:[%s8795] ss:$2 sm:$0xff] %v8776
    %s8797 = scalar_lea.vmem [#allocation1], 33
    %8798 = vst [vmem:[%s8797] ss:$2 sm:$0xff] %v8777
    %s8799 = scalar_lea.vmem [#allocation1], 48
    %8800 = vst [vmem:[%s8799] ss:$2 sm:$0xff] %v8778
    %s8801 = scalar_lea.vmem [#allocation1], 49
    %8802 = vst [vmem:[%s8801] ss:$2 sm:$0xff] %v8779
    %v8803 = vld.sshfl [vmem:[#allocation1] sm:$0xff pattern:$0x75316420]
    %v8804 = vld.sshfl [vmem:[#allocation1 + $0x10] sm:$0xff pattern:$0x75316420]
    %v8805 = vld.sshfl [vmem:[#allocation1 + $0x20] sm:$0xff pattern:$0x75316420]
    %v8806 = vld.sshfl [vmem:[#allocation1 + $0x30] sm:$0xff pattern:$0x75316420]
    %v8811 = vpack.c.bf16 %v8804, %v8803
    %v8812 = vpack.c.bf16 %v8806, %v8805
    %s8813 = scalar_lea.vmem [#allocation5], 2240
    %v8814 = vld [vmem:[%s8813] sm:$0xf]
    %v8815 = vld [vmem:[%s8813 + $0x4] sm:$0xf]
    %v8816 = vld [vmem:[%s8813 + $0x8] sm:$0xf]
    %v8817 = vld [vmem:[%s8813 + $0xc] sm:$0xf]
    %v8818 = vld [vmem:[%s8813 + $0x10] sm:$0xf]
    %v8819 = vld [vmem:[%s8813 + $0x14] sm:$0xf]
    %v8820 = vld [vmem:[%s8813 + $0x18] sm:$0xf]
    %v8821 = vld [vmem:[%s8813 + $0x1c] sm:$0xf]
    %v8822 = vld [vmem:[%s8813 + $0x20] sm:$0xf]
    %v8823 = vld [vmem:[%s8813 + $0x24] sm:$0xf]
    %v8824 = vld [vmem:[%s8813 + $0x28] sm:$0xf]
    %v8825 = vld [vmem:[%s8813 + $0x2c] sm:$0xf]
    %v8826 = vld [vmem:[%s8813 + $0x30] sm:$0xf]
    %v8827 = vld [vmem:[%s8813 + $0x34] sm:$0xf]
    %v8828 = vld [vmem:[%s8813 + $0x38] sm:$0xf]
    %v8829 = vld [vmem:[%s8813 + $0x3c] sm:$0xf]
    %v8846 = vunpack.c.l.b16 %v8814
    %v8847 = vunpack.c.l.b16 %v8815
    %v8848 = vunpack.c.l.b16 %v8816
    %v8849 = vunpack.c.l.b16 %v8817
    %v8850 = vunpack.c.l.b16 %v8818
    %v8851 = vunpack.c.l.b16 %v8819
    %v8852 = vunpack.c.l.b16 %v8820
    %v8853 = vunpack.c.l.b16 %v8821
    %v8854 = vunpack.c.l.b16 %v8822
    %v8855 = vunpack.c.l.b16 %v8823
    %v8856 = vunpack.c.l.b16 %v8824
    %v8857 = vunpack.c.l.b16 %v8825
    %v8858 = vunpack.c.l.b16 %v8826
    %v8859 = vunpack.c.l.b16 %v8827
    %v8860 = vunpack.c.l.b16 %v8828
    %v8861 = vunpack.c.l.b16 %v8829
    %v8862 = vpack.c.b16 %v8847, %v8846
    %v8863 = vpack.c.b16 %v8849, %v8848
    %v8864 = vpack.c.b16 %v8851, %v8850
    %v8865 = vpack.c.b16 %v8853, %v8852
    %v8866 = vpack.c.b16 %v8855, %v8854
    %v8867 = vpack.c.b16 %v8857, %v8856
    %v8868 = vpack.c.b16 %v8859, %v8858
    %v8869 = vpack.c.b16 %v8861, %v8860
    %8878 = vmatpush.bf16.msra.mxu0 %v8869
    %8879 = vmatpush.bf16.msra.mxu0 %v8868
    %8880 = vmatpush.bf16.msra.mxu0 %v8867
    %8881 = vmatpush.bf16.msra.mxu0 %v8866
    %8882 = vmatpush.bf16.msra.mxu0 %v8865
    %8883 = vmatpush.bf16.msra.mxu0 %v8864
    %8884 = vmatpush.bf16.msra.mxu0 %v8863
    %8885 = vmatpush.bf16.msra.mxu0 %v8862
    %8886 = vmatmul.bf16.gmra.mxu0 %v8811
    %v8887 = vpop.f32.mrf.mxu0
    %v8888 = vadd.f32 0.0, %v8887
    %v8889 = vpop.f32.mrf.mxu0
    %v8890 = vadd.f32 0.0, %v8889
    %8891 = vmatmul.bf16.gmra.mxu0 %v8812
    %v8892 = vpop.f32.mrf.mxu0
    %v8893 = vadd.f32 0.0, %v8892
    %v8894 = vpop.f32.mrf.mxu0
    %v8895 = vadd.f32 0.0, %v8894
    %8896 = vdwg.mxu0
    %v8897 = vadd.f32 %v8768, %v8888
    %v8898 = vadd.f32 %v8769, %v8890
    %v8899 = vadd.f32 %v8770, %v8893
    %v8900 = vadd.f32 %v8771, %v8895
    %v8901 = vadd.f32 %v8897, %v8898
    %v8902 = vadd.f32 %v8901, %v8899
    %v8903 = vadd.f32 %v8902, %v8900
    %v8904 = vrot.slane %v8903, 4
    %v8905 = vadd.f32 %v8903, %v8904
    %v8906 = vrot.slane %v8905, 2
    %v8907 = vadd.f32 %v8905, %v8906
    %v8908 = vrot.slane %v8907, 1
    %v8909 = vadd.f32 %v8907, %v8908
    %v8910 = vmul.f32 %v8897, %v8897
    %v8911 = vmul.f32 %v8898, %v8898
    %v8912 = vmul.f32 %v8899, %v8899
    %v8913 = vmul.f32 %v8900, %v8900
    %v8914 = vadd.f32 %v8910, %v8911
    %v8915 = vadd.f32 %v8914, %v8912
    %v8916 = vadd.f32 %v8915, %v8913
    %v8917 = vrot.slane %v8916, 4
    %v8918 = vadd.f32 %v8916, %v8917
    %v8919 = vrot.slane %v8918, 2
    %v8920 = vadd.f32 %v8918, %v8919
    %v8921 = vrot.slane %v8920, 1
    %v8922 = vadd.f32 %v8920, %v8921
    %v8923 = vmul.f32 %v8909, 0.03125
    %v8924 = vmul.f32 %v8922, 0.03125
    %v8925 = vmul.f32 %v8923, %v8923
    %v8926 = vsub.f32 %v8924, %v8925
    %v8927 = vmax.f32 %v8926, 0.0
    %v8928 = vld [vmem:[#allocation7 + $0x3] sm:$0x1]
    %v8929 = vadd.f32 %v8927, 1e-05
    %v8930 = vrsqrt.pop %v8929
    %v8931 = vmul.f32 %v8930, %v8929
    %v8932 = vmul.f32 %v8931, %v8930
    %v8933 = vmul.f32 0.5, %v8932
    %v8934 = vsub.f32 1.5, %v8933
    %v8935 = vmul.f32 %v8930, %v8934
    %vm8936 = vweird.f32 %v8929
    %vm8937 = vweird.f32 %v8930
    %vm8938 = vmor %vm8936, %vm8937
    %v8939 = vsel %vm8938, %v8930, %v8935
    %v8940 = vmul.f32 %v8928, %v8939
    %v8941 = vld [vmem:[#allocation9 + $0x3] sm:$0x1]
    %v8942 = vmul.f32 %v8923, %v8940
    %v8943 = vsub.f32 %v8941, %v8942
    %v8944 = vperm.slane %v8940, 0
    %v8945 = vmul.f32 %v8897, %v8944
    %v8946 = vmul.f32 %v8898, %v8944
    %v8947 = vmul.f32 %v8899, %v8944
    %v8948 = vmul.f32 %v8900, %v8944
    %v8949 = vperm.slane %v8943, 0
    %v8950 = vadd.f32 %v8945, %v8949
    %v8951 = vadd.f32 %v8946, %v8949
    %v8952 = vadd.f32 %v8947, %v8949
    %v8953 = vadd.f32 %v8948, %v8949
    %v8954 = vmax.f32 %v8950, 0.0
    %v8955 = vmax.f32 %v8951, 0.0
    %v8956 = vmax.f32 %v8952, 0.0
    %v8957 = vmax.f32 %v8953, 0.0
    %v8962 = vrot.slane %v8954, 4
    %v8963 = vrot.slane %v8955, 4
    %v8964 = vrot.slane %v8956, 4
    %v8965 = vrot.slane %v8957, 4
    %8970 = vst [vmem:[%s5] sm:$0xf] %v8954
    %8971 = vst [vmem:[%s5 + $0x4] sm:$0xf] %v8962
    %8972 = vst [vmem:[%s5 + $0x8] sm:$0xf] %v8955
    %8973 = vst [vmem:[%s5 + $0xc] sm:$0xf] %v8963
    %8974 = vst [vmem:[%s5 + $0x10] sm:$0xf] %v8956
    %8975 = vst [vmem:[%s5 + $0x14] sm:$0xf] %v8964
    %8976 = vst [vmem:[%s5 + $0x18] sm:$0xf] %v8957
    %8977 = vst [vmem:[%s5 + $0x1c] sm:$0xf] %v8965
    %v8978 = vrot.slane %v8954, 2
    %v8979 = vrot.slane %v8954, 6
    %v8980 = vrot.slane %v8955, 2
    %v8981 = vrot.slane %v8955, 6
    %v8982 = vrot.slane %v8956, 2
    %v8983 = vrot.slane %v8956, 6
    %v8984 = vrot.slane %v8957, 2
    %v8985 = vrot.slane %v8957, 6
    %v8994 = vsel %vm575, %v8954, -inf
    %v8995 = vrot.slane %v8994, 4
    %v8996 = vmax.f32 %v8994, %v8995
    %v8997 = vrot.slane %v8996, 2
    %v8998 = vmax.f32 %v8996, %v8997
    %v8999 = vrot.slane %v8998, 1
    %v9000 = vmax.f32 %v8998, %v8999
    %v9001 = vsel %vm575, %v8978, -inf
    %v9002 = vrot.slane %v9001, 4
    %v9003 = vmax.f32 %v9001, %v9002
    %v9004 = vrot.slane %v9003, 2
    %v9005 = vmax.f32 %v9003, %v9004
    %v9006 = vrot.slane %v9005, 1
    %v9007 = vmax.f32 %v9005, %v9006
    %v9008 = vsel %vm575, %v8962, -inf
    %v9009 = vrot.slane %v9008, 4
    %v9010 = vmax.f32 %v9008, %v9009
    %v9011 = vrot.slane %v9010, 2
    %v9012 = vmax.f32 %v9010, %v9011
    %v9013 = vrot.slane %v9012, 1
    %v9014 = vmax.f32 %v9012, %v9013
    %v9015 = vsel %vm575, %v8979, -inf
    %v9016 = vrot.slane %v9015, 4
    %v9017 = vmax.f32 %v9015, %v9016
    %v9018 = vrot.slane %v9017, 2
    %v9019 = vmax.f32 %v9017, %v9018
    %v9020 = vrot.slane %v9019, 1
    %v9021 = vmax.f32 %v9019, %v9020
    %v9022 = vsel %vm575, %v8955, -inf
    %v9023 = vrot.slane %v9022, 4
    %v9024 = vmax.f32 %v9022, %v9023
    %v9025 = vrot.slane %v9024, 2
    %v9026 = vmax.f32 %v9024, %v9025
    %v9027 = vrot.slane %v9026, 1
    %v9028 = vmax.f32 %v9026, %v9027
    %v9029 = vsel %vm575, %v8980, -inf
    %v9030 = vrot.slane %v9029, 4
    %v9031 = vmax.f32 %v9029, %v9030
    %v9032 = vrot.slane %v9031, 2
    %v9033 = vmax.f32 %v9031, %v9032
    %v9034 = vrot.slane %v9033, 1
    %v9035 = vmax.f32 %v9033, %v9034
    %v9036 = vsel %vm575, %v8963, -inf
    %v9037 = vrot.slane %v9036, 4
    %v9038 = vmax.f32 %v9036, %v9037
    %v9039 = vrot.slane %v9038, 2
    %v9040 = vmax.f32 %v9038, %v9039
    %v9041 = vrot.slane %v9040, 1
    %v9042 = vmax.f32 %v9040, %v9041
    %v9043 = vsel %vm575, %v8981, -inf
    %v9044 = vrot.slane %v9043, 4
    %v9045 = vmax.f32 %v9043, %v9044
    %v9046 = vrot.slane %v9045, 2
    %v9047 = vmax.f32 %v9045, %v9046
    %v9048 = vrot.slane %v9047, 1
    %v9049 = vmax.f32 %v9047, %v9048
    %v9050 = vsel %vm575, %v8956, -inf
    %v9051 = vrot.slane %v9050, 4
    %v9052 = vmax.f32 %v9050, %v9051
    %v9053 = vrot.slane %v9052, 2
    %v9054 = vmax.f32 %v9052, %v9053
    %v9055 = vrot.slane %v9054, 1
    %v9056 = vmax.f32 %v9054, %v9055
    %v9057 = vsel %vm575, %v8982, -inf
    %v9058 = vrot.slane %v9057, 4
    %v9059 = vmax.f32 %v9057, %v9058
    %v9060 = vrot.slane %v9059, 2
    %v9061 = vmax.f32 %v9059, %v9060
    %v9062 = vrot.slane %v9061, 1
    %v9063 = vmax.f32 %v9061, %v9062
    %v9064 = vsel %vm575, %v8964, -inf
    %v9065 = vrot.slane %v9064, 4
    %v9066 = vmax.f32 %v9064, %v9065
    %v9067 = vrot.slane %v9066, 2
    %v9068 = vmax.f32 %v9066, %v9067
    %v9069 = vrot.slane %v9068, 1
    %v9070 = vmax.f32 %v9068, %v9069
    %v9071 = vsel %vm575, %v8983, -inf
    %v9072 = vrot.slane %v9071, 4
    %v9073 = vmax.f32 %v9071, %v9072
    %v9074 = vrot.slane %v9073, 2
    %v9075 = vmax.f32 %v9073, %v9074
    %v9076 = vrot.slane %v9075, 1
    %v9077 = vmax.f32 %v9075, %v9076
    %v9078 = vsel %vm575, %v8957, -inf
    %v9079 = vrot.slane %v9078, 4
    %v9080 = vmax.f32 %v9078, %v9079
    %v9081 = vrot.slane %v9080, 2
    %v9082 = vmax.f32 %v9080, %v9081
    %v9083 = vrot.slane %v9082, 1
    %v9084 = vmax.f32 %v9082, %v9083
    %v9085 = vsel %vm575, %v8984, -inf
    %v9086 = vrot.slane %v9085, 4
    %v9087 = vmax.f32 %v9085, %v9086
    %v9088 = vrot.slane %v9087, 2
    %v9089 = vmax.f32 %v9087, %v9088
    %v9090 = vrot.slane %v9089, 1
    %v9091 = vmax.f32 %v9089, %v9090
    %v9092 = vsel %vm575, %v8965, -inf
    %v9093 = vrot.slane %v9092, 4
    %v9094 = vmax.f32 %v9092, %v9093
    %v9095 = vrot.slane %v9094, 2
    %v9096 = vmax.f32 %v9094, %v9095
    %v9097 = vrot.slane %v9096, 1
    %v9098 = vmax.f32 %v9096, %v9097
    %v9099 = vsel %vm575, %v8985, -inf
    %v9100 = vrot.slane %v9099, 4
    %v9101 = vmax.f32 %v9099, %v9100
    %v9102 = vrot.slane %v9101, 2
    %v9103 = vmax.f32 %v9101, %v9102
    %v9104 = vrot.slane %v9103, 1
    %v9105 = vmax.f32 %v9103, %v9104
    %v9106 = vmax.f32 %v9000, %v9014
    %v9107 = vmax.f32 %v9007, %v9021
    %v9108 = vmax.f32 %v9028, %v9042
    %v9109 = vmax.f32 %v9035, %v9049
    %v9110 = vmax.f32 %v9056, %v9070
    %v9111 = vmax.f32 %v9063, %v9077
    %v9112 = vmax.f32 %v9084, %v9098
    %v9113 = vmax.f32 %v9091, %v9105
    %9114 = vst [vmem:[#allocation4] sm:$0xf] 0.0
    %9115 = vst [vmem:[#allocation4 + $0x10] sm:$0xf] 0.0
    %s9116 = scalar_lea.vmem [#allocation4], 12
    %9117 = vst [vmem:[%s9116] sm:$0xf] 0.0
    %9118 = vst [vmem:[%s9116 + $0x10] sm:$0xf] 0.0
    %9119 = vst [vmem:[#allocation4] sm:$0x1] 0.0
    %9120 = vst [vmem:[#allocation4 + $0x4] sm:$0x1] 0.0
    %9121 = vst [vmem:[#allocation4 + $0x8] sm:$0x1] 0.0
    %9122 = vst [vmem:[#allocation4 + $0xc] sm:$0x1] 0.0
    %9123 = vst [vmem:[#allocation4 + $0x10] sm:$0x1] 0.0
    %9124 = vst [vmem:[#allocation4 + $0x14] sm:$0x1] 0.0
    %9125 = vst [vmem:[#allocation4 + $0x18] sm:$0x1] 0.0
    %9126 = vst [vmem:[#allocation4 + $0x1c] sm:$0x1] 0.0
    %9127 = vst [vmem:[#allocation4 + $0x3] sm:$0x1] 0.0
    %9128 = vst [vmem:[#allocation4 + $0x7] sm:$0x1] 0.0
    %9129 = vst [vmem:[#allocation4 + $0xb] sm:$0x1] 0.0
    %9130 = vst [vmem:[#allocation4 + $0xf] sm:$0x1] 0.0
    %9131 = vst [vmem:[#allocation4 + $0x13] sm:$0x1] 0.0
    %9132 = vst [vmem:[#allocation4 + $0x17] sm:$0x1] 0.0
    %9133 = vst [vmem:[#allocation4 + $0x1b] sm:$0x1] 0.0
    %9134 = vst [vmem:[#allocation4 + $0x1f] sm:$0x1] 0.0
    %v9143 = vsel %vm2673, %v9107, %v9106
    %v9144 = vsel %vm2673, %v9109, %v9108
    %v9145 = vsel %vm2673, %v9111, %v9110
    %v9146 = vsel %vm2673, %v9113, %v9112
    %s9151 = scalar_lea.vmem [#allocation4], 4
    %9152 = vst [vmem:[%s9151 + $0x1] sm:$0x3] %v9143
    %9153 = vst [vmem:[%s9151 + $0x5] sm:$0x3] %v9144
    %9154 = vst [vmem:[%s9151 + $0x11] sm:$0x3] %v9145
    %9155 = vst [vmem:[%s9151 + $0x15] sm:$0x3] %v9146
    %v9156 = vld [vmem:[#allocation4] sm:$0x3]
    %v9157 = vld [vmem:[#allocation4 + $0x4] sm:$0x3]
    %v9158 = vld [vmem:[#allocation4 + $0x10] sm:$0x3]
    %v9159 = vld [vmem:[#allocation4 + $0x14] sm:$0x3]
    %9164 = vst [vmem:[#allocation1] ss:$4 sm:$0xff] %v9156
    %s9165 = scalar_lea.vmem [#allocation1], 1
    %9166 = vst [vmem:[%s9165] ss:$4 sm:$0xff] %v9157
    %s9167 = scalar_lea.vmem [#allocation1], 2
    %9168 = vst [vmem:[%s9167] ss:$4 sm:$0xff] %v9158
    %s9169 = scalar_lea.vmem [#allocation1], 3
    %9170 = vst [vmem:[%s9169] ss:$4 sm:$0xff] %v9159
    %v9171 = vld.sshfl [vmem:[#allocation1] sm:$0xff pattern:$0x73625140]
    %v9173 = vpack.c.bf16 %v9171, %v9171
    %s9174 = scalar_lea.vmem [#allocation5], 2304
    %v9175 = vld [vmem:[%s9174] sm:$0xf]
    %v9176 = vld [vmem:[%s9174 + $0x4] sm:$0xf]
    %v9177 = vld [vmem:[%s9174 + $0x8] sm:$0xf]
    %v9178 = vld [vmem:[%s9174 + $0xc] sm:$0xf]
    %v9179 = vld [vmem:[%s9174 + $0x10] sm:$0xf]
    %v9180 = vld [vmem:[%s9174 + $0x14] sm:$0xf]
    %v9181 = vld [vmem:[%s9174 + $0x18] sm:$0xf]
    %v9182 = vld [vmem:[%s9174 + $0x1c] sm:$0xf]
    %v9183 = vld [vmem:[%s9174 + $0x20] sm:$0xf]
    %v9184 = vld [vmem:[%s9174 + $0x24] sm:$0xf]
    %v9185 = vld [vmem:[%s9174 + $0x28] sm:$0xf]
    %v9186 = vld [vmem:[%s9174 + $0x2c] sm:$0xf]
    %v9187 = vld [vmem:[%s9174 + $0x30] sm:$0xf]
    %v9188 = vld [vmem:[%s9174 + $0x34] sm:$0xf]
    %v9189 = vld [vmem:[%s9174 + $0x38] sm:$0xf]
    %v9190 = vld [vmem:[%s9174 + $0x3c] sm:$0xf]
    %v9191 = vld [vmem:[#allocation4 + $0x1] sm:$0x3]
    %v9192 = vld [vmem:[#allocation4 + $0x5] sm:$0x3]
    %v9193 = vld [vmem:[#allocation4 + $0x11] sm:$0x3]
    %v9194 = vld [vmem:[#allocation4 + $0x15] sm:$0x3]
    %9199 = vst [vmem:[#allocation1] ss:$4 sm:$0xff] %v9191
    %s9200 = scalar_lea.vmem [#allocation1], 1
    %9201 = vst [vmem:[%s9200] ss:$4 sm:$0xff] %v9192
    %s9202 = scalar_lea.vmem [#allocation1], 2
    %9203 = vst [vmem:[%s9202] ss:$4 sm:$0xff] %v9193
    %s9204 = scalar_lea.vmem [#allocation1], 3
    %9205 = vst [vmem:[%s9204] ss:$4 sm:$0xff] %v9194
    %v9206 = vld.sshfl [vmem:[#allocation1] sm:$0xff pattern:$0x73625140]
    %v9208 = vpack.c.bf16 %v9206, %v9206
    %s9209 = scalar_lea.vmem [#allocation5], 2368
    %v9210 = vld [vmem:[%s9209] sm:$0xf]
    %v9211 = vld [vmem:[%s9209 + $0x4] sm:$0xf]
    %v9212 = vld [vmem:[%s9209 + $0x8] sm:$0xf]
    %v9213 = vld [vmem:[%s9209 + $0xc] sm:$0xf]
    %v9214 = vld [vmem:[%s9209 + $0x10] sm:$0xf]
    %v9215 = vld [vmem:[%s9209 + $0x14] sm:$0xf]
    %v9216 = vld [vmem:[%s9209 + $0x18] sm:$0xf]
    %v9217 = vld [vmem:[%s9209 + $0x1c] sm:$0xf]
    %v9218 = vld [vmem:[%s9209 + $0x20] sm:$0xf]
    %v9219 = vld [vmem:[%s9209 + $0x24] sm:$0xf]
    %v9220 = vld [vmem:[%s9209 + $0x28] sm:$0xf]
    %v9221 = vld [vmem:[%s9209 + $0x2c] sm:$0xf]
    %v9222 = vld [vmem:[%s9209 + $0x30] sm:$0xf]
    %v9223 = vld [vmem:[%s9209 + $0x34] sm:$0xf]
    %v9224 = vld [vmem:[%s9209 + $0x38] sm:$0xf]
    %v9225 = vld [vmem:[%s9209 + $0x3c] sm:$0xf]
    %v9242 = vunpack.c.l.b16 %v9210
    %v9243 = vunpack.c.l.b16 %v9211
    %v9244 = vunpack.c.l.b16 %v9212
    %v9245 = vunpack.c.l.b16 %v9213
    %v9246 = vunpack.c.l.b16 %v9214
    %v9247 = vunpack.c.l.b16 %v9215
    %v9248 = vunpack.c.l.b16 %v9216
    %v9249 = vunpack.c.l.b16 %v9217
    %v9250 = vunpack.c.l.b16 %v9218
    %v9251 = vunpack.c.l.b16 %v9219
    %v9252 = vunpack.c.l.b16 %v9220
    %v9253 = vunpack.c.l.b16 %v9221
    %v9254 = vunpack.c.l.b16 %v9222
    %v9255 = vunpack.c.l.b16 %v9223
    %v9256 = vunpack.c.l.b16 %v9224
    %v9257 = vunpack.c.l.b16 %v9225
    %v9258 = vpack.c.b16 %v9243, %v9242
    %v9259 = vpack.c.b16 %v9245, %v9244
    %v9260 = vpack.c.b16 %v9247, %v9246
    %v9261 = vpack.c.b16 %v9249, %v9248
    %v9262 = vpack.c.b16 %v9251, %v9250
    %v9263 = vpack.c.b16 %v9253, %v9252
    %v9264 = vpack.c.b16 %v9255, %v9254
    %v9265 = vpack.c.b16 %v9257, %v9256
    %9274 = vmatpush.bf16.msra.mxu0 %v9265
    %9275 = vmatpush.bf16.msra.mxu0 %v9264
    %9276 = vmatpush.bf16.msra.mxu0 %v9263
    %9277 = vmatpush.bf16.msra.mxu0 %v9262
    %9278 = vmatpush.bf16.msra.mxu0 %v9261
    %9279 = vmatpush.bf16.msra.mxu0 %v9260
    %9280 = vmatpush.bf16.msra.mxu0 %v9259
    %9281 = vmatpush.bf16.msra.mxu0 %v9258
    %9282 = vmatmul.bf16.gmra.mxu0 %v9208
    %v9283 = vpop.f32.mrf.mxu0
    %v9284 = vadd.f32 0.0, %v9283
    %v9285 = vpop.f32.mrf.mxu0
    %9286 = vdwg.mxu0
    %v9303 = vunpack.c.l.b16 %v9175
    %v9304 = vunpack.c.l.b16 %v9176
    %v9305 = vunpack.c.l.b16 %v9177
    %v9306 = vunpack.c.l.b16 %v9178
    %v9307 = vunpack.c.l.b16 %v9179
    %v9308 = vunpack.c.l.b16 %v9180
    %v9309 = vunpack.c.l.b16 %v9181
    %v9310 = vunpack.c.l.b16 %v9182
    %v9311 = vunpack.c.l.b16 %v9183
    %v9312 = vunpack.c.l.b16 %v9184
    %v9313 = vunpack.c.l.b16 %v9185
    %v9314 = vunpack.c.l.b16 %v9186
    %v9315 = vunpack.c.l.b16 %v9187
    %v9316 = vunpack.c.l.b16 %v9188
    %v9317 = vunpack.c.l.b16 %v9189
    %v9318 = vunpack.c.l.b16 %v9190
    %v9319 = vpack.c.b16 %v9304, %v9303
    %v9320 = vpack.c.b16 %v9306, %v9305
    %v9321 = vpack.c.b16 %v9308, %v9307
    %v9322 = vpack.c.b16 %v9310, %v9309
    %v9323 = vpack.c.b16 %v9312, %v9311
    %v9324 = vpack.c.b16 %v9314, %v9313
    %v9325 = vpack.c.b16 %v9316, %v9315
    %v9326 = vpack.c.b16 %v9318, %v9317
    %9335 = vmatpush.bf16.msra.mxu0 %v9326
    %9336 = vmatpush.bf16.msra.mxu0 %v9325
    %9337 = vmatpush.bf16.msra.mxu0 %v9324
    %9338 = vmatpush.bf16.msra.mxu0 %v9323
    %9339 = vmatpush.bf16.msra.mxu0 %v9322
    %9340 = vmatpush.bf16.msra.mxu0 %v9321
    %9341 = vmatpush.bf16.msra.mxu0 %v9320
    %9342 = vmatpush.bf16.msra.mxu0 %v9319
    %9343 = vmatmul.bf16.gmra.mxu0 %v9173
    %v9344 = vpop.f32.mrf.mxu0
    %v9345 = vadd.f32 %v9284, %v9344
    %v9346 = vpop.f32.mrf.mxu0
    %9347 = vdwg.mxu0
    %v9348 = vld [vmem:[#allocation4 + $0x2] sm:$0x3]
    %v9349 = vld [vmem:[#allocation4 + $0x6] sm:$0x3]
    %v9350 = vld [vmem:[#allocation4 + $0x12] sm:$0x3]
    %v9351 = vld [vmem:[#allocation4 + $0x16] sm:$0x3]
    %9356 = vst [vmem:[#allocation1] ss:$4 sm:$0xff] %v9348
    %s9357 = scalar_lea.vmem [#allocation1], 1
    %9358 = vst [vmem:[%s9357] ss:$4 sm:$0xff] %v9349
    %s9359 = scalar_lea.vmem [#allocation1], 2
    %9360 = vst [vmem:[%s9359] ss:$4 sm:$0xff] %v9350
    %s9361 = scalar_lea.vmem [#allocation1], 3
    %9362 = vst [vmem:[%s9361] ss:$4 sm:$0xff] %v9351
    %v9363 = vld.sshfl [vmem:[#allocation1] sm:$0xff pattern:$0x73625140]
    %v9365 = vpack.c.bf16 %v9363, %v9363
    %s9366 = scalar_lea.vmem [#allocation5], 2432
    %v9367 = vld [vmem:[%s9366] sm:$0xf]
    %v9368 = vld [vmem:[%s9366 + $0x4] sm:$0xf]
    %v9369 = vld [vmem:[%s9366 + $0x8] sm:$0xf]
    %v9370 = vld [vmem:[%s9366 + $0xc] sm:$0xf]
    %v9371 = vld [vmem:[%s9366 + $0x10] sm:$0xf]
    %v9372 = vld [vmem:[%s9366 + $0x14] sm:$0xf]
    %v9373 = vld [vmem:[%s9366 + $0x18] sm:$0xf]
    %v9374 = vld [vmem:[%s9366 + $0x1c] sm:$0xf]
    %v9375 = vld [vmem:[%s9366 + $0x20] sm:$0xf]
    %v9376 = vld [vmem:[%s9366 + $0x24] sm:$0xf]
    %v9377 = vld [vmem:[%s9366 + $0x28] sm:$0xf]
    %v9378 = vld [vmem:[%s9366 + $0x2c] sm:$0xf]
    %v9379 = vld [vmem:[%s9366 + $0x30] sm:$0xf]
    %v9380 = vld [vmem:[%s9366 + $0x34] sm:$0xf]
    %v9381 = vld [vmem:[%s9366 + $0x38] sm:$0xf]
    %v9382 = vld [vmem:[%s9366 + $0x3c] sm:$0xf]
    %v9399 = vunpack.c.l.b16 %v9367
    %v9400 = vunpack.c.l.b16 %v9368
    %v9401 = vunpack.c.l.b16 %v9369
    %v9402 = vunpack.c.l.b16 %v9370
    %v9403 = vunpack.c.l.b16 %v9371
    %v9404 = vunpack.c.l.b16 %v9372
    %v9405 = vunpack.c.l.b16 %v9373
    %v9406 = vunpack.c.l.b16 %v9374
    %v9407 = vunpack.c.l.b16 %v9375
    %v9408 = vunpack.c.l.b16 %v9376
    %v9409 = vunpack.c.l.b16 %v9377
    %v9410 = vunpack.c.l.b16 %v9378
    %v9411 = vunpack.c.l.b16 %v9379
    %v9412 = vunpack.c.l.b16 %v9380
    %v9413 = vunpack.c.l.b16 %v9381
    %v9414 = vunpack.c.l.b16 %v9382
    %v9415 = vpack.c.b16 %v9400, %v9399
    %v9416 = vpack.c.b16 %v9402, %v9401
    %v9417 = vpack.c.b16 %v9404, %v9403
    %v9418 = vpack.c.b16 %v9406, %v9405
    %v9419 = vpack.c.b16 %v9408, %v9407
    %v9420 = vpack.c.b16 %v9410, %v9409
    %v9421 = vpack.c.b16 %v9412, %v9411
    %v9422 = vpack.c.b16 %v9414, %v9413
    %9431 = vmatpush.bf16.msra.mxu0 %v9422
    %9432 = vmatpush.bf16.msra.mxu0 %v9421
    %9433 = vmatpush.bf16.msra.mxu0 %v9420
    %9434 = vmatpush.bf16.msra.mxu0 %v9419
    %9435 = vmatpush.bf16.msra.mxu0 %v9418
    %9436 = vmatpush.bf16.msra.mxu0 %v9417
    %9437 = vmatpush.bf16.msra.mxu0 %v9416
    %9438 = vmatpush.bf16.msra.mxu0 %v9415
    %9439 = vmatmul.bf16.gmra.mxu0 %v9365
    %v9440 = vpop.f32.mrf.mxu0
    %v9441 = vadd.f32 0.0, %v9440
    %v9442 = vpop.f32.mrf.mxu0
    %9443 = vdwg.mxu0
    %v9444 = vadd.f32 %v9345, %v9441
    %v9445 = vld [vmem:[%s9151] sm:$0x3]
    %v9446 = vld [vmem:[%s9151 + $0x4] sm:$0x3]
    %v9447 = vld [vmem:[%s9151 + $0x10] sm:$0x3]
    %v9448 = vld [vmem:[%s9151 + $0x14] sm:$0x3]
    %9453 = vst [vmem:[#allocation1] ss:$4 sm:$0xff] %v9445
    %s9454 = scalar_lea.vmem [#allocation1], 1
    %9455 = vst [vmem:[%s9454] ss:$4 sm:$0xff] %v9446
    %s9456 = scalar_lea.vmem [#allocation1], 2
    %9457 = vst [vmem:[%s9456] ss:$4 sm:$0xff] %v9447
    %s9458 = scalar_lea.vmem [#allocation1], 3
    %9459 = vst [vmem:[%s9458] ss:$4 sm:$0xff] %v9448
    %v9460 = vld.sshfl [vmem:[#allocation1] sm:$0xff pattern:$0x73625140]
    %v9462 = vpack.c.bf16 %v9460, %v9460
    %s9463 = scalar_lea.vmem [#allocation5], 2496
    %v9464 = vld [vmem:[%s9463] sm:$0xf]
    %v9465 = vld [vmem:[%s9463 + $0x4] sm:$0xf]
    %v9466 = vld [vmem:[%s9463 + $0x8] sm:$0xf]
    %v9467 = vld [vmem:[%s9463 + $0xc] sm:$0xf]
    %v9468 = vld [vmem:[%s9463 + $0x10] sm:$0xf]
    %v9469 = vld [vmem:[%s9463 + $0x14] sm:$0xf]
    %v9470 = vld [vmem:[%s9463 + $0x18] sm:$0xf]
    %v9471 = vld [vmem:[%s9463 + $0x1c] sm:$0xf]
    %v9472 = vld [vmem:[%s9463 + $0x20] sm:$0xf]
    %v9473 = vld [vmem:[%s9463 + $0x24] sm:$0xf]
    %v9474 = vld [vmem:[%s9463 + $0x28] sm:$0xf]
    %v9475 = vld [vmem:[%s9463 + $0x2c] sm:$0xf]
    %v9476 = vld [vmem:[%s9463 + $0x30] sm:$0xf]
    %v9477 = vld [vmem:[%s9463 + $0x34] sm:$0xf]
    %v9478 = vld [vmem:[%s9463 + $0x38] sm:$0xf]
    %v9479 = vld [vmem:[%s9463 + $0x3c] sm:$0xf]
    %v9496 = vunpack.c.l.b16 %v9464
    %v9497 = vunpack.c.l.b16 %v9465
    %v9498 = vunpack.c.l.b16 %v9466
    %v9499 = vunpack.c.l.b16 %v9467
    %v9500 = vunpack.c.l.b16 %v9468
    %v9501 = vunpack.c.l.b16 %v9469
    %v9502 = vunpack.c.l.b16 %v9470
    %v9503 = vunpack.c.l.b16 %v9471
    %v9504 = vunpack.c.l.b16 %v9472
    %v9505 = vunpack.c.l.b16 %v9473
    %v9506 = vunpack.c.l.b16 %v9474
    %v9507 = vunpack.c.l.b16 %v9475
    %v9508 = vunpack.c.l.b16 %v9476
    %v9509 = vunpack.c.l.b16 %v9477
    %v9510 = vunpack.c.l.b16 %v9478
    %v9511 = vunpack.c.l.b16 %v9479
    %v9512 = vpack.c.b16 %v9497, %v9496
    %v9513 = vpack.c.b16 %v9499, %v9498
    %v9514 = vpack.c.b16 %v9501, %v9500
    %v9515 = vpack.c.b16 %v9503, %v9502
    %v9516 = vpack.c.b16 %v9505, %v9504
    %v9517 = vpack.c.b16 %v9507, %v9506
    %v9518 = vpack.c.b16 %v9509, %v9508
    %v9519 = vpack.c.b16 %v9511, %v9510
    %9528 = vmatpush.bf16.msra.mxu0 %v9519
    %9529 = vmatpush.bf16.msra.mxu0 %v9518
    %9530 = vmatpush.bf16.msra.mxu0 %v9517
    %9531 = vmatpush.bf16.msra.mxu0 %v9516
    %9532 = vmatpush.bf16.msra.mxu0 %v9515
    %9533 = vmatpush.bf16.msra.mxu0 %v9514
    %9534 = vmatpush.bf16.msra.mxu0 %v9513
    %9535 = vmatpush.bf16.msra.mxu0 %v9512
    %9536 = vmatmul.bf16.gmra.mxu0 %v9462
    %v9537 = vpop.f32.mrf.mxu0
    %v9538 = vadd.f32 0.0, %v9537
    %v9539 = vpop.f32.mrf.mxu0
    %9540 = vdwg.mxu0
    %v9541 = vadd.f32 %v9444, %v9538
    %v9542 = vld [vmem:[%s9151 + $0x1] sm:$0x3]
    %v9543 = vld [vmem:[%s9151 + $0x5] sm:$0x3]
    %v9544 = vld [vmem:[%s9151 + $0x11] sm:$0x3]
    %v9545 = vld [vmem:[%s9151 + $0x15] sm:$0x3]
    %9550 = vst [vmem:[#allocation1] ss:$4 sm:$0xff] %v9542
    %s9551 = scalar_lea.vmem [#allocation1], 1
    %9552 = vst [vmem:[%s9551] ss:$4 sm:$0xff] %v9543
    %s9553 = scalar_lea.vmem [#allocation1], 2
    %9554 = vst [vmem:[%s9553] ss:$4 sm:$0xff] %v9544
    %s9555 = scalar_lea.vmem [#allocation1], 3
    %9556 = vst [vmem:[%s9555] ss:$4 sm:$0xff] %v9545
    %v9557 = vld.sshfl [vmem:[#allocation1] sm:$0xff pattern:$0x73625140]
    %v9559 = vpack.c.bf16 %v9557, %v9557
    %s9560 = scalar_lea.vmem [#allocation5], 2560
    %v9561 = vld [vmem:[%s9560] sm:$0xf]
    %v9562 = vld [vmem:[%s9560 + $0x4] sm:$0xf]
    %v9563 = vld [vmem:[%s9560 + $0x8] sm:$0xf]
    %v9564 = vld [vmem:[%s9560 + $0xc] sm:$0xf]
    %v9565 = vld [vmem:[%s9560 + $0x10] sm:$0xf]
    %v9566 = vld [vmem:[%s9560 + $0x14] sm:$0xf]
    %v9567 = vld [vmem:[%s9560 + $0x18] sm:$0xf]
    %v9568 = vld [vmem:[%s9560 + $0x1c] sm:$0xf]
    %v9569 = vld [vmem:[%s9560 + $0x20] sm:$0xf]
    %v9570 = vld [vmem:[%s9560 + $0x24] sm:$0xf]
    %v9571 = vld [vmem:[%s9560 + $0x28] sm:$0xf]
    %v9572 = vld [vmem:[%s9560 + $0x2c] sm:$0xf]
    %v9573 = vld [vmem:[%s9560 + $0x30] sm:$0xf]
    %v9574 = vld [vmem:[%s9560 + $0x34] sm:$0xf]
    %v9575 = vld [vmem:[%s9560 + $0x38] sm:$0xf]
    %v9576 = vld [vmem:[%s9560 + $0x3c] sm:$0xf]
    %v9593 = vunpack.c.l.b16 %v9561
    %v9594 = vunpack.c.l.b16 %v9562
    %v9595 = vunpack.c.l.b16 %v9563
    %v9596 = vunpack.c.l.b16 %v9564
    %v9597 = vunpack.c.l.b16 %v9565
    %v9598 = vunpack.c.l.b16 %v9566
    %v9599 = vunpack.c.l.b16 %v9567
    %v9600 = vunpack.c.l.b16 %v9568
    %v9601 = vunpack.c.l.b16 %v9569
    %v9602 = vunpack.c.l.b16 %v9570
    %v9603 = vunpack.c.l.b16 %v9571
    %v9604 = vunpack.c.l.b16 %v9572
    %v9605 = vunpack.c.l.b16 %v9573
    %v9606 = vunpack.c.l.b16 %v9574
    %v9607 = vunpack.c.l.b16 %v9575
    %v9608 = vunpack.c.l.b16 %v9576
    %v9609 = vpack.c.b16 %v9594, %v9593
    %v9610 = vpack.c.b16 %v9596, %v9595
    %v9611 = vpack.c.b16 %v9598, %v9597
    %v9612 = vpack.c.b16 %v9600, %v9599
    %v9613 = vpack.c.b16 %v9602, %v9601
    %v9614 = vpack.c.b16 %v9604, %v9603
    %v9615 = vpack.c.b16 %v9606, %v9605
    %v9616 = vpack.c.b16 %v9608, %v9607
    %9625 = vmatpush.bf16.msra.mxu0 %v9616
    %9626 = vmatpush.bf16.msra.mxu0 %v9615
    %9627 = vmatpush.bf16.msra.mxu0 %v9614
    %9628 = vmatpush.bf16.msra.mxu0 %v9613
    %9629 = vmatpush.bf16.msra.mxu0 %v9612
    %9630 = vmatpush.bf16.msra.mxu0 %v9611
    %9631 = vmatpush.bf16.msra.mxu0 %v9610
    %9632 = vmatpush.bf16.msra.mxu0 %v9609
    %9633 = vmatmul.bf16.gmra.mxu0 %v9559
    %v9634 = vpop.f32.mrf.mxu0
    %v9635 = vadd.f32 0.0, %v9634
    %v9636 = vpop.f32.mrf.mxu0
    %9637 = vdwg.mxu0
    %v9638 = vadd.f32 %v9541, %v9635
    %v9639 = vld [vmem:[%s9151 + $0x2] sm:$0x3]
    %v9640 = vld [vmem:[%s9151 + $0x6] sm:$0x3]
    %v9641 = vld [vmem:[%s9151 + $0x12] sm:$0x3]
    %v9642 = vld [vmem:[%s9151 + $0x16] sm:$0x3]
    %9647 = vst [vmem:[#allocation1] ss:$4 sm:$0xff] %v9639
    %s9648 = scalar_lea.vmem [#allocation1], 1
    %9649 = vst [vmem:[%s9648] ss:$4 sm:$0xff] %v9640
    %s9650 = scalar_lea.vmem [#allocation1], 2
    %9651 = vst [vmem:[%s9650] ss:$4 sm:$0xff] %v9641
    %s9652 = scalar_lea.vmem [#allocation1], 3
    %9653 = vst [vmem:[%s9652] ss:$4 sm:$0xff] %v9642
    %v9654 = vld.sshfl [vmem:[#allocation1] sm:$0xff pattern:$0x73625140]
    %v9656 = vpack.c.bf16 %v9654, %v9654
    %s9657 = scalar_lea.vmem [#allocation5], 2624
    %v9658 = vld [vmem:[%s9657] sm:$0xf]
    %v9659 = vld [vmem:[%s9657 + $0x4] sm:$0xf]
    %v9660 = vld [vmem:[%s9657 + $0x8] sm:$0xf]
    %v9661 = vld [vmem:[%s9657 + $0xc] sm:$0xf]
    %v9662 = vld [vmem:[%s9657 + $0x10] sm:$0xf]
    %v9663 = vld [vmem:[%s9657 + $0x14] sm:$0xf]
    %v9664 = vld [vmem:[%s9657 + $0x18] sm:$0xf]
    %v9665 = vld [vmem:[%s9657 + $0x1c] sm:$0xf]
    %v9666 = vld [vmem:[%s9657 + $0x20] sm:$0xf]
    %v9667 = vld [vmem:[%s9657 + $0x24] sm:$0xf]
    %v9668 = vld [vmem:[%s9657 + $0x28] sm:$0xf]
    %v9669 = vld [vmem:[%s9657 + $0x2c] sm:$0xf]
    %v9670 = vld [vmem:[%s9657 + $0x30] sm:$0xf]
    %v9671 = vld [vmem:[%s9657 + $0x34] sm:$0xf]
    %v9672 = vld [vmem:[%s9657 + $0x38] sm:$0xf]
    %v9673 = vld [vmem:[%s9657 + $0x3c] sm:$0xf]
    %v9690 = vunpack.c.l.b16 %v9658
    %v9691 = vunpack.c.l.b16 %v9659
    %v9692 = vunpack.c.l.b16 %v9660
    %v9693 = vunpack.c.l.b16 %v9661
    %v9694 = vunpack.c.l.b16 %v9662
    %v9695 = vunpack.c.l.b16 %v9663
    %v9696 = vunpack.c.l.b16 %v9664
    %v9697 = vunpack.c.l.b16 %v9665
    %v9698 = vunpack.c.l.b16 %v9666
    %v9699 = vunpack.c.l.b16 %v9667
    %v9700 = vunpack.c.l.b16 %v9668
    %v9701 = vunpack.c.l.b16 %v9669
    %v9702 = vunpack.c.l.b16 %v9670
    %v9703 = vunpack.c.l.b16 %v9671
    %v9704 = vunpack.c.l.b16 %v9672
    %v9705 = vunpack.c.l.b16 %v9673
    %v9706 = vpack.c.b16 %v9691, %v9690
    %v9707 = vpack.c.b16 %v9693, %v9692
    %v9708 = vpack.c.b16 %v9695, %v9694
    %v9709 = vpack.c.b16 %v9697, %v9696
    %v9710 = vpack.c.b16 %v9699, %v9698
    %v9711 = vpack.c.b16 %v9701, %v9700
    %v9712 = vpack.c.b16 %v9703, %v9702
    %v9713 = vpack.c.b16 %v9705, %v9704
    %9722 = vmatpush.bf16.msra.mxu0 %v9713
    %9723 = vmatpush.bf16.msra.mxu0 %v9712
    %9724 = vmatpush.bf16.msra.mxu0 %v9711
    %9725 = vmatpush.bf16.msra.mxu0 %v9710
    %9726 = vmatpush.bf16.msra.mxu0 %v9709
    %9727 = vmatpush.bf16.msra.mxu0 %v9708
    %9728 = vmatpush.bf16.msra.mxu0 %v9707
    %9729 = vmatpush.bf16.msra.mxu0 %v9706
    %9730 = vmatmul.bf16.gmra.mxu0 %v9656
    %v9731 = vpop.f32.mrf.mxu0
    %v9732 = vadd.f32 0.0, %v9731
    %v9733 = vpop.f32.mrf.mxu0
    %9734 = vdwg.mxu0
    %v9735 = vadd.f32 %v9638, %v9732
    %s9736 = scalar_lea.vmem [#allocation4], 8
    %v9737 = vld [vmem:[%s9736] sm:$0x3]
    %v9738 = vld [vmem:[%s9736 + $0x4] sm:$0x3]
    %v9739 = vld [vmem:[%s9736 + $0x10] sm:$0x3]
    %v9740 = vld [vmem:[%s9736 + $0x14] sm:$0x3]
    %9745 = vst [vmem:[#allocation1] ss:$4 sm:$0xff] %v9737
    %s9746 = scalar_lea.vmem [#allocation1], 1
    %9747 = vst [vmem:[%s9746] ss:$4 sm:$0xff] %v9738
    %s9748 = scalar_lea.vmem [#allocation1], 2
    %9749 = vst [vmem:[%s9748] ss:$4 sm:$0xff] %v9739
    %s9750 = scalar_lea.vmem [#allocation1], 3
    %9751 = vst [vmem:[%s9750] ss:$4 sm:$0xff] %v9740
    %v9752 = vld.sshfl [vmem:[#allocation1] sm:$0xff pattern:$0x73625140]
    %v9754 = vpack.c.bf16 %v9752, %v9752
    %s9755 = scalar_lea.vmem [#allocation5], 2688
    %v9756 = vld [vmem:[%s9755] sm:$0xf]
    %v9757 = vld [vmem:[%s9755 + $0x4] sm:$0xf]
    %v9758 = vld [vmem:[%s9755 + $0x8] sm:$0xf]
    %v9759 = vld [vmem:[%s9755 + $0xc] sm:$0xf]
    %v9760 = vld [vmem:[%s9755 + $0x10] sm:$0xf]
    %v9761 = vld [vmem:[%s9755 + $0x14] sm:$0xf]
    %v9762 = vld [vmem:[%s9755 + $0x18] sm:$0xf]
    %v9763 = vld [vmem:[%s9755 + $0x1c] sm:$0xf]
    %v9764 = vld [vmem:[%s9755 + $0x20] sm:$0xf]
    %v9765 = vld [vmem:[%s9755 + $0x24] sm:$0xf]
    %v9766 = vld [vmem:[%s9755 + $0x28] sm:$0xf]
    %v9767 = vld [vmem:[%s9755 + $0x2c] sm:$0xf]
    %v9768 = vld [vmem:[%s9755 + $0x30] sm:$0xf]
    %v9769 = vld [vmem:[%s9755 + $0x34] sm:$0xf]
    %v9770 = vld [vmem:[%s9755 + $0x38] sm:$0xf]
    %v9771 = vld [vmem:[%s9755 + $0x3c] sm:$0xf]
    %v9788 = vunpack.c.l.b16 %v9756
    %v9789 = vunpack.c.l.b16 %v9757
    %v9790 = vunpack.c.l.b16 %v9758
    %v9791 = vunpack.c.l.b16 %v9759
    %v9792 = vunpack.c.l.b16 %v9760
    %v9793 = vunpack.c.l.b16 %v9761
    %v9794 = vunpack.c.l.b16 %v9762
    %v9795 = vunpack.c.l.b16 %v9763
    %v9796 = vunpack.c.l.b16 %v9764
    %v9797 = vunpack.c.l.b16 %v9765
    %v9798 = vunpack.c.l.b16 %v9766
    %v9799 = vunpack.c.l.b16 %v9767
    %v9800 = vunpack.c.l.b16 %v9768
    %v9801 = vunpack.c.l.b16 %v9769
    %v9802 = vunpack.c.l.b16 %v9770
    %v9803 = vunpack.c.l.b16 %v9771
    %v9804 = vpack.c.b16 %v9789, %v9788
    %v9805 = vpack.c.b16 %v9791, %v9790
    %v9806 = vpack.c.b16 %v9793, %v9792
    %v9807 = vpack.c.b16 %v9795, %v9794
    %v9808 = vpack.c.b16 %v9797, %v9796
    %v9809 = vpack.c.b16 %v9799, %v9798
    %v9810 = vpack.c.b16 %v9801, %v9800
    %v9811 = vpack.c.b16 %v9803, %v9802
    %9820 = vmatpush.bf16.msra.mxu0 %v9811
    %9821 = vmatpush.bf16.msra.mxu0 %v9810
    %9822 = vmatpush.bf16.msra.mxu0 %v9809
    %9823 = vmatpush.bf16.msra.mxu0 %v9808
    %9824 = vmatpush.bf16.msra.mxu0 %v9807
    %9825 = vmatpush.bf16.msra.mxu0 %v9806
    %9826 = vmatpush.bf16.msra.mxu0 %v9805
    %9827 = vmatpush.bf16.msra.mxu0 %v9804
    %9828 = vmatmul.bf16.gmra.mxu0 %v9754
    %v9829 = vpop.f32.mrf.mxu0
    %v9830 = vadd.f32 0.0, %v9829
    %v9831 = vpop.f32.mrf.mxu0
    %9832 = vdwg.mxu0
    %v9833 = vadd.f32 %v9735, %v9830
    %v9834 = vld [vmem:[%s9736 + $0x1] sm:$0x3]
    %v9835 = vld [vmem:[%s9736 + $0x5] sm:$0x3]
    %v9836 = vld [vmem:[%s9736 + $0x11] sm:$0x3]
    %v9837 = vld [vmem:[%s9736 + $0x15] sm:$0x3]
    %9842 = vst [vmem:[#allocation1] ss:$4 sm:$0xff] %v9834
    %s9843 = scalar_lea.vmem [#allocation1], 1
    %9844 = vst [vmem:[%s9843] ss:$4 sm:$0xff] %v9835
    %s9845 = scalar_lea.vmem [#allocation1], 2
    %9846 = vst [vmem:[%s9845] ss:$4 sm:$0xff] %v9836
    %s9847 = scalar_lea.vmem [#allocation1], 3
    %9848 = vst [vmem:[%s9847] ss:$4 sm:$0xff] %v9837
    %v9849 = vld.sshfl [vmem:[#allocation1] sm:$0xff pattern:$0x73625140]
    %v9851 = vpack.c.bf16 %v9849, %v9849
    %s9852 = scalar_lea.vmem [#allocation5], 2752
    %v9853 = vld [vmem:[%s9852] sm:$0xf]
    %v9854 = vld [vmem:[%s9852 + $0x4] sm:$0xf]
    %v9855 = vld [vmem:[%s9852 + $0x8] sm:$0xf]
    %v9856 = vld [vmem:[%s9852 + $0xc] sm:$0xf]
    %v9857 = vld [vmem:[%s9852 + $0x10] sm:$0xf]
    %v9858 = vld [vmem:[%s9852 + $0x14] sm:$0xf]
    %v9859 = vld [vmem:[%s9852 + $0x18] sm:$0xf]
    %v9860 = vld [vmem:[%s9852 + $0x1c] sm:$0xf]
    %v9861 = vld [vmem:[%s9852 + $0x20] sm:$0xf]
    %v9862 = vld [vmem:[%s9852 + $0x24] sm:$0xf]
    %v9863 = vld [vmem:[%s9852 + $0x28] sm:$0xf]
    %v9864 = vld [vmem:[%s9852 + $0x2c] sm:$0xf]
    %v9865 = vld [vmem:[%s9852 + $0x30] sm:$0xf]
    %v9866 = vld [vmem:[%s9852 + $0x34] sm:$0xf]
    %v9867 = vld [vmem:[%s9852 + $0x38] sm:$0xf]
    %v9868 = vld [vmem:[%s9852 + $0x3c] sm:$0xf]
    %v9885 = vunpack.c.l.b16 %v9853
    %v9886 = vunpack.c.l.b16 %v9854
    %v9887 = vunpack.c.l.b16 %v9855
    %v9888 = vunpack.c.l.b16 %v9856
    %v9889 = vunpack.c.l.b16 %v9857
    %v9890 = vunpack.c.l.b16 %v9858
    %v9891 = vunpack.c.l.b16 %v9859
    %v9892 = vunpack.c.l.b16 %v9860
    %v9893 = vunpack.c.l.b16 %v9861
    %v9894 = vunpack.c.l.b16 %v9862
    %v9895 = vunpack.c.l.b16 %v9863
    %v9896 = vunpack.c.l.b16 %v9864
    %v9897 = vunpack.c.l.b16 %v9865
    %v9898 = vunpack.c.l.b16 %v9866
    %v9899 = vunpack.c.l.b16 %v9867
    %v9900 = vunpack.c.l.b16 %v9868
    %v9901 = vpack.c.b16 %v9886, %v9885
    %v9902 = vpack.c.b16 %v9888, %v9887
    %v9903 = vpack.c.b16 %v9890, %v9889
    %v9904 = vpack.c.b16 %v9892, %v9891
    %v9905 = vpack.c.b16 %v9894, %v9893
    %v9906 = vpack.c.b16 %v9896, %v9895
    %v9907 = vpack.c.b16 %v9898, %v9897
    %v9908 = vpack.c.b16 %v9900, %v9899
    %9917 = vmatpush.bf16.msra.mxu0 %v9908
    %9918 = vmatpush.bf16.msra.mxu0 %v9907
    %9919 = vmatpush.bf16.msra.mxu0 %v9906
    %9920 = vmatpush.bf16.msra.mxu0 %v9905
    %9921 = vmatpush.bf16.msra.mxu0 %v9904
    %9922 = vmatpush.bf16.msra.mxu0 %v9903
    %9923 = vmatpush.bf16.msra.mxu0 %v9902
    %9924 = vmatpush.bf16.msra.mxu0 %v9901
    %9925 = vmatmul.bf16.gmra.mxu0 %v9851
    %v9926 = vpop.f32.mrf.mxu0
    %v9927 = vadd.f32 0.0, %v9926
    %v9928 = vpop.f32.mrf.mxu0
    %9929 = vdwg.mxu0
    %v9930 = vadd.f32 %v9833, %v9927
    %v9931 = vld [vmem:[%s9736 + $0x2] sm:$0x3]
    %v9932 = vld [vmem:[%s9736 + $0x6] sm:$0x3]
    %v9933 = vld [vmem:[%s9736 + $0x12] sm:$0x3]
    %v9934 = vld [vmem:[%s9736 + $0x16] sm:$0x3]
    %9939 = vst [vmem:[#allocation1] ss:$4 sm:$0xff] %v9931
    %s9940 = scalar_lea.vmem [#allocation1], 1
    %9941 = vst [vmem:[%s9940] ss:$4 sm:$0xff] %v9932
    %s9942 = scalar_lea.vmem [#allocation1], 2
    %9943 = vst [vmem:[%s9942] ss:$4 sm:$0xff] %v9933
    %s9944 = scalar_lea.vmem [#allocation1], 3
    %9945 = vst [vmem:[%s9944] ss:$4 sm:$0xff] %v9934
    %v9946 = vld.sshfl [vmem:[#allocation1] sm:$0xff pattern:$0x73625140]
    %v9948 = vpack.c.bf16 %v9946, %v9946
    %s9949 = scalar_lea.vmem [#allocation5], 2816
    %v9950 = vld [vmem:[%s9949] sm:$0xf]
    %v9951 = vld [vmem:[%s9949 + $0x4] sm:$0xf]
    %v9952 = vld [vmem:[%s9949 + $0x8] sm:$0xf]
    %v9953 = vld [vmem:[%s9949 + $0xc] sm:$0xf]
    %v9954 = vld [vmem:[%s9949 + $0x10] sm:$0xf]
    %v9955 = vld [vmem:[%s9949 + $0x14] sm:$0xf]
    %v9956 = vld [vmem:[%s9949 + $0x18] sm:$0xf]
    %v9957 = vld [vmem:[%s9949 + $0x1c] sm:$0xf]
    %v9958 = vld [vmem:[%s9949 + $0x20] sm:$0xf]
    %v9959 = vld [vmem:[%s9949 + $0x24] sm:$0xf]
    %v9960 = vld [vmem:[%s9949 + $0x28] sm:$0xf]
    %v9961 = vld [vmem:[%s9949 + $0x2c] sm:$0xf]
    %v9962 = vld [vmem:[%s9949 + $0x30] sm:$0xf]
    %v9963 = vld [vmem:[%s9949 + $0x34] sm:$0xf]
    %v9964 = vld [vmem:[%s9949 + $0x38] sm:$0xf]
    %v9965 = vld [vmem:[%s9949 + $0x3c] sm:$0xf]
    %v9982 = vunpack.c.l.b16 %v9950
    %v9983 = vunpack.c.l.b16 %v9951
    %v9984 = vunpack.c.l.b16 %v9952
    %v9985 = vunpack.c.l.b16 %v9953
    %v9986 = vunpack.c.l.b16 %v9954
    %v9987 = vunpack.c.l.b16 %v9955
    %v9988 = vunpack.c.l.b16 %v9956
    %v9989 = vunpack.c.l.b16 %v9957
    %v9990 = vunpack.c.l.b16 %v9958
    %v9991 = vunpack.c.l.b16 %v9959
    %v9992 = vunpack.c.l.b16 %v9960
    %v9993 = vunpack.c.l.b16 %v9961
    %v9994 = vunpack.c.l.b16 %v9962
    %v9995 = vunpack.c.l.b16 %v9963
    %v9996 = vunpack.c.l.b16 %v9964
    %v9997 = vunpack.c.l.b16 %v9965
    %v9998 = vpack.c.b16 %v9983, %v9982
    %v9999 = vpack.c.b16 %v9985, %v9984
    %v10000 = vpack.c.b16 %v9987, %v9986
    %v10001 = vpack.c.b16 %v9989, %v9988
    %v10002 = vpack.c.b16 %v9991, %v9990
    %v10003 = vpack.c.b16 %v9993, %v9992
    %v10004 = vpack.c.b16 %v9995, %v9994
    %v10005 = vpack.c.b16 %v9997, %v9996
    %10014 = vmatpush.bf16.msra.mxu0 %v10005
    %10015 = vmatpush.bf16.msra.mxu0 %v10004
    %10016 = vmatpush.bf16.msra.mxu0 %v10003
    %10017 = vmatpush.bf16.msra.mxu0 %v10002
    %10018 = vmatpush.bf16.msra.mxu0 %v10001
    %10019 = vmatpush.bf16.msra.mxu0 %v10000
    %10020 = vmatpush.bf16.msra.mxu0 %v9999
    %10021 = vmatpush.bf16.msra.mxu0 %v9998
    %10022 = vmatmul.bf16.gmra.mxu0 %v9948
    %v10023 = vpop.f32.mrf.mxu0
    %v10024 = vadd.f32 0.0, %v10023
    %v10025 = vpop.f32.mrf.mxu0
    %10026 = vdwg.mxu0
    %v10027 = vadd.f32 %v9930, %v10024
    %v10028 = vrot.slane %v10027, 4
    %v10029 = vadd.f32 %v10027, %v10028
    %v10030 = vrot.slane %v10029, 2
    %v10031 = vadd.f32 %v10029, %v10030
    %v10032 = vrot.slane %v10031, 1
    %v10033 = vadd.f32 %v10031, %v10032
    %v10034 = vmul.f32 %v10027, %v10027
    %v10035 = vrot.slane %v10034, 4
    %v10036 = vadd.f32 %v10034, %v10035
    %v10037 = vrot.slane %v10036, 2
    %v10038 = vadd.f32 %v10036, %v10037
    %v10039 = vrot.slane %v10038, 1
    %v10040 = vadd.f32 %v10038, %v10039
    %v10041 = vmul.f32 %v10033, 0.125
    %v10042 = vmul.f32 %v10040, 0.125
    %v10043 = vmul.f32 %v10041, %v10041
    %v10044 = vsub.f32 %v10042, %v10043
    %v10045 = vmax.f32 %v10044, 0.0
    %v10046 = vld [vmem:[#allocation7 + $0x4] sm:$0x1]
    %v10047 = vadd.f32 %v10045, 1e-05
    %v10048 = vrsqrt.pop %v10047
    %v10049 = vmul.f32 %v10048, %v10047
    %v10050 = vmul.f32 %v10049, %v10048
    %v10051 = vmul.f32 0.5, %v10050
    %v10052 = vsub.f32 1.5, %v10051
    %v10053 = vmul.f32 %v10048, %v10052
    %vm10054 = vweird.f32 %v10047
    %vm10055 = vweird.f32 %v10048
    %vm10056 = vmor %vm10054, %vm10055
    %v10057 = vsel %vm10056, %v10048, %v10053
    %v10058 = vmul.f32 %v10046, %v10057
    %v10059 = vld [vmem:[#allocation9 + $0x4] sm:$0x1]
    %v10060 = vmul.f32 %v10041, %v10058
    %v10061 = vsub.f32 %v10059, %v10060
    %v10062 = vperm.slane %v10058, 0
    %v10063 = vmul.f32 %v10027, %v10062
    %v10064 = vperm.slane %v10061, 0
    %v10065 = vadd.f32 %v10063, %v10064
    %v10066 = vmax.f32 %v10065, 0.0
    %v10068 = vrot.slane %v10066, 2
    %v10069 = vrot.slane %v10066, 4
    %v10070 = vrot.slane %v10066, 6
    %10074 = vst [vmem:[%s9151 + $0x1] sm:$0x3] %v10066
    %10075 = vst [vmem:[%s9151 + $0x5] sm:$0x3] %v10068
    %10076 = vst [vmem:[%s9151 + $0x11] sm:$0x3] %v10069
    %10077 = vst [vmem:[%s9151 + $0x15] sm:$0x3] %v10070
    %v10078 = vld [vmem:[#allocation4] sm:$0x3]
    %v10079 = vld [vmem:[#allocation4 + $0x4] sm:$0x3]
    %v10080 = vld [vmem:[#allocation4 + $0x10] sm:$0x3]
    %v10081 = vld [vmem:[#allocation4 + $0x14] sm:$0x3]
    %10086 = vst [vmem:[#allocation1] ss:$4 sm:$0xff] %v10078
    %s10087 = scalar_lea.vmem [#allocation1], 1
    %10088 = vst [vmem:[%s10087] ss:$4 sm:$0xff] %v10079
    %s10089 = scalar_lea.vmem [#allocation1], 2
    %10090 = vst [vmem:[%s10089] ss:$4 sm:$0xff] %v10080
    %s10091 = scalar_lea.vmem [#allocation1], 3
    %10092 = vst [vmem:[%s10091] ss:$4 sm:$0xff] %v10081
    %v10093 = vld.sshfl [vmem:[#allocation1] sm:$0xff pattern:$0x73625140]
    %v10095 = vpack.c.bf16 %v10093, %v10093
    %s10096 = scalar_lea.vmem [#allocation5], 2880
    %v10097 = vld [vmem:[%s10096] sm:$0xf]
    %v10098 = vld [vmem:[%s10096 + $0x4] sm:$0xf]
    %v10099 = vld [vmem:[%s10096 + $0x8] sm:$0xf]
    %v10100 = vld [vmem:[%s10096 + $0xc] sm:$0xf]
    %v10101 = vld [vmem:[%s10096 + $0x10] sm:$0xf]
    %v10102 = vld [vmem:[%s10096 + $0x14] sm:$0xf]
    %v10103 = vld [vmem:[%s10096 + $0x18] sm:$0xf]
    %v10104 = vld [vmem:[%s10096 + $0x1c] sm:$0xf]
    %v10105 = vld [vmem:[%s10096 + $0x20] sm:$0xf]
    %v10106 = vld [vmem:[%s10096 + $0x24] sm:$0xf]
    %v10107 = vld [vmem:[%s10096 + $0x28] sm:$0xf]
    %v10108 = vld [vmem:[%s10096 + $0x2c] sm:$0xf]
    %v10109 = vld [vmem:[%s10096 + $0x30] sm:$0xf]
    %v10110 = vld [vmem:[%s10096 + $0x34] sm:$0xf]
    %v10111 = vld [vmem:[%s10096 + $0x38] sm:$0xf]
    %v10112 = vld [vmem:[%s10096 + $0x3c] sm:$0xf]
    %v10113 = vld [vmem:[#allocation4 + $0x1] sm:$0x3]
    %v10114 = vld [vmem:[#allocation4 + $0x5] sm:$0x3]
    %v10115 = vld [vmem:[#allocation4 + $0x11] sm:$0x3]
    %v10116 = vld [vmem:[#allocation4 + $0x15] sm:$0x3]
    %10121 = vst [vmem:[#allocation1] ss:$4 sm:$0xff] %v10113
    %s10122 = scalar_lea.vmem [#allocation1], 1
    %10123 = vst [vmem:[%s10122] ss:$4 sm:$0xff] %v10114
    %s10124 = scalar_lea.vmem [#allocation1], 2
    %10125 = vst [vmem:[%s10124] ss:$4 sm:$0xff] %v10115
    %s10126 = scalar_lea.vmem [#allocation1], 3
    %10127 = vst [vmem:[%s10126] ss:$4 sm:$0xff] %v10116
    %v10128 = vld.sshfl [vmem:[#allocation1] sm:$0xff pattern:$0x73625140]
    %v10130 = vpack.c.bf16 %v10128, %v10128
    %s10131 = scalar_lea.vmem [#allocation5], 2944
    %v10132 = vld [vmem:[%s10131] sm:$0xf]
    %v10133 = vld [vmem:[%s10131 + $0x4] sm:$0xf]
    %v10134 = vld [vmem:[%s10131 + $0x8] sm:$0xf]
    %v10135 = vld [vmem:[%s10131 + $0xc] sm:$0xf]
    %v10136 = vld [vmem:[%s10131 + $0x10] sm:$0xf]
    %v10137 = vld [vmem:[%s10131 + $0x14] sm:$0xf]
    %v10138 = vld [vmem:[%s10131 + $0x18] sm:$0xf]
    %v10139 = vld [vmem:[%s10131 + $0x1c] sm:$0xf]
    %v10140 = vld [vmem:[%s10131 + $0x20] sm:$0xf]
    %v10141 = vld [vmem:[%s10131 + $0x24] sm:$0xf]
    %v10142 = vld [vmem:[%s10131 + $0x28] sm:$0xf]
    %v10143 = vld [vmem:[%s10131 + $0x2c] sm:$0xf]
    %v10144 = vld [vmem:[%s10131 + $0x30] sm:$0xf]
    %v10145 = vld [vmem:[%s10131 + $0x34] sm:$0xf]
    %v10146 = vld [vmem:[%s10131 + $0x38] sm:$0xf]
    %v10147 = vld [vmem:[%s10131 + $0x3c] sm:$0xf]
    %v10164 = vunpack.c.l.b16 %v10132
    %v10165 = vunpack.c.l.b16 %v10133
    %v10166 = vunpack.c.l.b16 %v10134
    %v10167 = vunpack.c.l.b16 %v10135
    %v10168 = vunpack.c.l.b16 %v10136
    %v10169 = vunpack.c.l.b16 %v10137
    %v10170 = vunpack.c.l.b16 %v10138
    %v10171 = vunpack.c.l.b16 %v10139
    %v10172 = vunpack.c.l.b16 %v10140
    %v10173 = vunpack.c.l.b16 %v10141
    %v10174 = vunpack.c.l.b16 %v10142
    %v10175 = vunpack.c.l.b16 %v10143
    %v10176 = vunpack.c.l.b16 %v10144
    %v10177 = vunpack.c.l.b16 %v10145
    %v10178 = vunpack.c.l.b16 %v10146
    %v10179 = vunpack.c.l.b16 %v10147
    %v10180 = vpack.c.b16 %v10165, %v10164
    %v10181 = vpack.c.b16 %v10167, %v10166
    %v10182 = vpack.c.b16 %v10169, %v10168
    %v10183 = vpack.c.b16 %v10171, %v10170
    %v10184 = vpack.c.b16 %v10173, %v10172
    %v10185 = vpack.c.b16 %v10175, %v10174
    %v10186 = vpack.c.b16 %v10177, %v10176
    %v10187 = vpack.c.b16 %v10179, %v10178
    %10196 = vmatpush.bf16.msra.mxu0 %v10187
    %10197 = vmatpush.bf16.msra.mxu0 %v10186
    %10198 = vmatpush.bf16.msra.mxu0 %v10185
    %10199 = vmatpush.bf16.msra.mxu0 %v10184
    %10200 = vmatpush.bf16.msra.mxu0 %v10183
    %10201 = vmatpush.bf16.msra.mxu0 %v10182
    %10202 = vmatpush.bf16.msra.mxu0 %v10181
    %10203 = vmatpush.bf16.msra.mxu0 %v10180
    %10204 = vmatmul.bf16.gmra.mxu0 %v10130
    %v10205 = vpop.f32.mrf.mxu0
    %v10206 = vadd.f32 0.0, %v10205
    %v10207 = vpop.f32.mrf.mxu0
    %10208 = vdwg.mxu0
    %v10225 = vunpack.c.l.b16 %v10097
    %v10226 = vunpack.c.l.b16 %v10098
    %v10227 = vunpack.c.l.b16 %v10099
    %v10228 = vunpack.c.l.b16 %v10100
    %v10229 = vunpack.c.l.b16 %v10101
    %v10230 = vunpack.c.l.b16 %v10102
    %v10231 = vunpack.c.l.b16 %v10103
    %v10232 = vunpack.c.l.b16 %v10104
    %v10233 = vunpack.c.l.b16 %v10105
    %v10234 = vunpack.c.l.b16 %v10106
    %v10235 = vunpack.c.l.b16 %v10107
    %v10236 = vunpack.c.l.b16 %v10108
    %v10237 = vunpack.c.l.b16 %v10109
    %v10238 = vunpack.c.l.b16 %v10110
    %v10239 = vunpack.c.l.b16 %v10111
    %v10240 = vunpack.c.l.b16 %v10112
    %v10241 = vpack.c.b16 %v10226, %v10225
    %v10242 = vpack.c.b16 %v10228, %v10227
    %v10243 = vpack.c.b16 %v10230, %v10229
    %v10244 = vpack.c.b16 %v10232, %v10231
    %v10245 = vpack.c.b16 %v10234, %v10233
    %v10246 = vpack.c.b16 %v10236, %v10235
    %v10247 = vpack.c.b16 %v10238, %v10237
    %v10248 = vpack.c.b16 %v10240, %v10239
    %10257 = vmatpush.bf16.msra.mxu0 %v10248
    %10258 = vmatpush.bf16.msra.mxu0 %v10247
    %10259 = vmatpush.bf16.msra.mxu0 %v10246
    %10260 = vmatpush.bf16.msra.mxu0 %v10245
    %10261 = vmatpush.bf16.msra.mxu0 %v10244
    %10262 = vmatpush.bf16.msra.mxu0 %v10243
    %10263 = vmatpush.bf16.msra.mxu0 %v10242
    %10264 = vmatpush.bf16.msra.mxu0 %v10241
    %10265 = vmatmul.bf16.gmra.mxu0 %v10095
    %v10266 = vpop.f32.mrf.mxu0
    %v10267 = vadd.f32 %v10206, %v10266
    %v10268 = vpop.f32.mrf.mxu0
    %10269 = vdwg.mxu0
    %v10270 = vld [vmem:[#allocation4 + $0x2] sm:$0x3]
    %v10271 = vld [vmem:[#allocation4 + $0x6] sm:$0x3]
    %v10272 = vld [vmem:[#allocation4 + $0x12] sm:$0x3]
    %v10273 = vld [vmem:[#allocation4 + $0x16] sm:$0x3]
    %10278 = vst [vmem:[#allocation1] ss:$4 sm:$0xff] %v10270
    %s10279 = scalar_lea.vmem [#allocation1], 1
    %10280 = vst [vmem:[%s10279] ss:$4 sm:$0xff] %v10271
    %s10281 = scalar_lea.vmem [#allocation1], 2
    %10282 = vst [vmem:[%s10281] ss:$4 sm:$0xff] %v10272
    %s10283 = scalar_lea.vmem [#allocation1], 3
    %10284 = vst [vmem:[%s10283] ss:$4 sm:$0xff] %v10273
    %v10285 = vld.sshfl [vmem:[#allocation1] sm:$0xff pattern:$0x73625140]
    %v10287 = vpack.c.bf16 %v10285, %v10285
    %s10288 = scalar_lea.vmem [#allocation5], 3008
    %v10289 = vld [vmem:[%s10288] sm:$0xf]
    %v10290 = vld [vmem:[%s10288 + $0x4] sm:$0xf]
    %v10291 = vld [vmem:[%s10288 + $0x8] sm:$0xf]
    %v10292 = vld [vmem:[%s10288 + $0xc] sm:$0xf]
    %v10293 = vld [vmem:[%s10288 + $0x10] sm:$0xf]
    %v10294 = vld [vmem:[%s10288 + $0x14] sm:$0xf]
    %v10295 = vld [vmem:[%s10288 + $0x18] sm:$0xf]
    %v10296 = vld [vmem:[%s10288 + $0x1c] sm:$0xf]
    %v10297 = vld [vmem:[%s10288 + $0x20] sm:$0xf]
    %v10298 = vld [vmem:[%s10288 + $0x24] sm:$0xf]
    %v10299 = vld [vmem:[%s10288 + $0x28] sm:$0xf]
    %v10300 = vld [vmem:[%s10288 + $0x2c] sm:$0xf]
    %v10301 = vld [vmem:[%s10288 + $0x30] sm:$0xf]
    %v10302 = vld [vmem:[%s10288 + $0x34] sm:$0xf]
    %v10303 = vld [vmem:[%s10288 + $0x38] sm:$0xf]
    %v10304 = vld [vmem:[%s10288 + $0x3c] sm:$0xf]
    %v10321 = vunpack.c.l.b16 %v10289
    %v10322 = vunpack.c.l.b16 %v10290
    %v10323 = vunpack.c.l.b16 %v10291
    %v10324 = vunpack.c.l.b16 %v10292
    %v10325 = vunpack.c.l.b16 %v10293
    %v10326 = vunpack.c.l.b16 %v10294
    %v10327 = vunpack.c.l.b16 %v10295
    %v10328 = vunpack.c.l.b16 %v10296
    %v10329 = vunpack.c.l.b16 %v10297
    %v10330 = vunpack.c.l.b16 %v10298
    %v10331 = vunpack.c.l.b16 %v10299
    %v10332 = vunpack.c.l.b16 %v10300
    %v10333 = vunpack.c.l.b16 %v10301
    %v10334 = vunpack.c.l.b16 %v10302
    %v10335 = vunpack.c.l.b16 %v10303
    %v10336 = vunpack.c.l.b16 %v10304
    %v10337 = vpack.c.b16 %v10322, %v10321
    %v10338 = vpack.c.b16 %v10324, %v10323
    %v10339 = vpack.c.b16 %v10326, %v10325
    %v10340 = vpack.c.b16 %v10328, %v10327
    %v10341 = vpack.c.b16 %v10330, %v10329
    %v10342 = vpack.c.b16 %v10332, %v10331
    %v10343 = vpack.c.b16 %v10334, %v10333
    %v10344 = vpack.c.b16 %v10336, %v10335
    %10353 = vmatpush.bf16.msra.mxu0 %v10344
    %10354 = vmatpush.bf16.msra.mxu0 %v10343
    %10355 = vmatpush.bf16.msra.mxu0 %v10342
    %10356 = vmatpush.bf16.msra.mxu0 %v10341
    %10357 = vmatpush.bf16.msra.mxu0 %v10340
    %10358 = vmatpush.bf16.msra.mxu0 %v10339
    %10359 = vmatpush.bf16.msra.mxu0 %v10338
    %10360 = vmatpush.bf16.msra.mxu0 %v10337
    %10361 = vmatmul.bf16.gmra.mxu0 %v10287
    %v10362 = vpop.f32.mrf.mxu0
    %v10363 = vadd.f32 0.0, %v10362
    %v10364 = vpop.f32.mrf.mxu0
    %10365 = vdwg.mxu0
    %v10366 = vadd.f32 %v10267, %v10363
    %v10367 = vld [vmem:[%s9151] sm:$0x3]
    %v10368 = vld [vmem:[%s9151 + $0x4] sm:$0x3]
    %v10369 = vld [vmem:[%s9151 + $0x10] sm:$0x3]
    %v10370 = vld [vmem:[%s9151 + $0x14] sm:$0x3]
    %10375 = vst [vmem:[#allocation1] ss:$4 sm:$0xff] %v10367
    %s10376 = scalar_lea.vmem [#allocation1], 1
    %10377 = vst [vmem:[%s10376] ss:$4 sm:$0xff] %v10368
    %s10378 = scalar_lea.vmem [#allocation1], 2
    %10379 = vst [vmem:[%s10378] ss:$4 sm:$0xff] %v10369
    %s10380 = scalar_lea.vmem [#allocation1], 3
    %10381 = vst [vmem:[%s10380] ss:$4 sm:$0xff] %v10370
    %v10382 = vld.sshfl [vmem:[#allocation1] sm:$0xff pattern:$0x73625140]
    %v10384 = vpack.c.bf16 %v10382, %v10382
    %s10385 = scalar_lea.vmem [#allocation5], 3072
    %v10386 = vld [vmem:[%s10385] sm:$0xf]
    %v10387 = vld [vmem:[%s10385 + $0x4] sm:$0xf]
    %v10388 = vld [vmem:[%s10385 + $0x8] sm:$0xf]
    %v10389 = vld [vmem:[%s10385 + $0xc] sm:$0xf]
    %v10390 = vld [vmem:[%s10385 + $0x10] sm:$0xf]
    %v10391 = vld [vmem:[%s10385 + $0x14] sm:$0xf]
    %v10392 = vld [vmem:[%s10385 + $0x18] sm:$0xf]
    %v10393 = vld [vmem:[%s10385 + $0x1c] sm:$0xf]
    %v10394 = vld [vmem:[%s10385 + $0x20] sm:$0xf]
    %v10395 = vld [vmem:[%s10385 + $0x24] sm:$0xf]
    %v10396 = vld [vmem:[%s10385 + $0x28] sm:$0xf]
    %v10397 = vld [vmem:[%s10385 + $0x2c] sm:$0xf]
    %v10398 = vld [vmem:[%s10385 + $0x30] sm:$0xf]
    %v10399 = vld [vmem:[%s10385 + $0x34] sm:$0xf]
    %v10400 = vld [vmem:[%s10385 + $0x38] sm:$0xf]
    %v10401 = vld [vmem:[%s10385 + $0x3c] sm:$0xf]
    %v10418 = vunpack.c.l.b16 %v10386
    %v10419 = vunpack.c.l.b16 %v10387
    %v10420 = vunpack.c.l.b16 %v10388
    %v10421 = vunpack.c.l.b16 %v10389
    %v10422 = vunpack.c.l.b16 %v10390
    %v10423 = vunpack.c.l.b16 %v10391
    %v10424 = vunpack.c.l.b16 %v10392
    %v10425 = vunpack.c.l.b16 %v10393
    %v10426 = vunpack.c.l.b16 %v10394
    %v10427 = vunpack.c.l.b16 %v10395
    %v10428 = vunpack.c.l.b16 %v10396
    %v10429 = vunpack.c.l.b16 %v10397
    %v10430 = vunpack.c.l.b16 %v10398
    %v10431 = vunpack.c.l.b16 %v10399
    %v10432 = vunpack.c.l.b16 %v10400
    %v10433 = vunpack.c.l.b16 %v10401
    %v10434 = vpack.c.b16 %v10419, %v10418
    %v10435 = vpack.c.b16 %v10421, %v10420
    %v10436 = vpack.c.b16 %v10423, %v10422
    %v10437 = vpack.c.b16 %v10425, %v10424
    %v10438 = vpack.c.b16 %v10427, %v10426
    %v10439 = vpack.c.b16 %v10429, %v10428
    %v10440 = vpack.c.b16 %v10431, %v10430
    %v10441 = vpack.c.b16 %v10433, %v10432
    %10450 = vmatpush.bf16.msra.mxu0 %v10441
    %10451 = vmatpush.bf16.msra.mxu0 %v10440
    %10452 = vmatpush.bf16.msra.mxu0 %v10439
    %10453 = vmatpush.bf16.msra.mxu0 %v10438
    %10454 = vmatpush.bf16.msra.mxu0 %v10437
    %10455 = vmatpush.bf16.msra.mxu0 %v10436
    %10456 = vmatpush.bf16.msra.mxu0 %v10435
    %10457 = vmatpush.bf16.msra.mxu0 %v10434
    %10458 = vmatmul.bf16.gmra.mxu0 %v10384
    %v10459 = vpop.f32.mrf.mxu0
    %v10460 = vadd.f32 0.0, %v10459
    %v10461 = vpop.f32.mrf.mxu0
    %10462 = vdwg.mxu0
    %v10463 = vadd.f32 %v10366, %v10460
    %v10464 = vld [vmem:[%s9151 + $0x1] sm:$0x3]
    %v10465 = vld [vmem:[%s9151 + $0x5] sm:$0x3]
    %v10466 = vld [vmem:[%s9151 + $0x11] sm:$0x3]
    %v10467 = vld [vmem:[%s9151 + $0x15] sm:$0x3]
    %10472 = vst [vmem:[#allocation1] ss:$4 sm:$0xff] %v10464
    %s10473 = scalar_lea.vmem [#allocation1], 1
    %10474 = vst [vmem:[%s10473] ss:$4 sm:$0xff] %v10465
    %s10475 = scalar_lea.vmem [#allocation1], 2
    %10476 = vst [vmem:[%s10475] ss:$4 sm:$0xff] %v10466
    %s10477 = scalar_lea.vmem [#allocation1], 3
    %10478 = vst [vmem:[%s10477] ss:$4 sm:$0xff] %v10467
    %v10479 = vld.sshfl [vmem:[#allocation1] sm:$0xff pattern:$0x73625140]
    %v10481 = vpack.c.bf16 %v10479, %v10479
    %s10482 = scalar_lea.vmem [#allocation5], 3136
    %v10483 = vld [vmem:[%s10482] sm:$0xf]
    %v10484 = vld [vmem:[%s10482 + $0x4] sm:$0xf]
    %v10485 = vld [vmem:[%s10482 + $0x8] sm:$0xf]
    %v10486 = vld [vmem:[%s10482 + $0xc] sm:$0xf]
    %v10487 = vld [vmem:[%s10482 + $0x10] sm:$0xf]
    %v10488 = vld [vmem:[%s10482 + $0x14] sm:$0xf]
    %v10489 = vld [vmem:[%s10482 + $0x18] sm:$0xf]
    %v10490 = vld [vmem:[%s10482 + $0x1c] sm:$0xf]
    %v10491 = vld [vmem:[%s10482 + $0x20] sm:$0xf]
    %v10492 = vld [vmem:[%s10482 + $0x24] sm:$0xf]
    %v10493 = vld [vmem:[%s10482 + $0x28] sm:$0xf]
    %v10494 = vld [vmem:[%s10482 + $0x2c] sm:$0xf]
    %v10495 = vld [vmem:[%s10482 + $0x30] sm:$0xf]
    %v10496 = vld [vmem:[%s10482 + $0x34] sm:$0xf]
    %v10497 = vld [vmem:[%s10482 + $0x38] sm:$0xf]
    %v10498 = vld [vmem:[%s10482 + $0x3c] sm:$0xf]
    %v10515 = vunpack.c.l.b16 %v10483
    %v10516 = vunpack.c.l.b16 %v10484
    %v10517 = vunpack.c.l.b16 %v10485
    %v10518 = vunpack.c.l.b16 %v10486
    %v10519 = vunpack.c.l.b16 %v10487
    %v10520 = vunpack.c.l.b16 %v10488
    %v10521 = vunpack.c.l.b16 %v10489
    %v10522 = vunpack.c.l.b16 %v10490
    %v10523 = vunpack.c.l.b16 %v10491
    %v10524 = vunpack.c.l.b16 %v10492
    %v10525 = vunpack.c.l.b16 %v10493
    %v10526 = vunpack.c.l.b16 %v10494
    %v10527 = vunpack.c.l.b16 %v10495
    %v10528 = vunpack.c.l.b16 %v10496
    %v10529 = vunpack.c.l.b16 %v10497
    %v10530 = vunpack.c.l.b16 %v10498
    %v10531 = vpack.c.b16 %v10516, %v10515
    %v10532 = vpack.c.b16 %v10518, %v10517
    %v10533 = vpack.c.b16 %v10520, %v10519
    %v10534 = vpack.c.b16 %v10522, %v10521
    %v10535 = vpack.c.b16 %v10524, %v10523
    %v10536 = vpack.c.b16 %v10526, %v10525
    %v10537 = vpack.c.b16 %v10528, %v10527
    %v10538 = vpack.c.b16 %v10530, %v10529
    %10547 = vmatpush.bf16.msra.mxu0 %v10538
    %10548 = vmatpush.bf16.msra.mxu0 %v10537
    %10549 = vmatpush.bf16.msra.mxu0 %v10536
    %10550 = vmatpush.bf16.msra.mxu0 %v10535
    %10551 = vmatpush.bf16.msra.mxu0 %v10534
    %10552 = vmatpush.bf16.msra.mxu0 %v10533
    %10553 = vmatpush.bf16.msra.mxu0 %v10532
    %10554 = vmatpush.bf16.msra.mxu0 %v10531
    %10555 = vmatmul.bf16.gmra.mxu0 %v10481
    %v10556 = vpop.f32.mrf.mxu0
    %v10557 = vadd.f32 0.0, %v10556
    %v10558 = vpop.f32.mrf.mxu0
    %10559 = vdwg.mxu0
    %v10560 = vadd.f32 %v10463, %v10557
    %v10561 = vld [vmem:[%s9151 + $0x2] sm:$0x3]
    %v10562 = vld [vmem:[%s9151 + $0x6] sm:$0x3]
    %v10563 = vld [vmem:[%s9151 + $0x12] sm:$0x3]
    %v10564 = vld [vmem:[%s9151 + $0x16] sm:$0x3]
    %10569 = vst [vmem:[#allocation1] ss:$4 sm:$0xff] %v10561
    %s10570 = scalar_lea.vmem [#allocation1], 1
    %10571 = vst [vmem:[%s10570] ss:$4 sm:$0xff] %v10562
    %s10572 = scalar_lea.vmem [#allocation1], 2
    %10573 = vst [vmem:[%s10572] ss:$4 sm:$0xff] %v10563
    %s10574 = scalar_lea.vmem [#allocation1], 3
    %10575 = vst [vmem:[%s10574] ss:$4 sm:$0xff] %v10564
    %v10576 = vld.sshfl [vmem:[#allocation1] sm:$0xff pattern:$0x73625140]
    %v10578 = vpack.c.bf16 %v10576, %v10576
    %s10579 = scalar_lea.vmem [#allocation5], 3200
    %v10580 = vld [vmem:[%s10579] sm:$0xf]
    %v10581 = vld [vmem:[%s10579 + $0x4] sm:$0xf]
    %v10582 = vld [vmem:[%s10579 + $0x8] sm:$0xf]
    %v10583 = vld [vmem:[%s10579 + $0xc] sm:$0xf]
    %v10584 = vld [vmem:[%s10579 + $0x10] sm:$0xf]
    %v10585 = vld [vmem:[%s10579 + $0x14] sm:$0xf]
    %v10586 = vld [vmem:[%s10579 + $0x18] sm:$0xf]
    %v10587 = vld [vmem:[%s10579 + $0x1c] sm:$0xf]
    %v10588 = vld [vmem:[%s10579 + $0x20] sm:$0xf]
    %v10589 = vld [vmem:[%s10579 + $0x24] sm:$0xf]
    %v10590 = vld [vmem:[%s10579 + $0x28] sm:$0xf]
    %v10591 = vld [vmem:[%s10579 + $0x2c] sm:$0xf]
    %v10592 = vld [vmem:[%s10579 + $0x30] sm:$0xf]
    %v10593 = vld [vmem:[%s10579 + $0x34] sm:$0xf]
    %v10594 = vld [vmem:[%s10579 + $0x38] sm:$0xf]
    %v10595 = vld [vmem:[%s10579 + $0x3c] sm:$0xf]
    %v10612 = vunpack.c.l.b16 %v10580
    %v10613 = vunpack.c.l.b16 %v10581
    %v10614 = vunpack.c.l.b16 %v10582
    %v10615 = vunpack.c.l.b16 %v10583
    %v10616 = vunpack.c.l.b16 %v10584
    %v10617 = vunpack.c.l.b16 %v10585
    %v10618 = vunpack.c.l.b16 %v10586
    %v10619 = vunpack.c.l.b16 %v10587
    %v10620 = vunpack.c.l.b16 %v10588
    %v10621 = vunpack.c.l.b16 %v10589
    %v10622 = vunpack.c.l.b16 %v10590
    %v10623 = vunpack.c.l.b16 %v10591
    %v10624 = vunpack.c.l.b16 %v10592
    %v10625 = vunpack.c.l.b16 %v10593
    %v10626 = vunpack.c.l.b16 %v10594
    %v10627 = vunpack.c.l.b16 %v10595
    %v10628 = vpack.c.b16 %v10613, %v10612
    %v10629 = vpack.c.b16 %v10615, %v10614
    %v10630 = vpack.c.b16 %v10617, %v10616
    %v10631 = vpack.c.b16 %v10619, %v10618
    %v10632 = vpack.c.b16 %v10621, %v10620
    %v10633 = vpack.c.b16 %v10623, %v10622
    %v10634 = vpack.c.b16 %v10625, %v10624
    %v10635 = vpack.c.b16 %v10627, %v10626
    %10644 = vmatpush.bf16.msra.mxu0 %v10635
    %10645 = vmatpush.bf16.msra.mxu0 %v10634
    %10646 = vmatpush.bf16.msra.mxu0 %v10633
    %10647 = vmatpush.bf16.msra.mxu0 %v10632
    %10648 = vmatpush.bf16.msra.mxu0 %v10631
    %10649 = vmatpush.bf16.msra.mxu0 %v10630
    %10650 = vmatpush.bf16.msra.mxu0 %v10629
    %10651 = vmatpush.bf16.msra.mxu0 %v10628
    %10652 = vmatmul.bf16.gmra.mxu0 %v10578
    %v10653 = vpop.f32.mrf.mxu0
    %v10654 = vadd.f32 0.0, %v10653
    %v10655 = vpop.f32.mrf.mxu0
    %10656 = vdwg.mxu0
    %v10657 = vadd.f32 %v10560, %v10654
    %v10658 = vld [vmem:[%s9736] sm:$0x3]
    %v10659 = vld [vmem:[%s9736 + $0x4] sm:$0x3]
    %v10660 = vld [vmem:[%s9736 + $0x10] sm:$0x3]
    %v10661 = vld [vmem:[%s9736 + $0x14] sm:$0x3]
    %10666 = vst [vmem:[#allocation1] ss:$4 sm:$0xff] %v10658
    %s10667 = scalar_lea.vmem [#allocation1], 1
    %10668 = vst [vmem:[%s10667] ss:$4 sm:$0xff] %v10659
    %s10669 = scalar_lea.vmem [#allocation1], 2
    %10670 = vst [vmem:[%s10669] ss:$4 sm:$0xff] %v10660
    %s10671 = scalar_lea.vmem [#allocation1], 3
    %10672 = vst [vmem:[%s10671] ss:$4 sm:$0xff] %v10661
    %v10673 = vld.sshfl [vmem:[#allocation1] sm:$0xff pattern:$0x73625140]
    %v10675 = vpack.c.bf16 %v10673, %v10673
    %s10676 = scalar_lea.vmem [#allocation5], 3264
    %v10677 = vld [vmem:[%s10676] sm:$0xf]
    %v10678 = vld [vmem:[%s10676 + $0x4] sm:$0xf]
    %v10679 = vld [vmem:[%s10676 + $0x8] sm:$0xf]
    %v10680 = vld [vmem:[%s10676 + $0xc] sm:$0xf]
    %v10681 = vld [vmem:[%s10676 + $0x10] sm:$0xf]
    %v10682 = vld [vmem:[%s10676 + $0x14] sm:$0xf]
    %v10683 = vld [vmem:[%s10676 + $0x18] sm:$0xf]
    %v10684 = vld [vmem:[%s10676 + $0x1c] sm:$0xf]
    %v10685 = vld [vmem:[%s10676 + $0x20] sm:$0xf]
    %v10686 = vld [vmem:[%s10676 + $0x24] sm:$0xf]
    %v10687 = vld [vmem:[%s10676 + $0x28] sm:$0xf]
    %v10688 = vld [vmem:[%s10676 + $0x2c] sm:$0xf]
    %v10689 = vld [vmem:[%s10676 + $0x30] sm:$0xf]
    %v10690 = vld [vmem:[%s10676 + $0x34] sm:$0xf]
    %v10691 = vld [vmem:[%s10676 + $0x38] sm:$0xf]
    %v10692 = vld [vmem:[%s10676 + $0x3c] sm:$0xf]
    %v10709 = vunpack.c.l.b16 %v10677
    %v10710 = vunpack.c.l.b16 %v10678
    %v10711 = vunpack.c.l.b16 %v10679
    %v10712 = vunpack.c.l.b16 %v10680
    %v10713 = vunpack.c.l.b16 %v10681
    %v10714 = vunpack.c.l.b16 %v10682
    %v10715 = vunpack.c.l.b16 %v10683
    %v10716 = vunpack.c.l.b16 %v10684
    %v10717 = vunpack.c.l.b16 %v10685
    %v10718 = vunpack.c.l.b16 %v10686
    %v10719 = vunpack.c.l.b16 %v10687
    %v10720 = vunpack.c.l.b16 %v10688
    %v10721 = vunpack.c.l.b16 %v10689
    %v10722 = vunpack.c.l.b16 %v10690
    %v10723 = vunpack.c.l.b16 %v10691
    %v10724 = vunpack.c.l.b16 %v10692
    %v10725 = vpack.c.b16 %v10710, %v10709
    %v10726 = vpack.c.b16 %v10712, %v10711
    %v10727 = vpack.c.b16 %v10714, %v10713
    %v10728 = vpack.c.b16 %v10716, %v10715
    %v10729 = vpack.c.b16 %v10718, %v10717
    %v10730 = vpack.c.b16 %v10720, %v10719
    %v10731 = vpack.c.b16 %v10722, %v10721
    %v10732 = vpack.c.b16 %v10724, %v10723
    %10741 = vmatpush.bf16.msra.mxu0 %v10732
    %10742 = vmatpush.bf16.msra.mxu0 %v10731
    %10743 = vmatpush.bf16.msra.mxu0 %v10730
    %10744 = vmatpush.bf16.msra.mxu0 %v10729
    %10745 = vmatpush.bf16.msra.mxu0 %v10728
    %10746 = vmatpush.bf16.msra.mxu0 %v10727
    %10747 = vmatpush.bf16.msra.mxu0 %v10726
    %10748 = vmatpush.bf16.msra.mxu0 %v10725
    %10749 = vmatmul.bf16.gmra.mxu0 %v10675
    %v10750 = vpop.f32.mrf.mxu0
    %v10751 = vadd.f32 0.0, %v10750
    %v10752 = vpop.f32.mrf.mxu0
    %10753 = vdwg.mxu0
    %v10754 = vadd.f32 %v10657, %v10751
    %v10755 = vld [vmem:[%s9736 + $0x1] sm:$0x3]
    %v10756 = vld [vmem:[%s9736 + $0x5] sm:$0x3]
    %v10757 = vld [vmem:[%s9736 + $0x11] sm:$0x3]
    %v10758 = vld [vmem:[%s9736 + $0x15] sm:$0x3]
    %10763 = vst [vmem:[#allocation1] ss:$4 sm:$0xff] %v10755
    %s10764 = scalar_lea.vmem [#allocation1], 1
    %10765 = vst [vmem:[%s10764] ss:$4 sm:$0xff] %v10756
    %s10766 = scalar_lea.vmem [#allocation1], 2
    %10767 = vst [vmem:[%s10766] ss:$4 sm:$0xff] %v10757
    %s10768 = scalar_lea.vmem [#allocation1], 3
    %10769 = vst [vmem:[%s10768] ss:$4 sm:$0xff] %v10758
    %v10770 = vld.sshfl [vmem:[#allocation1] sm:$0xff pattern:$0x73625140]
    %v10772 = vpack.c.bf16 %v10770, %v10770
    %s10773 = scalar_lea.vmem [#allocation5], 3328
    %v10774 = vld [vmem:[%s10773] sm:$0xf]
    %v10775 = vld [vmem:[%s10773 + $0x4] sm:$0xf]
    %v10776 = vld [vmem:[%s10773 + $0x8] sm:$0xf]
    %v10777 = vld [vmem:[%s10773 + $0xc] sm:$0xf]
    %v10778 = vld [vmem:[%s10773 + $0x10] sm:$0xf]
    %v10779 = vld [vmem:[%s10773 + $0x14] sm:$0xf]
    %v10780 = vld [vmem:[%s10773 + $0x18] sm:$0xf]
    %v10781 = vld [vmem:[%s10773 + $0x1c] sm:$0xf]
    %v10782 = vld [vmem:[%s10773 + $0x20] sm:$0xf]
    %v10783 = vld [vmem:[%s10773 + $0x24] sm:$0xf]
    %v10784 = vld [vmem:[%s10773 + $0x28] sm:$0xf]
    %v10785 = vld [vmem:[%s10773 + $0x2c] sm:$0xf]
    %v10786 = vld [vmem:[%s10773 + $0x30] sm:$0xf]
    %v10787 = vld [vmem:[%s10773 + $0x34] sm:$0xf]
    %v10788 = vld [vmem:[%s10773 + $0x38] sm:$0xf]
    %v10789 = vld [vmem:[%s10773 + $0x3c] sm:$0xf]
    %v10806 = vunpack.c.l.b16 %v10774
    %v10807 = vunpack.c.l.b16 %v10775
    %v10808 = vunpack.c.l.b16 %v10776
    %v10809 = vunpack.c.l.b16 %v10777
    %v10810 = vunpack.c.l.b16 %v10778
    %v10811 = vunpack.c.l.b16 %v10779
    %v10812 = vunpack.c.l.b16 %v10780
    %v10813 = vunpack.c.l.b16 %v10781
    %v10814 = vunpack.c.l.b16 %v10782
    %v10815 = vunpack.c.l.b16 %v10783
    %v10816 = vunpack.c.l.b16 %v10784
    %v10817 = vunpack.c.l.b16 %v10785
    %v10818 = vunpack.c.l.b16 %v10786
    %v10819 = vunpack.c.l.b16 %v10787
    %v10820 = vunpack.c.l.b16 %v10788
    %v10821 = vunpack.c.l.b16 %v10789
    %v10822 = vpack.c.b16 %v10807, %v10806
    %v10823 = vpack.c.b16 %v10809, %v10808
    %v10824 = vpack.c.b16 %v10811, %v10810
    %v10825 = vpack.c.b16 %v10813, %v10812
    %v10826 = vpack.c.b16 %v10815, %v10814
    %v10827 = vpack.c.b16 %v10817, %v10816
    %v10828 = vpack.c.b16 %v10819, %v10818
    %v10829 = vpack.c.b16 %v10821, %v10820
    %10838 = vmatpush.bf16.msra.mxu0 %v10829
    %10839 = vmatpush.bf16.msra.mxu0 %v10828
    %10840 = vmatpush.bf16.msra.mxu0 %v10827
    %10841 = vmatpush.bf16.msra.mxu0 %v10826
    %10842 = vmatpush.bf16.msra.mxu0 %v10825
    %10843 = vmatpush.bf16.msra.mxu0 %v10824
    %10844 = vmatpush.bf16.msra.mxu0 %v10823
    %10845 = vmatpush.bf16.msra.mxu0 %v10822
    %10846 = vmatmul.bf16.gmra.mxu0 %v10772
    %v10847 = vpop.f32.mrf.mxu0
    %v10848 = vadd.f32 0.0, %v10847
    %v10849 = vpop.f32.mrf.mxu0
    %10850 = vdwg.mxu0
    %v10851 = vadd.f32 %v10754, %v10848
    %v10852 = vld [vmem:[%s9736 + $0x2] sm:$0x3]
    %v10853 = vld [vmem:[%s9736 + $0x6] sm:$0x3]
    %v10854 = vld [vmem:[%s9736 + $0x12] sm:$0x3]
    %v10855 = vld [vmem:[%s9736 + $0x16] sm:$0x3]
    %10860 = vst [vmem:[#allocation1] ss:$4 sm:$0xff] %v10852
    %s10861 = scalar_lea.vmem [#allocation1], 1
    %10862 = vst [vmem:[%s10861] ss:$4 sm:$0xff] %v10853
    %s10863 = scalar_lea.vmem [#allocation1], 2
    %10864 = vst [vmem:[%s10863] ss:$4 sm:$0xff] %v10854
    %s10865 = scalar_lea.vmem [#allocation1], 3
    %10866 = vst [vmem:[%s10865] ss:$4 sm:$0xff] %v10855
    %v10867 = vld.sshfl [vmem:[#allocation1] sm:$0xff pattern:$0x73625140]
    %v10869 = vpack.c.bf16 %v10867, %v10867
    %s10870 = scalar_lea.vmem [#allocation5], 3392
    %v10871 = vld [vmem:[%s10870] sm:$0xf]
    %v10872 = vld [vmem:[%s10870 + $0x4] sm:$0xf]
    %v10873 = vld [vmem:[%s10870 + $0x8] sm:$0xf]
    %v10874 = vld [vmem:[%s10870 + $0xc] sm:$0xf]
    %v10875 = vld [vmem:[%s10870 + $0x10] sm:$0xf]
    %v10876 = vld [vmem:[%s10870 + $0x14] sm:$0xf]
    %v10877 = vld [vmem:[%s10870 + $0x18] sm:$0xf]
    %v10878 = vld [vmem:[%s10870 + $0x1c] sm:$0xf]
    %v10879 = vld [vmem:[%s10870 + $0x20] sm:$0xf]
    %v10880 = vld [vmem:[%s10870 + $0x24] sm:$0xf]
    %v10881 = vld [vmem:[%s10870 + $0x28] sm:$0xf]
    %v10882 = vld [vmem:[%s10870 + $0x2c] sm:$0xf]
    %v10883 = vld [vmem:[%s10870 + $0x30] sm:$0xf]
    %v10884 = vld [vmem:[%s10870 + $0x34] sm:$0xf]
    %v10885 = vld [vmem:[%s10870 + $0x38] sm:$0xf]
    %v10886 = vld [vmem:[%s10870 + $0x3c] sm:$0xf]
    %v10903 = vunpack.c.l.b16 %v10871
    %v10904 = vunpack.c.l.b16 %v10872
    %v10905 = vunpack.c.l.b16 %v10873
    %v10906 = vunpack.c.l.b16 %v10874
    %v10907 = vunpack.c.l.b16 %v10875
    %v10908 = vunpack.c.l.b16 %v10876
    %v10909 = vunpack.c.l.b16 %v10877
    %v10910 = vunpack.c.l.b16 %v10878
    %v10911 = vunpack.c.l.b16 %v10879
    %v10912 = vunpack.c.l.b16 %v10880
    %v10913 = vunpack.c.l.b16 %v10881
    %v10914 = vunpack.c.l.b16 %v10882
    %v10915 = vunpack.c.l.b16 %v10883
    %v10916 = vunpack.c.l.b16 %v10884
    %v10917 = vunpack.c.l.b16 %v10885
    %v10918 = vunpack.c.l.b16 %v10886
    %v10919 = vpack.c.b16 %v10904, %v10903
    %v10920 = vpack.c.b16 %v10906, %v10905
    %v10921 = vpack.c.b16 %v10908, %v10907
    %v10922 = vpack.c.b16 %v10910, %v10909
    %v10923 = vpack.c.b16 %v10912, %v10911
    %v10924 = vpack.c.b16 %v10914, %v10913
    %v10925 = vpack.c.b16 %v10916, %v10915
    %v10926 = vpack.c.b16 %v10918, %v10917
    %10935 = vmatpush.bf16.msra.mxu0 %v10926
    %10936 = vmatpush.bf16.msra.mxu0 %v10925
    %10937 = vmatpush.bf16.msra.mxu0 %v10924
    %10938 = vmatpush.bf16.msra.mxu0 %v10923
    %10939 = vmatpush.bf16.msra.mxu0 %v10922
    %10940 = vmatpush.bf16.msra.mxu0 %v10921
    %10941 = vmatpush.bf16.msra.mxu0 %v10920
    %10942 = vmatpush.bf16.msra.mxu0 %v10919
    %10943 = vmatmul.bf16.gmra.mxu0 %v10869
    %v10944 = vpop.f32.mrf.mxu0
    %v10945 = vadd.f32 0.0, %v10944
    %v10946 = vpop.f32.mrf.mxu0
    %10947 = vdwg.mxu0
    %v10948 = vadd.f32 %v10851, %v10945
    %v10949 = vrot.slane %v10948, 4
    %v10950 = vadd.f32 %v10948, %v10949
    %v10951 = vrot.slane %v10950, 2
    %v10952 = vadd.f32 %v10950, %v10951
    %v10953 = vrot.slane %v10952, 1
    %v10954 = vadd.f32 %v10952, %v10953
    %v10955 = vmul.f32 %v10948, %v10948
    %v10956 = vrot.slane %v10955, 4
    %v10957 = vadd.f32 %v10955, %v10956
    %v10958 = vrot.slane %v10957, 2
    %v10959 = vadd.f32 %v10957, %v10958
    %v10960 = vrot.slane %v10959, 1
    %v10961 = vadd.f32 %v10959, %v10960
    %v10962 = vmul.f32 %v10954, 0.125
    %v10963 = vmul.f32 %v10961, 0.125
    %v10964 = vmul.f32 %v10962, %v10962
    %v10965 = vsub.f32 %v10963, %v10964
    %v10966 = vmax.f32 %v10965, 0.0
    %v10967 = vld [vmem:[#allocation7 + $0x5] sm:$0x1]
    %v10968 = vadd.f32 %v10966, 1e-05
    %v10969 = vrsqrt.pop %v10968
    %v10970 = vmul.f32 %v10969, %v10968
    %v10971 = vmul.f32 %v10970, %v10969
    %v10972 = vmul.f32 0.5, %v10971
    %v10973 = vsub.f32 1.5, %v10972
    %v10974 = vmul.f32 %v10969, %v10973
    %vm10975 = vweird.f32 %v10968
    %vm10976 = vweird.f32 %v10969
    %vm10977 = vmor %vm10975, %vm10976
    %v10978 = vsel %vm10977, %v10969, %v10974
    %v10979 = vmul.f32 %v10967, %v10978
    %v10980 = vld [vmem:[#allocation9 + $0x5] sm:$0x1]
    %v10981 = vmul.f32 %v10962, %v10979
    %v10982 = vsub.f32 %v10980, %v10981
    %v10983 = vperm.slane %v10979, 0
    %v10984 = vmul.f32 %v10948, %v10983
    %v10985 = vperm.slane %v10982, 0
    %v10986 = vadd.f32 %v10984, %v10985
    %v10987 = vmax.f32 %v10986, 0.0
    %v10989 = vrot.slane %v10987, 2
    %v10990 = vrot.slane %v10987, 4
    %v10991 = vrot.slane %v10987, 6
    %10995 = vst [vmem:[%s6] sm:$0x3] %v10987
    %10996 = vst [vmem:[%s6 + $0x2] sm:$0x3] %v10989
    %10997 = vst [vmem:[%s6 + $0x4] sm:$0x3] %v10990
    %10998 = vst [vmem:[%s6 + $0x6] sm:$0x3] %v10991
    // Predicated region
    $region30: #{encoder_forward.1} parent=1 // pred_check
      _
    $region31: #{encoder_forward.1} parent=1 // pred_check_branch
      %11000 = sbr.rel (0) target = $region33
    $region32: #{encoder_forward.1} parent=1 // pred_region
      _
    $region33: #{encoder_forward.1} parent=1 // pred_fallthru
      _
    // Predicated region
    $region34: #{encoder_forward.1} parent=1 // pred_check
      _
    $region35: #{encoder_forward.1} parent=1 // pred_check_branch
      %11002 = sbr.rel (0) target = $region37
    $region36: #{encoder_forward.1} parent=1 // pred_region
      _
    $region37: #{encoder_forward.1} parent=1 // pred_fallthru
      _
    // Predicated region
    $region38: #{encoder_forward.1} parent=1 // pred_check
      _
    $region39: #{encoder_forward.1} parent=1 // pred_check_branch
      %11004 = sbr.rel (0) target = $region41
    $region40: #{encoder_forward.1} parent=1 // pred_region
      _
    $region41: #{encoder_forward.1} parent=1 // pred_fallthru
      _
    // Predicated region
    $region42: #{encoder_forward.1} parent=1 // pred_check
      _
    $region43: #{encoder_forward.1} parent=1 // pred_check_branch
      %11006 = sbr.rel (0) target = $region45
    $region44: #{encoder_forward.1} parent=1 // pred_region
      _
    $region45: #{encoder_forward.1} parent=1 // pred_fallthru
      _
    // Predicated region
    $region46: #{encoder_forward.1} parent=1 // pred_check
      _
    $region47: #{encoder_forward.1} parent=1 // pred_check_branch
      %11008 = sbr.rel (0) target = $region49
    $region48: #{encoder_forward.1} parent=1 // pred_region
      _
    $region49: #{encoder_forward.1} parent=1 // pred_fallthru
      _
    // Predicated region
    $region50: #{encoder_forward.1} parent=1 // pred_check
      _
    $region51: #{encoder_forward.1} parent=1 // pred_check_branch
      %11010 = sbr.rel (0) target = $region53
    $region52: #{encoder_forward.1} parent=1 // pred_region
      _
    $region53: #{encoder_forward.1} parent=1 // pred_fallthru
      _
    %11011 = vsyncpa [#allocation6], 1
    %11012 = vsyncpa [#allocation8], 1

</llo_original>
